<compile_context>
chip_gen: v5e
topology: v5e:2x2
jax: 0.10.0
libtpu: 0.0.40
codegen_flags: <defaults>
</compile_context>

<pallas_src>
import functools

import jax
import jax.numpy as jnp
import numpy as np
from jax.experimental import pallas as pl
from jax.experimental.pallas import tpu as pltpu

T_COOL = 0.2
COS_EPS = 1e-8
MASK_FILL = -1e10


def _relevance_kernel(mem_ref, cur_ref, wk_ref, wq_ref, wv_ref, mask_ref, dist_ref,
                      x_ref, rel_ref, *, window):
    bw, h = mem_ref.shape          # bw = bt * window  (static)
    w = window
    bt = bw // w

    mem2d = mem_ref[...]                                                        # [bt*W, H] bf16

    # Key projection — the dominant MXU pass: [bt*W, H] x [H, H], f32 accumulate.
    key = jnp.dot(mem2d, wk_ref[...], preferred_element_type=jnp.float32)       # [bt*W, H]
    # Query projection: [bt, H] x [H, H].
    qp = jnp.dot(cur_ref[...], wq_ref[...], preferred_element_type=jnp.float32)  # [bt, H]

    key3 = key.reshape(bt, w, h)                       # trivial reshape (f32, W sublanes/tile)
    kq = jnp.sum(key3 * qp[:, None, :], axis=-1)       # [bt, W]  lane reduce
    ksq = jnp.sum(key3 * key3, axis=-1)                # [bt, W]
    qsq = jnp.sum(qp * qp, axis=-1, keepdims=True)     # [bt, 1]

    # torch-style cosine similarity with per-norm eps clamp (EUP rsqrt).
    inv_kn = jax.lax.rsqrt(jnp.maximum(ksq, COS_EPS * COS_EPS))
    inv_qn = jax.lax.rsqrt(jnp.maximum(qsq, COS_EPS * COS_EPS))
    sim = kq * inv_kn * inv_qn                          # [bt, W]

    # Distance weights are a precomputed constant row ([1, W], VMEM-resident).
    energy = sim * dist_ref[...]
    energy = jnp.where(mask_ref[...] == 0.0, MASK_FILL, energy)

    # Row softmax over W with EXACT normalization (relevance is user-visible).
    m = jnp.max(energy, axis=-1, keepdims=True)
    e = jnp.exp(energy - m)
    rel = e / jnp.sum(e, axis=-1, keepdims=True)        # [bt, W] f32
    rel_ref[...] = rel

    # x = relevance @ value = (relevance @ memory) @ Wv^T
    # -> Wv applied to bt rows instead of bt*W rows.
    mem3 = mem2d.astype(jnp.float32).reshape(bt, w, h)
    ctx = jnp.sum(rel[:, :, None] * mem3, axis=1)       # [bt, H]  sublane reduce
    x = jnp.dot(ctx.astype(jnp.bfloat16), wv_ref[...], preferred_element_type=jnp.float32)
    x_ref[...] = x.astype(x_ref.dtype)


def prepare_relevance_weights(wk, wq, wv):
    """One-time (model-init) weight prep.

    wk/wq/wv are torch-Linear layout [out, in]. Returns pre-transposed bf16
    matrices (matmul layout) so no per-forward transposed HBM copies are made
    and weight DMA bytes are halved; matmuls still accumulate in f32.
    """
    return (jnp.asarray(wk.T, dtype=jnp.bfloat16),
            jnp.asarray(wq.T, dtype=jnp.bfloat16),
            jnp.asarray(wv.T, dtype=jnp.bfloat16))


def relevance_forward_batched(memory, current_utterance, w_k, w_q, w_v,
                              attention_mask=None, block_b=128):
    """Batched relevance over B independent windows.

    memory: [B, W, H], current_utterance: [B, H] (or [B, 1, H]),
    attention_mask: [B, W] or None. Returns (x [B, H] f32, relevance [B, W] f32).
    block_b: windows per grid step (sweep 16/32/64/128 per chip; 128 default).
    """
    b, w, h = memory.shape
    cur = current_utterance.reshape(b, h)
    if attention_mask is None:
        mask = jnp.ones((b, w), dtype=jnp.float32)
    else:
        mask = attention_mask.reshape(b, w).astype(jnp.float32)

    mem_bf = memory.astype(jnp.bfloat16)
    cur_bf = cur.astype(jnp.bfloat16)

    # Trace-time constant distance weights: exp(-T * d), d = 1..W.
    dist = jnp.asarray(np.exp(-T_COOL * np.arange(1, w + 1, dtype=np.float32)))[None, :]

    if b <= block_b:
        bt = b                               # single block == full array dims
    else:
        bt = max(8, (block_b // 8) * 8)      # keep sublane alignment for (bt, H) blocks
    pad = (-b) % bt
    if pad:
        mem_bf = jnp.pad(mem_bf, ((0, pad), (0, 0), (0, 0)))
        cur_bf = jnp.pad(cur_bf, ((0, pad), (0, 0)))
        mask = jnp.pad(mask, ((0, pad), (0, 0)), constant_values=1.0)
    bp = b + pad
    nblk = bp // bt

    # Lane-dense 2D bf16 slab for the MXU (clean (16,128) bf16 tiling).
    mem2d = mem_bf.reshape(bp * w, h)

    kern = functools.partial(_relevance_kernel, window=w)
    x, rel = pl.pallas_call(
        kern,
        grid=(nblk,),
        in_specs=[
            pl.BlockSpec((bt * w, h), lambda i: (i, 0)),   # memory rows (bf16)
            pl.BlockSpec((bt, h), lambda i: (i, 0)),       # current utterances (bf16)
            pl.BlockSpec((h, h), lambda i: (0, 0)),        # Wk^T (VMEM-resident)
            pl.BlockSpec((h, h), lambda i: (0, 0)),        # Wq^T (VMEM-resident)
            pl.BlockSpec((h, h), lambda i: (0, 0)),        # Wv^T (VMEM-resident)
            pl.BlockSpec((bt, w), lambda i: (i, 0)),       # attention mask (f32)
            pl.BlockSpec((1, w), lambda i: (0, 0)),        # distance weights (resident)
        ],
        out_specs=(
            pl.BlockSpec((bt, h), lambda i: (i, 0)),       # x
            pl.BlockSpec((bt, w), lambda i: (i, 0)),       # relevance
        ),
        out_shape=(
            jax.ShapeDtypeStruct((bp, h), jnp.float32),
            jax.ShapeDtypeStruct((bp, w), jnp.float32),
        ),
        compiler_params=pltpu.CompilerParams(dimension_semantics=("parallel",)),
    )(mem2d, cur_bf, w_k, w_q, w_v, mask, dist)

    if pad:
        x, rel = x[:b], rel[:b]
    return x, rel


def relevance_forward(memory, current_utterance, w_k, w_q, w_v, attention_mask=None):
    """Module-parity single-window API: memory [W, H], current_utterance [1, H],
    attention_mask [W] or None. Returns (x [1, H], relevance [W]).
    NOTE: a standalone W=8 call is launch-overhead bound; prefer
    relevance_forward_batched (batch windows/timesteps) for throughput."""
    w, h = memory.shape
    mask = None if attention_mask is None else attention_mask.reshape(1, w)
    x, rel = relevance_forward_batched(memory[None], current_utterance.reshape(1, h),
                                       w_k, w_q, w_v, mask)
    return x, rel.reshape(w)


def _reference_batched(memory, cur, wk, wq, wv, mask=None):
    """Pure f32 JAX reference matching the torch module, batched over windows."""
    key = jnp.einsum('bwh,oh->bwo', memory, wk)
    value = jnp.einsum('bwh,oh->bwo', memory, wv)
    query = jnp.einsum('bh,oh->bo', cur, wq)
    kq = jnp.sum(key * query[:, None, :], axis=-1)
    kn = jnp.maximum(jnp.linalg.norm(key, axis=-1), COS_EPS)
    qn = jnp.maximum(jnp.linalg.norm(query, axis=-1, keepdims=True), COS_EPS)
    sim = kq / (kn * qn)
    w = memory.shape[1]
    dist = jnp.exp(-T_COOL * jnp.arange(1, w + 1, dtype=jnp.float32))
    energy = sim * dist[None, :]
    if mask is not None:
        energy = jnp.where(mask == 0, MASK_FILL, energy)
    rel = jax.nn.softmax(energy, axis=-1)
    x = jnp.einsum('bw,bwh->bh', rel, value)
    return x, rel


if __name__ == "__main__":
    hidden_size = 128
    window_size = 8
    batch = 256            # 2 grid blocks of 128 -> engages both v7x TensorCores

    key0 = jax.random.PRNGKey(0)
    k_mem, k_cur, k_wk, k_wq, k_wv, k_msk = jax.random.split(key0, 6)

    memory = jax.random.normal(k_mem, (batch, window_size, hidden_size), dtype=jnp.float32)
    current = jax.random.normal(k_cur, (batch, hidden_size), dtype=jnp.float32)

    scale = 1.0 / jnp.sqrt(hidden_size)
    wk = jax.random.normal(k_wk, (hidden_size, hidden_size), dtype=jnp.float32) * scale
    wq = jax.random.normal(k_wq, (hidden_size, hidden_size), dtype=jnp.float32) * scale
    wv = jax.random.normal(k_wv, (hidden_size, hidden_size), dtype=jnp.float32) * scale

    # Random 0/1 masks (slot 0 always valid so every window has a real target).
    mask = (jax.random.uniform(k_msk, (batch, window_size)) > 0.3).astype(jnp.int32)
    mask = mask.at[:, 0].set(1)

    # One-time weight prep (model init).
    w_k, w_q, w_v = prepare_relevance_weights(wk, wq, wv)

    # ---- Batched path (primary) ----
    x, rel = relevance_forward_batched(memory, current, w_k, w_q, w_v, mask)
    x = jax.block_until_ready(x)
    rel = jax.block_until_ready(rel)

    x_ref, rel_ref = _reference_batched(memory, current, wk, wq, wv, mask)
    np.testing.assert_allclose(np.asarray(rel), np.asarray(rel_ref), rtol=2e-2, atol=2e-2)
    np.testing.assert_allclose(np.asarray(x), np.asarray(x_ref), rtol=2e-2, atol=2e-2)
    # Exact softmax normalization now -> tight sum-to-one.
    np.testing.assert_allclose(np.asarray(rel).sum(axis=-1), 1.0, rtol=0, atol=1e-4)

    # ---- Single-window module-API path (B = 1) ----
    mem1 = memory[0]                      # [W, H]
    cur1 = current[0:1]                   # [1, H]
    msk1 = mask[0]                        # [W]
    x1, rel1 = relevance_forward(mem1, cur1, w_k, w_q, w_v, msk1)
    x1 = jax.block_until_ready(x1)
    rel1 = jax.block_until_ready(rel1)
    x1_ref, rel1_ref = _reference_batched(mem1[None], cur1, wk, wq, wv, msk1[None])
    np.testing.assert_allclose(np.asarray(rel1), np.asarray(rel1_ref[0]), rtol=2e-2, atol=2e-2)
    np.testing.assert_allclose(np.asarray(x1), np.asarray(x1_ref), rtol=2e-2, atol=2e-2)

    print("KERNEL_OK")
</pallas_src>

<mosaic_0001>
module attributes {stable_mosaic.version = 11 : i64} {
  func.func @_relevance_kernel(%arg0: i32, %arg1: memref<1024x128xbf16, #tpu.memory_space<vmem>>, %arg2: memref<128x128xbf16, #tpu.memory_space<vmem>>, %arg3: memref<128x128xbf16, #tpu.memory_space<vmem>>, %arg4: memref<128x128xbf16, #tpu.memory_space<vmem>>, %arg5: memref<128x128xbf16, #tpu.memory_space<vmem>>, %arg6: memref<128x8xf32, #tpu.memory_space<vmem>>, %arg7: memref<1x8xf32, #tpu.memory_space<vmem>>, %arg8: memref<128x128xf32, #tpu.memory_space<vmem>>, %arg9: memref<128x8xf32, #tpu.memory_space<vmem>>) attributes {dimension_semantics = [#tpu.dimension_semantics<parallel>], iteration_bounds = array<i64: 2>, scalar_prefetch = 0 : i64, scratch_operands = 0 : i64, tpu.core_type = #tpu.core_type<tc>, window_params = [{transform_indices = @transform_0, window_bounds = array<i64: 1024, 128>}, {transform_indices = @transform_1, window_bounds = array<i64: 128, 128>}, {pipeline_mode = #tpu.pipeline_mode<synchronous>, transform_indices = @transform_2, window_bounds = array<i64: 128, 128>}, {pipeline_mode = #tpu.pipeline_mode<synchronous>, transform_indices = @transform_3, window_bounds = array<i64: 128, 128>}, {pipeline_mode = #tpu.pipeline_mode<synchronous>, transform_indices = @transform_4, window_bounds = array<i64: 128, 128>}, {transform_indices = @transform_5, window_bounds = array<i64: 128, 8>}, {pipeline_mode = #tpu.pipeline_mode<synchronous>, transform_indices = @transform_6, window_bounds = array<i64: 1, 8>}, {transform_indices = @transform_7, window_bounds = array<i64: 128, 128>}, {transform_indices = @transform_8, window_bounds = array<i64: 128, 8>}]} {
    %c0 = arith.constant 0 : index
    %c0_0 = arith.constant 0 : index
    %0 = vector.load %arg1[%c0, %c0_0] : memref<1024x128xbf16, #tpu.memory_space<vmem>>, vector<1024x128xbf16>
    %c0_1 = arith.constant 0 : index
    %c0_2 = arith.constant 0 : index
    %1 = vector.load %arg3[%c0_1, %c0_2] : memref<128x128xbf16, #tpu.memory_space<vmem>>, vector<128x128xbf16>
    %cst = arith.constant dense<0.000000e+00> : vector<1024x128xf32>
    %2 = tpu.matmul %0, %1, %cst {dimension_numbers = #tpu.dot_dimension_numbers<[1], [0], [0], [1], [0, 0, 1, 1], [], []>} : vector<1024x128xbf16>, vector<128x128xbf16>, vector<1024x128xf32> -> vector<1024x128xf32>
    %c0_3 = arith.constant 0 : index
    %c0_4 = arith.constant 0 : index
    %3 = vector.load %arg2[%c0_3, %c0_4] : memref<128x128xbf16, #tpu.memory_space<vmem>>, vector<128x128xbf16>
    %c0_5 = arith.constant 0 : index
    %c0_6 = arith.constant 0 : index
    %4 = vector.load %arg4[%c0_5, %c0_6] : memref<128x128xbf16, #tpu.memory_space<vmem>>, vector<128x128xbf16>
    %cst_7 = arith.constant dense<0.000000e+00> : vector<128x128xf32>
    %5 = tpu.matmul %3, %4, %cst_7 {dimension_numbers = #tpu.dot_dimension_numbers<[1], [0], [0], [1], [0, 0, 1, 1], [], []>} : vector<128x128xbf16>, vector<128x128xbf16>, vector<128x128xf32> -> vector<128x128xf32>
    %6 = vector.shape_cast %2 : vector<1024x128xf32> to vector<128x8x128xf32>
    %7 = vector.shape_cast %5 : vector<128x128xf32> to vector<128x1x128xf32>
    %8 = vector.broadcast %7 : vector<128x1x128xf32> to vector<128x8x128xf32>
    %9 = arith.mulf %6, %8 : vector<128x8x128xf32>
    %cst_8 = arith.constant dense<0.000000e+00> : vector<128x8xf32>
    %10 = vector.multi_reduction <add>, %9, %cst_8 [2] : vector<128x8x128xf32> to vector<128x8xf32>
    %11 = arith.mulf %6, %6 : vector<128x8x128xf32>
    %cst_9 = arith.constant dense<0.000000e+00> : vector<128x8xf32>
    %12 = vector.multi_reduction <add>, %11, %cst_9 [2] : vector<128x8x128xf32> to vector<128x8xf32>
    %13 = arith.mulf %5, %5 : vector<128x128xf32>
    %cst_10 = arith.constant dense<0.000000e+00> : vector<128xf32>
    %14 = vector.multi_reduction <add>, %13, %cst_10 [1] : vector<128x128xf32> to vector<128xf32>
    %15 = vector.shape_cast %14 : vector<128xf32> to vector<128x1xf32>
    %cst_11 = arith.constant 1.000000e-16 : f32
    %16 = vector.broadcast %cst_11 : f32 to vector<128x8xf32>
    %17 = arith.maximumf %12, %16 : vector<128x8xf32>
    %18 = math.rsqrt %17 : vector<128x8xf32>
    %cst_12 = arith.constant 1.000000e-16 : f32
    %19 = vector.broadcast %cst_12 : f32 to vector<128x1xf32>
    %20 = arith.maximumf %15, %19 : vector<128x1xf32>
    %21 = math.rsqrt %20 : vector<128x1xf32>
    %22 = arith.mulf %10, %18 : vector<128x8xf32>
    %23 = vector.broadcast %21 : vector<128x1xf32> to vector<128x8xf32>
    %24 = arith.mulf %22, %23 : vector<128x8xf32>
    %c0_13 = arith.constant 0 : index
    %c0_14 = arith.constant 0 : index
    %25 = vector.load %arg7[%c0_13, %c0_14] : memref<1x8xf32, #tpu.memory_space<vmem>>, vector<1x8xf32>
    %26 = vector.broadcast %25 : vector<1x8xf32> to vector<128x8xf32>
    %27 = arith.mulf %24, %26 : vector<128x8xf32>
    %c0_15 = arith.constant 0 : index
    %c0_16 = arith.constant 0 : index
    %28 = vector.load %arg6[%c0_15, %c0_16] : memref<128x8xf32, #tpu.memory_space<vmem>>, vector<128x8xf32>
    %cst_17 = arith.constant 0.000000e+00 : f32
    %29 = vector.broadcast %cst_17 : f32 to vector<128x8xf32>
    %30 = arith.cmpf oeq, %28, %29 : vector<128x8xf32>
    %cst_18 = arith.constant -1.000000e+10 : f32
    %31 = vector.broadcast %cst_18 : f32 to vector<128x8xf32>
    %32 = arith.select %30, %31, %27 : vector<128x8xi1>, vector<128x8xf32>
    %cst_19 = arith.constant dense<0xFF800000> : vector<128xf32>
    %33 = vector.multi_reduction <maximumf>, %32, %cst_19 [1] : vector<128x8xf32> to vector<128xf32>
    %34 = vector.shape_cast %33 : vector<128xf32> to vector<128x1xf32>
    %35 = vector.broadcast %34 : vector<128x1xf32> to vector<128x8xf32>
    %36 = arith.subf %32, %35 : vector<128x8xf32>
    %37 = math.exp %36 : vector<128x8xf32>
    %cst_20 = arith.constant dense<0.000000e+00> : vector<128xf32>
    %38 = vector.multi_reduction <add>, %37, %cst_20 [1] : vector<128x8xf32> to vector<128xf32>
    %39 = vector.shape_cast %38 : vector<128xf32> to vector<128x1xf32>
    %40 = vector.broadcast %39 : vector<128x1xf32> to vector<128x8xf32>
    %41 = arith.divf %37, %40 : vector<128x8xf32>
    %c0_21 = arith.constant 0 : index
    %c0_22 = arith.constant 0 : index
    %42 = vector.load %arg9[%c0_21, %c0_22] : memref<128x8xf32, #tpu.memory_space<vmem>>, vector<128x8xf32>
    tpu.vector_store %arg9[%c0_21, %c0_22], %41 {strides = array<i32>} : memref<128x8xf32, #tpu.memory_space<vmem>>, vector<128x8xf32>,
    %43 = arith.extf %0 : vector<1024x128xbf16> to vector<1024x128xf32>
    %44 = vector.shape_cast %43 : vector<1024x128xf32> to vector<128x8x128xf32>
    %45 = vector.shape_cast %41 : vector<128x8xf32> to vector<128x8x1xf32>
    %46 = vector.broadcast %45 : vector<128x8x1xf32> to vector<128x8x128xf32>
    %47 = arith.mulf %46, %44 : vector<128x8x128xf32>
    %cst_23 = arith.constant dense<0.000000e+00> : vector<128x128xf32>
    %48 = vector.multi_reduction <add>, %47, %cst_23 [1] : vector<128x8x128xf32> to vector<128x128xf32>
    %49 = arith.truncf %48 : vector<128x128xf32> to vector<128x128xbf16>
    %c0_24 = arith.constant 0 : index
    %c0_25 = arith.constant 0 : index
    %50 = vector.load %arg5[%c0_24, %c0_25] : memref<128x128xbf16, #tpu.memory_space<vmem>>, vector<128x128xbf16>
    %cst_26 = arith.constant dense<0.000000e+00> : vector<128x128xf32>
    %51 = tpu.matmul %49, %50, %cst_26 {dimension_numbers = #tpu.dot_dimension_numbers<[1], [0], [0], [1], [0, 0, 1, 1], [], []>} : vector<128x128xbf16>, vector<128x128xbf16>, vector<128x128xf32> -> vector<128x128xf32>
    %c0_27 = arith.constant 0 : index
    %c0_28 = arith.constant 0 : index
    %52 = vector.load %arg8[%c0_27, %c0_28] : memref<128x128xf32, #tpu.memory_space<vmem>>, vector<128x128xf32>
    tpu.vector_store %arg8[%c0_27, %c0_28], %51 {strides = array<i32>} : memref<128x128xf32, #tpu.memory_space<vmem>>, vector<128x128xf32>,
    return
  }
  func.func @transform_0(%arg0: i32) -> (i32, i32) {
    %c0_i32 = arith.constant 0 : i32
    %c0_i32_0 = arith.constant 0 : i32
    return %arg0, %c0_i32 : i32, i32
  }
  func.func @transform_1(%arg0: i32) -> (i32, i32) {
    %c0_i32 = arith.constant 0 : i32
    %c0_i32_0 = arith.constant 0 : i32
    return %arg0, %c0_i32 : i32, i32
  }
  func.func @transform_2(%arg0: i32) -> (i32, i32) {
    %c0_i32 = arith.constant 0 : i32
    %c0_i32_0 = arith.constant 0 : i32
    %c0_i32_1 = arith.constant 0 : i32
    return %c0_i32, %c0_i32_0 : i32, i32
  }
  func.func @transform_3(%arg0: i32) -> (i32, i32) {
    %c0_i32 = arith.constant 0 : i32
    %c0_i32_0 = arith.constant 0 : i32
    %c0_i32_1 = arith.constant 0 : i32
    return %c0_i32, %c0_i32_0 : i32, i32
  }
  func.func @transform_4(%arg0: i32) -> (i32, i32) {
    %c0_i32 = arith.constant 0 : i32
    %c0_i32_0 = arith.constant 0 : i32
    %c0_i32_1 = arith.constant 0 : i32
    return %c0_i32, %c0_i32_0 : i32, i32
  }
  func.func @transform_5(%arg0: i32) -> (i32, i32) {
    %c0_i32 = arith.constant 0 : i32
    %c0_i32_0 = arith.constant 0 : i32
    return %arg0, %c0_i32 : i32, i32
  }
  func.func @transform_6(%arg0: i32) -> (i32, i32) {
    %c0_i32 = arith.constant 0 : i32
    %c0_i32_0 = arith.constant 0 : i32
    %c0_i32_1 = arith.constant 0 : i32
    return %c0_i32, %c0_i32_0 : i32, i32
  }
  func.func @transform_7(%arg0: i32) -> (i32, i32) {
    %c0_i32 = arith.constant 0 : i32
    %c0_i32_0 = arith.constant 0 : i32
    return %arg0, %c0_i32 : i32, i32
  }
  func.func @transform_8(%arg0: i32) -> (i32, i32) {
    %c0_i32 = arith.constant 0 : i32
    %c0_i32_0 = arith.constant 0 : i32
    return %arg0, %c0_i32 : i32, i32
  }
}

</mosaic_0001>

<llo_original>
// kernel: tpu_custom_call.1
$region0: #{tpu_custom_call.1}
  #allocation0 [shape = 'u32[]', space=smem, size = 0x4, offset = 0x4, fixed_abs, tag = 'smem constant byte address 0x4 - core index']
  #allocation1 [shape = 'u32[72,128]{1,0:T(1,128)}', space=vmem, size = 0x9000, scoped, tag = 'internal scratch']
  %s0 = inlined_call_operand.hbm [shape: bf16[2048,128], index: 0, kind: input, shape index: {}]
  %s1 = inlined_call_operand.vmem [shape: bf16[256,128], index: 1, kind: input, shape index: {}]
  %s2 = inlined_call_operand.vmem [shape: bf16[128,128], index: 2, kind: input, shape index: {}]
  %s3 = inlined_call_operand.vmem [shape: bf16[128,128], index: 3, kind: input, shape index: {}]
  %s4 = inlined_call_operand.hbm [shape: bf16[128,128], index: 4, kind: input, shape index: {}]
  %s5 = inlined_call_operand.vmem [shape: f32[256,8], index: 5, kind: input, shape index: {}]
  %s6 = inlined_call_operand.vmem [shape: f32[1,8], index: 6, kind: input, shape index: {}]
  %s7 = inlined_call_operand.hbm [shape: f32[256,128], index: 7, kind: output, shape index: {0}]
  %s8 = inlined_call_operand.vmem [shape: f32[256,8], index: 8, kind: output, shape index: {1}]
  %9 = xla_tuple %s7, %s8
  %s10 = sld [smem:[#allocation0]]
  $region77: #{tpu_custom_call.1} parent=0
    _
  %s12 = ssub.s32 1, %s10
  %s13 = scalar_select 0, %s12, %s10
  $region1: #{tpu_custom_call.1} parent=0
    #allocation2 [shape = 'u8[524288]{0}', space=vmem, size = 0x80000, scoped, tag = 'input window, operand 0']
    #allocation3 [shape = 's32[2]{0}', space=sflag, size = 0x8, scoped, tag = 'scoped memory for tpu_custom_call.1']
    #allocation4 [shape = 's32[2]{0}', space=sflag, size = 0x8, scoped, tag = 'scoped memory for tpu_custom_call.1']
    #allocation5 [shape = 'u8[32768]{0}', space=vmem, size = 0x8000, scoped, tag = 'input window, operand 4, single buffered']
    #allocation6 [shape = 's32[1]{0}', space=sflag, size = 0x4, scoped, tag = 'scoped memory for tpu_custom_call.1']
    #allocation7 [shape = 'u8[131072]{0}', space=vmem, size = 0x20000, scoped, tag = 'output window, operand 0']
    %14 = vsyncpa [#allocation3], 0
    %s15 = scalar_lea.sflag [#allocation3], 1
    %16 = vsyncpa %s15, 0
    %17 = vsyncpa [#allocation6], 0
    %18 = vsyncpa [#allocation4], 0
    %s19 = scalar_lea.sflag [#allocation4], 1
    %20 = vsyncpa %s19, 0
    loop: start=0, step=1, limit=4
    $region2: #{tpu_custom_call.1} parent=1 // loop_pre_header
      _
    $region3: #{tpu_custom_call.1} parent=1 // loop_header
      %s22 = sphi 0, %s26
      %p23 = scmp.ge.s32.totalorder %s22, 4
      %s32 = sphi 0, %s34
      %s35 = sphi 0, %s32
      %s36 = sphi 0, %s35
      %s52 = sphi 0, %s36
      %s58 = sphi 0, %s60
      %s61 = sphi 0, %s58
      %s62 = sphi 0, %s61
      %s78 = sphi 0, %s62
      %s82 = sphi 0, %s82
      %s84 = sphi 0, %s82
      %s85 = sphi 0, %s84
      %s99 = sphi 0, %s85
      %s103 = sphi 0, %s103
      %s105 = sphi 0, %s103
      %s106 = sphi 0, %s105
      %s120 = sphi 0, %s106
      %s124 = sphi 0, %s124
      %s126 = sphi 0, %s124
      %s127 = sphi 0, %s126
      %s141 = sphi 0, %s127
      %s147 = sphi 0, %s149
      %s150 = sphi 0, %s147
      %s151 = sphi 0, %s150
      %s167 = sphi 0, %s151
      %s171 = sphi 0, %s171
      %s173 = sphi 0, %s171
      %s174 = sphi 0, %s173
      %s188 = sphi 0, %s174
      %s194 = sphi 0, %s196
      %s197 = sphi 0, %s194
      %s198 = sphi 0, %s197
      %s214 = sphi 0, %s198
      %s220 = sphi 0, %s222
      %s223 = sphi 0, %s220
      %s224 = sphi 0, %s223
      %s240 = sphi 0, %s224
    $region4: #{tpu_custom_call.1} parent=1 // loop_header_branch
      %25 = sbr.rel (%p23) target = $region8
    $region5: #{tpu_custom_call.1} parent=1 // loop_body
      %s27 = ssub.s32 %s22, 1
      %s28 = ssub.s32 %s22, 2
      %s29 = sadd.s32 %s22, 1
      %s30 = ssub.s32 %s22, %s29
      %p31 = scmp.eq.s32.totalorder %s30, 0
      %s33 = sadd.s32 %s32, 1
      %s34 = scalar_select %p31, %s32, %s33
      %p37 = pneg %p31
      %p38 = scmp.eq.s32.totalorder %s22, 1
      %p39 = por %p37, %p38
      %p40 = scmp.ne.s32.totalorder %s32, %s35
      %p41 = scmp.eq.s32.totalorder %s22, 0
      %p42 = por %p40, %p41
      %p43 = scmp.ne.s32.totalorder %s32, %s35
      %p44 = scmp.eq.s32.totalorder %s27, 1
      %p45 = por %p43, %p44
      %p46 = scmp.ne.s32.totalorder %s35, %s36
      %p47 = scmp.eq.s32.totalorder %s27, 0
      %p48 = por %p46, %p47
      %p49 = scmp.ne.s32.totalorder %s35, %s36
      %p50 = scmp.eq.s32.totalorder %s28, 1
      %p51 = por %p49, %p50
      %p53 = scmp.ne.s32.totalorder %s36, %s52
      %p54 = scmp.eq.s32.totalorder %s28, 0
      %p55 = por %p53, %p54
      %s56 = ssub.s32 %s22, %s29
      %p57 = scmp.eq.s32.totalorder %s56, 0
      %s59 = sadd.s32 %s58, 1
      %s60 = scalar_select %p57, %s58, %s59
      %p63 = pneg %p57
      %p64 = scmp.eq.s32.totalorder %s22, 1
      %p65 = por %p63, %p64
      %p66 = scmp.ne.s32.totalorder %s58, %s61
      %p67 = scmp.eq.s32.totalorder %s22, 0
      %p68 = por %p66, %p67
      %p69 = scmp.ne.s32.totalorder %s58, %s61
      %p70 = scmp.eq.s32.totalorder %s27, 1
      %p71 = por %p69, %p70
      %p72 = scmp.ne.s32.totalorder %s61, %s62
      %p73 = scmp.eq.s32.totalorder %s27, 0
      %p74 = por %p72, %p73
      %p75 = scmp.ne.s32.totalorder %s61, %s62
      %p76 = scmp.eq.s32.totalorder %s28, 1
      %p77 = por %p75, %p76
      %p79 = scmp.ne.s32.totalorder %s62, %s78
      %p80 = scmp.eq.s32.totalorder %s28, 0
      %p81 = por %p79, %p80
      %s83 = sadd.s32 %s82, 1
      %p86 = scmp.eq.s32.totalorder %s22, 1
      %p87 = scmp.ne.s32.totalorder %s82, %s84
      %p88 = scmp.eq.s32.totalorder %s22, 0
      %p89 = por %p87, %p88
      %p90 = scmp.ne.s32.totalorder %s82, %s84
      %p91 = scmp.eq.s32.totalorder %s27, 1
      %p92 = por %p90, %p91
      %p93 = scmp.ne.s32.totalorder %s84, %s85
      %p94 = scmp.eq.s32.totalorder %s27, 0
      %p95 = por %p93, %p94
      %p96 = scmp.ne.s32.totalorder %s84, %s85
      %p97 = scmp.eq.s32.totalorder %s28, 1
      %p98 = por %p96, %p97
      %p100 = scmp.ne.s32.totalorder %s85, %s99
      %p101 = scmp.eq.s32.totalorder %s28, 0
      %p102 = por %p100, %p101
      %s104 = sadd.s32 %s103, 1
      %p107 = scmp.eq.s32.totalorder %s22, 1
      %p108 = scmp.ne.s32.totalorder %s103, %s105
      %p109 = scmp.eq.s32.totalorder %s22, 0
      %p110 = por %p108, %p109
      %p111 = scmp.ne.s32.totalorder %s103, %s105
      %p112 = scmp.eq.s32.totalorder %s27, 1
      %p113 = por %p111, %p112
      %p114 = scmp.ne.s32.totalorder %s105, %s106
      %p115 = scmp.eq.s32.totalorder %s27, 0
      %p116 = por %p114, %p115
      %p117 = scmp.ne.s32.totalorder %s105, %s106
      %p118 = scmp.eq.s32.totalorder %s28, 1
      %p119 = por %p117, %p118
      %p121 = scmp.ne.s32.totalorder %s106, %s120
      %p122 = scmp.eq.s32.totalorder %s28, 0
      %p123 = por %p121, %p122
      %s125 = sadd.s32 %s124, 1
      %p128 = scmp.eq.s32.totalorder %s22, 1
      %p129 = scmp.ne.s32.totalorder %s124, %s126
      %p130 = scmp.eq.s32.totalorder %s22, 0
      %p131 = por %p129, %p130
      %p132 = scmp.ne.s32.totalorder %s124, %s126
      %p133 = scmp.eq.s32.totalorder %s27, 1
      %p134 = por %p132, %p133
      %p135 = scmp.ne.s32.totalorder %s126, %s127
      %p136 = scmp.eq.s32.totalorder %s27, 0
      %p137 = por %p135, %p136
      %p138 = scmp.ne.s32.totalorder %s126, %s127
      %p139 = scmp.eq.s32.totalorder %s28, 1
      %p140 = por %p138, %p139
      %p142 = scmp.ne.s32.totalorder %s127, %s141
      %p143 = scmp.eq.s32.totalorder %s28, 0
      %p144 = por %p142, %p143
      %s145 = ssub.s32 %s22, %s29
      %p146 = scmp.eq.s32.totalorder %s145, 0
      %s148 = sadd.s32 %s147, 1
      %s149 = scalar_select %p146, %s147, %s148
      %p152 = pneg %p146
      %p153 = scmp.eq.s32.totalorder %s22, 1
      %p154 = por %p152, %p153
      %p155 = scmp.ne.s32.totalorder %s147, %s150
      %p156 = scmp.eq.s32.totalorder %s22, 0
      %p157 = por %p155, %p156
      %p158 = scmp.ne.s32.totalorder %s147, %s150
      %p159 = scmp.eq.s32.totalorder %s27, 1
      %p160 = por %p158, %p159
      %p161 = scmp.ne.s32.totalorder %s150, %s151
      %p162 = scmp.eq.s32.totalorder %s27, 0
      %p163 = por %p161, %p162
      %p164 = scmp.ne.s32.totalorder %s150, %s151
      %p165 = scmp.eq.s32.totalorder %s28, 1
      %p166 = por %p164, %p165
      %p168 = scmp.ne.s32.totalorder %s151, %s167
      %p169 = scmp.eq.s32.totalorder %s28, 0
      %p170 = por %p168, %p169
      %s172 = sadd.s32 %s171, 1
      %p175 = scmp.eq.s32.totalorder %s22, 1
      %p176 = scmp.ne.s32.totalorder %s171, %s173
      %p177 = scmp.eq.s32.totalorder %s22, 0
      %p178 = por %p176, %p177
      %p179 = scmp.ne.s32.totalorder %s171, %s173
      %p180 = scmp.eq.s32.totalorder %s27, 1
      %p181 = por %p179, %p180
      %p182 = scmp.ne.s32.totalorder %s173, %s174
      %p183 = scmp.eq.s32.totalorder %s27, 0
      %p184 = por %p182, %p183
      %p185 = scmp.ne.s32.totalorder %s173, %s174
      %p186 = scmp.eq.s32.totalorder %s28, 1
      %p187 = por %p185, %p186
      %p189 = scmp.ne.s32.totalorder %s174, %s188
      %p190 = scmp.eq.s32.totalorder %s28, 0
      %p191 = por %p189, %p190
      %s192 = ssub.s32 %s22, %s29
      %p193 = scmp.eq.s32.totalorder %s192, 0
      %s195 = sadd.s32 %s194, 1
      %s196 = scalar_select %p193, %s194, %s195
      %p199 = pneg %p193
      %p200 = scmp.eq.s32.totalorder %s22, 1
      %p201 = por %p199, %p200
      %p202 = scmp.ne.s32.totalorder %s194, %s197
      %p203 = scmp.eq.s32.totalorder %s22, 0
      %p204 = por %p202, %p203
      %p205 = scmp.ne.s32.totalorder %s194, %s197
      %p206 = scmp.eq.s32.totalorder %s27, 1
      %p207 = por %p205, %p206
      %p208 = scmp.ne.s32.totalorder %s197, %s198
      %p209 = scmp.eq.s32.totalorder %s27, 0
      %p210 = por %p208, %p209
      %p211 = scmp.ne.s32.totalorder %s197, %s198
      %p212 = scmp.eq.s32.totalorder %s28, 1
      %p213 = por %p211, %p212
      %p215 = scmp.ne.s32.totalorder %s198, %s214
      %p216 = scmp.eq.s32.totalorder %s28, 0
      %p217 = por %p215, %p216
      %s218 = ssub.s32 %s22, %s29
      %p219 = scmp.eq.s32.totalorder %s218, 0
      %s221 = sadd.s32 %s220, 1
      %s222 = scalar_select %p219, %s220, %s221
      %p225 = pneg %p219
      %p226 = scmp.eq.s32.totalorder %s22, 1
      %p227 = por %p225, %p226
      %p228 = scmp.ne.s32.totalorder %s220, %s223
      %p229 = scmp.eq.s32.totalorder %s22, 0
      %p230 = por %p228, %p229
      %p231 = scmp.ne.s32.totalorder %s220, %s223
      %p232 = scmp.eq.s32.totalorder %s27, 1
      %p233 = por %p231, %p232
      %p234 = scmp.ne.s32.totalorder %s223, %s224
      %p235 = scmp.eq.s32.totalorder %s27, 0
      %p236 = por %p234, %p235
      %p237 = scmp.ne.s32.totalorder %s223, %s224
      %p238 = scmp.eq.s32.totalorder %s28, 1
      %p239 = por %p237, %p238
      %p241 = scmp.ne.s32.totalorder %s224, %s240
      %p242 = scmp.eq.s32.totalorder %s28, 0
      %p243 = por %p241, %p242
      %p244 = scmp.le.s32.totalorder 1, %s22
      %p245 = scmp.lt.s32.totalorder %s22, 3
      %p246 = pnand %p244, %p245
      %p247 = pneg %p246
      // Predicated region
      $region9: #{tpu_custom_call.1} parent=5 // pred_check
        _
      $region10: #{tpu_custom_call.1} parent=5 // pred_check_branch
        %249 = sbr.rel (%p246) target = $region12
      $region11: #{tpu_custom_call.1} parent=5 // pred_region
        %s250 = ssub.s32 %s22, 1
        // Predicated region
        $region13: #{tpu_custom_call.1} parent=11 // pred_check
          %p251 = pneg %p95
        $region14: #{tpu_custom_call.1} parent=11 // pred_check_branch
          %253 = sbr.rel (%p251) target = $region16
        $region15: #{tpu_custom_call.1} parent=11 // pred_region
          _
        $region16: #{tpu_custom_call.1} parent=11 // pred_fallthru
          _
        // Predicated region
        $region17: #{tpu_custom_call.1} parent=11 // pred_check
          %p254 = pneg %p116
        $region18: #{tpu_custom_call.1} parent=11 // pred_check_branch
          %256 = sbr.rel (%p254) target = $region20
        $region19: #{tpu_custom_call.1} parent=11 // pred_region
          _
        $region20: #{tpu_custom_call.1} parent=11 // pred_fallthru
          _
        // Predicated region
        $region21: #{tpu_custom_call.1} parent=11 // pred_check
          %p257 = pneg %p137
        $region22: #{tpu_custom_call.1} parent=11 // pred_check_branch
          %259 = sbr.rel (%p257) target = $region24
        $region23: #{tpu_custom_call.1} parent=11 // pred_region
          %261 = vsyncadd [#allocation6], 0
          %s262 = sshll.u32 %s4, 4
          %s263 = int_to_ptr.hbm [resolvable:$true] %s262
          %s264 = sshll.u32 [#allocation5], 4
          %s265 = int_to_ptr.vmem [resolvable:$true] %s264
          %270 = dma.hbm_to_vmem [thread:$0]  %s263, 1024, %s265, [#allocation6], 64, 64, 4
        $region24: #{tpu_custom_call.1} parent=11 // pred_fallthru
          _
        // Predicated region
        $region25: #{tpu_custom_call.1} parent=11 // pred_check
          %p271 = pneg %p184
        $region26: #{tpu_custom_call.1} parent=11 // pred_check_branch
          %273 = sbr.rel (%p271) target = $region28
        $region27: #{tpu_custom_call.1} parent=11 // pred_region
          _
        $region28: #{tpu_custom_call.1} parent=11 // pred_fallthru
          _
      $region12: #{tpu_custom_call.1} parent=5 // pred_fallthru
        _
      %p274 = scmp.lt.s32.totalorder %s22, 2
      // Predicated region
      $region29: #{tpu_custom_call.1} parent=5 // pred_check
        %p275 = pneg %p274
      $region30: #{tpu_custom_call.1} parent=5 // pred_check_branch
        %277 = sbr.rel (%p275) target = $region32
      $region31: #{tpu_custom_call.1} parent=5 // pred_region
        // Predicated region
        $region33: #{tpu_custom_call.1} parent=31 // pred_check
          %p278 = pneg %p42
        $region34: #{tpu_custom_call.1} parent=31 // pred_check_branch
          %280 = sbr.rel (%p278) target = $region36
        $region35: #{tpu_custom_call.1} parent=31 // pred_region
          %s281 = sand.u32 %s32, 1
          %s282 = scalar_lea.sflag [#allocation3], %s281
          %s283 = sand.u32 %s32, 1
          %s284 = smul.addr %s283, 512
          %s285 = scalar_lea.vmem [#allocation2], %s284
          %s286 = smul.u32 128, %s22
          %288 = vsyncadd %s282, 0
          %s289 = smul.addr %s286, 4
          %s290 = scalar_lea.hbm %s0, %s289
          %s291 = sshll.u32 %s290, 4
          %s292 = int_to_ptr.hbm [resolvable:$true] %s291
          %s293 = sshll.u32 %s285, 4
          %s294 = int_to_ptr.vmem [resolvable:$true] %s293
          %299 = dma.hbm_to_vmem [thread:$0]  %s292, 8192, %s294, %s282, 64, 64, 4
        $region36: #{tpu_custom_call.1} parent=31 // pred_fallthru
          _
        // Predicated region
        $region37: #{tpu_custom_call.1} parent=31 // pred_check
          %p300 = pneg %p68
        $region38: #{tpu_custom_call.1} parent=31 // pred_check_branch
          %302 = sbr.rel (%p300) target = $region40
        $region39: #{tpu_custom_call.1} parent=31 // pred_region
          %s303 = smul.u32 16, %s22
          %p304 = scmp.lt.s32.totalorder %s303, 31
          %s305 = scalar_select %p304, %s303, 31
          %s306 = smul.addr %s305, 4
          %s307 = scalar_lea.vmem %s1, %s306
          %s308 = smul.u32 16, %s22
        $region40: #{tpu_custom_call.1} parent=31 // pred_fallthru
          _
        // Predicated region
        $region41: #{tpu_custom_call.1} parent=31 // pred_check
          %p309 = pneg %p157
        $region42: #{tpu_custom_call.1} parent=31 // pred_check_branch
          %311 = sbr.rel (%p309) target = $region44
        $region43: #{tpu_custom_call.1} parent=31 // pred_region
          %s312 = smul.u32 16, %s22
          %p313 = scmp.lt.s32.totalorder %s312, 31
          %s314 = scalar_select %p313, %s312, 31
          %s315 = smul.addr %s314, 8
          %s316 = scalar_lea.vmem %s5, %s315
          %s317 = smul.u32 16, %s22
        $region44: #{tpu_custom_call.1} parent=31 // pred_fallthru
          _
      $region32: #{tpu_custom_call.1} parent=5 // pred_fallthru
        _
      %p318 = scmp.le.s32.totalorder 1, %s22
      %p319 = scmp.lt.s32.totalorder %s22, 3
      %p320 = pnand %p318, %p319
      %p321 = pneg %p320
      // Predicated region
      $region45: #{tpu_custom_call.1} parent=5 // pred_check
        _
      $region46: #{tpu_custom_call.1} parent=5 // pred_check_branch
        %323 = sbr.rel (%p320) target = $region48
      $region47: #{tpu_custom_call.1} parent=5 // pred_region
        %s324 = ssub.s32 %s22, 1
        %s325 = sand.u32 %s35, 1
        %s326 = scalar_lea.sflag [#allocation3], %s325
        %s327 = sand.u32 %s35, 1
        %s328 = smul.addr %s327, 512
        %s329 = scalar_lea.vmem [#allocation2], %s328
        // Predicated region
        $region49: #{tpu_custom_call.1} parent=47 // pred_check
          %p330 = pneg %p48
        $region50: #{tpu_custom_call.1} parent=47 // pred_check_branch
          %332 = sbr.rel (%p330) target = $region52
        $region51: #{tpu_custom_call.1} parent=47 // pred_region
          %334 = dma.done %s326, 8192
        $region52: #{tpu_custom_call.1} parent=47 // pred_fallthru
          _
        // Predicated region
        $region53: #{tpu_custom_call.1} parent=47 // pred_check
          %p335 = pneg %p137
        $region54: #{tpu_custom_call.1} parent=47 // pred_check_branch
          %337 = sbr.rel (%p335) target = $region56
        $region55: #{tpu_custom_call.1} parent=47 // pred_region
          %339 = dma.done [#allocation6], 1024
        $region56: #{tpu_custom_call.1} parent=47 // pred_fallthru
          _
        %s340 = sand.u32 %s35, 1
        %s341 = scalar_lea.sflag [#allocation3], %s340
        %s342 = sand.u32 %s35, 1
        %s343 = smul.addr %s342, 512
        %s344 = scalar_lea.vmem [#allocation2], %s343
        %p345 = pneg %p48
        %p346 = pneg %p45
        %s347 = smul.u32 16, %s27
        %p348 = scmp.lt.s32.totalorder %s347, 31
        %s349 = scalar_select %p348, %s347, 31
        %s350 = smul.addr %s349, 4
        %s351 = scalar_lea.vmem %s1, %s350
        %p352 = pneg %p74
        %p353 = pneg %p71
        %p354 = pneg %p95
        %p355 = pneg %p92
        %p356 = pneg %p116
        %p357 = pneg %p113
        %p358 = pneg %p137
        %p359 = pneg %p134
        %s360 = smul.u32 16, %s27
        %p361 = scmp.lt.s32.totalorder %s360, 31
        %s362 = scalar_select %p361, %s360, 31
        %s363 = smul.addr %s362, 8
        %s364 = scalar_lea.vmem %s5, %s363
        %p365 = pneg %p163
        %p366 = pneg %p160
        %p367 = pneg %p184
        %p368 = pneg %p181
        %p369 = pneg %p210
        %p370 = pneg %p207
        %s371 = sand.u32 %s197, 1
        %s372 = scalar_lea.sflag [#allocation4], %s371
        %s373 = sand.u32 %s197, 1
        %s374 = smul.addr %s373, 128
        %s375 = scalar_lea.vmem [#allocation7], %s374
        %p376 = pneg %p236
        %p377 = pneg %p233
        %s378 = smul.u32 16, %s27
        %p379 = scmp.lt.s32.totalorder %s378, 31
        %s380 = scalar_select %p379, %s378, 31
        %s381 = smul.addr %s380, 8
        %s382 = scalar_lea.vmem %s8, %s381
        %s383 = smul.u32 128, %s27
        %s384 = smul.u32 16, %s27
        %p385 = scmp.lt.s32.totalorder %s384, 31
        %s386 = scalar_select %p385, %s384, 31
        %s387 = smul.addr %s386, 4
        %s388 = scalar_lea.vmem %s1, %s387
        %s389 = smul.u32 16, %s27
        %s390 = smul.u32 16, %s27
        %p391 = scmp.lt.s32.totalorder %s390, 31
        %s392 = scalar_select %p391, %s390, 31
        %s393 = smul.addr %s392, 8
        %s394 = scalar_lea.vmem %s5, %s393
        %s395 = smul.u32 16, %s27
        %s396 = smul.u32 16, %s27
        %s397 = smul.u32 16, %s27
        %p398 = scmp.lt.s32.totalorder %s397, 31
        %s399 = scalar_select %p398, %s397, 31
        %s400 = smul.addr %s399, 8
        %s401 = scalar_lea.vmem %s8, %s400
        %s402 = smul.u32 16, %s27
        %v403 = vld [vmem:[%s329] sm:$0xf]
        %v404 = vld [vmem:[%s329 + $0x4] sm:$0xf]
        %v405 = vld [vmem:[%s329 + $0x8] sm:$0xf]
        %v406 = vld [vmem:[%s329 + $0xc] sm:$0xf]
        %v407 = vld [vmem:[%s329 + $0x10] sm:$0xf]
        %v408 = vld [vmem:[%s329 + $0x14] sm:$0xf]
        %v409 = vld [vmem:[%s329 + $0x18] sm:$0xf]
        %v410 = vld [vmem:[%s329 + $0x1c] sm:$0xf]
        %v411 = vld [vmem:[%s329 + $0x20] sm:$0xf]
        %v412 = vld [vmem:[%s329 + $0x24] sm:$0xf]
        %v413 = vld [vmem:[%s329 + $0x28] sm:$0xf]
        %v414 = vld [vmem:[%s329 + $0x2c] sm:$0xf]
        %v415 = vld [vmem:[%s329 + $0x30] sm:$0xf]
        %v416 = vld [vmem:[%s329 + $0x34] sm:$0xf]
        %v417 = vld [vmem:[%s329 + $0x38] sm:$0xf]
        %v418 = vld [vmem:[%s329 + $0x3c] sm:$0xf]
        %v419 = vld [vmem:[%s329 + $0x40] sm:$0xf]
        %v420 = vld [vmem:[%s329 + $0x44] sm:$0xf]
        %v421 = vld [vmem:[%s329 + $0x48] sm:$0xf]
        %v422 = vld [vmem:[%s329 + $0x4c] sm:$0xf]
        %v423 = vld [vmem:[%s329 + $0x50] sm:$0xf]
        %v424 = vld [vmem:[%s329 + $0x54] sm:$0xf]
        %v425 = vld [vmem:[%s329 + $0x58] sm:$0xf]
        %v426 = vld [vmem:[%s329 + $0x5c] sm:$0xf]
        %v427 = vld [vmem:[%s329 + $0x60] sm:$0xf]
        %v428 = vld [vmem:[%s329 + $0x64] sm:$0xf]
        %v429 = vld [vmem:[%s329 + $0x68] sm:$0xf]
        %v430 = vld [vmem:[%s329 + $0x6c] sm:$0xf]
        %v431 = vld [vmem:[%s329 + $0x70] sm:$0xf]
        %v432 = vld [vmem:[%s329 + $0x74] sm:$0xf]
        %v433 = vld [vmem:[%s329 + $0x78] sm:$0xf]
        %v434 = vld [vmem:[%s329 + $0x7c] sm:$0xf]
        %v435 = vld [vmem:[%s329 + $0x80] sm:$0xf]
        %v436 = vld [vmem:[%s329 + $0x84] sm:$0xf]
        %v437 = vld [vmem:[%s329 + $0x88] sm:$0xf]
        %v438 = vld [vmem:[%s329 + $0x8c] sm:$0xf]
        %v439 = vld [vmem:[%s329 + $0x90] sm:$0xf]
        %v440 = vld [vmem:[%s329 + $0x94] sm:$0xf]
        %v441 = vld [vmem:[%s329 + $0x98] sm:$0xf]
        %v442 = vld [vmem:[%s329 + $0x9c] sm:$0xf]
        %v443 = vld [vmem:[%s329 + $0xa0] sm:$0xf]
        %v444 = vld [vmem:[%s329 + $0xa4] sm:$0xf]
        %v445 = vld [vmem:[%s329 + $0xa8] sm:$0xf]
        %v446 = vld [vmem:[%s329 + $0xac] sm:$0xf]
        %v447 = vld [vmem:[%s329 + $0xb0] sm:$0xf]
        %v448 = vld [vmem:[%s329 + $0xb4] sm:$0xf]
        %v449 = vld [vmem:[%s329 + $0xb8] sm:$0xf]
        %v450 = vld [vmem:[%s329 + $0xbc] sm:$0xf]
        %v451 = vld [vmem:[%s329 + $0xc0] sm:$0xf]
        %v452 = vld [vmem:[%s329 + $0xc4] sm:$0xf]
        %v453 = vld [vmem:[%s329 + $0xc8] sm:$0xf]
        %v454 = vld [vmem:[%s329 + $0xcc] sm:$0xf]
        %v455 = vld [vmem:[%s329 + $0xd0] sm:$0xf]
        %v456 = vld [vmem:[%s329 + $0xd4] sm:$0xf]
        %v457 = vld [vmem:[%s329 + $0xd8] sm:$0xf]
        %v458 = vld [vmem:[%s329 + $0xdc] sm:$0xf]
        %v459 = vld [vmem:[%s329 + $0xe0] sm:$0xf]
        %v460 = vld [vmem:[%s329 + $0xe4] sm:$0xf]
        %v461 = vld [vmem:[%s329 + $0xe8] sm:$0xf]
        %v462 = vld [vmem:[%s329 + $0xec] sm:$0xf]
        %v463 = vld [vmem:[%s329 + $0xf0] sm:$0xf]
        %v464 = vld [vmem:[%s329 + $0xf4] sm:$0xf]
        %v465 = vld [vmem:[%s329 + $0xf8] sm:$0xf]
        %v466 = vld [vmem:[%s329 + $0xfc] sm:$0xf]
        %v467 = vld [vmem:[%s329 + $0x100] sm:$0xf]
        %v468 = vld [vmem:[%s329 + $0x104] sm:$0xf]
        %v469 = vld [vmem:[%s329 + $0x108] sm:$0xf]
        %v470 = vld [vmem:[%s329 + $0x10c] sm:$0xf]
        %v471 = vld [vmem:[%s329 + $0x110] sm:$0xf]
        %v472 = vld [vmem:[%s329 + $0x114] sm:$0xf]
        %v473 = vld [vmem:[%s329 + $0x118] sm:$0xf]
        %v474 = vld [vmem:[%s329 + $0x11c] sm:$0xf]
        %v475 = vld [vmem:[%s329 + $0x120] sm:$0xf]
        %v476 = vld [vmem:[%s329 + $0x124] sm:$0xf]
        %v477 = vld [vmem:[%s329 + $0x128] sm:$0xf]
        %v478 = vld [vmem:[%s329 + $0x12c] sm:$0xf]
        %v479 = vld [vmem:[%s329 + $0x130] sm:$0xf]
        %v480 = vld [vmem:[%s329 + $0x134] sm:$0xf]
        %v481 = vld [vmem:[%s329 + $0x138] sm:$0xf]
        %v482 = vld [vmem:[%s329 + $0x13c] sm:$0xf]
        %v483 = vld [vmem:[%s329 + $0x140] sm:$0xf]
        %v484 = vld [vmem:[%s329 + $0x144] sm:$0xf]
        %v485 = vld [vmem:[%s329 + $0x148] sm:$0xf]
        %v486 = vld [vmem:[%s329 + $0x14c] sm:$0xf]
        %v487 = vld [vmem:[%s329 + $0x150] sm:$0xf]
        %v488 = vld [vmem:[%s329 + $0x154] sm:$0xf]
        %v489 = vld [vmem:[%s329 + $0x158] sm:$0xf]
        %v490 = vld [vmem:[%s329 + $0x15c] sm:$0xf]
        %v491 = vld [vmem:[%s329 + $0x160] sm:$0xf]
        %v492 = vld [vmem:[%s329 + $0x164] sm:$0xf]
        %v493 = vld [vmem:[%s329 + $0x168] sm:$0xf]
        %v494 = vld [vmem:[%s329 + $0x16c] sm:$0xf]
        %v495 = vld [vmem:[%s329 + $0x170] sm:$0xf]
        %v496 = vld [vmem:[%s329 + $0x174] sm:$0xf]
        %v497 = vld [vmem:[%s329 + $0x178] sm:$0xf]
        %v498 = vld [vmem:[%s329 + $0x17c] sm:$0xf]
        %v499 = vld [vmem:[%s329 + $0x180] sm:$0xf]
        %v500 = vld [vmem:[%s329 + $0x184] sm:$0xf]
        %v501 = vld [vmem:[%s329 + $0x188] sm:$0xf]
        %v502 = vld [vmem:[%s329 + $0x18c] sm:$0xf]
        %v503 = vld [vmem:[%s329 + $0x190] sm:$0xf]
        %v504 = vld [vmem:[%s329 + $0x194] sm:$0xf]
        %v505 = vld [vmem:[%s329 + $0x198] sm:$0xf]
        %v506 = vld [vmem:[%s329 + $0x19c] sm:$0xf]
        %v507 = vld [vmem:[%s329 + $0x1a0] sm:$0xf]
        %v508 = vld [vmem:[%s329 + $0x1a4] sm:$0xf]
        %v509 = vld [vmem:[%s329 + $0x1a8] sm:$0xf]
        %v510 = vld [vmem:[%s329 + $0x1ac] sm:$0xf]
        %v511 = vld [vmem:[%s329 + $0x1b0] sm:$0xf]
        %v512 = vld [vmem:[%s329 + $0x1b4] sm:$0xf]
        %v513 = vld [vmem:[%s329 + $0x1b8] sm:$0xf]
        %v514 = vld [vmem:[%s329 + $0x1bc] sm:$0xf]
        %v515 = vld [vmem:[%s329 + $0x1c0] sm:$0xf]
        %v516 = vld [vmem:[%s329 + $0x1c4] sm:$0xf]
        %v517 = vld [vmem:[%s329 + $0x1c8] sm:$0xf]
        %v518 = vld [vmem:[%s329 + $0x1cc] sm:$0xf]
        %v519 = vld [vmem:[%s329 + $0x1d0] sm:$0xf]
        %v520 = vld [vmem:[%s329 + $0x1d4] sm:$0xf]
        %v521 = vld [vmem:[%s329 + $0x1d8] sm:$0xf]
        %v522 = vld [vmem:[%s329 + $0x1dc] sm:$0xf]
        %v523 = vld [vmem:[%s329 + $0x1e0] sm:$0xf]
        %v524 = vld [vmem:[%s329 + $0x1e4] sm:$0xf]
        %v525 = vld [vmem:[%s329 + $0x1e8] sm:$0xf]
        %v526 = vld [vmem:[%s329 + $0x1ec] sm:$0xf]
        %v527 = vld [vmem:[%s329 + $0x1f0] sm:$0xf]
        %v528 = vld [vmem:[%s329 + $0x1f4] sm:$0xf]
        %v529 = vld [vmem:[%s329 + $0x1f8] sm:$0xf]
        %v530 = vld [vmem:[%s329 + $0x1fc] sm:$0xf]
        %v531 = vld [vmem:[%s2] sm:$0xf]
        %v532 = vld [vmem:[%s2 + $0x4] sm:$0xf]
        %v533 = vld [vmem:[%s2 + $0x8] sm:$0xf]
        %v534 = vld [vmem:[%s2 + $0xc] sm:$0xf]
        %v535 = vld [vmem:[%s2 + $0x10] sm:$0xf]
        %v536 = vld [vmem:[%s2 + $0x14] sm:$0xf]
        %v537 = vld [vmem:[%s2 + $0x18] sm:$0xf]
        %v538 = vld [vmem:[%s2 + $0x1c] sm:$0xf]
        %v539 = vld [vmem:[%s2 + $0x20] sm:$0xf]
        %v540 = vld [vmem:[%s2 + $0x24] sm:$0xf]
        %v541 = vld [vmem:[%s2 + $0x28] sm:$0xf]
        %v542 = vld [vmem:[%s2 + $0x2c] sm:$0xf]
        %v543 = vld [vmem:[%s2 + $0x30] sm:$0xf]
        %v544 = vld [vmem:[%s2 + $0x34] sm:$0xf]
        %v545 = vld [vmem:[%s2 + $0x38] sm:$0xf]
        %v546 = vld [vmem:[%s2 + $0x3c] sm:$0xf]
        %v675 = vunpack.c.l.b16 %v403
        %v676 = vunpack.c.l.b16 %v404
        %v677 = vunpack.c.l.b16 %v405
        %v678 = vunpack.c.l.b16 %v406
        %v679 = vunpack.c.l.b16 %v407
        %v680 = vunpack.c.l.b16 %v408
        %v681 = vunpack.c.l.b16 %v409
        %v682 = vunpack.c.l.b16 %v410
        %v683 = vunpack.c.l.b16 %v411
        %v684 = vunpack.c.l.b16 %v412
        %v685 = vunpack.c.l.b16 %v413
        %v686 = vunpack.c.l.b16 %v414
        %v687 = vunpack.c.l.b16 %v415
        %v688 = vunpack.c.l.b16 %v416
        %v689 = vunpack.c.l.b16 %v417
        %v690 = vunpack.c.l.b16 %v418
        %v691 = vunpack.c.l.b16 %v419
        %v692 = vunpack.c.l.b16 %v420
        %v693 = vunpack.c.l.b16 %v421
        %v694 = vunpack.c.l.b16 %v422
        %v695 = vunpack.c.l.b16 %v423
        %v696 = vunpack.c.l.b16 %v424
        %v697 = vunpack.c.l.b16 %v425
        %v698 = vunpack.c.l.b16 %v426
        %v699 = vunpack.c.l.b16 %v427
        %v700 = vunpack.c.l.b16 %v428
        %v701 = vunpack.c.l.b16 %v429
        %v702 = vunpack.c.l.b16 %v430
        %v703 = vunpack.c.l.b16 %v431
        %v704 = vunpack.c.l.b16 %v432
        %v705 = vunpack.c.l.b16 %v433
        %v706 = vunpack.c.l.b16 %v434
        %v707 = vunpack.c.l.b16 %v435
        %v708 = vunpack.c.l.b16 %v436
        %v709 = vunpack.c.l.b16 %v437
        %v710 = vunpack.c.l.b16 %v438
        %v711 = vunpack.c.l.b16 %v439
        %v712 = vunpack.c.l.b16 %v440
        %v713 = vunpack.c.l.b16 %v441
        %v714 = vunpack.c.l.b16 %v442
        %v715 = vunpack.c.l.b16 %v443
        %v716 = vunpack.c.l.b16 %v444
        %v717 = vunpack.c.l.b16 %v445
        %v718 = vunpack.c.l.b16 %v446
        %v719 = vunpack.c.l.b16 %v447
        %v720 = vunpack.c.l.b16 %v448
        %v721 = vunpack.c.l.b16 %v449
        %v722 = vunpack.c.l.b16 %v450
        %v723 = vunpack.c.l.b16 %v451
        %v724 = vunpack.c.l.b16 %v452
        %v725 = vunpack.c.l.b16 %v453
        %v726 = vunpack.c.l.b16 %v454
        %v727 = vunpack.c.l.b16 %v455
        %v728 = vunpack.c.l.b16 %v456
        %v729 = vunpack.c.l.b16 %v457
        %v730 = vunpack.c.l.b16 %v458
        %v731 = vunpack.c.l.b16 %v459
        %v732 = vunpack.c.l.b16 %v460
        %v733 = vunpack.c.l.b16 %v461
        %v734 = vunpack.c.l.b16 %v462
        %v735 = vunpack.c.l.b16 %v463
        %v736 = vunpack.c.l.b16 %v464
        %v737 = vunpack.c.l.b16 %v465
        %v738 = vunpack.c.l.b16 %v466
        %v739 = vunpack.c.l.b16 %v467
        %v740 = vunpack.c.l.b16 %v468
        %v741 = vunpack.c.l.b16 %v469
        %v742 = vunpack.c.l.b16 %v470
        %v743 = vunpack.c.l.b16 %v471
        %v744 = vunpack.c.l.b16 %v472
        %v745 = vunpack.c.l.b16 %v473
        %v746 = vunpack.c.l.b16 %v474
        %v747 = vunpack.c.l.b16 %v475
        %v748 = vunpack.c.l.b16 %v476
        %v749 = vunpack.c.l.b16 %v477
        %v750 = vunpack.c.l.b16 %v478
        %v751 = vunpack.c.l.b16 %v479
        %v752 = vunpack.c.l.b16 %v480
        %v753 = vunpack.c.l.b16 %v481
        %v754 = vunpack.c.l.b16 %v482
        %v755 = vunpack.c.l.b16 %v483
        %v756 = vunpack.c.l.b16 %v484
        %v757 = vunpack.c.l.b16 %v485
        %v758 = vunpack.c.l.b16 %v486
        %v759 = vunpack.c.l.b16 %v487
        %v760 = vunpack.c.l.b16 %v488
        %v761 = vunpack.c.l.b16 %v489
        %v762 = vunpack.c.l.b16 %v490
        %v763 = vunpack.c.l.b16 %v491
        %v764 = vunpack.c.l.b16 %v492
        %v765 = vunpack.c.l.b16 %v493
        %v766 = vunpack.c.l.b16 %v494
        %v767 = vunpack.c.l.b16 %v495
        %v768 = vunpack.c.l.b16 %v496
        %v769 = vunpack.c.l.b16 %v497
        %v770 = vunpack.c.l.b16 %v498
        %v771 = vunpack.c.l.b16 %v499
        %v772 = vunpack.c.l.b16 %v500
        %v773 = vunpack.c.l.b16 %v501
        %v774 = vunpack.c.l.b16 %v502
        %v775 = vunpack.c.l.b16 %v503
        %v776 = vunpack.c.l.b16 %v504
        %v777 = vunpack.c.l.b16 %v505
        %v778 = vunpack.c.l.b16 %v506
        %v779 = vunpack.c.l.b16 %v507
        %v780 = vunpack.c.l.b16 %v508
        %v781 = vunpack.c.l.b16 %v509
        %v782 = vunpack.c.l.b16 %v510
        %v783 = vunpack.c.l.b16 %v511
        %v784 = vunpack.c.l.b16 %v512
        %v785 = vunpack.c.l.b16 %v513
        %v786 = vunpack.c.l.b16 %v514
        %v787 = vunpack.c.l.b16 %v515
        %v788 = vunpack.c.l.b16 %v516
        %v789 = vunpack.c.l.b16 %v517
        %v790 = vunpack.c.l.b16 %v518
        %v791 = vunpack.c.l.b16 %v519
        %v792 = vunpack.c.l.b16 %v520
        %v793 = vunpack.c.l.b16 %v521
        %v794 = vunpack.c.l.b16 %v522
        %v795 = vunpack.c.l.b16 %v523
        %v796 = vunpack.c.l.b16 %v524
        %v797 = vunpack.c.l.b16 %v525
        %v798 = vunpack.c.l.b16 %v526
        %v799 = vunpack.c.l.b16 %v527
        %v800 = vunpack.c.l.b16 %v528
        %v801 = vunpack.c.l.b16 %v529
        %v802 = vunpack.c.l.b16 %v530
        %v803 = vpack.c.b16 %v676, %v675
        %v804 = vpack.c.b16 %v678, %v677
        %v805 = vpack.c.b16 %v680, %v679
        %v806 = vpack.c.b16 %v682, %v681
        %v807 = vpack.c.b16 %v684, %v683
        %v808 = vpack.c.b16 %v686, %v685
        %v809 = vpack.c.b16 %v688, %v687
        %v810 = vpack.c.b16 %v690, %v689
        %v811 = vpack.c.b16 %v692, %v691
        %v812 = vpack.c.b16 %v694, %v693
        %v813 = vpack.c.b16 %v696, %v695
        %v814 = vpack.c.b16 %v698, %v697
        %v815 = vpack.c.b16 %v700, %v699
        %v816 = vpack.c.b16 %v702, %v701
        %v817 = vpack.c.b16 %v704, %v703
        %v818 = vpack.c.b16 %v706, %v705
        %v819 = vpack.c.b16 %v708, %v707
        %v820 = vpack.c.b16 %v710, %v709
        %v821 = vpack.c.b16 %v712, %v711
        %v822 = vpack.c.b16 %v714, %v713
        %v823 = vpack.c.b16 %v716, %v715
        %v824 = vpack.c.b16 %v718, %v717
        %v825 = vpack.c.b16 %v720, %v719
        %v826 = vpack.c.b16 %v722, %v721
        %v827 = vpack.c.b16 %v724, %v723
        %v828 = vpack.c.b16 %v726, %v725
        %v829 = vpack.c.b16 %v728, %v727
        %v830 = vpack.c.b16 %v730, %v729
        %v831 = vpack.c.b16 %v732, %v731
        %v832 = vpack.c.b16 %v734, %v733
        %v833 = vpack.c.b16 %v736, %v735
        %v834 = vpack.c.b16 %v738, %v737
        %v835 = vpack.c.b16 %v740, %v739
        %v836 = vpack.c.b16 %v742, %v741
        %v837 = vpack.c.b16 %v744, %v743
        %v838 = vpack.c.b16 %v746, %v745
        %v839 = vpack.c.b16 %v748, %v747
        %v840 = vpack.c.b16 %v750, %v749
        %v841 = vpack.c.b16 %v752, %v751
        %v842 = vpack.c.b16 %v754, %v753
        %v843 = vpack.c.b16 %v756, %v755
        %v844 = vpack.c.b16 %v758, %v757
        %v845 = vpack.c.b16 %v760, %v759
        %v846 = vpack.c.b16 %v762, %v761
        %v847 = vpack.c.b16 %v764, %v763
        %v848 = vpack.c.b16 %v766, %v765
        %v849 = vpack.c.b16 %v768, %v767
        %v850 = vpack.c.b16 %v770, %v769
        %v851 = vpack.c.b16 %v772, %v771
        %v852 = vpack.c.b16 %v774, %v773
        %v853 = vpack.c.b16 %v776, %v775
        %v854 = vpack.c.b16 %v778, %v777
        %v855 = vpack.c.b16 %v780, %v779
        %v856 = vpack.c.b16 %v782, %v781
        %v857 = vpack.c.b16 %v784, %v783
        %v858 = vpack.c.b16 %v786, %v785
        %v859 = vpack.c.b16 %v788, %v787
        %v860 = vpack.c.b16 %v790, %v789
        %v861 = vpack.c.b16 %v792, %v791
        %v862 = vpack.c.b16 %v794, %v793
        %v863 = vpack.c.b16 %v796, %v795
        %v864 = vpack.c.b16 %v798, %v797
        %v865 = vpack.c.b16 %v800, %v799
        %v866 = vpack.c.b16 %v802, %v801
        %v947 = vunpack.c.l.b16 %v531
        %v948 = vunpack.c.l.b16 %v532
        %v949 = vunpack.c.l.b16 %v533
        %v950 = vunpack.c.l.b16 %v534
        %v951 = vunpack.c.l.b16 %v535
        %v952 = vunpack.c.l.b16 %v536
        %v953 = vunpack.c.l.b16 %v537
        %v954 = vunpack.c.l.b16 %v538
        %v955 = vunpack.c.l.b16 %v539
        %v956 = vunpack.c.l.b16 %v540
        %v957 = vunpack.c.l.b16 %v541
        %v958 = vunpack.c.l.b16 %v542
        %v959 = vunpack.c.l.b16 %v543
        %v960 = vunpack.c.l.b16 %v544
        %v961 = vunpack.c.l.b16 %v545
        %v962 = vunpack.c.l.b16 %v546
        %v963 = vpack.c.b16 %v948, %v947
        %v964 = vpack.c.b16 %v950, %v949
        %v965 = vpack.c.b16 %v952, %v951
        %v966 = vpack.c.b16 %v954, %v953
        %v967 = vpack.c.b16 %v956, %v955
        %v968 = vpack.c.b16 %v958, %v957
        %v969 = vpack.c.b16 %v960, %v959
        %v970 = vpack.c.b16 %v962, %v961
        %979 = vmatpush.bf16.msra.mxu0 %v970
        %980 = vmatpush.bf16.msra.mxu0 %v969
        %981 = vmatpush.bf16.msra.mxu0 %v968
        %982 = vmatpush.bf16.msra.mxu0 %v967
        %983 = vmatpush.bf16.msra.mxu0 %v966
        %984 = vmatpush.bf16.msra.mxu0 %v965
        %985 = vmatpush.bf16.msra.mxu0 %v964
        %986 = vmatpush.bf16.msra.mxu0 %v963
        %987 = vmatmul.bf16.gmra.mxu0 %v803
        %v988 = vpop.f32.mrf.mxu0
        %v989 = vadd.f32 0.0, %v988
        %v990 = vpop.f32.mrf.mxu0
        %v991 = vadd.f32 0.0, %v990
        %992 = vmatmul.bf16.gmra.mxu0 %v804
        %v993 = vpop.f32.mrf.mxu0
        %v994 = vadd.f32 0.0, %v993
        %v995 = vpop.f32.mrf.mxu0
        %v996 = vadd.f32 0.0, %v995
        %997 = vmatmul.bf16.gmra.mxu0 %v805
        %v998 = vpop.f32.mrf.mxu0
        %v999 = vadd.f32 0.0, %v998
        %v1000 = vpop.f32.mrf.mxu0
        %v1001 = vadd.f32 0.0, %v1000
        %1002 = vmatmul.bf16.gmra.mxu0 %v806
        %v1003 = vpop.f32.mrf.mxu0
        %v1004 = vadd.f32 0.0, %v1003
        %v1005 = vpop.f32.mrf.mxu0
        %v1006 = vadd.f32 0.0, %v1005
        %1007 = vmatmul.bf16.gmra.mxu0 %v807
        %v1008 = vpop.f32.mrf.mxu0
        %v1009 = vadd.f32 0.0, %v1008
        %v1010 = vpop.f32.mrf.mxu0
        %v1011 = vadd.f32 0.0, %v1010
        %1012 = vmatmul.bf16.gmra.mxu0 %v808
        %v1013 = vpop.f32.mrf.mxu0
        %v1014 = vadd.f32 0.0, %v1013
        %v1015 = vpop.f32.mrf.mxu0
        %v1016 = vadd.f32 0.0, %v1015
        %1017 = vmatmul.bf16.gmra.mxu0 %v809
        %v1018 = vpop.f32.mrf.mxu0
        %v1019 = vadd.f32 0.0, %v1018
        %v1020 = vpop.f32.mrf.mxu0
        %v1021 = vadd.f32 0.0, %v1020
        %1022 = vmatmul.bf16.gmra.mxu0 %v810
        %v1023 = vpop.f32.mrf.mxu0
        %v1024 = vadd.f32 0.0, %v1023
        %v1025 = vpop.f32.mrf.mxu0
        %v1026 = vadd.f32 0.0, %v1025
        %1027 = vmatmul.bf16.gmra.mxu0 %v811
        %v1028 = vpop.f32.mrf.mxu0
        %v1029 = vadd.f32 0.0, %v1028
        %v1030 = vpop.f32.mrf.mxu0
        %v1031 = vadd.f32 0.0, %v1030
        %1032 = vmatmul.bf16.gmra.mxu0 %v812
        %v1033 = vpop.f32.mrf.mxu0
        %v1034 = vadd.f32 0.0, %v1033
        %v1035 = vpop.f32.mrf.mxu0
        %v1036 = vadd.f32 0.0, %v1035
        %1037 = vmatmul.bf16.gmra.mxu0 %v813
        %v1038 = vpop.f32.mrf.mxu0
        %v1039 = vadd.f32 0.0, %v1038
        %v1040 = vpop.f32.mrf.mxu0
        %v1041 = vadd.f32 0.0, %v1040
        %1042 = vmatmul.bf16.gmra.mxu0 %v814
        %v1043 = vpop.f32.mrf.mxu0
        %v1044 = vadd.f32 0.0, %v1043
        %v1045 = vpop.f32.mrf.mxu0
        %v1046 = vadd.f32 0.0, %v1045
        %1047 = vmatmul.bf16.gmra.mxu0 %v815
        %v1048 = vpop.f32.mrf.mxu0
        %v1049 = vadd.f32 0.0, %v1048
        %v1050 = vpop.f32.mrf.mxu0
        %v1051 = vadd.f32 0.0, %v1050
        %1052 = vmatmul.bf16.gmra.mxu0 %v816
        %v1053 = vpop.f32.mrf.mxu0
        %v1054 = vadd.f32 0.0, %v1053
        %v1055 = vpop.f32.mrf.mxu0
        %v1056 = vadd.f32 0.0, %v1055
        %1057 = vmatmul.bf16.gmra.mxu0 %v817
        %v1058 = vpop.f32.mrf.mxu0
        %v1059 = vadd.f32 0.0, %v1058
        %v1060 = vpop.f32.mrf.mxu0
        %v1061 = vadd.f32 0.0, %v1060
        %1062 = vmatmul.bf16.gmra.mxu0 %v818
        %v1063 = vpop.f32.mrf.mxu0
        %v1064 = vadd.f32 0.0, %v1063
        %v1065 = vpop.f32.mrf.mxu0
        %v1066 = vadd.f32 0.0, %v1065
        %1067 = vmatmul.bf16.gmra.mxu0 %v819
        %v1068 = vpop.f32.mrf.mxu0
        %v1069 = vadd.f32 0.0, %v1068
        %v1070 = vpop.f32.mrf.mxu0
        %v1071 = vadd.f32 0.0, %v1070
        %1072 = vmatmul.bf16.gmra.mxu0 %v820
        %v1073 = vpop.f32.mrf.mxu0
        %v1074 = vadd.f32 0.0, %v1073
        %v1075 = vpop.f32.mrf.mxu0
        %v1076 = vadd.f32 0.0, %v1075
        %1077 = vmatmul.bf16.gmra.mxu0 %v821
        %v1078 = vpop.f32.mrf.mxu0
        %v1079 = vadd.f32 0.0, %v1078
        %v1080 = vpop.f32.mrf.mxu0
        %v1081 = vadd.f32 0.0, %v1080
        %1082 = vmatmul.bf16.gmra.mxu0 %v822
        %v1083 = vpop.f32.mrf.mxu0
        %v1084 = vadd.f32 0.0, %v1083
        %v1085 = vpop.f32.mrf.mxu0
        %v1086 = vadd.f32 0.0, %v1085
        %1087 = vmatmul.bf16.gmra.mxu0 %v823
        %v1088 = vpop.f32.mrf.mxu0
        %v1089 = vadd.f32 0.0, %v1088
        %v1090 = vpop.f32.mrf.mxu0
        %v1091 = vadd.f32 0.0, %v1090
        %1092 = vmatmul.bf16.gmra.mxu0 %v824
        %v1093 = vpop.f32.mrf.mxu0
        %v1094 = vadd.f32 0.0, %v1093
        %v1095 = vpop.f32.mrf.mxu0
        %v1096 = vadd.f32 0.0, %v1095
        %1097 = vmatmul.bf16.gmra.mxu0 %v825
        %v1098 = vpop.f32.mrf.mxu0
        %v1099 = vadd.f32 0.0, %v1098
        %v1100 = vpop.f32.mrf.mxu0
        %v1101 = vadd.f32 0.0, %v1100
        %1102 = vmatmul.bf16.gmra.mxu0 %v826
        %v1103 = vpop.f32.mrf.mxu0
        %v1104 = vadd.f32 0.0, %v1103
        %v1105 = vpop.f32.mrf.mxu0
        %v1106 = vadd.f32 0.0, %v1105
        %1107 = vmatmul.bf16.gmra.mxu0 %v827
        %v1108 = vpop.f32.mrf.mxu0
        %v1109 = vadd.f32 0.0, %v1108
        %v1110 = vpop.f32.mrf.mxu0
        %v1111 = vadd.f32 0.0, %v1110
        %1112 = vmatmul.bf16.gmra.mxu0 %v828
        %v1113 = vpop.f32.mrf.mxu0
        %v1114 = vadd.f32 0.0, %v1113
        %v1115 = vpop.f32.mrf.mxu0
        %v1116 = vadd.f32 0.0, %v1115
        %1117 = vmatmul.bf16.gmra.mxu0 %v829
        %v1118 = vpop.f32.mrf.mxu0
        %v1119 = vadd.f32 0.0, %v1118
        %v1120 = vpop.f32.mrf.mxu0
        %v1121 = vadd.f32 0.0, %v1120
        %1122 = vmatmul.bf16.gmra.mxu0 %v830
        %v1123 = vpop.f32.mrf.mxu0
        %v1124 = vadd.f32 0.0, %v1123
        %v1125 = vpop.f32.mrf.mxu0
        %v1126 = vadd.f32 0.0, %v1125
        %1127 = vmatmul.bf16.gmra.mxu0 %v831
        %v1128 = vpop.f32.mrf.mxu0
        %v1129 = vadd.f32 0.0, %v1128
        %v1130 = vpop.f32.mrf.mxu0
        %v1131 = vadd.f32 0.0, %v1130
        %1132 = vmatmul.bf16.gmra.mxu0 %v832
        %v1133 = vpop.f32.mrf.mxu0
        %v1134 = vadd.f32 0.0, %v1133
        %v1135 = vpop.f32.mrf.mxu0
        %v1136 = vadd.f32 0.0, %v1135
        %1137 = vmatmul.bf16.gmra.mxu0 %v833
        %v1138 = vpop.f32.mrf.mxu0
        %v1139 = vadd.f32 0.0, %v1138
        %v1140 = vpop.f32.mrf.mxu0
        %v1141 = vadd.f32 0.0, %v1140
        %1142 = vmatmul.bf16.gmra.mxu0 %v834
        %v1143 = vpop.f32.mrf.mxu0
        %v1144 = vadd.f32 0.0, %v1143
        %v1145 = vpop.f32.mrf.mxu0
        %v1146 = vadd.f32 0.0, %v1145
        %1147 = vmatmul.bf16.gmra.mxu0 %v835
        %v1148 = vpop.f32.mrf.mxu0
        %v1149 = vadd.f32 0.0, %v1148
        %v1150 = vpop.f32.mrf.mxu0
        %v1151 = vadd.f32 0.0, %v1150
        %1152 = vmatmul.bf16.gmra.mxu0 %v836
        %v1153 = vpop.f32.mrf.mxu0
        %v1154 = vadd.f32 0.0, %v1153
        %v1155 = vpop.f32.mrf.mxu0
        %v1156 = vadd.f32 0.0, %v1155
        %1157 = vmatmul.bf16.gmra.mxu0 %v837
        %v1158 = vpop.f32.mrf.mxu0
        %v1159 = vadd.f32 0.0, %v1158
        %v1160 = vpop.f32.mrf.mxu0
        %v1161 = vadd.f32 0.0, %v1160
        %1162 = vmatmul.bf16.gmra.mxu0 %v838
        %v1163 = vpop.f32.mrf.mxu0
        %v1164 = vadd.f32 0.0, %v1163
        %v1165 = vpop.f32.mrf.mxu0
        %v1166 = vadd.f32 0.0, %v1165
        %1167 = vmatmul.bf16.gmra.mxu0 %v839
        %v1168 = vpop.f32.mrf.mxu0
        %v1169 = vadd.f32 0.0, %v1168
        %v1170 = vpop.f32.mrf.mxu0
        %v1171 = vadd.f32 0.0, %v1170
        %1172 = vmatmul.bf16.gmra.mxu0 %v840
        %v1173 = vpop.f32.mrf.mxu0
        %v1174 = vadd.f32 0.0, %v1173
        %v1175 = vpop.f32.mrf.mxu0
        %v1176 = vadd.f32 0.0, %v1175
        %1177 = vmatmul.bf16.gmra.mxu0 %v841
        %v1178 = vpop.f32.mrf.mxu0
        %v1179 = vadd.f32 0.0, %v1178
        %v1180 = vpop.f32.mrf.mxu0
        %v1181 = vadd.f32 0.0, %v1180
        %1182 = vmatmul.bf16.gmra.mxu0 %v842
        %v1183 = vpop.f32.mrf.mxu0
        %v1184 = vadd.f32 0.0, %v1183
        %v1185 = vpop.f32.mrf.mxu0
        %v1186 = vadd.f32 0.0, %v1185
        %1187 = vmatmul.bf16.gmra.mxu0 %v843
        %v1188 = vpop.f32.mrf.mxu0
        %v1189 = vadd.f32 0.0, %v1188
        %v1190 = vpop.f32.mrf.mxu0
        %v1191 = vadd.f32 0.0, %v1190
        %1192 = vmatmul.bf16.gmra.mxu0 %v844
        %v1193 = vpop.f32.mrf.mxu0
        %v1194 = vadd.f32 0.0, %v1193
        %v1195 = vpop.f32.mrf.mxu0
        %v1196 = vadd.f32 0.0, %v1195
        %1197 = vmatmul.bf16.gmra.mxu0 %v845
        %v1198 = vpop.f32.mrf.mxu0
        %v1199 = vadd.f32 0.0, %v1198
        %v1200 = vpop.f32.mrf.mxu0
        %v1201 = vadd.f32 0.0, %v1200
        %1202 = vmatmul.bf16.gmra.mxu0 %v846
        %v1203 = vpop.f32.mrf.mxu0
        %v1204 = vadd.f32 0.0, %v1203
        %v1205 = vpop.f32.mrf.mxu0
        %v1206 = vadd.f32 0.0, %v1205
        %1207 = vmatmul.bf16.gmra.mxu0 %v847
        %v1208 = vpop.f32.mrf.mxu0
        %v1209 = vadd.f32 0.0, %v1208
        %v1210 = vpop.f32.mrf.mxu0
        %v1211 = vadd.f32 0.0, %v1210
        %1212 = vmatmul.bf16.gmra.mxu0 %v848
        %v1213 = vpop.f32.mrf.mxu0
        %v1214 = vadd.f32 0.0, %v1213
        %v1215 = vpop.f32.mrf.mxu0
        %v1216 = vadd.f32 0.0, %v1215
        %1217 = vmatmul.bf16.gmra.mxu0 %v849
        %v1218 = vpop.f32.mrf.mxu0
        %v1219 = vadd.f32 0.0, %v1218
        %v1220 = vpop.f32.mrf.mxu0
        %v1221 = vadd.f32 0.0, %v1220
        %1222 = vmatmul.bf16.gmra.mxu0 %v850
        %v1223 = vpop.f32.mrf.mxu0
        %v1224 = vadd.f32 0.0, %v1223
        %v1225 = vpop.f32.mrf.mxu0
        %v1226 = vadd.f32 0.0, %v1225
        %1227 = vmatmul.bf16.gmra.mxu0 %v851
        %v1228 = vpop.f32.mrf.mxu0
        %v1229 = vadd.f32 0.0, %v1228
        %v1230 = vpop.f32.mrf.mxu0
        %v1231 = vadd.f32 0.0, %v1230
        %1232 = vmatmul.bf16.gmra.mxu0 %v852
        %v1233 = vpop.f32.mrf.mxu0
        %v1234 = vadd.f32 0.0, %v1233
        %v1235 = vpop.f32.mrf.mxu0
        %v1236 = vadd.f32 0.0, %v1235
        %1237 = vmatmul.bf16.gmra.mxu0 %v853
        %v1238 = vpop.f32.mrf.mxu0
        %v1239 = vadd.f32 0.0, %v1238
        %v1240 = vpop.f32.mrf.mxu0
        %v1241 = vadd.f32 0.0, %v1240
        %1242 = vmatmul.bf16.gmra.mxu0 %v854
        %v1243 = vpop.f32.mrf.mxu0
        %v1244 = vadd.f32 0.0, %v1243
        %v1245 = vpop.f32.mrf.mxu0
        %v1246 = vadd.f32 0.0, %v1245
        %1247 = vmatmul.bf16.gmra.mxu0 %v855
        %v1248 = vpop.f32.mrf.mxu0
        %v1249 = vadd.f32 0.0, %v1248
        %v1250 = vpop.f32.mrf.mxu0
        %v1251 = vadd.f32 0.0, %v1250
        %1252 = vmatmul.bf16.gmra.mxu0 %v856
        %v1253 = vpop.f32.mrf.mxu0
        %v1254 = vadd.f32 0.0, %v1253
        %v1255 = vpop.f32.mrf.mxu0
        %v1256 = vadd.f32 0.0, %v1255
        %1257 = vmatmul.bf16.gmra.mxu0 %v857
        %v1258 = vpop.f32.mrf.mxu0
        %v1259 = vadd.f32 0.0, %v1258
        %v1260 = vpop.f32.mrf.mxu0
        %v1261 = vadd.f32 0.0, %v1260
        %1262 = vmatmul.bf16.gmra.mxu0 %v858
        %v1263 = vpop.f32.mrf.mxu0
        %v1264 = vadd.f32 0.0, %v1263
        %v1265 = vpop.f32.mrf.mxu0
        %v1266 = vadd.f32 0.0, %v1265
        %1267 = vmatmul.bf16.gmra.mxu0 %v859
        %v1268 = vpop.f32.mrf.mxu0
        %v1269 = vadd.f32 0.0, %v1268
        %v1270 = vpop.f32.mrf.mxu0
        %v1271 = vadd.f32 0.0, %v1270
        %1272 = vmatmul.bf16.gmra.mxu0 %v860
        %v1273 = vpop.f32.mrf.mxu0
        %v1274 = vadd.f32 0.0, %v1273
        %v1275 = vpop.f32.mrf.mxu0
        %v1276 = vadd.f32 0.0, %v1275
        %1277 = vmatmul.bf16.gmra.mxu0 %v861
        %v1278 = vpop.f32.mrf.mxu0
        %v1279 = vadd.f32 0.0, %v1278
        %v1280 = vpop.f32.mrf.mxu0
        %v1281 = vadd.f32 0.0, %v1280
        %1282 = vmatmul.bf16.gmra.mxu0 %v862
        %v1283 = vpop.f32.mrf.mxu0
        %v1284 = vadd.f32 0.0, %v1283
        %v1285 = vpop.f32.mrf.mxu0
        %v1286 = vadd.f32 0.0, %v1285
        %1287 = vmatmul.bf16.gmra.mxu0 %v863
        %v1288 = vpop.f32.mrf.mxu0
        %v1289 = vadd.f32 0.0, %v1288
        %v1290 = vpop.f32.mrf.mxu0
        %v1291 = vadd.f32 0.0, %v1290
        %1292 = vmatmul.bf16.gmra.mxu0 %v864
        %v1293 = vpop.f32.mrf.mxu0
        %v1294 = vadd.f32 0.0, %v1293
        %v1295 = vpop.f32.mrf.mxu0
        %v1296 = vadd.f32 0.0, %v1295
        %1297 = vmatmul.bf16.gmra.mxu0 %v865
        %v1298 = vpop.f32.mrf.mxu0
        %v1299 = vadd.f32 0.0, %v1298
        %v1300 = vpop.f32.mrf.mxu0
        %v1301 = vadd.f32 0.0, %v1300
        %1302 = vmatmul.bf16.gmra.mxu0 %v866
        %v1303 = vpop.f32.mrf.mxu0
        %v1304 = vadd.f32 0.0, %v1303
        %v1305 = vpop.f32.mrf.mxu0
        %v1306 = vadd.f32 0.0, %v1305
        %1307 = vdwg.mxu0
        %v1308 = vld [vmem:[%s388] sm:$0xf]
        %v1309 = vld [vmem:[%s388 + $0x4] sm:$0xf]
        %v1310 = vld [vmem:[%s388 + $0x8] sm:$0xf]
        %v1311 = vld [vmem:[%s388 + $0xc] sm:$0xf]
        %v1312 = vld [vmem:[%s388 + $0x10] sm:$0xf]
        %v1313 = vld [vmem:[%s388 + $0x14] sm:$0xf]
        %v1314 = vld [vmem:[%s388 + $0x18] sm:$0xf]
        %v1315 = vld [vmem:[%s388 + $0x1c] sm:$0xf]
        %v1316 = vld [vmem:[%s388 + $0x20] sm:$0xf]
        %v1317 = vld [vmem:[%s388 + $0x24] sm:$0xf]
        %v1318 = vld [vmem:[%s388 + $0x28] sm:$0xf]
        %v1319 = vld [vmem:[%s388 + $0x2c] sm:$0xf]
        %v1320 = vld [vmem:[%s388 + $0x30] sm:$0xf]
        %v1321 = vld [vmem:[%s388 + $0x34] sm:$0xf]
        %v1322 = vld [vmem:[%s388 + $0x38] sm:$0xf]
        %v1323 = vld [vmem:[%s388 + $0x3c] sm:$0xf]
        %v1324 = vld [vmem:[%s3] sm:$0xf]
        %v1325 = vld [vmem:[%s3 + $0x4] sm:$0xf]
        %v1326 = vld [vmem:[%s3 + $0x8] sm:$0xf]
        %v1327 = vld [vmem:[%s3 + $0xc] sm:$0xf]
        %v1328 = vld [vmem:[%s3 + $0x10] sm:$0xf]
        %v1329 = vld [vmem:[%s3 + $0x14] sm:$0xf]
        %v1330 = vld [vmem:[%s3 + $0x18] sm:$0xf]
        %v1331 = vld [vmem:[%s3 + $0x1c] sm:$0xf]
        %v1332 = vld [vmem:[%s3 + $0x20] sm:$0xf]
        %v1333 = vld [vmem:[%s3 + $0x24] sm:$0xf]
        %v1334 = vld [vmem:[%s3 + $0x28] sm:$0xf]
        %v1335 = vld [vmem:[%s3 + $0x2c] sm:$0xf]
        %v1336 = vld [vmem:[%s3 + $0x30] sm:$0xf]
        %v1337 = vld [vmem:[%s3 + $0x34] sm:$0xf]
        %v1338 = vld [vmem:[%s3 + $0x38] sm:$0xf]
        %v1339 = vld [vmem:[%s3 + $0x3c] sm:$0xf]
        %v1356 = vunpack.c.l.b16 %v1308
        %v1357 = vunpack.c.l.b16 %v1309
        %v1358 = vunpack.c.l.b16 %v1310
        %v1359 = vunpack.c.l.b16 %v1311
        %v1360 = vunpack.c.l.b16 %v1312
        %v1361 = vunpack.c.l.b16 %v1313
        %v1362 = vunpack.c.l.b16 %v1314
        %v1363 = vunpack.c.l.b16 %v1315
        %v1364 = vunpack.c.l.b16 %v1316
        %v1365 = vunpack.c.l.b16 %v1317
        %v1366 = vunpack.c.l.b16 %v1318
        %v1367 = vunpack.c.l.b16 %v1319
        %v1368 = vunpack.c.l.b16 %v1320
        %v1369 = vunpack.c.l.b16 %v1321
        %v1370 = vunpack.c.l.b16 %v1322
        %v1371 = vunpack.c.l.b16 %v1323
        %v1372 = vpack.c.b16 %v1357, %v1356
        %v1373 = vpack.c.b16 %v1359, %v1358
        %v1374 = vpack.c.b16 %v1361, %v1360
        %v1375 = vpack.c.b16 %v1363, %v1362
        %v1376 = vpack.c.b16 %v1365, %v1364
        %v1377 = vpack.c.b16 %v1367, %v1366
        %v1378 = vpack.c.b16 %v1369, %v1368
        %v1379 = vpack.c.b16 %v1371, %v1370
        %v1404 = vunpack.c.l.b16 %v1324
        %v1405 = vunpack.c.l.b16 %v1325
        %v1406 = vunpack.c.l.b16 %v1326
        %v1407 = vunpack.c.l.b16 %v1327
        %v1408 = vunpack.c.l.b16 %v1328
        %v1409 = vunpack.c.l.b16 %v1329
        %v1410 = vunpack.c.l.b16 %v1330
        %v1411 = vunpack.c.l.b16 %v1331
        %v1412 = vunpack.c.l.b16 %v1332
        %v1413 = vunpack.c.l.b16 %v1333
        %v1414 = vunpack.c.l.b16 %v1334
        %v1415 = vunpack.c.l.b16 %v1335
        %v1416 = vunpack.c.l.b16 %v1336
        %v1417 = vunpack.c.l.b16 %v1337
        %v1418 = vunpack.c.l.b16 %v1338
        %v1419 = vunpack.c.l.b16 %v1339
        %v1420 = vpack.c.b16 %v1405, %v1404
        %v1421 = vpack.c.b16 %v1407, %v1406
        %v1422 = vpack.c.b16 %v1409, %v1408
        %v1423 = vpack.c.b16 %v1411, %v1410
        %v1424 = vpack.c.b16 %v1413, %v1412
        %v1425 = vpack.c.b16 %v1415, %v1414
        %v1426 = vpack.c.b16 %v1417, %v1416
        %v1427 = vpack.c.b16 %v1419, %v1418
        %1436 = vmatpush.bf16.msra.mxu0 %v1427
        %1437 = vmatpush.bf16.msra.mxu0 %v1426
        %1438 = vmatpush.bf16.msra.mxu0 %v1425
        %1439 = vmatpush.bf16.msra.mxu0 %v1424
        %1440 = vmatpush.bf16.msra.mxu0 %v1423
        %1441 = vmatpush.bf16.msra.mxu0 %v1422
        %1442 = vmatpush.bf16.msra.mxu0 %v1421
        %1443 = vmatpush.bf16.msra.mxu0 %v1420
        %1444 = vmatmul.bf16.gmra.mxu0 %v1372
        %v1445 = vpop.f32.mrf.mxu0
        %v1446 = vadd.f32 0.0, %v1445
        %v1447 = vpop.f32.mrf.mxu0
        %v1448 = vadd.f32 0.0, %v1447
        %1449 = vmatmul.bf16.gmra.mxu0 %v1373
        %v1450 = vpop.f32.mrf.mxu0
        %v1451 = vadd.f32 0.0, %v1450
        %v1452 = vpop.f32.mrf.mxu0
        %v1453 = vadd.f32 0.0, %v1452
        %1454 = vmatmul.bf16.gmra.mxu0 %v1374
        %v1455 = vpop.f32.mrf.mxu0
        %v1456 = vadd.f32 0.0, %v1455
        %v1457 = vpop.f32.mrf.mxu0
        %v1458 = vadd.f32 0.0, %v1457
        %1459 = vmatmul.bf16.gmra.mxu0 %v1375
        %v1460 = vpop.f32.mrf.mxu0
        %v1461 = vadd.f32 0.0, %v1460
        %v1462 = vpop.f32.mrf.mxu0
        %v1463 = vadd.f32 0.0, %v1462
        %1464 = vmatmul.bf16.gmra.mxu0 %v1376
        %v1465 = vpop.f32.mrf.mxu0
        %v1466 = vadd.f32 0.0, %v1465
        %v1467 = vpop.f32.mrf.mxu0
        %v1468 = vadd.f32 0.0, %v1467
        %1469 = vmatmul.bf16.gmra.mxu0 %v1377
        %v1470 = vpop.f32.mrf.mxu0
        %v1471 = vadd.f32 0.0, %v1470
        %v1472 = vpop.f32.mrf.mxu0
        %v1473 = vadd.f32 0.0, %v1472
        %1474 = vmatmul.bf16.gmra.mxu0 %v1378
        %v1475 = vpop.f32.mrf.mxu0
        %v1476 = vadd.f32 0.0, %v1475
        %v1477 = vpop.f32.mrf.mxu0
        %v1478 = vadd.f32 0.0, %v1477
        %1479 = vmatmul.bf16.gmra.mxu0 %v1379
        %v1480 = vpop.f32.mrf.mxu0
        %v1481 = vadd.f32 0.0, %v1480
        %v1482 = vpop.f32.mrf.mxu0
        %v1483 = vadd.f32 0.0, %v1482
        %1484 = vdwg.mxu0
        %v1501 = vrot.slane %v1446, 1
        %v1502 = vrot.slane %v1446, 2
        %v1503 = vrot.slane %v1446, 3
        %v1504 = vrot.slane %v1446, 4
        %v1505 = vrot.slane %v1446, 5
        %v1506 = vrot.slane %v1446, 6
        %v1507 = vrot.slane %v1446, 7
        %v1508 = vrot.slane %v1448, 1
        %v1509 = vrot.slane %v1448, 2
        %v1510 = vrot.slane %v1448, 3
        %v1511 = vrot.slane %v1448, 4
        %v1512 = vrot.slane %v1448, 5
        %v1513 = vrot.slane %v1448, 6
        %v1514 = vrot.slane %v1448, 7
        %v1515 = vrot.slane %v1451, 1
        %v1516 = vrot.slane %v1451, 2
        %v1517 = vrot.slane %v1451, 3
        %v1518 = vrot.slane %v1451, 4
        %v1519 = vrot.slane %v1451, 5
        %v1520 = vrot.slane %v1451, 6
        %v1521 = vrot.slane %v1451, 7
        %v1522 = vrot.slane %v1453, 1
        %v1523 = vrot.slane %v1453, 2
        %v1524 = vrot.slane %v1453, 3
        %v1525 = vrot.slane %v1453, 4
        %v1526 = vrot.slane %v1453, 5
        %v1527 = vrot.slane %v1453, 6
        %v1528 = vrot.slane %v1453, 7
        %v1529 = vrot.slane %v1456, 1
        %v1530 = vrot.slane %v1456, 2
        %v1531 = vrot.slane %v1456, 3
        %v1532 = vrot.slane %v1456, 4
        %v1533 = vrot.slane %v1456, 5
        %v1534 = vrot.slane %v1456, 6
        %v1535 = vrot.slane %v1456, 7
        %v1536 = vrot.slane %v1458, 1
        %v1537 = vrot.slane %v1458, 2
        %v1538 = vrot.slane %v1458, 3
        %v1539 = vrot.slane %v1458, 4
        %v1540 = vrot.slane %v1458, 5
        %v1541 = vrot.slane %v1458, 6
        %v1542 = vrot.slane %v1458, 7
        %v1543 = vrot.slane %v1461, 1
        %v1544 = vrot.slane %v1461, 2
        %v1545 = vrot.slane %v1461, 3
        %v1546 = vrot.slane %v1461, 4
        %v1547 = vrot.slane %v1461, 5
        %v1548 = vrot.slane %v1461, 6
        %v1549 = vrot.slane %v1461, 7
        %v1550 = vrot.slane %v1463, 1
        %v1551 = vrot.slane %v1463, 2
        %v1552 = vrot.slane %v1463, 3
        %v1553 = vrot.slane %v1463, 4
        %v1554 = vrot.slane %v1463, 5
        %v1555 = vrot.slane %v1463, 6
        %v1556 = vrot.slane %v1463, 7
        %v1557 = vrot.slane %v1466, 1
        %v1558 = vrot.slane %v1466, 2
        %v1559 = vrot.slane %v1466, 3
        %v1560 = vrot.slane %v1466, 4
        %v1561 = vrot.slane %v1466, 5
        %v1562 = vrot.slane %v1466, 6
        %v1563 = vrot.slane %v1466, 7
        %v1564 = vrot.slane %v1468, 1
        %v1565 = vrot.slane %v1468, 2
        %v1566 = vrot.slane %v1468, 3
        %v1567 = vrot.slane %v1468, 4
        %v1568 = vrot.slane %v1468, 5
        %v1569 = vrot.slane %v1468, 6
        %v1570 = vrot.slane %v1468, 7
        %v1571 = vrot.slane %v1471, 1
        %v1572 = vrot.slane %v1471, 2
        %v1573 = vrot.slane %v1471, 3
        %v1574 = vrot.slane %v1471, 4
        %v1575 = vrot.slane %v1471, 5
        %v1576 = vrot.slane %v1471, 6
        %v1577 = vrot.slane %v1471, 7
        %v1578 = vrot.slane %v1473, 1
        %v1579 = vrot.slane %v1473, 2
        %v1580 = vrot.slane %v1473, 3
        %v1581 = vrot.slane %v1473, 4
        %v1582 = vrot.slane %v1473, 5
        %v1583 = vrot.slane %v1473, 6
        %v1584 = vrot.slane %v1473, 7
        %v1585 = vrot.slane %v1476, 1
        %v1586 = vrot.slane %v1476, 2
        %v1587 = vrot.slane %v1476, 3
        %v1588 = vrot.slane %v1476, 4
        %v1589 = vrot.slane %v1476, 5
        %v1590 = vrot.slane %v1476, 6
        %v1591 = vrot.slane %v1476, 7
        %v1592 = vrot.slane %v1478, 1
        %v1593 = vrot.slane %v1478, 2
        %v1594 = vrot.slane %v1478, 3
        %v1595 = vrot.slane %v1478, 4
        %v1596 = vrot.slane %v1478, 5
        %v1597 = vrot.slane %v1478, 6
        %v1598 = vrot.slane %v1478, 7
        %v1599 = vrot.slane %v1481, 1
        %v1600 = vrot.slane %v1481, 2
        %v1601 = vrot.slane %v1481, 3
        %v1602 = vrot.slane %v1481, 4
        %v1603 = vrot.slane %v1481, 5
        %v1604 = vrot.slane %v1481, 6
        %v1605 = vrot.slane %v1481, 7
        %v1606 = vrot.slane %v1483, 1
        %v1607 = vrot.slane %v1483, 2
        %v1608 = vrot.slane %v1483, 3
        %v1609 = vrot.slane %v1483, 4
        %v1610 = vrot.slane %v1483, 5
        %v1611 = vrot.slane %v1483, 6
        %v1612 = vrot.slane %v1483, 7
        %v1613 = vperm.slane %v1446, 0
        %v1614 = vperm.slane %v1501, 0
        %v1615 = vperm.slane %v1502, 0
        %v1616 = vperm.slane %v1503, 0
        %v1617 = vperm.slane %v1504, 0
        %v1618 = vperm.slane %v1505, 0
        %v1619 = vperm.slane %v1506, 0
        %v1620 = vperm.slane %v1507, 0
        %v1621 = vperm.slane %v1448, 0
        %v1622 = vperm.slane %v1508, 0
        %v1623 = vperm.slane %v1509, 0
        %v1624 = vperm.slane %v1510, 0
        %v1625 = vperm.slane %v1511, 0
        %v1626 = vperm.slane %v1512, 0
        %v1627 = vperm.slane %v1513, 0
        %v1628 = vperm.slane %v1514, 0
        %v1629 = vperm.slane %v1451, 0
        %v1630 = vperm.slane %v1515, 0
        %v1631 = vperm.slane %v1516, 0
        %v1632 = vperm.slane %v1517, 0
        %v1633 = vperm.slane %v1518, 0
        %v1634 = vperm.slane %v1519, 0
        %v1635 = vperm.slane %v1520, 0
        %v1636 = vperm.slane %v1521, 0
        %v1637 = vperm.slane %v1453, 0
        %v1638 = vperm.slane %v1522, 0
        %v1639 = vperm.slane %v1523, 0
        %v1640 = vperm.slane %v1524, 0
        %v1641 = vperm.slane %v1525, 0
        %v1642 = vperm.slane %v1526, 0
        %v1643 = vperm.slane %v1527, 0
        %v1644 = vperm.slane %v1528, 0
        %v1645 = vperm.slane %v1456, 0
        %v1646 = vperm.slane %v1529, 0
        %v1647 = vperm.slane %v1530, 0
        %v1648 = vperm.slane %v1531, 0
        %v1649 = vperm.slane %v1532, 0
        %v1650 = vperm.slane %v1533, 0
        %v1651 = vperm.slane %v1534, 0
        %v1652 = vperm.slane %v1535, 0
        %v1653 = vperm.slane %v1458, 0
        %v1654 = vperm.slane %v1536, 0
        %v1655 = vperm.slane %v1537, 0
        %v1656 = vperm.slane %v1538, 0
        %v1657 = vperm.slane %v1539, 0
        %v1658 = vperm.slane %v1540, 0
        %v1659 = vperm.slane %v1541, 0
        %v1660 = vperm.slane %v1542, 0
        %v1661 = vperm.slane %v1461, 0
        %v1662 = vperm.slane %v1543, 0
        %v1663 = vperm.slane %v1544, 0
        %v1664 = vperm.slane %v1545, 0
        %v1665 = vperm.slane %v1546, 0
        %v1666 = vperm.slane %v1547, 0
        %v1667 = vperm.slane %v1548, 0
        %v1668 = vperm.slane %v1549, 0
        %v1669 = vperm.slane %v1463, 0
        %v1670 = vperm.slane %v1550, 0
        %v1671 = vperm.slane %v1551, 0
        %v1672 = vperm.slane %v1552, 0
        %v1673 = vperm.slane %v1553, 0
        %v1674 = vperm.slane %v1554, 0
        %v1675 = vperm.slane %v1555, 0
        %v1676 = vperm.slane %v1556, 0
        %v1677 = vperm.slane %v1466, 0
        %v1678 = vperm.slane %v1557, 0
        %v1679 = vperm.slane %v1558, 0
        %v1680 = vperm.slane %v1559, 0
        %v1681 = vperm.slane %v1560, 0
        %v1682 = vperm.slane %v1561, 0
        %v1683 = vperm.slane %v1562, 0
        %v1684 = vperm.slane %v1563, 0
        %v1685 = vperm.slane %v1468, 0
        %v1686 = vperm.slane %v1564, 0
        %v1687 = vperm.slane %v1565, 0
        %v1688 = vperm.slane %v1566, 0
        %v1689 = vperm.slane %v1567, 0
        %v1690 = vperm.slane %v1568, 0
        %v1691 = vperm.slane %v1569, 0
        %v1692 = vperm.slane %v1570, 0
        %v1693 = vperm.slane %v1471, 0
        %v1694 = vperm.slane %v1571, 0
        %v1695 = vperm.slane %v1572, 0
        %v1696 = vperm.slane %v1573, 0
        %v1697 = vperm.slane %v1574, 0
        %v1698 = vperm.slane %v1575, 0
        %v1699 = vperm.slane %v1576, 0
        %v1700 = vperm.slane %v1577, 0
        %v1701 = vperm.slane %v1473, 0
        %v1702 = vperm.slane %v1578, 0
        %v1703 = vperm.slane %v1579, 0
        %v1704 = vperm.slane %v1580, 0
        %v1705 = vperm.slane %v1581, 0
        %v1706 = vperm.slane %v1582, 0
        %v1707 = vperm.slane %v1583, 0
        %v1708 = vperm.slane %v1584, 0
        %v1709 = vperm.slane %v1476, 0
        %v1710 = vperm.slane %v1585, 0
        %v1711 = vperm.slane %v1586, 0
        %v1712 = vperm.slane %v1587, 0
        %v1713 = vperm.slane %v1588, 0
        %v1714 = vperm.slane %v1589, 0
        %v1715 = vperm.slane %v1590, 0
        %v1716 = vperm.slane %v1591, 0
        %v1717 = vperm.slane %v1478, 0
        %v1718 = vperm.slane %v1592, 0
        %v1719 = vperm.slane %v1593, 0
        %v1720 = vperm.slane %v1594, 0
        %v1721 = vperm.slane %v1595, 0
        %v1722 = vperm.slane %v1596, 0
        %v1723 = vperm.slane %v1597, 0
        %v1724 = vperm.slane %v1598, 0
        %v1725 = vperm.slane %v1481, 0
        %v1726 = vperm.slane %v1599, 0
        %v1727 = vperm.slane %v1600, 0
        %v1728 = vperm.slane %v1601, 0
        %v1729 = vperm.slane %v1602, 0
        %v1730 = vperm.slane %v1603, 0
        %v1731 = vperm.slane %v1604, 0
        %v1732 = vperm.slane %v1605, 0
        %v1733 = vperm.slane %v1483, 0
        %v1734 = vperm.slane %v1606, 0
        %v1735 = vperm.slane %v1607, 0
        %v1736 = vperm.slane %v1608, 0
        %v1737 = vperm.slane %v1609, 0
        %v1738 = vperm.slane %v1610, 0
        %v1739 = vperm.slane %v1611, 0
        %v1740 = vperm.slane %v1612, 0
        %v1869 = vmul.f32 %v989, %v1613
        %v1870 = vmul.f32 %v991, %v1614
        %v1871 = vmul.f32 %v994, %v1615
        %v1872 = vmul.f32 %v996, %v1616
        %v1873 = vmul.f32 %v999, %v1617
        %v1874 = vmul.f32 %v1001, %v1618
        %v1875 = vmul.f32 %v1004, %v1619
        %v1876 = vmul.f32 %v1006, %v1620
        %v1877 = vmul.f32 %v1009, %v1621
        %v1878 = vmul.f32 %v1011, %v1622
        %v1879 = vmul.f32 %v1014, %v1623
        %v1880 = vmul.f32 %v1016, %v1624
        %v1881 = vmul.f32 %v1019, %v1625
        %v1882 = vmul.f32 %v1021, %v1626
        %v1883 = vmul.f32 %v1024, %v1627
        %v1884 = vmul.f32 %v1026, %v1628
        %v1885 = vmul.f32 %v1029, %v1629
        %v1886 = vmul.f32 %v1031, %v1630
        %v1887 = vmul.f32 %v1034, %v1631
        %v1888 = vmul.f32 %v1036, %v1632
        %v1889 = vmul.f32 %v1039, %v1633
        %v1890 = vmul.f32 %v1041, %v1634
        %v1891 = vmul.f32 %v1044, %v1635
        %v1892 = vmul.f32 %v1046, %v1636
        %v1893 = vmul.f32 %v1049, %v1637
        %v1894 = vmul.f32 %v1051, %v1638
        %v1895 = vmul.f32 %v1054, %v1639
        %v1896 = vmul.f32 %v1056, %v1640
        %v1897 = vmul.f32 %v1059, %v1641
        %v1898 = vmul.f32 %v1061, %v1642
        %v1899 = vmul.f32 %v1064, %v1643
        %v1900 = vmul.f32 %v1066, %v1644
        %v1901 = vmul.f32 %v1069, %v1645
        %v1902 = vmul.f32 %v1071, %v1646
        %v1903 = vmul.f32 %v1074, %v1647
        %v1904 = vmul.f32 %v1076, %v1648
        %v1905 = vmul.f32 %v1079, %v1649
        %v1906 = vmul.f32 %v1081, %v1650
        %v1907 = vmul.f32 %v1084, %v1651
        %v1908 = vmul.f32 %v1086, %v1652
        %v1909 = vmul.f32 %v1089, %v1653
        %v1910 = vmul.f32 %v1091, %v1654
        %v1911 = vmul.f32 %v1094, %v1655
        %v1912 = vmul.f32 %v1096, %v1656
        %v1913 = vmul.f32 %v1099, %v1657
        %v1914 = vmul.f32 %v1101, %v1658
        %v1915 = vmul.f32 %v1104, %v1659
        %v1916 = vmul.f32 %v1106, %v1660
        %v1917 = vmul.f32 %v1109, %v1661
        %v1918 = vmul.f32 %v1111, %v1662
        %v1919 = vmul.f32 %v1114, %v1663
        %v1920 = vmul.f32 %v1116, %v1664
        %v1921 = vmul.f32 %v1119, %v1665
        %v1922 = vmul.f32 %v1121, %v1666
        %v1923 = vmul.f32 %v1124, %v1667
        %v1924 = vmul.f32 %v1126, %v1668
        %v1925 = vmul.f32 %v1129, %v1669
        %v1926 = vmul.f32 %v1131, %v1670
        %v1927 = vmul.f32 %v1134, %v1671
        %v1928 = vmul.f32 %v1136, %v1672
        %v1929 = vmul.f32 %v1139, %v1673
        %v1930 = vmul.f32 %v1141, %v1674
        %v1931 = vmul.f32 %v1144, %v1675
        %v1932 = vmul.f32 %v1146, %v1676
        %v1933 = vmul.f32 %v1149, %v1677
        %v1934 = vmul.f32 %v1151, %v1678
        %v1935 = vmul.f32 %v1154, %v1679
        %v1936 = vmul.f32 %v1156, %v1680
        %v1937 = vmul.f32 %v1159, %v1681
        %v1938 = vmul.f32 %v1161, %v1682
        %v1939 = vmul.f32 %v1164, %v1683
        %v1940 = vmul.f32 %v1166, %v1684
        %v1941 = vmul.f32 %v1169, %v1685
        %v1942 = vmul.f32 %v1171, %v1686
        %v1943 = vmul.f32 %v1174, %v1687
        %v1944 = vmul.f32 %v1176, %v1688
        %v1945 = vmul.f32 %v1179, %v1689
        %v1946 = vmul.f32 %v1181, %v1690
        %v1947 = vmul.f32 %v1184, %v1691
        %v1948 = vmul.f32 %v1186, %v1692
        %v1949 = vmul.f32 %v1189, %v1693
        %v1950 = vmul.f32 %v1191, %v1694
        %v1951 = vmul.f32 %v1194, %v1695
        %v1952 = vmul.f32 %v1196, %v1696
        %v1953 = vmul.f32 %v1199, %v1697
        %v1954 = vmul.f32 %v1201, %v1698
        %v1955 = vmul.f32 %v1204, %v1699
        %v1956 = vmul.f32 %v1206, %v1700
        %v1957 = vmul.f32 %v1209, %v1701
        %v1958 = vmul.f32 %v1211, %v1702
        %v1959 = vmul.f32 %v1214, %v1703
        %v1960 = vmul.f32 %v1216, %v1704
        %v1961 = vmul.f32 %v1219, %v1705
        %v1962 = vmul.f32 %v1221, %v1706
        %v1963 = vmul.f32 %v1224, %v1707
        %v1964 = vmul.f32 %v1226, %v1708
        %v1965 = vmul.f32 %v1229, %v1709
        %v1966 = vmul.f32 %v1231, %v1710
        %v1967 = vmul.f32 %v1234, %v1711
        %v1968 = vmul.f32 %v1236, %v1712
        %v1969 = vmul.f32 %v1239, %v1713
        %v1970 = vmul.f32 %v1241, %v1714
        %v1971 = vmul.f32 %v1244, %v1715
        %v1972 = vmul.f32 %v1246, %v1716
        %v1973 = vmul.f32 %v1249, %v1717
        %v1974 = vmul.f32 %v1251, %v1718
        %v1975 = vmul.f32 %v1254, %v1719
        %v1976 = vmul.f32 %v1256, %v1720
        %v1977 = vmul.f32 %v1259, %v1721
        %v1978 = vmul.f32 %v1261, %v1722
        %v1979 = vmul.f32 %v1264, %v1723
        %v1980 = vmul.f32 %v1266, %v1724
        %v1981 = vmul.f32 %v1269, %v1725
        %v1982 = vmul.f32 %v1271, %v1726
        %v1983 = vmul.f32 %v1274, %v1727
        %v1984 = vmul.f32 %v1276, %v1728
        %v1985 = vmul.f32 %v1279, %v1729
        %v1986 = vmul.f32 %v1281, %v1730
        %v1987 = vmul.f32 %v1284, %v1731
        %v1988 = vmul.f32 %v1286, %v1732
        %v1989 = vmul.f32 %v1289, %v1733
        %v1990 = vmul.f32 %v1291, %v1734
        %v1991 = vmul.f32 %v1294, %v1735
        %v1992 = vmul.f32 %v1296, %v1736
        %v1993 = vmul.f32 %v1299, %v1737
        %v1994 = vmul.f32 %v1301, %v1738
        %v1995 = vmul.f32 %v1304, %v1739
        %v1996 = vmul.f32 %v1306, %v1740
        %1997 = vadd.xlane.f32.xlu0 %v1869
        %v1998 = vpop.xlane.xlu0 %1997
        %1999 = vadd.xlane.f32.xlu0 %v1870
        %v2000 = vpop.xlane.xlu0 %1999
        %2001 = vadd.xlane.f32.xlu0 %v1871
        %v2002 = vpop.xlane.xlu0 %2001
        %2003 = vadd.xlane.f32.xlu0 %v1872
        %v2004 = vpop.xlane.xlu0 %2003
        %2005 = vadd.xlane.f32.xlu0 %v1873
        %v2006 = vpop.xlane.xlu0 %2005
        %2007 = vadd.xlane.f32.xlu0 %v1874
        %v2008 = vpop.xlane.xlu0 %2007
        %2009 = vadd.xlane.f32.xlu0 %v1875
        %v2010 = vpop.xlane.xlu0 %2009
        %2011 = vadd.xlane.f32.xlu0 %v1876
        %v2012 = vpop.xlane.xlu0 %2011
        %2013 = vadd.xlane.f32.xlu0 %v1877
        %v2014 = vpop.xlane.xlu0 %2013
        %2015 = vadd.xlane.f32.xlu0 %v1878
        %v2016 = vpop.xlane.xlu0 %2015
        %2017 = vadd.xlane.f32.xlu0 %v1879
        %v2018 = vpop.xlane.xlu0 %2017
        %2019 = vadd.xlane.f32.xlu0 %v1880
        %v2020 = vpop.xlane.xlu0 %2019
        %2021 = vadd.xlane.f32.xlu0 %v1881
        %v2022 = vpop.xlane.xlu0 %2021
        %2023 = vadd.xlane.f32.xlu0 %v1882
        %v2024 = vpop.xlane.xlu0 %2023
        %2025 = vadd.xlane.f32.xlu0 %v1883
        %v2026 = vpop.xlane.xlu0 %2025
        %2027 = vadd.xlane.f32.xlu0 %v1884
        %v2028 = vpop.xlane.xlu0 %2027
        %2029 = vadd.xlane.f32.xlu0 %v1885
        %v2030 = vpop.xlane.xlu0 %2029
        %2031 = vadd.xlane.f32.xlu0 %v1886
        %v2032 = vpop.xlane.xlu0 %2031
        %2033 = vadd.xlane.f32.xlu0 %v1887
        %v2034 = vpop.xlane.xlu0 %2033
        %2035 = vadd.xlane.f32.xlu0 %v1888
        %v2036 = vpop.xlane.xlu0 %2035
        %2037 = vadd.xlane.f32.xlu0 %v1889
        %v2038 = vpop.xlane.xlu0 %2037
        %2039 = vadd.xlane.f32.xlu0 %v1890
        %v2040 = vpop.xlane.xlu0 %2039
        %2041 = vadd.xlane.f32.xlu0 %v1891
        %v2042 = vpop.xlane.xlu0 %2041
        %2043 = vadd.xlane.f32.xlu0 %v1892
        %v2044 = vpop.xlane.xlu0 %2043
        %2045 = vadd.xlane.f32.xlu0 %v1893
        %v2046 = vpop.xlane.xlu0 %2045
        %2047 = vadd.xlane.f32.xlu0 %v1894
        %v2048 = vpop.xlane.xlu0 %2047
        %2049 = vadd.xlane.f32.xlu0 %v1895
        %v2050 = vpop.xlane.xlu0 %2049
        %2051 = vadd.xlane.f32.xlu0 %v1896
        %v2052 = vpop.xlane.xlu0 %2051
        %2053 = vadd.xlane.f32.xlu0 %v1897
        %v2054 = vpop.xlane.xlu0 %2053
        %2055 = vadd.xlane.f32.xlu0 %v1898
        %v2056 = vpop.xlane.xlu0 %2055
        %2057 = vadd.xlane.f32.xlu0 %v1899
        %v2058 = vpop.xlane.xlu0 %2057
        %2059 = vadd.xlane.f32.xlu0 %v1900
        %v2060 = vpop.xlane.xlu0 %2059
        %2061 = vadd.xlane.f32.xlu0 %v1901
        %v2062 = vpop.xlane.xlu0 %2061
        %2063 = vadd.xlane.f32.xlu0 %v1902
        %v2064 = vpop.xlane.xlu0 %2063
        %2065 = vadd.xlane.f32.xlu0 %v1903
        %v2066 = vpop.xlane.xlu0 %2065
        %2067 = vadd.xlane.f32.xlu0 %v1904
        %v2068 = vpop.xlane.xlu0 %2067
        %2069 = vadd.xlane.f32.xlu0 %v1905
        %v2070 = vpop.xlane.xlu0 %2069
        %2071 = vadd.xlane.f32.xlu0 %v1906
        %v2072 = vpop.xlane.xlu0 %2071
        %2073 = vadd.xlane.f32.xlu0 %v1907
        %v2074 = vpop.xlane.xlu0 %2073
        %2075 = vadd.xlane.f32.xlu0 %v1908
        %v2076 = vpop.xlane.xlu0 %2075
        %2077 = vadd.xlane.f32.xlu0 %v1909
        %v2078 = vpop.xlane.xlu0 %2077
        %2079 = vadd.xlane.f32.xlu0 %v1910
        %v2080 = vpop.xlane.xlu0 %2079
        %2081 = vadd.xlane.f32.xlu0 %v1911
        %v2082 = vpop.xlane.xlu0 %2081
        %2083 = vadd.xlane.f32.xlu0 %v1912
        %v2084 = vpop.xlane.xlu0 %2083
        %2085 = vadd.xlane.f32.xlu0 %v1913
        %v2086 = vpop.xlane.xlu0 %2085
        %2087 = vadd.xlane.f32.xlu0 %v1914
        %v2088 = vpop.xlane.xlu0 %2087
        %2089 = vadd.xlane.f32.xlu0 %v1915
        %v2090 = vpop.xlane.xlu0 %2089
        %2091 = vadd.xlane.f32.xlu0 %v1916
        %v2092 = vpop.xlane.xlu0 %2091
        %2093 = vadd.xlane.f32.xlu0 %v1917
        %v2094 = vpop.xlane.xlu0 %2093
        %2095 = vadd.xlane.f32.xlu0 %v1918
        %v2096 = vpop.xlane.xlu0 %2095
        %2097 = vadd.xlane.f32.xlu0 %v1919
        %v2098 = vpop.xlane.xlu0 %2097
        %2099 = vadd.xlane.f32.xlu0 %v1920
        %v2100 = vpop.xlane.xlu0 %2099
        %2101 = vadd.xlane.f32.xlu0 %v1921
        %v2102 = vpop.xlane.xlu0 %2101
        %2103 = vadd.xlane.f32.xlu0 %v1922
        %v2104 = vpop.xlane.xlu0 %2103
        %2105 = vadd.xlane.f32.xlu0 %v1923
        %v2106 = vpop.xlane.xlu0 %2105
        %2107 = vadd.xlane.f32.xlu0 %v1924
        %v2108 = vpop.xlane.xlu0 %2107
        %2109 = vadd.xlane.f32.xlu0 %v1925
        %v2110 = vpop.xlane.xlu0 %2109
        %2111 = vadd.xlane.f32.xlu0 %v1926
        %v2112 = vpop.xlane.xlu0 %2111
        %2113 = vadd.xlane.f32.xlu0 %v1927
        %v2114 = vpop.xlane.xlu0 %2113
        %2115 = vadd.xlane.f32.xlu0 %v1928
        %v2116 = vpop.xlane.xlu0 %2115
        %2117 = vadd.xlane.f32.xlu0 %v1929
        %v2118 = vpop.xlane.xlu0 %2117
        %2119 = vadd.xlane.f32.xlu0 %v1930
        %v2120 = vpop.xlane.xlu0 %2119
        %2121 = vadd.xlane.f32.xlu0 %v1931
        %v2122 = vpop.xlane.xlu0 %2121
        %2123 = vadd.xlane.f32.xlu0 %v1932
        %v2124 = vpop.xlane.xlu0 %2123
        %2125 = vadd.xlane.f32.xlu0 %v1933
        %v2126 = vpop.xlane.xlu0 %2125
        %2127 = vadd.xlane.f32.xlu0 %v1934
        %v2128 = vpop.xlane.xlu0 %2127
        %2129 = vadd.xlane.f32.xlu0 %v1935
        %v2130 = vpop.xlane.xlu0 %2129
        %2131 = vadd.xlane.f32.xlu0 %v1936
        %v2132 = vpop.xlane.xlu0 %2131
        %2133 = vadd.xlane.f32.xlu0 %v1937
        %v2134 = vpop.xlane.xlu0 %2133
        %2135 = vadd.xlane.f32.xlu0 %v1938
        %v2136 = vpop.xlane.xlu0 %2135
        %2137 = vadd.xlane.f32.xlu0 %v1939
        %v2138 = vpop.xlane.xlu0 %2137
        %2139 = vadd.xlane.f32.xlu0 %v1940
        %v2140 = vpop.xlane.xlu0 %2139
        %2141 = vadd.xlane.f32.xlu0 %v1941
        %v2142 = vpop.xlane.xlu0 %2141
        %2143 = vadd.xlane.f32.xlu0 %v1942
        %v2144 = vpop.xlane.xlu0 %2143
        %2145 = vadd.xlane.f32.xlu0 %v1943
        %v2146 = vpop.xlane.xlu0 %2145
        %2147 = vadd.xlane.f32.xlu0 %v1944
        %v2148 = vpop.xlane.xlu0 %2147
        %2149 = vadd.xlane.f32.xlu0 %v1945
        %v2150 = vpop.xlane.xlu0 %2149
        %2151 = vadd.xlane.f32.xlu0 %v1946
        %v2152 = vpop.xlane.xlu0 %2151
        %2153 = vadd.xlane.f32.xlu0 %v1947
        %v2154 = vpop.xlane.xlu0 %2153
        %2155 = vadd.xlane.f32.xlu0 %v1948
        %v2156 = vpop.xlane.xlu0 %2155
        %2157 = vadd.xlane.f32.xlu0 %v1949
        %v2158 = vpop.xlane.xlu0 %2157
        %2159 = vadd.xlane.f32.xlu0 %v1950
        %v2160 = vpop.xlane.xlu0 %2159
        %2161 = vadd.xlane.f32.xlu0 %v1951
        %v2162 = vpop.xlane.xlu0 %2161
        %2163 = vadd.xlane.f32.xlu0 %v1952
        %v2164 = vpop.xlane.xlu0 %2163
        %2165 = vadd.xlane.f32.xlu0 %v1953
        %v2166 = vpop.xlane.xlu0 %2165
        %2167 = vadd.xlane.f32.xlu0 %v1954
        %v2168 = vpop.xlane.xlu0 %2167
        %2169 = vadd.xlane.f32.xlu0 %v1955
        %v2170 = vpop.xlane.xlu0 %2169
        %2171 = vadd.xlane.f32.xlu0 %v1956
        %v2172 = vpop.xlane.xlu0 %2171
        %2173 = vadd.xlane.f32.xlu0 %v1957
        %v2174 = vpop.xlane.xlu0 %2173
        %2175 = vadd.xlane.f32.xlu0 %v1958
        %v2176 = vpop.xlane.xlu0 %2175
        %2177 = vadd.xlane.f32.xlu0 %v1959
        %v2178 = vpop.xlane.xlu0 %2177
        %2179 = vadd.xlane.f32.xlu0 %v1960
        %v2180 = vpop.xlane.xlu0 %2179
        %2181 = vadd.xlane.f32.xlu0 %v1961
        %v2182 = vpop.xlane.xlu0 %2181
        %2183 = vadd.xlane.f32.xlu0 %v1962
        %v2184 = vpop.xlane.xlu0 %2183
        %2185 = vadd.xlane.f32.xlu0 %v1963
        %v2186 = vpop.xlane.xlu0 %2185
        %2187 = vadd.xlane.f32.xlu0 %v1964
        %v2188 = vpop.xlane.xlu0 %2187
        %2189 = vadd.xlane.f32.xlu0 %v1965
        %v2190 = vpop.xlane.xlu0 %2189
        %2191 = vadd.xlane.f32.xlu0 %v1966
        %v2192 = vpop.xlane.xlu0 %2191
        %2193 = vadd.xlane.f32.xlu0 %v1967
        %v2194 = vpop.xlane.xlu0 %2193
        %2195 = vadd.xlane.f32.xlu0 %v1968
        %v2196 = vpop.xlane.xlu0 %2195
        %2197 = vadd.xlane.f32.xlu0 %v1969
        %v2198 = vpop.xlane.xlu0 %2197
        %2199 = vadd.xlane.f32.xlu0 %v1970
        %v2200 = vpop.xlane.xlu0 %2199
        %2201 = vadd.xlane.f32.xlu0 %v1971
        %v2202 = vpop.xlane.xlu0 %2201
        %2203 = vadd.xlane.f32.xlu0 %v1972
        %v2204 = vpop.xlane.xlu0 %2203
        %2205 = vadd.xlane.f32.xlu0 %v1973
        %v2206 = vpop.xlane.xlu0 %2205
        %2207 = vadd.xlane.f32.xlu0 %v1974
        %v2208 = vpop.xlane.xlu0 %2207
        %2209 = vadd.xlane.f32.xlu0 %v1975
        %v2210 = vpop.xlane.xlu0 %2209
        %2211 = vadd.xlane.f32.xlu0 %v1976
        %v2212 = vpop.xlane.xlu0 %2211
        %2213 = vadd.xlane.f32.xlu0 %v1977
        %v2214 = vpop.xlane.xlu0 %2213
        %2215 = vadd.xlane.f32.xlu0 %v1978
        %v2216 = vpop.xlane.xlu0 %2215
        %2217 = vadd.xlane.f32.xlu0 %v1979
        %v2218 = vpop.xlane.xlu0 %2217
        %2219 = vadd.xlane.f32.xlu0 %v1980
        %v2220 = vpop.xlane.xlu0 %2219
        %2221 = vadd.xlane.f32.xlu0 %v1981
        %v2222 = vpop.xlane.xlu0 %2221
        %2223 = vadd.xlane.f32.xlu0 %v1982
        %v2224 = vpop.xlane.xlu0 %2223
        %2225 = vadd.xlane.f32.xlu0 %v1983
        %v2226 = vpop.xlane.xlu0 %2225
        %2227 = vadd.xlane.f32.xlu0 %v1984
        %v2228 = vpop.xlane.xlu0 %2227
        %2229 = vadd.xlane.f32.xlu0 %v1985
        %v2230 = vpop.xlane.xlu0 %2229
        %2231 = vadd.xlane.f32.xlu0 %v1986
        %v2232 = vpop.xlane.xlu0 %2231
        %2233 = vadd.xlane.f32.xlu0 %v1987
        %v2234 = vpop.xlane.xlu0 %2233
        %2235 = vadd.xlane.f32.xlu0 %v1988
        %v2236 = vpop.xlane.xlu0 %2235
        %2237 = vadd.xlane.f32.xlu0 %v1989
        %v2238 = vpop.xlane.xlu0 %2237
        %2239 = vadd.xlane.f32.xlu0 %v1990
        %v2240 = vpop.xlane.xlu0 %2239
        %2241 = vadd.xlane.f32.xlu0 %v1991
        %v2242 = vpop.xlane.xlu0 %2241
        %2243 = vadd.xlane.f32.xlu0 %v1992
        %v2244 = vpop.xlane.xlu0 %2243
        %2245 = vadd.xlane.f32.xlu0 %v1993
        %v2246 = vpop.xlane.xlu0 %2245
        %2247 = vadd.xlane.f32.xlu0 %v1994
        %v2248 = vpop.xlane.xlu0 %2247
        %2249 = vadd.xlane.f32.xlu0 %v1995
        %v2250 = vpop.xlane.xlu0 %2249
        %2251 = vadd.xlane.f32.xlu0 %v1996
        %v2252 = vpop.xlane.xlu0 %2251
        %v2253 = vmul.f32 %v989, %v989
        %v2254 = vmul.f32 %v991, %v991
        %v2255 = vmul.f32 %v994, %v994
        %v2256 = vmul.f32 %v996, %v996
        %v2257 = vmul.f32 %v999, %v999
        %v2258 = vmul.f32 %v1001, %v1001
        %v2259 = vmul.f32 %v1004, %v1004
        %v2260 = vmul.f32 %v1006, %v1006
        %v2261 = vmul.f32 %v1009, %v1009
        %v2262 = vmul.f32 %v1011, %v1011
        %v2263 = vmul.f32 %v1014, %v1014
        %v2264 = vmul.f32 %v1016, %v1016
        %v2265 = vmul.f32 %v1019, %v1019
        %v2266 = vmul.f32 %v1021, %v1021
        %v2267 = vmul.f32 %v1024, %v1024
        %v2268 = vmul.f32 %v1026, %v1026
        %v2269 = vmul.f32 %v1029, %v1029
        %v2270 = vmul.f32 %v1031, %v1031
        %v2271 = vmul.f32 %v1034, %v1034
        %v2272 = vmul.f32 %v1036, %v1036
        %v2273 = vmul.f32 %v1039, %v1039
        %v2274 = vmul.f32 %v1041, %v1041
        %v2275 = vmul.f32 %v1044, %v1044
        %v2276 = vmul.f32 %v1046, %v1046
        %v2277 = vmul.f32 %v1049, %v1049
        %v2278 = vmul.f32 %v1051, %v1051
        %v2279 = vmul.f32 %v1054, %v1054
        %v2280 = vmul.f32 %v1056, %v1056
        %v2281 = vmul.f32 %v1059, %v1059
        %v2282 = vmul.f32 %v1061, %v1061
        %v2283 = vmul.f32 %v1064, %v1064
        %v2284 = vmul.f32 %v1066, %v1066
        %v2285 = vmul.f32 %v1069, %v1069
        %v2286 = vmul.f32 %v1071, %v1071
        %v2287 = vmul.f32 %v1074, %v1074
        %v2288 = vmul.f32 %v1076, %v1076
        %v2289 = vmul.f32 %v1079, %v1079
        %v2290 = vmul.f32 %v1081, %v1081
        %v2291 = vmul.f32 %v1084, %v1084
        %v2292 = vmul.f32 %v1086, %v1086
        %v2293 = vmul.f32 %v1089, %v1089
        %v2294 = vmul.f32 %v1091, %v1091
        %v2295 = vmul.f32 %v1094, %v1094
        %v2296 = vmul.f32 %v1096, %v1096
        %v2297 = vmul.f32 %v1099, %v1099
        %v2298 = vmul.f32 %v1101, %v1101
        %v2299 = vmul.f32 %v1104, %v1104
        %v2300 = vmul.f32 %v1106, %v1106
        %v2301 = vmul.f32 %v1109, %v1109
        %v2302 = vmul.f32 %v1111, %v1111
        %v2303 = vmul.f32 %v1114, %v1114
        %v2304 = vmul.f32 %v1116, %v1116
        %v2305 = vmul.f32 %v1119, %v1119
        %v2306 = vmul.f32 %v1121, %v1121
        %v2307 = vmul.f32 %v1124, %v1124
        %v2308 = vmul.f32 %v1126, %v1126
        %v2309 = vmul.f32 %v1129, %v1129
        %v2310 = vmul.f32 %v1131, %v1131
        %v2311 = vmul.f32 %v1134, %v1134
        %v2312 = vmul.f32 %v1136, %v1136
        %v2313 = vmul.f32 %v1139, %v1139
        %v2314 = vmul.f32 %v1141, %v1141
        %v2315 = vmul.f32 %v1144, %v1144
        %v2316 = vmul.f32 %v1146, %v1146
        %v2317 = vmul.f32 %v1149, %v1149
        %v2318 = vmul.f32 %v1151, %v1151
        %v2319 = vmul.f32 %v1154, %v1154
        %v2320 = vmul.f32 %v1156, %v1156
        %v2321 = vmul.f32 %v1159, %v1159
        %v2322 = vmul.f32 %v1161, %v1161
        %v2323 = vmul.f32 %v1164, %v1164
        %v2324 = vmul.f32 %v1166, %v1166
        %v2325 = vmul.f32 %v1169, %v1169
        %v2326 = vmul.f32 %v1171, %v1171
        %v2327 = vmul.f32 %v1174, %v1174
        %v2328 = vmul.f32 %v1176, %v1176
        %v2329 = vmul.f32 %v1179, %v1179
        %v2330 = vmul.f32 %v1181, %v1181
        %v2331 = vmul.f32 %v1184, %v1184
        %v2332 = vmul.f32 %v1186, %v1186
        %v2333 = vmul.f32 %v1189, %v1189
        %v2334 = vmul.f32 %v1191, %v1191
        %v2335 = vmul.f32 %v1194, %v1194
        %v2336 = vmul.f32 %v1196, %v1196
        %v2337 = vmul.f32 %v1199, %v1199
        %v2338 = vmul.f32 %v1201, %v1201
        %v2339 = vmul.f32 %v1204, %v1204
        %v2340 = vmul.f32 %v1206, %v1206
        %v2341 = vmul.f32 %v1209, %v1209
        %v2342 = vmul.f32 %v1211, %v1211
        %v2343 = vmul.f32 %v1214, %v1214
        %v2344 = vmul.f32 %v1216, %v1216
        %v2345 = vmul.f32 %v1219, %v1219
        %v2346 = vmul.f32 %v1221, %v1221
        %v2347 = vmul.f32 %v1224, %v1224
        %v2348 = vmul.f32 %v1226, %v1226
        %v2349 = vmul.f32 %v1229, %v1229
        %v2350 = vmul.f32 %v1231, %v1231
        %v2351 = vmul.f32 %v1234, %v1234
        %v2352 = vmul.f32 %v1236, %v1236
        %v2353 = vmul.f32 %v1239, %v1239
        %v2354 = vmul.f32 %v1241, %v1241
        %v2355 = vmul.f32 %v1244, %v1244
        %v2356 = vmul.f32 %v1246, %v1246
        %v2357 = vmul.f32 %v1249, %v1249
        %v2358 = vmul.f32 %v1251, %v1251
        %v2359 = vmul.f32 %v1254, %v1254
        %v2360 = vmul.f32 %v1256, %v1256
        %v2361 = vmul.f32 %v1259, %v1259
        %v2362 = vmul.f32 %v1261, %v1261
        %v2363 = vmul.f32 %v1264, %v1264
        %v2364 = vmul.f32 %v1266, %v1266
        %v2365 = vmul.f32 %v1269, %v1269
        %v2366 = vmul.f32 %v1271, %v1271
        %v2367 = vmul.f32 %v1274, %v1274
        %v2368 = vmul.f32 %v1276, %v1276
        %v2369 = vmul.f32 %v1279, %v1279
        %v2370 = vmul.f32 %v1281, %v1281
        %v2371 = vmul.f32 %v1284, %v1284
        %v2372 = vmul.f32 %v1286, %v1286
        %v2373 = vmul.f32 %v1289, %v1289
        %v2374 = vmul.f32 %v1291, %v1291
        %v2375 = vmul.f32 %v1294, %v1294
        %v2376 = vmul.f32 %v1296, %v1296
        %v2377 = vmul.f32 %v1299, %v1299
        %v2378 = vmul.f32 %v1301, %v1301
        %v2379 = vmul.f32 %v1304, %v1304
        %v2380 = vmul.f32 %v1306, %v1306
        %2381 = vadd.xlane.f32.xlu0 %v2253
        %v2382 = vpop.xlane.xlu0 %2381
        %2383 = vadd.xlane.f32.xlu0 %v2254
        %v2384 = vpop.xlane.xlu0 %2383
        %2385 = vadd.xlane.f32.xlu0 %v2255
        %v2386 = vpop.xlane.xlu0 %2385
        %2387 = vadd.xlane.f32.xlu0 %v2256
        %v2388 = vpop.xlane.xlu0 %2387
        %2389 = vadd.xlane.f32.xlu0 %v2257
        %v2390 = vpop.xlane.xlu0 %2389
        %2391 = vadd.xlane.f32.xlu0 %v2258
        %v2392 = vpop.xlane.xlu0 %2391
        %2393 = vadd.xlane.f32.xlu0 %v2259
        %v2394 = vpop.xlane.xlu0 %2393
        %2395 = vadd.xlane.f32.xlu0 %v2260
        %v2396 = vpop.xlane.xlu0 %2395
        %2397 = vadd.xlane.f32.xlu0 %v2261
        %v2398 = vpop.xlane.xlu0 %2397
        %2399 = vadd.xlane.f32.xlu0 %v2262
        %v2400 = vpop.xlane.xlu0 %2399
        %2401 = vadd.xlane.f32.xlu0 %v2263
        %v2402 = vpop.xlane.xlu0 %2401
        %2403 = vadd.xlane.f32.xlu0 %v2264
        %v2404 = vpop.xlane.xlu0 %2403
        %2405 = vadd.xlane.f32.xlu0 %v2265
        %v2406 = vpop.xlane.xlu0 %2405
        %2407 = vadd.xlane.f32.xlu0 %v2266
        %v2408 = vpop.xlane.xlu0 %2407
        %2409 = vadd.xlane.f32.xlu0 %v2267
        %v2410 = vpop.xlane.xlu0 %2409
        %2411 = vadd.xlane.f32.xlu0 %v2268
        %v2412 = vpop.xlane.xlu0 %2411
        %2413 = vadd.xlane.f32.xlu0 %v2269
        %v2414 = vpop.xlane.xlu0 %2413
        %2415 = vadd.xlane.f32.xlu0 %v2270
        %v2416 = vpop.xlane.xlu0 %2415
        %2417 = vadd.xlane.f32.xlu0 %v2271
        %v2418 = vpop.xlane.xlu0 %2417
        %2419 = vadd.xlane.f32.xlu0 %v2272
        %v2420 = vpop.xlane.xlu0 %2419
        %2421 = vadd.xlane.f32.xlu0 %v2273
        %v2422 = vpop.xlane.xlu0 %2421
        %2423 = vadd.xlane.f32.xlu0 %v2274
        %v2424 = vpop.xlane.xlu0 %2423
        %2425 = vadd.xlane.f32.xlu0 %v2275
        %v2426 = vpop.xlane.xlu0 %2425
        %2427 = vadd.xlane.f32.xlu0 %v2276
        %v2428 = vpop.xlane.xlu0 %2427
        %2429 = vadd.xlane.f32.xlu0 %v2277
        %v2430 = vpop.xlane.xlu0 %2429
        %2431 = vadd.xlane.f32.xlu0 %v2278
        %v2432 = vpop.xlane.xlu0 %2431
        %2433 = vadd.xlane.f32.xlu0 %v2279
        %v2434 = vpop.xlane.xlu0 %2433
        %2435 = vadd.xlane.f32.xlu0 %v2280
        %v2436 = vpop.xlane.xlu0 %2435
        %2437 = vadd.xlane.f32.xlu0 %v2281
        %v2438 = vpop.xlane.xlu0 %2437
        %2439 = vadd.xlane.f32.xlu0 %v2282
        %v2440 = vpop.xlane.xlu0 %2439
        %2441 = vadd.xlane.f32.xlu0 %v2283
        %v2442 = vpop.xlane.xlu0 %2441
        %2443 = vadd.xlane.f32.xlu0 %v2284
        %v2444 = vpop.xlane.xlu0 %2443
        %2445 = vadd.xlane.f32.xlu0 %v2285
        %v2446 = vpop.xlane.xlu0 %2445
        %2447 = vadd.xlane.f32.xlu0 %v2286
        %v2448 = vpop.xlane.xlu0 %2447
        %2449 = vadd.xlane.f32.xlu0 %v2287
        %v2450 = vpop.xlane.xlu0 %2449
        %2451 = vadd.xlane.f32.xlu0 %v2288
        %v2452 = vpop.xlane.xlu0 %2451
        %2453 = vadd.xlane.f32.xlu0 %v2289
        %v2454 = vpop.xlane.xlu0 %2453
        %2455 = vadd.xlane.f32.xlu0 %v2290
        %v2456 = vpop.xlane.xlu0 %2455
        %2457 = vadd.xlane.f32.xlu0 %v2291
        %v2458 = vpop.xlane.xlu0 %2457
        %2459 = vadd.xlane.f32.xlu0 %v2292
        %v2460 = vpop.xlane.xlu0 %2459
        %2461 = vadd.xlane.f32.xlu0 %v2293
        %v2462 = vpop.xlane.xlu0 %2461
        %2463 = vadd.xlane.f32.xlu0 %v2294
        %v2464 = vpop.xlane.xlu0 %2463
        %2465 = vadd.xlane.f32.xlu0 %v2295
        %v2466 = vpop.xlane.xlu0 %2465
        %2467 = vadd.xlane.f32.xlu0 %v2296
        %v2468 = vpop.xlane.xlu0 %2467
        %2469 = vadd.xlane.f32.xlu0 %v2297
        %v2470 = vpop.xlane.xlu0 %2469
        %2471 = vadd.xlane.f32.xlu0 %v2298
        %v2472 = vpop.xlane.xlu0 %2471
        %2473 = vadd.xlane.f32.xlu0 %v2299
        %v2474 = vpop.xlane.xlu0 %2473
        %2475 = vadd.xlane.f32.xlu0 %v2300
        %v2476 = vpop.xlane.xlu0 %2475
        %2477 = vadd.xlane.f32.xlu0 %v2301
        %v2478 = vpop.xlane.xlu0 %2477
        %2479 = vadd.xlane.f32.xlu0 %v2302
        %v2480 = vpop.xlane.xlu0 %2479
        %2481 = vadd.xlane.f32.xlu0 %v2303
        %v2482 = vpop.xlane.xlu0 %2481
        %2483 = vadd.xlane.f32.xlu0 %v2304
        %v2484 = vpop.xlane.xlu0 %2483
        %2485 = vadd.xlane.f32.xlu0 %v2305
        %v2486 = vpop.xlane.xlu0 %2485
        %2487 = vadd.xlane.f32.xlu0 %v2306
        %v2488 = vpop.xlane.xlu0 %2487
        %2489 = vadd.xlane.f32.xlu0 %v2307
        %v2490 = vpop.xlane.xlu0 %2489
        %2491 = vadd.xlane.f32.xlu0 %v2308
        %v2492 = vpop.xlane.xlu0 %2491
        %2493 = vadd.xlane.f32.xlu0 %v2309
        %v2494 = vpop.xlane.xlu0 %2493
        %2495 = vadd.xlane.f32.xlu0 %v2310
        %v2496 = vpop.xlane.xlu0 %2495
        %2497 = vadd.xlane.f32.xlu0 %v2311
        %v2498 = vpop.xlane.xlu0 %2497
        %2499 = vadd.xlane.f32.xlu0 %v2312
        %v2500 = vpop.xlane.xlu0 %2499
        %2501 = vadd.xlane.f32.xlu0 %v2313
        %v2502 = vpop.xlane.xlu0 %2501
        %2503 = vadd.xlane.f32.xlu0 %v2314
        %v2504 = vpop.xlane.xlu0 %2503
        %2505 = vadd.xlane.f32.xlu0 %v2315
        %v2506 = vpop.xlane.xlu0 %2505
        %2507 = vadd.xlane.f32.xlu0 %v2316
        %v2508 = vpop.xlane.xlu0 %2507
        %2509 = vadd.xlane.f32.xlu0 %v2317
        %v2510 = vpop.xlane.xlu0 %2509
        %2511 = vadd.xlane.f32.xlu0 %v2318
        %v2512 = vpop.xlane.xlu0 %2511
        %2513 = vadd.xlane.f32.xlu0 %v2319
        %v2514 = vpop.xlane.xlu0 %2513
        %2515 = vadd.xlane.f32.xlu0 %v2320
        %v2516 = vpop.xlane.xlu0 %2515
        %2517 = vadd.xlane.f32.xlu0 %v2321
        %v2518 = vpop.xlane.xlu0 %2517
        %2519 = vadd.xlane.f32.xlu0 %v2322
        %v2520 = vpop.xlane.xlu0 %2519
        %2521 = vadd.xlane.f32.xlu0 %v2323
        %v2522 = vpop.xlane.xlu0 %2521
        %2523 = vadd.xlane.f32.xlu0 %v2324
        %v2524 = vpop.xlane.xlu0 %2523
        %2525 = vadd.xlane.f32.xlu0 %v2325
        %v2526 = vpop.xlane.xlu0 %2525
        %2527 = vadd.xlane.f32.xlu0 %v2326
        %v2528 = vpop.xlane.xlu0 %2527
        %2529 = vadd.xlane.f32.xlu0 %v2327
        %v2530 = vpop.xlane.xlu0 %2529
        %2531 = vadd.xlane.f32.xlu0 %v2328
        %v2532 = vpop.xlane.xlu0 %2531
        %2533 = vadd.xlane.f32.xlu0 %v2329
        %v2534 = vpop.xlane.xlu0 %2533
        %2535 = vadd.xlane.f32.xlu0 %v2330
        %v2536 = vpop.xlane.xlu0 %2535
        %2537 = vadd.xlane.f32.xlu0 %v2331
        %v2538 = vpop.xlane.xlu0 %2537
        %2539 = vadd.xlane.f32.xlu0 %v2332
        %v2540 = vpop.xlane.xlu0 %2539
        %2541 = vadd.xlane.f32.xlu0 %v2333
        %v2542 = vpop.xlane.xlu0 %2541
        %2543 = vadd.xlane.f32.xlu0 %v2334
        %v2544 = vpop.xlane.xlu0 %2543
        %2545 = vadd.xlane.f32.xlu0 %v2335
        %v2546 = vpop.xlane.xlu0 %2545
        %2547 = vadd.xlane.f32.xlu0 %v2336
        %v2548 = vpop.xlane.xlu0 %2547
        %2549 = vadd.xlane.f32.xlu0 %v2337
        %v2550 = vpop.xlane.xlu0 %2549
        %2551 = vadd.xlane.f32.xlu0 %v2338
        %v2552 = vpop.xlane.xlu0 %2551
        %2553 = vadd.xlane.f32.xlu0 %v2339
        %v2554 = vpop.xlane.xlu0 %2553
        %2555 = vadd.xlane.f32.xlu0 %v2340
        %v2556 = vpop.xlane.xlu0 %2555
        %2557 = vadd.xlane.f32.xlu0 %v2341
        %v2558 = vpop.xlane.xlu0 %2557
        %2559 = vadd.xlane.f32.xlu0 %v2342
        %v2560 = vpop.xlane.xlu0 %2559
        %2561 = vadd.xlane.f32.xlu0 %v2343
        %v2562 = vpop.xlane.xlu0 %2561
        %2563 = vadd.xlane.f32.xlu0 %v2344
        %v2564 = vpop.xlane.xlu0 %2563
        %2565 = vadd.xlane.f32.xlu0 %v2345
        %v2566 = vpop.xlane.xlu0 %2565
        %2567 = vadd.xlane.f32.xlu0 %v2346
        %v2568 = vpop.xlane.xlu0 %2567
        %2569 = vadd.xlane.f32.xlu0 %v2347
        %v2570 = vpop.xlane.xlu0 %2569
        %2571 = vadd.xlane.f32.xlu0 %v2348
        %v2572 = vpop.xlane.xlu0 %2571
        %2573 = vadd.xlane.f32.xlu0 %v2349
        %v2574 = vpop.xlane.xlu0 %2573
        %2575 = vadd.xlane.f32.xlu0 %v2350
        %v2576 = vpop.xlane.xlu0 %2575
        %2577 = vadd.xlane.f32.xlu0 %v2351
        %v2578 = vpop.xlane.xlu0 %2577
        %2579 = vadd.xlane.f32.xlu0 %v2352
        %v2580 = vpop.xlane.xlu0 %2579
        %2581 = vadd.xlane.f32.xlu0 %v2353
        %v2582 = vpop.xlane.xlu0 %2581
        %2583 = vadd.xlane.f32.xlu0 %v2354
        %v2584 = vpop.xlane.xlu0 %2583
        %2585 = vadd.xlane.f32.xlu0 %v2355
        %v2586 = vpop.xlane.xlu0 %2585
        %2587 = vadd.xlane.f32.xlu0 %v2356
        %v2588 = vpop.xlane.xlu0 %2587
        %2589 = vadd.xlane.f32.xlu0 %v2357
        %v2590 = vpop.xlane.xlu0 %2589
        %2591 = vadd.xlane.f32.xlu0 %v2358
        %v2592 = vpop.xlane.xlu0 %2591
        %2593 = vadd.xlane.f32.xlu0 %v2359
        %v2594 = vpop.xlane.xlu0 %2593
        %2595 = vadd.xlane.f32.xlu0 %v2360
        %v2596 = vpop.xlane.xlu0 %2595
        %2597 = vadd.xlane.f32.xlu0 %v2361
        %v2598 = vpop.xlane.xlu0 %2597
        %2599 = vadd.xlane.f32.xlu0 %v2362
        %v2600 = vpop.xlane.xlu0 %2599
        %2601 = vadd.xlane.f32.xlu0 %v2363
        %v2602 = vpop.xlane.xlu0 %2601
        %2603 = vadd.xlane.f32.xlu0 %v2364
        %v2604 = vpop.xlane.xlu0 %2603
        %2605 = vadd.xlane.f32.xlu0 %v2365
        %v2606 = vpop.xlane.xlu0 %2605
        %2607 = vadd.xlane.f32.xlu0 %v2366
        %v2608 = vpop.xlane.xlu0 %2607
        %2609 = vadd.xlane.f32.xlu0 %v2367
        %v2610 = vpop.xlane.xlu0 %2609
        %2611 = vadd.xlane.f32.xlu0 %v2368
        %v2612 = vpop.xlane.xlu0 %2611
        %2613 = vadd.xlane.f32.xlu0 %v2369
        %v2614 = vpop.xlane.xlu0 %2613
        %2615 = vadd.xlane.f32.xlu0 %v2370
        %v2616 = vpop.xlane.xlu0 %2615
        %2617 = vadd.xlane.f32.xlu0 %v2371
        %v2618 = vpop.xlane.xlu0 %2617
        %2619 = vadd.xlane.f32.xlu0 %v2372
        %v2620 = vpop.xlane.xlu0 %2619
        %2621 = vadd.xlane.f32.xlu0 %v2373
        %v2622 = vpop.xlane.xlu0 %2621
        %2623 = vadd.xlane.f32.xlu0 %v2374
        %v2624 = vpop.xlane.xlu0 %2623
        %2625 = vadd.xlane.f32.xlu0 %v2375
        %v2626 = vpop.xlane.xlu0 %2625
        %2627 = vadd.xlane.f32.xlu0 %v2376
        %v2628 = vpop.xlane.xlu0 %2627
        %2629 = vadd.xlane.f32.xlu0 %v2377
        %v2630 = vpop.xlane.xlu0 %2629
        %2631 = vadd.xlane.f32.xlu0 %v2378
        %v2632 = vpop.xlane.xlu0 %2631
        %2633 = vadd.xlane.f32.xlu0 %v2379
        %v2634 = vpop.xlane.xlu0 %2633
        %2635 = vadd.xlane.f32.xlu0 %v2380
        %v2636 = vpop.xlane.xlu0 %2635
        %v2637 = vmul.f32 %v1446, %v1446
        %v2638 = vmul.f32 %v1448, %v1448
        %v2639 = vmul.f32 %v1451, %v1451
        %v2640 = vmul.f32 %v1453, %v1453
        %v2641 = vmul.f32 %v1456, %v1456
        %v2642 = vmul.f32 %v1458, %v1458
        %v2643 = vmul.f32 %v1461, %v1461
        %v2644 = vmul.f32 %v1463, %v1463
        %v2645 = vmul.f32 %v1466, %v1466
        %v2646 = vmul.f32 %v1468, %v1468
        %v2647 = vmul.f32 %v1471, %v1471
        %v2648 = vmul.f32 %v1473, %v1473
        %v2649 = vmul.f32 %v1476, %v1476
        %v2650 = vmul.f32 %v1478, %v1478
        %v2651 = vmul.f32 %v1481, %v1481
        %v2652 = vmul.f32 %v1483, %v1483
        %2653 = vadd.xlane.f32.xlu0 %v2637
        %v2654 = vpop.xlane.xlu0 %2653
        %2655 = vadd.xlane.f32.xlu0 %v2638
        %v2656 = vpop.xlane.xlu0 %2655
        %2657 = vadd.xlane.f32.xlu0 %v2639
        %v2658 = vpop.xlane.xlu0 %2657
        %2659 = vadd.xlane.f32.xlu0 %v2640
        %v2660 = vpop.xlane.xlu0 %2659
        %2661 = vadd.xlane.f32.xlu0 %v2641
        %v2662 = vpop.xlane.xlu0 %2661
        %2663 = vadd.xlane.f32.xlu0 %v2642
        %v2664 = vpop.xlane.xlu0 %2663
        %2665 = vadd.xlane.f32.xlu0 %v2643
        %v2666 = vpop.xlane.xlu0 %2665
        %2667 = vadd.xlane.f32.xlu0 %v2644
        %v2668 = vpop.xlane.xlu0 %2667
        %2669 = vadd.xlane.f32.xlu0 %v2645
        %v2670 = vpop.xlane.xlu0 %2669
        %2671 = vadd.xlane.f32.xlu0 %v2646
        %v2672 = vpop.xlane.xlu0 %2671
        %2673 = vadd.xlane.f32.xlu0 %v2647
        %v2674 = vpop.xlane.xlu0 %2673
        %2675 = vadd.xlane.f32.xlu0 %v2648
        %v2676 = vpop.xlane.xlu0 %2675
        %2677 = vadd.xlane.f32.xlu0 %v2649
        %v2678 = vpop.xlane.xlu0 %2677
        %2679 = vadd.xlane.f32.xlu0 %v2650
        %v2680 = vpop.xlane.xlu0 %2679
        %2681 = vadd.xlane.f32.xlu0 %v2651
        %v2682 = vpop.xlane.xlu0 %2681
        %2683 = vadd.xlane.f32.xlu0 %v2652
        %v2684 = vpop.xlane.xlu0 %2683
        %v2685 = vmax.f32 %v2382, 1e-16
        %v2686 = vmax.f32 %v2384, 1e-16
        %v2687 = vmax.f32 %v2386, 1e-16
        %v2688 = vmax.f32 %v2388, 1e-16
        %v2689 = vmax.f32 %v2390, 1e-16
        %v2690 = vmax.f32 %v2392, 1e-16
        %v2691 = vmax.f32 %v2394, 1e-16
        %v2692 = vmax.f32 %v2396, 1e-16
        %v2693 = vmax.f32 %v2398, 1e-16
        %v2694 = vmax.f32 %v2400, 1e-16
        %v2695 = vmax.f32 %v2402, 1e-16
        %v2696 = vmax.f32 %v2404, 1e-16
        %v2697 = vmax.f32 %v2406, 1e-16
        %v2698 = vmax.f32 %v2408, 1e-16
        %v2699 = vmax.f32 %v2410, 1e-16
        %v2700 = vmax.f32 %v2412, 1e-16
        %v2701 = vmax.f32 %v2414, 1e-16
        %v2702 = vmax.f32 %v2416, 1e-16
        %v2703 = vmax.f32 %v2418, 1e-16
        %v2704 = vmax.f32 %v2420, 1e-16
        %v2705 = vmax.f32 %v2422, 1e-16
        %v2706 = vmax.f32 %v2424, 1e-16
        %v2707 = vmax.f32 %v2426, 1e-16
        %v2708 = vmax.f32 %v2428, 1e-16
        %v2709 = vmax.f32 %v2430, 1e-16
        %v2710 = vmax.f32 %v2432, 1e-16
        %v2711 = vmax.f32 %v2434, 1e-16
        %v2712 = vmax.f32 %v2436, 1e-16
        %v2713 = vmax.f32 %v2438, 1e-16
        %v2714 = vmax.f32 %v2440, 1e-16
        %v2715 = vmax.f32 %v2442, 1e-16
        %v2716 = vmax.f32 %v2444, 1e-16
        %v2717 = vmax.f32 %v2446, 1e-16
        %v2718 = vmax.f32 %v2448, 1e-16
        %v2719 = vmax.f32 %v2450, 1e-16
        %v2720 = vmax.f32 %v2452, 1e-16
        %v2721 = vmax.f32 %v2454, 1e-16
        %v2722 = vmax.f32 %v2456, 1e-16
        %v2723 = vmax.f32 %v2458, 1e-16
        %v2724 = vmax.f32 %v2460, 1e-16
        %v2725 = vmax.f32 %v2462, 1e-16
        %v2726 = vmax.f32 %v2464, 1e-16
        %v2727 = vmax.f32 %v2466, 1e-16
        %v2728 = vmax.f32 %v2468, 1e-16
        %v2729 = vmax.f32 %v2470, 1e-16
        %v2730 = vmax.f32 %v2472, 1e-16
        %v2731 = vmax.f32 %v2474, 1e-16
        %v2732 = vmax.f32 %v2476, 1e-16
        %v2733 = vmax.f32 %v2478, 1e-16
        %v2734 = vmax.f32 %v2480, 1e-16
        %v2735 = vmax.f32 %v2482, 1e-16
        %v2736 = vmax.f32 %v2484, 1e-16
        %v2737 = vmax.f32 %v2486, 1e-16
        %v2738 = vmax.f32 %v2488, 1e-16
        %v2739 = vmax.f32 %v2490, 1e-16
        %v2740 = vmax.f32 %v2492, 1e-16
        %v2741 = vmax.f32 %v2494, 1e-16
        %v2742 = vmax.f32 %v2496, 1e-16
        %v2743 = vmax.f32 %v2498, 1e-16
        %v2744 = vmax.f32 %v2500, 1e-16
        %v2745 = vmax.f32 %v2502, 1e-16
        %v2746 = vmax.f32 %v2504, 1e-16
        %v2747 = vmax.f32 %v2506, 1e-16
        %v2748 = vmax.f32 %v2508, 1e-16
        %v2749 = vmax.f32 %v2510, 1e-16
        %v2750 = vmax.f32 %v2512, 1e-16
        %v2751 = vmax.f32 %v2514, 1e-16
        %v2752 = vmax.f32 %v2516, 1e-16
        %v2753 = vmax.f32 %v2518, 1e-16
        %v2754 = vmax.f32 %v2520, 1e-16
        %v2755 = vmax.f32 %v2522, 1e-16
        %v2756 = vmax.f32 %v2524, 1e-16
        %v2757 = vmax.f32 %v2526, 1e-16
        %v2758 = vmax.f32 %v2528, 1e-16
        %v2759 = vmax.f32 %v2530, 1e-16
        %v2760 = vmax.f32 %v2532, 1e-16
        %v2761 = vmax.f32 %v2534, 1e-16
        %v2762 = vmax.f32 %v2536, 1e-16
        %v2763 = vmax.f32 %v2538, 1e-16
        %v2764 = vmax.f32 %v2540, 1e-16
        %v2765 = vmax.f32 %v2542, 1e-16
        %v2766 = vmax.f32 %v2544, 1e-16
        %v2767 = vmax.f32 %v2546, 1e-16
        %v2768 = vmax.f32 %v2548, 1e-16
        %v2769 = vmax.f32 %v2550, 1e-16
        %v2770 = vmax.f32 %v2552, 1e-16
        %v2771 = vmax.f32 %v2554, 1e-16
        %v2772 = vmax.f32 %v2556, 1e-16
        %v2773 = vmax.f32 %v2558, 1e-16
        %v2774 = vmax.f32 %v2560, 1e-16
        %v2775 = vmax.f32 %v2562, 1e-16
        %v2776 = vmax.f32 %v2564, 1e-16
        %v2777 = vmax.f32 %v2566, 1e-16
        %v2778 = vmax.f32 %v2568, 1e-16
        %v2779 = vmax.f32 %v2570, 1e-16
        %v2780 = vmax.f32 %v2572, 1e-16
        %v2781 = vmax.f32 %v2574, 1e-16
        %v2782 = vmax.f32 %v2576, 1e-16
        %v2783 = vmax.f32 %v2578, 1e-16
        %v2784 = vmax.f32 %v2580, 1e-16
        %v2785 = vmax.f32 %v2582, 1e-16
        %v2786 = vmax.f32 %v2584, 1e-16
        %v2787 = vmax.f32 %v2586, 1e-16
        %v2788 = vmax.f32 %v2588, 1e-16
        %v2789 = vmax.f32 %v2590, 1e-16
        %v2790 = vmax.f32 %v2592, 1e-16
        %v2791 = vmax.f32 %v2594, 1e-16
        %v2792 = vmax.f32 %v2596, 1e-16
        %v2793 = vmax.f32 %v2598, 1e-16
        %v2794 = vmax.f32 %v2600, 1e-16
        %v2795 = vmax.f32 %v2602, 1e-16
        %v2796 = vmax.f32 %v2604, 1e-16
        %v2797 = vmax.f32 %v2606, 1e-16
        %v2798 = vmax.f32 %v2608, 1e-16
        %v2799 = vmax.f32 %v2610, 1e-16
        %v2800 = vmax.f32 %v2612, 1e-16
        %v2801 = vmax.f32 %v2614, 1e-16
        %v2802 = vmax.f32 %v2616, 1e-16
        %v2803 = vmax.f32 %v2618, 1e-16
        %v2804 = vmax.f32 %v2620, 1e-16
        %v2805 = vmax.f32 %v2622, 1e-16
        %v2806 = vmax.f32 %v2624, 1e-16
        %v2807 = vmax.f32 %v2626, 1e-16
        %v2808 = vmax.f32 %v2628, 1e-16
        %v2809 = vmax.f32 %v2630, 1e-16
        %v2810 = vmax.f32 %v2632, 1e-16
        %v2811 = vmax.f32 %v2634, 1e-16
        %v2812 = vmax.f32 %v2636, 1e-16
        %v2813 = vrsqrt.pop %v2685
        %v2814 = vmul.f32 %v2813, %v2685
        %v2815 = vmul.f32 %v2814, %v2813
        %v2816 = vmul.f32 0.5, %v2815
        %v2817 = vsub.f32 1.5, %v2816
        %v2818 = vmul.f32 %v2813, %v2817
        %vm2819 = vweird.f32 %v2685
        %vm2820 = vweird.f32 %v2813
        %vm2821 = vmor %vm2819, %vm2820
        %v2822 = vsel %vm2821, %v2813, %v2818
        %v2823 = vrsqrt.pop %v2686
        %v2824 = vmul.f32 %v2823, %v2686
        %v2825 = vmul.f32 %v2824, %v2823
        %v2826 = vmul.f32 0.5, %v2825
        %v2827 = vsub.f32 1.5, %v2826
        %v2828 = vmul.f32 %v2823, %v2827
        %vm2829 = vweird.f32 %v2686
        %vm2830 = vweird.f32 %v2823
        %vm2831 = vmor %vm2829, %vm2830
        %v2832 = vsel %vm2831, %v2823, %v2828
        %v2833 = vrsqrt.pop %v2687
        %v2834 = vmul.f32 %v2833, %v2687
        %v2835 = vmul.f32 %v2834, %v2833
        %v2836 = vmul.f32 0.5, %v2835
        %v2837 = vsub.f32 1.5, %v2836
        %v2838 = vmul.f32 %v2833, %v2837
        %vm2839 = vweird.f32 %v2687
        %vm2840 = vweird.f32 %v2833
        %vm2841 = vmor %vm2839, %vm2840
        %v2842 = vsel %vm2841, %v2833, %v2838
        %v2843 = vrsqrt.pop %v2688
        %v2844 = vmul.f32 %v2843, %v2688
        %v2845 = vmul.f32 %v2844, %v2843
        %v2846 = vmul.f32 0.5, %v2845
        %v2847 = vsub.f32 1.5, %v2846
        %v2848 = vmul.f32 %v2843, %v2847
        %vm2849 = vweird.f32 %v2688
        %vm2850 = vweird.f32 %v2843
        %vm2851 = vmor %vm2849, %vm2850
        %v2852 = vsel %vm2851, %v2843, %v2848
        %v2853 = vrsqrt.pop %v2689
        %v2854 = vmul.f32 %v2853, %v2689
        %v2855 = vmul.f32 %v2854, %v2853
        %v2856 = vmul.f32 0.5, %v2855
        %v2857 = vsub.f32 1.5, %v2856
        %v2858 = vmul.f32 %v2853, %v2857
        %vm2859 = vweird.f32 %v2689
        %vm2860 = vweird.f32 %v2853
        %vm2861 = vmor %vm2859, %vm2860
        %v2862 = vsel %vm2861, %v2853, %v2858
        %v2863 = vrsqrt.pop %v2690
        %v2864 = vmul.f32 %v2863, %v2690
        %v2865 = vmul.f32 %v2864, %v2863
        %v2866 = vmul.f32 0.5, %v2865
        %v2867 = vsub.f32 1.5, %v2866
        %v2868 = vmul.f32 %v2863, %v2867
        %vm2869 = vweird.f32 %v2690
        %vm2870 = vweird.f32 %v2863
        %vm2871 = vmor %vm2869, %vm2870
        %v2872 = vsel %vm2871, %v2863, %v2868
        %v2873 = vrsqrt.pop %v2691
        %v2874 = vmul.f32 %v2873, %v2691
        %v2875 = vmul.f32 %v2874, %v2873
        %v2876 = vmul.f32 0.5, %v2875
        %v2877 = vsub.f32 1.5, %v2876
        %v2878 = vmul.f32 %v2873, %v2877
        %vm2879 = vweird.f32 %v2691
        %vm2880 = vweird.f32 %v2873
        %vm2881 = vmor %vm2879, %vm2880
        %v2882 = vsel %vm2881, %v2873, %v2878
        %v2883 = vrsqrt.pop %v2692
        %v2884 = vmul.f32 %v2883, %v2692
        %v2885 = vmul.f32 %v2884, %v2883
        %v2886 = vmul.f32 0.5, %v2885
        %v2887 = vsub.f32 1.5, %v2886
        %v2888 = vmul.f32 %v2883, %v2887
        %vm2889 = vweird.f32 %v2692
        %vm2890 = vweird.f32 %v2883
        %vm2891 = vmor %vm2889, %vm2890
        %v2892 = vsel %vm2891, %v2883, %v2888
        %v2893 = vrsqrt.pop %v2693
        %v2894 = vmul.f32 %v2893, %v2693
        %v2895 = vmul.f32 %v2894, %v2893
        %v2896 = vmul.f32 0.5, %v2895
        %v2897 = vsub.f32 1.5, %v2896
        %v2898 = vmul.f32 %v2893, %v2897
        %vm2899 = vweird.f32 %v2693
        %vm2900 = vweird.f32 %v2893
        %vm2901 = vmor %vm2899, %vm2900
        %v2902 = vsel %vm2901, %v2893, %v2898
        %v2903 = vrsqrt.pop %v2694
        %v2904 = vmul.f32 %v2903, %v2694
        %v2905 = vmul.f32 %v2904, %v2903
        %v2906 = vmul.f32 0.5, %v2905
        %v2907 = vsub.f32 1.5, %v2906
        %v2908 = vmul.f32 %v2903, %v2907
        %vm2909 = vweird.f32 %v2694
        %vm2910 = vweird.f32 %v2903
        %vm2911 = vmor %vm2909, %vm2910
        %v2912 = vsel %vm2911, %v2903, %v2908
        %v2913 = vrsqrt.pop %v2695
        %v2914 = vmul.f32 %v2913, %v2695
        %v2915 = vmul.f32 %v2914, %v2913
        %v2916 = vmul.f32 0.5, %v2915
        %v2917 = vsub.f32 1.5, %v2916
        %v2918 = vmul.f32 %v2913, %v2917
        %vm2919 = vweird.f32 %v2695
        %vm2920 = vweird.f32 %v2913
        %vm2921 = vmor %vm2919, %vm2920
        %v2922 = vsel %vm2921, %v2913, %v2918
        %v2923 = vrsqrt.pop %v2696
        %v2924 = vmul.f32 %v2923, %v2696
        %v2925 = vmul.f32 %v2924, %v2923
        %v2926 = vmul.f32 0.5, %v2925
        %v2927 = vsub.f32 1.5, %v2926
        %v2928 = vmul.f32 %v2923, %v2927
        %vm2929 = vweird.f32 %v2696
        %vm2930 = vweird.f32 %v2923
        %vm2931 = vmor %vm2929, %vm2930
        %v2932 = vsel %vm2931, %v2923, %v2928
        %v2933 = vrsqrt.pop %v2697
        %v2934 = vmul.f32 %v2933, %v2697
        %v2935 = vmul.f32 %v2934, %v2933
        %v2936 = vmul.f32 0.5, %v2935
        %v2937 = vsub.f32 1.5, %v2936
        %v2938 = vmul.f32 %v2933, %v2937
        %vm2939 = vweird.f32 %v2697
        %vm2940 = vweird.f32 %v2933
        %vm2941 = vmor %vm2939, %vm2940
        %v2942 = vsel %vm2941, %v2933, %v2938
        %v2943 = vrsqrt.pop %v2698
        %v2944 = vmul.f32 %v2943, %v2698
        %v2945 = vmul.f32 %v2944, %v2943
        %v2946 = vmul.f32 0.5, %v2945
        %v2947 = vsub.f32 1.5, %v2946
        %v2948 = vmul.f32 %v2943, %v2947
        %vm2949 = vweird.f32 %v2698
        %vm2950 = vweird.f32 %v2943
        %vm2951 = vmor %vm2949, %vm2950
        %v2952 = vsel %vm2951, %v2943, %v2948
        %v2953 = vrsqrt.pop %v2699
        %v2954 = vmul.f32 %v2953, %v2699
        %v2955 = vmul.f32 %v2954, %v2953
        %v2956 = vmul.f32 0.5, %v2955
        %v2957 = vsub.f32 1.5, %v2956
        %v2958 = vmul.f32 %v2953, %v2957
        %vm2959 = vweird.f32 %v2699
        %vm2960 = vweird.f32 %v2953
        %vm2961 = vmor %vm2959, %vm2960
        %v2962 = vsel %vm2961, %v2953, %v2958
        %v2963 = vrsqrt.pop %v2700
        %v2964 = vmul.f32 %v2963, %v2700
        %v2965 = vmul.f32 %v2964, %v2963
        %v2966 = vmul.f32 0.5, %v2965
        %v2967 = vsub.f32 1.5, %v2966
        %v2968 = vmul.f32 %v2963, %v2967
        %vm2969 = vweird.f32 %v2700
        %vm2970 = vweird.f32 %v2963
        %vm2971 = vmor %vm2969, %vm2970
        %v2972 = vsel %vm2971, %v2963, %v2968
        %v2973 = vrsqrt.pop %v2701
        %v2974 = vmul.f32 %v2973, %v2701
        %v2975 = vmul.f32 %v2974, %v2973
        %v2976 = vmul.f32 0.5, %v2975
        %v2977 = vsub.f32 1.5, %v2976
        %v2978 = vmul.f32 %v2973, %v2977
        %vm2979 = vweird.f32 %v2701
        %vm2980 = vweird.f32 %v2973
        %vm2981 = vmor %vm2979, %vm2980
        %v2982 = vsel %vm2981, %v2973, %v2978
        %v2983 = vrsqrt.pop %v2702
        %v2984 = vmul.f32 %v2983, %v2702
        %v2985 = vmul.f32 %v2984, %v2983
        %v2986 = vmul.f32 0.5, %v2985
        %v2987 = vsub.f32 1.5, %v2986
        %v2988 = vmul.f32 %v2983, %v2987
        %vm2989 = vweird.f32 %v2702
        %vm2990 = vweird.f32 %v2983
        %vm2991 = vmor %vm2989, %vm2990
        %v2992 = vsel %vm2991, %v2983, %v2988
        %v2993 = vrsqrt.pop %v2703
        %v2994 = vmul.f32 %v2993, %v2703
        %v2995 = vmul.f32 %v2994, %v2993
        %v2996 = vmul.f32 0.5, %v2995
        %v2997 = vsub.f32 1.5, %v2996
        %v2998 = vmul.f32 %v2993, %v2997
        %vm2999 = vweird.f32 %v2703
        %vm3000 = vweird.f32 %v2993
        %vm3001 = vmor %vm2999, %vm3000
        %v3002 = vsel %vm3001, %v2993, %v2998
        %v3003 = vrsqrt.pop %v2704
        %v3004 = vmul.f32 %v3003, %v2704
        %v3005 = vmul.f32 %v3004, %v3003
        %v3006 = vmul.f32 0.5, %v3005
        %v3007 = vsub.f32 1.5, %v3006
        %v3008 = vmul.f32 %v3003, %v3007
        %vm3009 = vweird.f32 %v2704
        %vm3010 = vweird.f32 %v3003
        %vm3011 = vmor %vm3009, %vm3010
        %v3012 = vsel %vm3011, %v3003, %v3008
        %v3013 = vrsqrt.pop %v2705
        %v3014 = vmul.f32 %v3013, %v2705
        %v3015 = vmul.f32 %v3014, %v3013
        %v3016 = vmul.f32 0.5, %v3015
        %v3017 = vsub.f32 1.5, %v3016
        %v3018 = vmul.f32 %v3013, %v3017
        %vm3019 = vweird.f32 %v2705
        %vm3020 = vweird.f32 %v3013
        %vm3021 = vmor %vm3019, %vm3020
        %v3022 = vsel %vm3021, %v3013, %v3018
        %v3023 = vrsqrt.pop %v2706
        %v3024 = vmul.f32 %v3023, %v2706
        %v3025 = vmul.f32 %v3024, %v3023
        %v3026 = vmul.f32 0.5, %v3025
        %v3027 = vsub.f32 1.5, %v3026
        %v3028 = vmul.f32 %v3023, %v3027
        %vm3029 = vweird.f32 %v2706
        %vm3030 = vweird.f32 %v3023
        %vm3031 = vmor %vm3029, %vm3030
        %v3032 = vsel %vm3031, %v3023, %v3028
        %v3033 = vrsqrt.pop %v2707
        %v3034 = vmul.f32 %v3033, %v2707
        %v3035 = vmul.f32 %v3034, %v3033
        %v3036 = vmul.f32 0.5, %v3035
        %v3037 = vsub.f32 1.5, %v3036
        %v3038 = vmul.f32 %v3033, %v3037
        %vm3039 = vweird.f32 %v2707
        %vm3040 = vweird.f32 %v3033
        %vm3041 = vmor %vm3039, %vm3040
        %v3042 = vsel %vm3041, %v3033, %v3038
        %v3043 = vrsqrt.pop %v2708
        %v3044 = vmul.f32 %v3043, %v2708
        %v3045 = vmul.f32 %v3044, %v3043
        %v3046 = vmul.f32 0.5, %v3045
        %v3047 = vsub.f32 1.5, %v3046
        %v3048 = vmul.f32 %v3043, %v3047
        %vm3049 = vweird.f32 %v2708
        %vm3050 = vweird.f32 %v3043
        %vm3051 = vmor %vm3049, %vm3050
        %v3052 = vsel %vm3051, %v3043, %v3048
        %v3053 = vrsqrt.pop %v2709
        %v3054 = vmul.f32 %v3053, %v2709
        %v3055 = vmul.f32 %v3054, %v3053
        %v3056 = vmul.f32 0.5, %v3055
        %v3057 = vsub.f32 1.5, %v3056
        %v3058 = vmul.f32 %v3053, %v3057
        %vm3059 = vweird.f32 %v2709
        %vm3060 = vweird.f32 %v3053
        %vm3061 = vmor %vm3059, %vm3060
        %v3062 = vsel %vm3061, %v3053, %v3058
        %v3063 = vrsqrt.pop %v2710
        %v3064 = vmul.f32 %v3063, %v2710
        %v3065 = vmul.f32 %v3064, %v3063
        %v3066 = vmul.f32 0.5, %v3065
        %v3067 = vsub.f32 1.5, %v3066
        %v3068 = vmul.f32 %v3063, %v3067
        %vm3069 = vweird.f32 %v2710
        %vm3070 = vweird.f32 %v3063
        %vm3071 = vmor %vm3069, %vm3070
        %v3072 = vsel %vm3071, %v3063, %v3068
        %v3073 = vrsqrt.pop %v2711
        %v3074 = vmul.f32 %v3073, %v2711
        %v3075 = vmul.f32 %v3074, %v3073
        %v3076 = vmul.f32 0.5, %v3075
        %v3077 = vsub.f32 1.5, %v3076
        %v3078 = vmul.f32 %v3073, %v3077
        %vm3079 = vweird.f32 %v2711
        %vm3080 = vweird.f32 %v3073
        %vm3081 = vmor %vm3079, %vm3080
        %v3082 = vsel %vm3081, %v3073, %v3078
        %v3083 = vrsqrt.pop %v2712
        %v3084 = vmul.f32 %v3083, %v2712
        %v3085 = vmul.f32 %v3084, %v3083
        %v3086 = vmul.f32 0.5, %v3085
        %v3087 = vsub.f32 1.5, %v3086
        %v3088 = vmul.f32 %v3083, %v3087
        %vm3089 = vweird.f32 %v2712
        %vm3090 = vweird.f32 %v3083
        %vm3091 = vmor %vm3089, %vm3090
        %v3092 = vsel %vm3091, %v3083, %v3088
        %v3093 = vrsqrt.pop %v2713
        %v3094 = vmul.f32 %v3093, %v2713
        %v3095 = vmul.f32 %v3094, %v3093
        %v3096 = vmul.f32 0.5, %v3095
        %v3097 = vsub.f32 1.5, %v3096
        %v3098 = vmul.f32 %v3093, %v3097
        %vm3099 = vweird.f32 %v2713
        %vm3100 = vweird.f32 %v3093
        %vm3101 = vmor %vm3099, %vm3100
        %v3102 = vsel %vm3101, %v3093, %v3098
        %v3103 = vrsqrt.pop %v2714
        %v3104 = vmul.f32 %v3103, %v2714
        %v3105 = vmul.f32 %v3104, %v3103
        %v3106 = vmul.f32 0.5, %v3105
        %v3107 = vsub.f32 1.5, %v3106
        %v3108 = vmul.f32 %v3103, %v3107
        %vm3109 = vweird.f32 %v2714
        %vm3110 = vweird.f32 %v3103
        %vm3111 = vmor %vm3109, %vm3110
        %v3112 = vsel %vm3111, %v3103, %v3108
        %v3113 = vrsqrt.pop %v2715
        %v3114 = vmul.f32 %v3113, %v2715
        %v3115 = vmul.f32 %v3114, %v3113
        %v3116 = vmul.f32 0.5, %v3115
        %v3117 = vsub.f32 1.5, %v3116
        %v3118 = vmul.f32 %v3113, %v3117
        %vm3119 = vweird.f32 %v2715
        %vm3120 = vweird.f32 %v3113
        %vm3121 = vmor %vm3119, %vm3120
        %v3122 = vsel %vm3121, %v3113, %v3118
        %v3123 = vrsqrt.pop %v2716
        %v3124 = vmul.f32 %v3123, %v2716
        %v3125 = vmul.f32 %v3124, %v3123
        %v3126 = vmul.f32 0.5, %v3125
        %v3127 = vsub.f32 1.5, %v3126
        %v3128 = vmul.f32 %v3123, %v3127
        %vm3129 = vweird.f32 %v2716
        %vm3130 = vweird.f32 %v3123
        %vm3131 = vmor %vm3129, %vm3130
        %v3132 = vsel %vm3131, %v3123, %v3128
        %v3133 = vrsqrt.pop %v2717
        %v3134 = vmul.f32 %v3133, %v2717
        %v3135 = vmul.f32 %v3134, %v3133
        %v3136 = vmul.f32 0.5, %v3135
        %v3137 = vsub.f32 1.5, %v3136
        %v3138 = vmul.f32 %v3133, %v3137
        %vm3139 = vweird.f32 %v2717
        %vm3140 = vweird.f32 %v3133
        %vm3141 = vmor %vm3139, %vm3140
        %v3142 = vsel %vm3141, %v3133, %v3138
        %v3143 = vrsqrt.pop %v2718
        %v3144 = vmul.f32 %v3143, %v2718
        %v3145 = vmul.f32 %v3144, %v3143
        %v3146 = vmul.f32 0.5, %v3145
        %v3147 = vsub.f32 1.5, %v3146
        %v3148 = vmul.f32 %v3143, %v3147
        %vm3149 = vweird.f32 %v2718
        %vm3150 = vweird.f32 %v3143
        %vm3151 = vmor %vm3149, %vm3150
        %v3152 = vsel %vm3151, %v3143, %v3148
        %v3153 = vrsqrt.pop %v2719
        %v3154 = vmul.f32 %v3153, %v2719
        %v3155 = vmul.f32 %v3154, %v3153
        %v3156 = vmul.f32 0.5, %v3155
        %v3157 = vsub.f32 1.5, %v3156
        %v3158 = vmul.f32 %v3153, %v3157
        %vm3159 = vweird.f32 %v2719
        %vm3160 = vweird.f32 %v3153
        %vm3161 = vmor %vm3159, %vm3160
        %v3162 = vsel %vm3161, %v3153, %v3158
        %v3163 = vrsqrt.pop %v2720
        %v3164 = vmul.f32 %v3163, %v2720
        %v3165 = vmul.f32 %v3164, %v3163
        %v3166 = vmul.f32 0.5, %v3165
        %v3167 = vsub.f32 1.5, %v3166
        %v3168 = vmul.f32 %v3163, %v3167
        %vm3169 = vweird.f32 %v2720
        %vm3170 = vweird.f32 %v3163
        %vm3171 = vmor %vm3169, %vm3170
        %v3172 = vsel %vm3171, %v3163, %v3168
        %v3173 = vrsqrt.pop %v2721
        %v3174 = vmul.f32 %v3173, %v2721
        %v3175 = vmul.f32 %v3174, %v3173
        %v3176 = vmul.f32 0.5, %v3175
        %v3177 = vsub.f32 1.5, %v3176
        %v3178 = vmul.f32 %v3173, %v3177
        %vm3179 = vweird.f32 %v2721
        %vm3180 = vweird.f32 %v3173
        %vm3181 = vmor %vm3179, %vm3180
        %v3182 = vsel %vm3181, %v3173, %v3178
        %v3183 = vrsqrt.pop %v2722
        %v3184 = vmul.f32 %v3183, %v2722
        %v3185 = vmul.f32 %v3184, %v3183
        %v3186 = vmul.f32 0.5, %v3185
        %v3187 = vsub.f32 1.5, %v3186
        %v3188 = vmul.f32 %v3183, %v3187
        %vm3189 = vweird.f32 %v2722
        %vm3190 = vweird.f32 %v3183
        %vm3191 = vmor %vm3189, %vm3190
        %v3192 = vsel %vm3191, %v3183, %v3188
        %v3193 = vrsqrt.pop %v2723
        %v3194 = vmul.f32 %v3193, %v2723
        %v3195 = vmul.f32 %v3194, %v3193
        %v3196 = vmul.f32 0.5, %v3195
        %v3197 = vsub.f32 1.5, %v3196
        %v3198 = vmul.f32 %v3193, %v3197
        %vm3199 = vweird.f32 %v2723
        %vm3200 = vweird.f32 %v3193
        %vm3201 = vmor %vm3199, %vm3200
        %v3202 = vsel %vm3201, %v3193, %v3198
        %v3203 = vrsqrt.pop %v2724
        %v3204 = vmul.f32 %v3203, %v2724
        %v3205 = vmul.f32 %v3204, %v3203
        %v3206 = vmul.f32 0.5, %v3205
        %v3207 = vsub.f32 1.5, %v3206
        %v3208 = vmul.f32 %v3203, %v3207
        %vm3209 = vweird.f32 %v2724
        %vm3210 = vweird.f32 %v3203
        %vm3211 = vmor %vm3209, %vm3210
        %v3212 = vsel %vm3211, %v3203, %v3208
        %v3213 = vrsqrt.pop %v2725
        %v3214 = vmul.f32 %v3213, %v2725
        %v3215 = vmul.f32 %v3214, %v3213
        %v3216 = vmul.f32 0.5, %v3215
        %v3217 = vsub.f32 1.5, %v3216
        %v3218 = vmul.f32 %v3213, %v3217
        %vm3219 = vweird.f32 %v2725
        %vm3220 = vweird.f32 %v3213
        %vm3221 = vmor %vm3219, %vm3220
        %v3222 = vsel %vm3221, %v3213, %v3218
        %v3223 = vrsqrt.pop %v2726
        %v3224 = vmul.f32 %v3223, %v2726
        %v3225 = vmul.f32 %v3224, %v3223
        %v3226 = vmul.f32 0.5, %v3225
        %v3227 = vsub.f32 1.5, %v3226
        %v3228 = vmul.f32 %v3223, %v3227
        %vm3229 = vweird.f32 %v2726
        %vm3230 = vweird.f32 %v3223
        %vm3231 = vmor %vm3229, %vm3230
        %v3232 = vsel %vm3231, %v3223, %v3228
        %v3233 = vrsqrt.pop %v2727
        %v3234 = vmul.f32 %v3233, %v2727
        %v3235 = vmul.f32 %v3234, %v3233
        %v3236 = vmul.f32 0.5, %v3235
        %v3237 = vsub.f32 1.5, %v3236
        %v3238 = vmul.f32 %v3233, %v3237
        %vm3239 = vweird.f32 %v2727
        %vm3240 = vweird.f32 %v3233
        %vm3241 = vmor %vm3239, %vm3240
        %v3242 = vsel %vm3241, %v3233, %v3238
        %v3243 = vrsqrt.pop %v2728
        %v3244 = vmul.f32 %v3243, %v2728
        %v3245 = vmul.f32 %v3244, %v3243
        %v3246 = vmul.f32 0.5, %v3245
        %v3247 = vsub.f32 1.5, %v3246
        %v3248 = vmul.f32 %v3243, %v3247
        %vm3249 = vweird.f32 %v2728
        %vm3250 = vweird.f32 %v3243
        %vm3251 = vmor %vm3249, %vm3250
        %v3252 = vsel %vm3251, %v3243, %v3248
        %v3253 = vrsqrt.pop %v2729
        %v3254 = vmul.f32 %v3253, %v2729
        %v3255 = vmul.f32 %v3254, %v3253
        %v3256 = vmul.f32 0.5, %v3255
        %v3257 = vsub.f32 1.5, %v3256
        %v3258 = vmul.f32 %v3253, %v3257
        %vm3259 = vweird.f32 %v2729
        %vm3260 = vweird.f32 %v3253
        %vm3261 = vmor %vm3259, %vm3260
        %v3262 = vsel %vm3261, %v3253, %v3258
        %v3263 = vrsqrt.pop %v2730
        %v3264 = vmul.f32 %v3263, %v2730
        %v3265 = vmul.f32 %v3264, %v3263
        %v3266 = vmul.f32 0.5, %v3265
        %v3267 = vsub.f32 1.5, %v3266
        %v3268 = vmul.f32 %v3263, %v3267
        %vm3269 = vweird.f32 %v2730
        %vm3270 = vweird.f32 %v3263
        %vm3271 = vmor %vm3269, %vm3270
        %v3272 = vsel %vm3271, %v3263, %v3268
        %v3273 = vrsqrt.pop %v2731
        %v3274 = vmul.f32 %v3273, %v2731
        %v3275 = vmul.f32 %v3274, %v3273
        %v3276 = vmul.f32 0.5, %v3275
        %v3277 = vsub.f32 1.5, %v3276
        %v3278 = vmul.f32 %v3273, %v3277
        %vm3279 = vweird.f32 %v2731
        %vm3280 = vweird.f32 %v3273
        %vm3281 = vmor %vm3279, %vm3280
        %v3282 = vsel %vm3281, %v3273, %v3278
        %v3283 = vrsqrt.pop %v2732
        %v3284 = vmul.f32 %v3283, %v2732
        %v3285 = vmul.f32 %v3284, %v3283
        %v3286 = vmul.f32 0.5, %v3285
        %v3287 = vsub.f32 1.5, %v3286
        %v3288 = vmul.f32 %v3283, %v3287
        %vm3289 = vweird.f32 %v2732
        %vm3290 = vweird.f32 %v3283
        %vm3291 = vmor %vm3289, %vm3290
        %v3292 = vsel %vm3291, %v3283, %v3288
        %v3293 = vrsqrt.pop %v2733
        %v3294 = vmul.f32 %v3293, %v2733
        %v3295 = vmul.f32 %v3294, %v3293
        %v3296 = vmul.f32 0.5, %v3295
        %v3297 = vsub.f32 1.5, %v3296
        %v3298 = vmul.f32 %v3293, %v3297
        %vm3299 = vweird.f32 %v2733
        %vm3300 = vweird.f32 %v3293
        %vm3301 = vmor %vm3299, %vm3300
        %v3302 = vsel %vm3301, %v3293, %v3298
        %v3303 = vrsqrt.pop %v2734
        %v3304 = vmul.f32 %v3303, %v2734
        %v3305 = vmul.f32 %v3304, %v3303
        %v3306 = vmul.f32 0.5, %v3305
        %v3307 = vsub.f32 1.5, %v3306
        %v3308 = vmul.f32 %v3303, %v3307
        %vm3309 = vweird.f32 %v2734
        %vm3310 = vweird.f32 %v3303
        %vm3311 = vmor %vm3309, %vm3310
        %v3312 = vsel %vm3311, %v3303, %v3308
        %v3313 = vrsqrt.pop %v2735
        %v3314 = vmul.f32 %v3313, %v2735
        %v3315 = vmul.f32 %v3314, %v3313
        %v3316 = vmul.f32 0.5, %v3315
        %v3317 = vsub.f32 1.5, %v3316
        %v3318 = vmul.f32 %v3313, %v3317
        %vm3319 = vweird.f32 %v2735
        %vm3320 = vweird.f32 %v3313
        %vm3321 = vmor %vm3319, %vm3320
        %v3322 = vsel %vm3321, %v3313, %v3318
        %v3323 = vrsqrt.pop %v2736
        %v3324 = vmul.f32 %v3323, %v2736
        %v3325 = vmul.f32 %v3324, %v3323
        %v3326 = vmul.f32 0.5, %v3325
        %v3327 = vsub.f32 1.5, %v3326
        %v3328 = vmul.f32 %v3323, %v3327
        %vm3329 = vweird.f32 %v2736
        %vm3330 = vweird.f32 %v3323
        %vm3331 = vmor %vm3329, %vm3330
        %v3332 = vsel %vm3331, %v3323, %v3328
        %v3333 = vrsqrt.pop %v2737
        %v3334 = vmul.f32 %v3333, %v2737
        %v3335 = vmul.f32 %v3334, %v3333
        %v3336 = vmul.f32 0.5, %v3335
        %v3337 = vsub.f32 1.5, %v3336
        %v3338 = vmul.f32 %v3333, %v3337
        %vm3339 = vweird.f32 %v2737
        %vm3340 = vweird.f32 %v3333
        %vm3341 = vmor %vm3339, %vm3340
        %v3342 = vsel %vm3341, %v3333, %v3338
        %v3343 = vrsqrt.pop %v2738
        %v3344 = vmul.f32 %v3343, %v2738
        %v3345 = vmul.f32 %v3344, %v3343
        %v3346 = vmul.f32 0.5, %v3345
        %v3347 = vsub.f32 1.5, %v3346
        %v3348 = vmul.f32 %v3343, %v3347
        %vm3349 = vweird.f32 %v2738
        %vm3350 = vweird.f32 %v3343
        %vm3351 = vmor %vm3349, %vm3350
        %v3352 = vsel %vm3351, %v3343, %v3348
        %v3353 = vrsqrt.pop %v2739
        %v3354 = vmul.f32 %v3353, %v2739
        %v3355 = vmul.f32 %v3354, %v3353
        %v3356 = vmul.f32 0.5, %v3355
        %v3357 = vsub.f32 1.5, %v3356
        %v3358 = vmul.f32 %v3353, %v3357
        %vm3359 = vweird.f32 %v2739
        %vm3360 = vweird.f32 %v3353
        %vm3361 = vmor %vm3359, %vm3360
        %v3362 = vsel %vm3361, %v3353, %v3358
        %v3363 = vrsqrt.pop %v2740
        %v3364 = vmul.f32 %v3363, %v2740
        %v3365 = vmul.f32 %v3364, %v3363
        %v3366 = vmul.f32 0.5, %v3365
        %v3367 = vsub.f32 1.5, %v3366
        %v3368 = vmul.f32 %v3363, %v3367
        %vm3369 = vweird.f32 %v2740
        %vm3370 = vweird.f32 %v3363
        %vm3371 = vmor %vm3369, %vm3370
        %v3372 = vsel %vm3371, %v3363, %v3368
        %v3373 = vrsqrt.pop %v2741
        %v3374 = vmul.f32 %v3373, %v2741
        %v3375 = vmul.f32 %v3374, %v3373
        %v3376 = vmul.f32 0.5, %v3375
        %v3377 = vsub.f32 1.5, %v3376
        %v3378 = vmul.f32 %v3373, %v3377
        %vm3379 = vweird.f32 %v2741
        %vm3380 = vweird.f32 %v3373
        %vm3381 = vmor %vm3379, %vm3380
        %v3382 = vsel %vm3381, %v3373, %v3378
        %v3383 = vrsqrt.pop %v2742
        %v3384 = vmul.f32 %v3383, %v2742
        %v3385 = vmul.f32 %v3384, %v3383
        %v3386 = vmul.f32 0.5, %v3385
        %v3387 = vsub.f32 1.5, %v3386
        %v3388 = vmul.f32 %v3383, %v3387
        %vm3389 = vweird.f32 %v2742
        %vm3390 = vweird.f32 %v3383
        %vm3391 = vmor %vm3389, %vm3390
        %v3392 = vsel %vm3391, %v3383, %v3388
        %v3393 = vrsqrt.pop %v2743
        %v3394 = vmul.f32 %v3393, %v2743
        %v3395 = vmul.f32 %v3394, %v3393
        %v3396 = vmul.f32 0.5, %v3395
        %v3397 = vsub.f32 1.5, %v3396
        %v3398 = vmul.f32 %v3393, %v3397
        %vm3399 = vweird.f32 %v2743
        %vm3400 = vweird.f32 %v3393
        %vm3401 = vmor %vm3399, %vm3400
        %v3402 = vsel %vm3401, %v3393, %v3398
        %v3403 = vrsqrt.pop %v2744
        %v3404 = vmul.f32 %v3403, %v2744
        %v3405 = vmul.f32 %v3404, %v3403
        %v3406 = vmul.f32 0.5, %v3405
        %v3407 = vsub.f32 1.5, %v3406
        %v3408 = vmul.f32 %v3403, %v3407
        %vm3409 = vweird.f32 %v2744
        %vm3410 = vweird.f32 %v3403
        %vm3411 = vmor %vm3409, %vm3410
        %v3412 = vsel %vm3411, %v3403, %v3408
        %v3413 = vrsqrt.pop %v2745
        %v3414 = vmul.f32 %v3413, %v2745
        %v3415 = vmul.f32 %v3414, %v3413
        %v3416 = vmul.f32 0.5, %v3415
        %v3417 = vsub.f32 1.5, %v3416
        %v3418 = vmul.f32 %v3413, %v3417
        %vm3419 = vweird.f32 %v2745
        %vm3420 = vweird.f32 %v3413
        %vm3421 = vmor %vm3419, %vm3420
        %v3422 = vsel %vm3421, %v3413, %v3418
        %v3423 = vrsqrt.pop %v2746
        %v3424 = vmul.f32 %v3423, %v2746
        %v3425 = vmul.f32 %v3424, %v3423
        %v3426 = vmul.f32 0.5, %v3425
        %v3427 = vsub.f32 1.5, %v3426
        %v3428 = vmul.f32 %v3423, %v3427
        %vm3429 = vweird.f32 %v2746
        %vm3430 = vweird.f32 %v3423
        %vm3431 = vmor %vm3429, %vm3430
        %v3432 = vsel %vm3431, %v3423, %v3428
        %v3433 = vrsqrt.pop %v2747
        %v3434 = vmul.f32 %v3433, %v2747
        %v3435 = vmul.f32 %v3434, %v3433
        %v3436 = vmul.f32 0.5, %v3435
        %v3437 = vsub.f32 1.5, %v3436
        %v3438 = vmul.f32 %v3433, %v3437
        %vm3439 = vweird.f32 %v2747
        %vm3440 = vweird.f32 %v3433
        %vm3441 = vmor %vm3439, %vm3440
        %v3442 = vsel %vm3441, %v3433, %v3438
        %v3443 = vrsqrt.pop %v2748
        %v3444 = vmul.f32 %v3443, %v2748
        %v3445 = vmul.f32 %v3444, %v3443
        %v3446 = vmul.f32 0.5, %v3445
        %v3447 = vsub.f32 1.5, %v3446
        %v3448 = vmul.f32 %v3443, %v3447
        %vm3449 = vweird.f32 %v2748
        %vm3450 = vweird.f32 %v3443
        %vm3451 = vmor %vm3449, %vm3450
        %v3452 = vsel %vm3451, %v3443, %v3448
        %v3453 = vrsqrt.pop %v2749
        %v3454 = vmul.f32 %v3453, %v2749
        %v3455 = vmul.f32 %v3454, %v3453
        %v3456 = vmul.f32 0.5, %v3455
        %v3457 = vsub.f32 1.5, %v3456
        %v3458 = vmul.f32 %v3453, %v3457
        %vm3459 = vweird.f32 %v2749
        %vm3460 = vweird.f32 %v3453
        %vm3461 = vmor %vm3459, %vm3460
        %v3462 = vsel %vm3461, %v3453, %v3458
        %v3463 = vrsqrt.pop %v2750
        %v3464 = vmul.f32 %v3463, %v2750
        %v3465 = vmul.f32 %v3464, %v3463
        %v3466 = vmul.f32 0.5, %v3465
        %v3467 = vsub.f32 1.5, %v3466
        %v3468 = vmul.f32 %v3463, %v3467
        %vm3469 = vweird.f32 %v2750
        %vm3470 = vweird.f32 %v3463
        %vm3471 = vmor %vm3469, %vm3470
        %v3472 = vsel %vm3471, %v3463, %v3468
        %v3473 = vrsqrt.pop %v2751
        %v3474 = vmul.f32 %v3473, %v2751
        %v3475 = vmul.f32 %v3474, %v3473
        %v3476 = vmul.f32 0.5, %v3475
        %v3477 = vsub.f32 1.5, %v3476
        %v3478 = vmul.f32 %v3473, %v3477
        %vm3479 = vweird.f32 %v2751
        %vm3480 = vweird.f32 %v3473
        %vm3481 = vmor %vm3479, %vm3480
        %v3482 = vsel %vm3481, %v3473, %v3478
        %v3483 = vrsqrt.pop %v2752
        %v3484 = vmul.f32 %v3483, %v2752
        %v3485 = vmul.f32 %v3484, %v3483
        %v3486 = vmul.f32 0.5, %v3485
        %v3487 = vsub.f32 1.5, %v3486
        %v3488 = vmul.f32 %v3483, %v3487
        %vm3489 = vweird.f32 %v2752
        %vm3490 = vweird.f32 %v3483
        %vm3491 = vmor %vm3489, %vm3490
        %v3492 = vsel %vm3491, %v3483, %v3488
        %v3493 = vrsqrt.pop %v2753
        %v3494 = vmul.f32 %v3493, %v2753
        %v3495 = vmul.f32 %v3494, %v3493
        %v3496 = vmul.f32 0.5, %v3495
        %v3497 = vsub.f32 1.5, %v3496
        %v3498 = vmul.f32 %v3493, %v3497
        %vm3499 = vweird.f32 %v2753
        %vm3500 = vweird.f32 %v3493
        %vm3501 = vmor %vm3499, %vm3500
        %v3502 = vsel %vm3501, %v3493, %v3498
        %v3503 = vrsqrt.pop %v2754
        %v3504 = vmul.f32 %v3503, %v2754
        %v3505 = vmul.f32 %v3504, %v3503
        %v3506 = vmul.f32 0.5, %v3505
        %v3507 = vsub.f32 1.5, %v3506
        %v3508 = vmul.f32 %v3503, %v3507
        %vm3509 = vweird.f32 %v2754
        %vm3510 = vweird.f32 %v3503
        %vm3511 = vmor %vm3509, %vm3510
        %v3512 = vsel %vm3511, %v3503, %v3508
        %v3513 = vrsqrt.pop %v2755
        %v3514 = vmul.f32 %v3513, %v2755
        %v3515 = vmul.f32 %v3514, %v3513
        %v3516 = vmul.f32 0.5, %v3515
        %v3517 = vsub.f32 1.5, %v3516
        %v3518 = vmul.f32 %v3513, %v3517
        %vm3519 = vweird.f32 %v2755
        %vm3520 = vweird.f32 %v3513
        %vm3521 = vmor %vm3519, %vm3520
        %v3522 = vsel %vm3521, %v3513, %v3518
        %v3523 = vrsqrt.pop %v2756
        %v3524 = vmul.f32 %v3523, %v2756
        %v3525 = vmul.f32 %v3524, %v3523
        %v3526 = vmul.f32 0.5, %v3525
        %v3527 = vsub.f32 1.5, %v3526
        %v3528 = vmul.f32 %v3523, %v3527
        %vm3529 = vweird.f32 %v2756
        %vm3530 = vweird.f32 %v3523
        %vm3531 = vmor %vm3529, %vm3530
        %v3532 = vsel %vm3531, %v3523, %v3528
        %v3533 = vrsqrt.pop %v2757
        %v3534 = vmul.f32 %v3533, %v2757
        %v3535 = vmul.f32 %v3534, %v3533
        %v3536 = vmul.f32 0.5, %v3535
        %v3537 = vsub.f32 1.5, %v3536
        %v3538 = vmul.f32 %v3533, %v3537
        %vm3539 = vweird.f32 %v2757
        %vm3540 = vweird.f32 %v3533
        %vm3541 = vmor %vm3539, %vm3540
        %v3542 = vsel %vm3541, %v3533, %v3538
        %v3543 = vrsqrt.pop %v2758
        %v3544 = vmul.f32 %v3543, %v2758
        %v3545 = vmul.f32 %v3544, %v3543
        %v3546 = vmul.f32 0.5, %v3545
        %v3547 = vsub.f32 1.5, %v3546
        %v3548 = vmul.f32 %v3543, %v3547
        %vm3549 = vweird.f32 %v2758
        %vm3550 = vweird.f32 %v3543
        %vm3551 = vmor %vm3549, %vm3550
        %v3552 = vsel %vm3551, %v3543, %v3548
        %v3553 = vrsqrt.pop %v2759
        %v3554 = vmul.f32 %v3553, %v2759
        %v3555 = vmul.f32 %v3554, %v3553
        %v3556 = vmul.f32 0.5, %v3555
        %v3557 = vsub.f32 1.5, %v3556
        %v3558 = vmul.f32 %v3553, %v3557
        %vm3559 = vweird.f32 %v2759
        %vm3560 = vweird.f32 %v3553
        %vm3561 = vmor %vm3559, %vm3560
        %v3562 = vsel %vm3561, %v3553, %v3558
        %v3563 = vrsqrt.pop %v2760
        %v3564 = vmul.f32 %v3563, %v2760
        %v3565 = vmul.f32 %v3564, %v3563
        %v3566 = vmul.f32 0.5, %v3565
        %v3567 = vsub.f32 1.5, %v3566
        %v3568 = vmul.f32 %v3563, %v3567
        %vm3569 = vweird.f32 %v2760
        %vm3570 = vweird.f32 %v3563
        %vm3571 = vmor %vm3569, %vm3570
        %v3572 = vsel %vm3571, %v3563, %v3568
        %v3573 = vrsqrt.pop %v2761
        %v3574 = vmul.f32 %v3573, %v2761
        %v3575 = vmul.f32 %v3574, %v3573
        %v3576 = vmul.f32 0.5, %v3575
        %v3577 = vsub.f32 1.5, %v3576
        %v3578 = vmul.f32 %v3573, %v3577
        %vm3579 = vweird.f32 %v2761
        %vm3580 = vweird.f32 %v3573
        %vm3581 = vmor %vm3579, %vm3580
        %v3582 = vsel %vm3581, %v3573, %v3578
        %v3583 = vrsqrt.pop %v2762
        %v3584 = vmul.f32 %v3583, %v2762
        %v3585 = vmul.f32 %v3584, %v3583
        %v3586 = vmul.f32 0.5, %v3585
        %v3587 = vsub.f32 1.5, %v3586
        %v3588 = vmul.f32 %v3583, %v3587
        %vm3589 = vweird.f32 %v2762
        %vm3590 = vweird.f32 %v3583
        %vm3591 = vmor %vm3589, %vm3590
        %v3592 = vsel %vm3591, %v3583, %v3588
        %v3593 = vrsqrt.pop %v2763
        %v3594 = vmul.f32 %v3593, %v2763
        %v3595 = vmul.f32 %v3594, %v3593
        %v3596 = vmul.f32 0.5, %v3595
        %v3597 = vsub.f32 1.5, %v3596
        %v3598 = vmul.f32 %v3593, %v3597
        %vm3599 = vweird.f32 %v2763
        %vm3600 = vweird.f32 %v3593
        %vm3601 = vmor %vm3599, %vm3600
        %v3602 = vsel %vm3601, %v3593, %v3598
        %v3603 = vrsqrt.pop %v2764
        %v3604 = vmul.f32 %v3603, %v2764
        %v3605 = vmul.f32 %v3604, %v3603
        %v3606 = vmul.f32 0.5, %v3605
        %v3607 = vsub.f32 1.5, %v3606
        %v3608 = vmul.f32 %v3603, %v3607
        %vm3609 = vweird.f32 %v2764
        %vm3610 = vweird.f32 %v3603
        %vm3611 = vmor %vm3609, %vm3610
        %v3612 = vsel %vm3611, %v3603, %v3608
        %v3613 = vrsqrt.pop %v2765
        %v3614 = vmul.f32 %v3613, %v2765
        %v3615 = vmul.f32 %v3614, %v3613
        %v3616 = vmul.f32 0.5, %v3615
        %v3617 = vsub.f32 1.5, %v3616
        %v3618 = vmul.f32 %v3613, %v3617
        %vm3619 = vweird.f32 %v2765
        %vm3620 = vweird.f32 %v3613
        %vm3621 = vmor %vm3619, %vm3620
        %v3622 = vsel %vm3621, %v3613, %v3618
        %v3623 = vrsqrt.pop %v2766
        %v3624 = vmul.f32 %v3623, %v2766
        %v3625 = vmul.f32 %v3624, %v3623
        %v3626 = vmul.f32 0.5, %v3625
        %v3627 = vsub.f32 1.5, %v3626
        %v3628 = vmul.f32 %v3623, %v3627
        %vm3629 = vweird.f32 %v2766
        %vm3630 = vweird.f32 %v3623
        %vm3631 = vmor %vm3629, %vm3630
        %v3632 = vsel %vm3631, %v3623, %v3628
        %v3633 = vrsqrt.pop %v2767
        %v3634 = vmul.f32 %v3633, %v2767
        %v3635 = vmul.f32 %v3634, %v3633
        %v3636 = vmul.f32 0.5, %v3635
        %v3637 = vsub.f32 1.5, %v3636
        %v3638 = vmul.f32 %v3633, %v3637
        %vm3639 = vweird.f32 %v2767
        %vm3640 = vweird.f32 %v3633
        %vm3641 = vmor %vm3639, %vm3640
        %v3642 = vsel %vm3641, %v3633, %v3638
        %v3643 = vrsqrt.pop %v2768
        %v3644 = vmul.f32 %v3643, %v2768
        %v3645 = vmul.f32 %v3644, %v3643
        %v3646 = vmul.f32 0.5, %v3645
        %v3647 = vsub.f32 1.5, %v3646
        %v3648 = vmul.f32 %v3643, %v3647
        %vm3649 = vweird.f32 %v2768
        %vm3650 = vweird.f32 %v3643
        %vm3651 = vmor %vm3649, %vm3650
        %v3652 = vsel %vm3651, %v3643, %v3648
        %v3653 = vrsqrt.pop %v2769
        %v3654 = vmul.f32 %v3653, %v2769
        %v3655 = vmul.f32 %v3654, %v3653
        %v3656 = vmul.f32 0.5, %v3655
        %v3657 = vsub.f32 1.5, %v3656
        %v3658 = vmul.f32 %v3653, %v3657
        %vm3659 = vweird.f32 %v2769
        %vm3660 = vweird.f32 %v3653
        %vm3661 = vmor %vm3659, %vm3660
        %v3662 = vsel %vm3661, %v3653, %v3658
        %v3663 = vrsqrt.pop %v2770
        %v3664 = vmul.f32 %v3663, %v2770
        %v3665 = vmul.f32 %v3664, %v3663
        %v3666 = vmul.f32 0.5, %v3665
        %v3667 = vsub.f32 1.5, %v3666
        %v3668 = vmul.f32 %v3663, %v3667
        %vm3669 = vweird.f32 %v2770
        %vm3670 = vweird.f32 %v3663
        %vm3671 = vmor %vm3669, %vm3670
        %v3672 = vsel %vm3671, %v3663, %v3668
        %v3673 = vrsqrt.pop %v2771
        %v3674 = vmul.f32 %v3673, %v2771
        %v3675 = vmul.f32 %v3674, %v3673
        %v3676 = vmul.f32 0.5, %v3675
        %v3677 = vsub.f32 1.5, %v3676
        %v3678 = vmul.f32 %v3673, %v3677
        %vm3679 = vweird.f32 %v2771
        %vm3680 = vweird.f32 %v3673
        %vm3681 = vmor %vm3679, %vm3680
        %v3682 = vsel %vm3681, %v3673, %v3678
        %v3683 = vrsqrt.pop %v2772
        %v3684 = vmul.f32 %v3683, %v2772
        %v3685 = vmul.f32 %v3684, %v3683
        %v3686 = vmul.f32 0.5, %v3685
        %v3687 = vsub.f32 1.5, %v3686
        %v3688 = vmul.f32 %v3683, %v3687
        %vm3689 = vweird.f32 %v2772
        %vm3690 = vweird.f32 %v3683
        %vm3691 = vmor %vm3689, %vm3690
        %v3692 = vsel %vm3691, %v3683, %v3688
        %v3693 = vrsqrt.pop %v2773
        %v3694 = vmul.f32 %v3693, %v2773
        %v3695 = vmul.f32 %v3694, %v3693
        %v3696 = vmul.f32 0.5, %v3695
        %v3697 = vsub.f32 1.5, %v3696
        %v3698 = vmul.f32 %v3693, %v3697
        %vm3699 = vweird.f32 %v2773
        %vm3700 = vweird.f32 %v3693
        %vm3701 = vmor %vm3699, %vm3700
        %v3702 = vsel %vm3701, %v3693, %v3698
        %v3703 = vrsqrt.pop %v2774
        %v3704 = vmul.f32 %v3703, %v2774
        %v3705 = vmul.f32 %v3704, %v3703
        %v3706 = vmul.f32 0.5, %v3705
        %v3707 = vsub.f32 1.5, %v3706
        %v3708 = vmul.f32 %v3703, %v3707
        %vm3709 = vweird.f32 %v2774
        %vm3710 = vweird.f32 %v3703
        %vm3711 = vmor %vm3709, %vm3710
        %v3712 = vsel %vm3711, %v3703, %v3708
        %v3713 = vrsqrt.pop %v2775
        %v3714 = vmul.f32 %v3713, %v2775
        %v3715 = vmul.f32 %v3714, %v3713
        %v3716 = vmul.f32 0.5, %v3715
        %v3717 = vsub.f32 1.5, %v3716
        %v3718 = vmul.f32 %v3713, %v3717
        %vm3719 = vweird.f32 %v2775
        %vm3720 = vweird.f32 %v3713
        %vm3721 = vmor %vm3719, %vm3720
        %v3722 = vsel %vm3721, %v3713, %v3718
        %v3723 = vrsqrt.pop %v2776
        %v3724 = vmul.f32 %v3723, %v2776
        %v3725 = vmul.f32 %v3724, %v3723
        %v3726 = vmul.f32 0.5, %v3725
        %v3727 = vsub.f32 1.5, %v3726
        %v3728 = vmul.f32 %v3723, %v3727
        %vm3729 = vweird.f32 %v2776
        %vm3730 = vweird.f32 %v3723
        %vm3731 = vmor %vm3729, %vm3730
        %v3732 = vsel %vm3731, %v3723, %v3728
        %v3733 = vrsqrt.pop %v2777
        %v3734 = vmul.f32 %v3733, %v2777
        %v3735 = vmul.f32 %v3734, %v3733
        %v3736 = vmul.f32 0.5, %v3735
        %v3737 = vsub.f32 1.5, %v3736
        %v3738 = vmul.f32 %v3733, %v3737
        %vm3739 = vweird.f32 %v2777
        %vm3740 = vweird.f32 %v3733
        %vm3741 = vmor %vm3739, %vm3740
        %v3742 = vsel %vm3741, %v3733, %v3738
        %v3743 = vrsqrt.pop %v2778
        %v3744 = vmul.f32 %v3743, %v2778
        %v3745 = vmul.f32 %v3744, %v3743
        %v3746 = vmul.f32 0.5, %v3745
        %v3747 = vsub.f32 1.5, %v3746
        %v3748 = vmul.f32 %v3743, %v3747
        %vm3749 = vweird.f32 %v2778
        %vm3750 = vweird.f32 %v3743
        %vm3751 = vmor %vm3749, %vm3750
        %v3752 = vsel %vm3751, %v3743, %v3748
        %v3753 = vrsqrt.pop %v2779
        %v3754 = vmul.f32 %v3753, %v2779
        %v3755 = vmul.f32 %v3754, %v3753
        %v3756 = vmul.f32 0.5, %v3755
        %v3757 = vsub.f32 1.5, %v3756
        %v3758 = vmul.f32 %v3753, %v3757
        %vm3759 = vweird.f32 %v2779
        %vm3760 = vweird.f32 %v3753
        %vm3761 = vmor %vm3759, %vm3760
        %v3762 = vsel %vm3761, %v3753, %v3758
        %v3763 = vrsqrt.pop %v2780
        %v3764 = vmul.f32 %v3763, %v2780
        %v3765 = vmul.f32 %v3764, %v3763
        %v3766 = vmul.f32 0.5, %v3765
        %v3767 = vsub.f32 1.5, %v3766
        %v3768 = vmul.f32 %v3763, %v3767
        %vm3769 = vweird.f32 %v2780
        %vm3770 = vweird.f32 %v3763
        %vm3771 = vmor %vm3769, %vm3770
        %v3772 = vsel %vm3771, %v3763, %v3768
        %v3773 = vrsqrt.pop %v2781
        %v3774 = vmul.f32 %v3773, %v2781
        %v3775 = vmul.f32 %v3774, %v3773
        %v3776 = vmul.f32 0.5, %v3775
        %v3777 = vsub.f32 1.5, %v3776
        %v3778 = vmul.f32 %v3773, %v3777
        %vm3779 = vweird.f32 %v2781
        %vm3780 = vweird.f32 %v3773
        %vm3781 = vmor %vm3779, %vm3780
        %v3782 = vsel %vm3781, %v3773, %v3778
        %v3783 = vrsqrt.pop %v2782
        %v3784 = vmul.f32 %v3783, %v2782
        %v3785 = vmul.f32 %v3784, %v3783
        %v3786 = vmul.f32 0.5, %v3785
        %v3787 = vsub.f32 1.5, %v3786
        %v3788 = vmul.f32 %v3783, %v3787
        %vm3789 = vweird.f32 %v2782
        %vm3790 = vweird.f32 %v3783
        %vm3791 = vmor %vm3789, %vm3790
        %v3792 = vsel %vm3791, %v3783, %v3788
        %v3793 = vrsqrt.pop %v2783
        %v3794 = vmul.f32 %v3793, %v2783
        %v3795 = vmul.f32 %v3794, %v3793
        %v3796 = vmul.f32 0.5, %v3795
        %v3797 = vsub.f32 1.5, %v3796
        %v3798 = vmul.f32 %v3793, %v3797
        %vm3799 = vweird.f32 %v2783
        %vm3800 = vweird.f32 %v3793
        %vm3801 = vmor %vm3799, %vm3800
        %v3802 = vsel %vm3801, %v3793, %v3798
        %v3803 = vrsqrt.pop %v2784
        %v3804 = vmul.f32 %v3803, %v2784
        %v3805 = vmul.f32 %v3804, %v3803
        %v3806 = vmul.f32 0.5, %v3805
        %v3807 = vsub.f32 1.5, %v3806
        %v3808 = vmul.f32 %v3803, %v3807
        %vm3809 = vweird.f32 %v2784
        %vm3810 = vweird.f32 %v3803
        %vm3811 = vmor %vm3809, %vm3810
        %v3812 = vsel %vm3811, %v3803, %v3808
        %v3813 = vrsqrt.pop %v2785
        %v3814 = vmul.f32 %v3813, %v2785
        %v3815 = vmul.f32 %v3814, %v3813
        %v3816 = vmul.f32 0.5, %v3815
        %v3817 = vsub.f32 1.5, %v3816
        %v3818 = vmul.f32 %v3813, %v3817
        %vm3819 = vweird.f32 %v2785
        %vm3820 = vweird.f32 %v3813
        %vm3821 = vmor %vm3819, %vm3820
        %v3822 = vsel %vm3821, %v3813, %v3818
        %v3823 = vrsqrt.pop %v2786
        %v3824 = vmul.f32 %v3823, %v2786
        %v3825 = vmul.f32 %v3824, %v3823
        %v3826 = vmul.f32 0.5, %v3825
        %v3827 = vsub.f32 1.5, %v3826
        %v3828 = vmul.f32 %v3823, %v3827
        %vm3829 = vweird.f32 %v2786
        %vm3830 = vweird.f32 %v3823
        %vm3831 = vmor %vm3829, %vm3830
        %v3832 = vsel %vm3831, %v3823, %v3828
        %v3833 = vrsqrt.pop %v2787
        %v3834 = vmul.f32 %v3833, %v2787
        %v3835 = vmul.f32 %v3834, %v3833
        %v3836 = vmul.f32 0.5, %v3835
        %v3837 = vsub.f32 1.5, %v3836
        %v3838 = vmul.f32 %v3833, %v3837
        %vm3839 = vweird.f32 %v2787
        %vm3840 = vweird.f32 %v3833
        %vm3841 = vmor %vm3839, %vm3840
        %v3842 = vsel %vm3841, %v3833, %v3838
        %v3843 = vrsqrt.pop %v2788
        %v3844 = vmul.f32 %v3843, %v2788
        %v3845 = vmul.f32 %v3844, %v3843
        %v3846 = vmul.f32 0.5, %v3845
        %v3847 = vsub.f32 1.5, %v3846
        %v3848 = vmul.f32 %v3843, %v3847
        %vm3849 = vweird.f32 %v2788
        %vm3850 = vweird.f32 %v3843
        %vm3851 = vmor %vm3849, %vm3850
        %v3852 = vsel %vm3851, %v3843, %v3848
        %v3853 = vrsqrt.pop %v2789
        %v3854 = vmul.f32 %v3853, %v2789
        %v3855 = vmul.f32 %v3854, %v3853
        %v3856 = vmul.f32 0.5, %v3855
        %v3857 = vsub.f32 1.5, %v3856
        %v3858 = vmul.f32 %v3853, %v3857
        %vm3859 = vweird.f32 %v2789
        %vm3860 = vweird.f32 %v3853
        %vm3861 = vmor %vm3859, %vm3860
        %v3862 = vsel %vm3861, %v3853, %v3858
        %v3863 = vrsqrt.pop %v2790
        %v3864 = vmul.f32 %v3863, %v2790
        %v3865 = vmul.f32 %v3864, %v3863
        %v3866 = vmul.f32 0.5, %v3865
        %v3867 = vsub.f32 1.5, %v3866
        %v3868 = vmul.f32 %v3863, %v3867
        %vm3869 = vweird.f32 %v2790
        %vm3870 = vweird.f32 %v3863
        %vm3871 = vmor %vm3869, %vm3870
        %v3872 = vsel %vm3871, %v3863, %v3868
        %v3873 = vrsqrt.pop %v2791
        %v3874 = vmul.f32 %v3873, %v2791
        %v3875 = vmul.f32 %v3874, %v3873
        %v3876 = vmul.f32 0.5, %v3875
        %v3877 = vsub.f32 1.5, %v3876
        %v3878 = vmul.f32 %v3873, %v3877
        %vm3879 = vweird.f32 %v2791
        %vm3880 = vweird.f32 %v3873
        %vm3881 = vmor %vm3879, %vm3880
        %v3882 = vsel %vm3881, %v3873, %v3878
        %v3883 = vrsqrt.pop %v2792
        %v3884 = vmul.f32 %v3883, %v2792
        %v3885 = vmul.f32 %v3884, %v3883
        %v3886 = vmul.f32 0.5, %v3885
        %v3887 = vsub.f32 1.5, %v3886
        %v3888 = vmul.f32 %v3883, %v3887
        %vm3889 = vweird.f32 %v2792
        %vm3890 = vweird.f32 %v3883
        %vm3891 = vmor %vm3889, %vm3890
        %v3892 = vsel %vm3891, %v3883, %v3888
        %v3893 = vrsqrt.pop %v2793
        %v3894 = vmul.f32 %v3893, %v2793
        %v3895 = vmul.f32 %v3894, %v3893
        %v3896 = vmul.f32 0.5, %v3895
        %v3897 = vsub.f32 1.5, %v3896
        %v3898 = vmul.f32 %v3893, %v3897
        %vm3899 = vweird.f32 %v2793
        %vm3900 = vweird.f32 %v3893
        %vm3901 = vmor %vm3899, %vm3900
        %v3902 = vsel %vm3901, %v3893, %v3898
        %v3903 = vrsqrt.pop %v2794
        %v3904 = vmul.f32 %v3903, %v2794
        %v3905 = vmul.f32 %v3904, %v3903
        %v3906 = vmul.f32 0.5, %v3905
        %v3907 = vsub.f32 1.5, %v3906
        %v3908 = vmul.f32 %v3903, %v3907
        %vm3909 = vweird.f32 %v2794
        %vm3910 = vweird.f32 %v3903
        %vm3911 = vmor %vm3909, %vm3910
        %v3912 = vsel %vm3911, %v3903, %v3908
        %v3913 = vrsqrt.pop %v2795
        %v3914 = vmul.f32 %v3913, %v2795
        %v3915 = vmul.f32 %v3914, %v3913
        %v3916 = vmul.f32 0.5, %v3915
        %v3917 = vsub.f32 1.5, %v3916
        %v3918 = vmul.f32 %v3913, %v3917
        %vm3919 = vweird.f32 %v2795
        %vm3920 = vweird.f32 %v3913
        %vm3921 = vmor %vm3919, %vm3920
        %v3922 = vsel %vm3921, %v3913, %v3918
        %v3923 = vrsqrt.pop %v2796
        %v3924 = vmul.f32 %v3923, %v2796
        %v3925 = vmul.f32 %v3924, %v3923
        %v3926 = vmul.f32 0.5, %v3925
        %v3927 = vsub.f32 1.5, %v3926
        %v3928 = vmul.f32 %v3923, %v3927
        %vm3929 = vweird.f32 %v2796
        %vm3930 = vweird.f32 %v3923
        %vm3931 = vmor %vm3929, %vm3930
        %v3932 = vsel %vm3931, %v3923, %v3928
        %v3933 = vrsqrt.pop %v2797
        %v3934 = vmul.f32 %v3933, %v2797
        %v3935 = vmul.f32 %v3934, %v3933
        %v3936 = vmul.f32 0.5, %v3935
        %v3937 = vsub.f32 1.5, %v3936
        %v3938 = vmul.f32 %v3933, %v3937
        %vm3939 = vweird.f32 %v2797
        %vm3940 = vweird.f32 %v3933
        %vm3941 = vmor %vm3939, %vm3940
        %v3942 = vsel %vm3941, %v3933, %v3938
        %v3943 = vrsqrt.pop %v2798
        %v3944 = vmul.f32 %v3943, %v2798
        %v3945 = vmul.f32 %v3944, %v3943
        %v3946 = vmul.f32 0.5, %v3945
        %v3947 = vsub.f32 1.5, %v3946
        %v3948 = vmul.f32 %v3943, %v3947
        %vm3949 = vweird.f32 %v2798
        %vm3950 = vweird.f32 %v3943
        %vm3951 = vmor %vm3949, %vm3950
        %v3952 = vsel %vm3951, %v3943, %v3948
        %v3953 = vrsqrt.pop %v2799
        %v3954 = vmul.f32 %v3953, %v2799
        %v3955 = vmul.f32 %v3954, %v3953
        %v3956 = vmul.f32 0.5, %v3955
        %v3957 = vsub.f32 1.5, %v3956
        %v3958 = vmul.f32 %v3953, %v3957
        %vm3959 = vweird.f32 %v2799
        %vm3960 = vweird.f32 %v3953
        %vm3961 = vmor %vm3959, %vm3960
        %v3962 = vsel %vm3961, %v3953, %v3958
        %v3963 = vrsqrt.pop %v2800
        %v3964 = vmul.f32 %v3963, %v2800
        %v3965 = vmul.f32 %v3964, %v3963
        %v3966 = vmul.f32 0.5, %v3965
        %v3967 = vsub.f32 1.5, %v3966
        %v3968 = vmul.f32 %v3963, %v3967
        %vm3969 = vweird.f32 %v2800
        %vm3970 = vweird.f32 %v3963
        %vm3971 = vmor %vm3969, %vm3970
        %v3972 = vsel %vm3971, %v3963, %v3968
        %v3973 = vrsqrt.pop %v2801
        %v3974 = vmul.f32 %v3973, %v2801
        %v3975 = vmul.f32 %v3974, %v3973
        %v3976 = vmul.f32 0.5, %v3975
        %v3977 = vsub.f32 1.5, %v3976
        %v3978 = vmul.f32 %v3973, %v3977
        %vm3979 = vweird.f32 %v2801
        %vm3980 = vweird.f32 %v3973
        %vm3981 = vmor %vm3979, %vm3980
        %v3982 = vsel %vm3981, %v3973, %v3978
        %v3983 = vrsqrt.pop %v2802
        %v3984 = vmul.f32 %v3983, %v2802
        %v3985 = vmul.f32 %v3984, %v3983
        %v3986 = vmul.f32 0.5, %v3985
        %v3987 = vsub.f32 1.5, %v3986
        %v3988 = vmul.f32 %v3983, %v3987
        %vm3989 = vweird.f32 %v2802
        %vm3990 = vweird.f32 %v3983
        %vm3991 = vmor %vm3989, %vm3990
        %v3992 = vsel %vm3991, %v3983, %v3988
        %v3993 = vrsqrt.pop %v2803
        %v3994 = vmul.f32 %v3993, %v2803
        %v3995 = vmul.f32 %v3994, %v3993
        %v3996 = vmul.f32 0.5, %v3995
        %v3997 = vsub.f32 1.5, %v3996
        %v3998 = vmul.f32 %v3993, %v3997
        %vm3999 = vweird.f32 %v2803
        %vm4000 = vweird.f32 %v3993
        %vm4001 = vmor %vm3999, %vm4000
        %v4002 = vsel %vm4001, %v3993, %v3998
        %v4003 = vrsqrt.pop %v2804
        %v4004 = vmul.f32 %v4003, %v2804
        %v4005 = vmul.f32 %v4004, %v4003
        %v4006 = vmul.f32 0.5, %v4005
        %v4007 = vsub.f32 1.5, %v4006
        %v4008 = vmul.f32 %v4003, %v4007
        %vm4009 = vweird.f32 %v2804
        %vm4010 = vweird.f32 %v4003
        %vm4011 = vmor %vm4009, %vm4010
        %v4012 = vsel %vm4011, %v4003, %v4008
        %v4013 = vrsqrt.pop %v2805
        %v4014 = vmul.f32 %v4013, %v2805
        %v4015 = vmul.f32 %v4014, %v4013
        %v4016 = vmul.f32 0.5, %v4015
        %v4017 = vsub.f32 1.5, %v4016
        %v4018 = vmul.f32 %v4013, %v4017
        %vm4019 = vweird.f32 %v2805
        %vm4020 = vweird.f32 %v4013
        %vm4021 = vmor %vm4019, %vm4020
        %v4022 = vsel %vm4021, %v4013, %v4018
        %v4023 = vrsqrt.pop %v2806
        %v4024 = vmul.f32 %v4023, %v2806
        %v4025 = vmul.f32 %v4024, %v4023
        %v4026 = vmul.f32 0.5, %v4025
        %v4027 = vsub.f32 1.5, %v4026
        %v4028 = vmul.f32 %v4023, %v4027
        %vm4029 = vweird.f32 %v2806
        %vm4030 = vweird.f32 %v4023
        %vm4031 = vmor %vm4029, %vm4030
        %v4032 = vsel %vm4031, %v4023, %v4028
        %v4033 = vrsqrt.pop %v2807
        %v4034 = vmul.f32 %v4033, %v2807
        %v4035 = vmul.f32 %v4034, %v4033
        %v4036 = vmul.f32 0.5, %v4035
        %v4037 = vsub.f32 1.5, %v4036
        %v4038 = vmul.f32 %v4033, %v4037
        %vm4039 = vweird.f32 %v2807
        %vm4040 = vweird.f32 %v4033
        %vm4041 = vmor %vm4039, %vm4040
        %v4042 = vsel %vm4041, %v4033, %v4038
        %v4043 = vrsqrt.pop %v2808
        %v4044 = vmul.f32 %v4043, %v2808
        %v4045 = vmul.f32 %v4044, %v4043
        %v4046 = vmul.f32 0.5, %v4045
        %v4047 = vsub.f32 1.5, %v4046
        %v4048 = vmul.f32 %v4043, %v4047
        %vm4049 = vweird.f32 %v2808
        %vm4050 = vweird.f32 %v4043
        %vm4051 = vmor %vm4049, %vm4050
        %v4052 = vsel %vm4051, %v4043, %v4048
        %v4053 = vrsqrt.pop %v2809
        %v4054 = vmul.f32 %v4053, %v2809
        %v4055 = vmul.f32 %v4054, %v4053
        %v4056 = vmul.f32 0.5, %v4055
        %v4057 = vsub.f32 1.5, %v4056
        %v4058 = vmul.f32 %v4053, %v4057
        %vm4059 = vweird.f32 %v2809
        %vm4060 = vweird.f32 %v4053
        %vm4061 = vmor %vm4059, %vm4060
        %v4062 = vsel %vm4061, %v4053, %v4058
        %v4063 = vrsqrt.pop %v2810
        %v4064 = vmul.f32 %v4063, %v2810
        %v4065 = vmul.f32 %v4064, %v4063
        %v4066 = vmul.f32 0.5, %v4065
        %v4067 = vsub.f32 1.5, %v4066
        %v4068 = vmul.f32 %v4063, %v4067
        %vm4069 = vweird.f32 %v2810
        %vm4070 = vweird.f32 %v4063
        %vm4071 = vmor %vm4069, %vm4070
        %v4072 = vsel %vm4071, %v4063, %v4068
        %v4073 = vrsqrt.pop %v2811
        %v4074 = vmul.f32 %v4073, %v2811
        %v4075 = vmul.f32 %v4074, %v4073
        %v4076 = vmul.f32 0.5, %v4075
        %v4077 = vsub.f32 1.5, %v4076
        %v4078 = vmul.f32 %v4073, %v4077
        %vm4079 = vweird.f32 %v2811
        %vm4080 = vweird.f32 %v4073
        %vm4081 = vmor %vm4079, %vm4080
        %v4082 = vsel %vm4081, %v4073, %v4078
        %v4083 = vrsqrt.pop %v2812
        %v4084 = vmul.f32 %v4083, %v2812
        %v4085 = vmul.f32 %v4084, %v4083
        %v4086 = vmul.f32 0.5, %v4085
        %v4087 = vsub.f32 1.5, %v4086
        %v4088 = vmul.f32 %v4083, %v4087
        %vm4089 = vweird.f32 %v2812
        %vm4090 = vweird.f32 %v4083
        %vm4091 = vmor %vm4089, %vm4090
        %v4092 = vsel %vm4091, %v4083, %v4088
        %v4093 = vmax.f32 %v2654, 1e-16
        %v4094 = vmax.f32 %v2656, 1e-16
        %v4095 = vmax.f32 %v2658, 1e-16
        %v4096 = vmax.f32 %v2660, 1e-16
        %v4097 = vmax.f32 %v2662, 1e-16
        %v4098 = vmax.f32 %v2664, 1e-16
        %v4099 = vmax.f32 %v2666, 1e-16
        %v4100 = vmax.f32 %v2668, 1e-16
        %v4101 = vmax.f32 %v2670, 1e-16
        %v4102 = vmax.f32 %v2672, 1e-16
        %v4103 = vmax.f32 %v2674, 1e-16
        %v4104 = vmax.f32 %v2676, 1e-16
        %v4105 = vmax.f32 %v2678, 1e-16
        %v4106 = vmax.f32 %v2680, 1e-16
        %v4107 = vmax.f32 %v2682, 1e-16
        %v4108 = vmax.f32 %v2684, 1e-16
        %v4109 = vrsqrt.pop %v4093
        %v4110 = vmul.f32 %v4109, %v4093
        %v4111 = vmul.f32 %v4110, %v4109
        %v4112 = vmul.f32 0.5, %v4111
        %v4113 = vsub.f32 1.5, %v4112
        %v4114 = vmul.f32 %v4109, %v4113
        %vm4115 = vweird.f32 %v4093
        %vm4116 = vweird.f32 %v4109
        %vm4117 = vmor %vm4115, %vm4116
        %v4118 = vsel %vm4117, %v4109, %v4114
        %v4119 = vrsqrt.pop %v4094
        %v4120 = vmul.f32 %v4119, %v4094
        %v4121 = vmul.f32 %v4120, %v4119
        %v4122 = vmul.f32 0.5, %v4121
        %v4123 = vsub.f32 1.5, %v4122
        %v4124 = vmul.f32 %v4119, %v4123
        %vm4125 = vweird.f32 %v4094
        %vm4126 = vweird.f32 %v4119
        %vm4127 = vmor %vm4125, %vm4126
        %v4128 = vsel %vm4127, %v4119, %v4124
        %v4129 = vrsqrt.pop %v4095
        %v4130 = vmul.f32 %v4129, %v4095
        %v4131 = vmul.f32 %v4130, %v4129
        %v4132 = vmul.f32 0.5, %v4131
        %v4133 = vsub.f32 1.5, %v4132
        %v4134 = vmul.f32 %v4129, %v4133
        %vm4135 = vweird.f32 %v4095
        %vm4136 = vweird.f32 %v4129
        %vm4137 = vmor %vm4135, %vm4136
        %v4138 = vsel %vm4137, %v4129, %v4134
        %v4139 = vrsqrt.pop %v4096
        %v4140 = vmul.f32 %v4139, %v4096
        %v4141 = vmul.f32 %v4140, %v4139
        %v4142 = vmul.f32 0.5, %v4141
        %v4143 = vsub.f32 1.5, %v4142
        %v4144 = vmul.f32 %v4139, %v4143
        %vm4145 = vweird.f32 %v4096
        %vm4146 = vweird.f32 %v4139
        %vm4147 = vmor %vm4145, %vm4146
        %v4148 = vsel %vm4147, %v4139, %v4144
        %v4149 = vrsqrt.pop %v4097
        %v4150 = vmul.f32 %v4149, %v4097
        %v4151 = vmul.f32 %v4150, %v4149
        %v4152 = vmul.f32 0.5, %v4151
        %v4153 = vsub.f32 1.5, %v4152
        %v4154 = vmul.f32 %v4149, %v4153
        %vm4155 = vweird.f32 %v4097
        %vm4156 = vweird.f32 %v4149
        %vm4157 = vmor %vm4155, %vm4156
        %v4158 = vsel %vm4157, %v4149, %v4154
        %v4159 = vrsqrt.pop %v4098
        %v4160 = vmul.f32 %v4159, %v4098
        %v4161 = vmul.f32 %v4160, %v4159
        %v4162 = vmul.f32 0.5, %v4161
        %v4163 = vsub.f32 1.5, %v4162
        %v4164 = vmul.f32 %v4159, %v4163
        %vm4165 = vweird.f32 %v4098
        %vm4166 = vweird.f32 %v4159
        %vm4167 = vmor %vm4165, %vm4166
        %v4168 = vsel %vm4167, %v4159, %v4164
        %v4169 = vrsqrt.pop %v4099
        %v4170 = vmul.f32 %v4169, %v4099
        %v4171 = vmul.f32 %v4170, %v4169
        %v4172 = vmul.f32 0.5, %v4171
        %v4173 = vsub.f32 1.5, %v4172
        %v4174 = vmul.f32 %v4169, %v4173
        %vm4175 = vweird.f32 %v4099
        %vm4176 = vweird.f32 %v4169
        %vm4177 = vmor %vm4175, %vm4176
        %v4178 = vsel %vm4177, %v4169, %v4174
        %v4179 = vrsqrt.pop %v4100
        %v4180 = vmul.f32 %v4179, %v4100
        %v4181 = vmul.f32 %v4180, %v4179
        %v4182 = vmul.f32 0.5, %v4181
        %v4183 = vsub.f32 1.5, %v4182
        %v4184 = vmul.f32 %v4179, %v4183
        %vm4185 = vweird.f32 %v4100
        %vm4186 = vweird.f32 %v4179
        %vm4187 = vmor %vm4185, %vm4186
        %v4188 = vsel %vm4187, %v4179, %v4184
        %v4189 = vrsqrt.pop %v4101
        %v4190 = vmul.f32 %v4189, %v4101
        %v4191 = vmul.f32 %v4190, %v4189
        %v4192 = vmul.f32 0.5, %v4191
        %v4193 = vsub.f32 1.5, %v4192
        %v4194 = vmul.f32 %v4189, %v4193
        %vm4195 = vweird.f32 %v4101
        %vm4196 = vweird.f32 %v4189
        %vm4197 = vmor %vm4195, %vm4196
        %v4198 = vsel %vm4197, %v4189, %v4194
        %v4199 = vrsqrt.pop %v4102
        %v4200 = vmul.f32 %v4199, %v4102
        %v4201 = vmul.f32 %v4200, %v4199
        %v4202 = vmul.f32 0.5, %v4201
        %v4203 = vsub.f32 1.5, %v4202
        %v4204 = vmul.f32 %v4199, %v4203
        %vm4205 = vweird.f32 %v4102
        %vm4206 = vweird.f32 %v4199
        %vm4207 = vmor %vm4205, %vm4206
        %v4208 = vsel %vm4207, %v4199, %v4204
        %v4209 = vrsqrt.pop %v4103
        %v4210 = vmul.f32 %v4209, %v4103
        %v4211 = vmul.f32 %v4210, %v4209
        %v4212 = vmul.f32 0.5, %v4211
        %v4213 = vsub.f32 1.5, %v4212
        %v4214 = vmul.f32 %v4209, %v4213
        %vm4215 = vweird.f32 %v4103
        %vm4216 = vweird.f32 %v4209
        %vm4217 = vmor %vm4215, %vm4216
        %v4218 = vsel %vm4217, %v4209, %v4214
        %v4219 = vrsqrt.pop %v4104
        %v4220 = vmul.f32 %v4219, %v4104
        %v4221 = vmul.f32 %v4220, %v4219
        %v4222 = vmul.f32 0.5, %v4221
        %v4223 = vsub.f32 1.5, %v4222
        %v4224 = vmul.f32 %v4219, %v4223
        %vm4225 = vweird.f32 %v4104
        %vm4226 = vweird.f32 %v4219
        %vm4227 = vmor %vm4225, %vm4226
        %v4228 = vsel %vm4227, %v4219, %v4224
        %v4229 = vrsqrt.pop %v4105
        %v4230 = vmul.f32 %v4229, %v4105
        %v4231 = vmul.f32 %v4230, %v4229
        %v4232 = vmul.f32 0.5, %v4231
        %v4233 = vsub.f32 1.5, %v4232
        %v4234 = vmul.f32 %v4229, %v4233
        %vm4235 = vweird.f32 %v4105
        %vm4236 = vweird.f32 %v4229
        %vm4237 = vmor %vm4235, %vm4236
        %v4238 = vsel %vm4237, %v4229, %v4234
        %v4239 = vrsqrt.pop %v4106
        %v4240 = vmul.f32 %v4239, %v4106
        %v4241 = vmul.f32 %v4240, %v4239
        %v4242 = vmul.f32 0.5, %v4241
        %v4243 = vsub.f32 1.5, %v4242
        %v4244 = vmul.f32 %v4239, %v4243
        %vm4245 = vweird.f32 %v4106
        %vm4246 = vweird.f32 %v4239
        %vm4247 = vmor %vm4245, %vm4246
        %v4248 = vsel %vm4247, %v4239, %v4244
        %v4249 = vrsqrt.pop %v4107
        %v4250 = vmul.f32 %v4249, %v4107
        %v4251 = vmul.f32 %v4250, %v4249
        %v4252 = vmul.f32 0.5, %v4251
        %v4253 = vsub.f32 1.5, %v4252
        %v4254 = vmul.f32 %v4249, %v4253
        %vm4255 = vweird.f32 %v4107
        %vm4256 = vweird.f32 %v4249
        %vm4257 = vmor %vm4255, %vm4256
        %v4258 = vsel %vm4257, %v4249, %v4254
        %v4259 = vrsqrt.pop %v4108
        %v4260 = vmul.f32 %v4259, %v4108
        %v4261 = vmul.f32 %v4260, %v4259
        %v4262 = vmul.f32 0.5, %v4261
        %v4263 = vsub.f32 1.5, %v4262
        %v4264 = vmul.f32 %v4259, %v4263
        %vm4265 = vweird.f32 %v4108
        %vm4266 = vweird.f32 %v4259
        %vm4267 = vmor %vm4265, %vm4266
        %v4268 = vsel %vm4267, %v4259, %v4264
        %v4269 = vmul.f32 %v1998, %v2822
        %v4270 = vmul.f32 %v2000, %v2832
        %v4271 = vmul.f32 %v2002, %v2842
        %v4272 = vmul.f32 %v2004, %v2852
        %v4273 = vmul.f32 %v2006, %v2862
        %v4274 = vmul.f32 %v2008, %v2872
        %v4275 = vmul.f32 %v2010, %v2882
        %v4276 = vmul.f32 %v2012, %v2892
        %v4277 = vmul.f32 %v2014, %v2902
        %v4278 = vmul.f32 %v2016, %v2912
        %v4279 = vmul.f32 %v2018, %v2922
        %v4280 = vmul.f32 %v2020, %v2932
        %v4281 = vmul.f32 %v2022, %v2942
        %v4282 = vmul.f32 %v2024, %v2952
        %v4283 = vmul.f32 %v2026, %v2962
        %v4284 = vmul.f32 %v2028, %v2972
        %v4285 = vmul.f32 %v2030, %v2982
        %v4286 = vmul.f32 %v2032, %v2992
        %v4287 = vmul.f32 %v2034, %v3002
        %v4288 = vmul.f32 %v2036, %v3012
        %v4289 = vmul.f32 %v2038, %v3022
        %v4290 = vmul.f32 %v2040, %v3032
        %v4291 = vmul.f32 %v2042, %v3042
        %v4292 = vmul.f32 %v2044, %v3052
        %v4293 = vmul.f32 %v2046, %v3062
        %v4294 = vmul.f32 %v2048, %v3072
        %v4295 = vmul.f32 %v2050, %v3082
        %v4296 = vmul.f32 %v2052, %v3092
        %v4297 = vmul.f32 %v2054, %v3102
        %v4298 = vmul.f32 %v2056, %v3112
        %v4299 = vmul.f32 %v2058, %v3122
        %v4300 = vmul.f32 %v2060, %v3132
        %v4301 = vmul.f32 %v2062, %v3142
        %v4302 = vmul.f32 %v2064, %v3152
        %v4303 = vmul.f32 %v2066, %v3162
        %v4304 = vmul.f32 %v2068, %v3172
        %v4305 = vmul.f32 %v2070, %v3182
        %v4306 = vmul.f32 %v2072, %v3192
        %v4307 = vmul.f32 %v2074, %v3202
        %v4308 = vmul.f32 %v2076, %v3212
        %v4309 = vmul.f32 %v2078, %v3222
        %v4310 = vmul.f32 %v2080, %v3232
        %v4311 = vmul.f32 %v2082, %v3242
        %v4312 = vmul.f32 %v2084, %v3252
        %v4313 = vmul.f32 %v2086, %v3262
        %v4314 = vmul.f32 %v2088, %v3272
        %v4315 = vmul.f32 %v2090, %v3282
        %v4316 = vmul.f32 %v2092, %v3292
        %v4317 = vmul.f32 %v2094, %v3302
        %v4318 = vmul.f32 %v2096, %v3312
        %v4319 = vmul.f32 %v2098, %v3322
        %v4320 = vmul.f32 %v2100, %v3332
        %v4321 = vmul.f32 %v2102, %v3342
        %v4322 = vmul.f32 %v2104, %v3352
        %v4323 = vmul.f32 %v2106, %v3362
        %v4324 = vmul.f32 %v2108, %v3372
        %v4325 = vmul.f32 %v2110, %v3382
        %v4326 = vmul.f32 %v2112, %v3392
        %v4327 = vmul.f32 %v2114, %v3402
        %v4328 = vmul.f32 %v2116, %v3412
        %v4329 = vmul.f32 %v2118, %v3422
        %v4330 = vmul.f32 %v2120, %v3432
        %v4331 = vmul.f32 %v2122, %v3442
        %v4332 = vmul.f32 %v2124, %v3452
        %v4333 = vmul.f32 %v2126, %v3462
        %v4334 = vmul.f32 %v2128, %v3472
        %v4335 = vmul.f32 %v2130, %v3482
        %v4336 = vmul.f32 %v2132, %v3492
        %v4337 = vmul.f32 %v2134, %v3502
        %v4338 = vmul.f32 %v2136, %v3512
        %v4339 = vmul.f32 %v2138, %v3522
        %v4340 = vmul.f32 %v2140, %v3532
        %v4341 = vmul.f32 %v2142, %v3542
        %v4342 = vmul.f32 %v2144, %v3552
        %v4343 = vmul.f32 %v2146, %v3562
        %v4344 = vmul.f32 %v2148, %v3572
        %v4345 = vmul.f32 %v2150, %v3582
        %v4346 = vmul.f32 %v2152, %v3592
        %v4347 = vmul.f32 %v2154, %v3602
        %v4348 = vmul.f32 %v2156, %v3612
        %v4349 = vmul.f32 %v2158, %v3622
        %v4350 = vmul.f32 %v2160, %v3632
        %v4351 = vmul.f32 %v2162, %v3642
        %v4352 = vmul.f32 %v2164, %v3652
        %v4353 = vmul.f32 %v2166, %v3662
        %v4354 = vmul.f32 %v2168, %v3672
        %v4355 = vmul.f32 %v2170, %v3682
        %v4356 = vmul.f32 %v2172, %v3692
        %v4357 = vmul.f32 %v2174, %v3702
        %v4358 = vmul.f32 %v2176, %v3712
        %v4359 = vmul.f32 %v2178, %v3722
        %v4360 = vmul.f32 %v2180, %v3732
        %v4361 = vmul.f32 %v2182, %v3742
        %v4362 = vmul.f32 %v2184, %v3752
        %v4363 = vmul.f32 %v2186, %v3762
        %v4364 = vmul.f32 %v2188, %v3772
        %v4365 = vmul.f32 %v2190, %v3782
        %v4366 = vmul.f32 %v2192, %v3792
        %v4367 = vmul.f32 %v2194, %v3802
        %v4368 = vmul.f32 %v2196, %v3812
        %v4369 = vmul.f32 %v2198, %v3822
        %v4370 = vmul.f32 %v2200, %v3832
        %v4371 = vmul.f32 %v2202, %v3842
        %v4372 = vmul.f32 %v2204, %v3852
        %v4373 = vmul.f32 %v2206, %v3862
        %v4374 = vmul.f32 %v2208, %v3872
        %v4375 = vmul.f32 %v2210, %v3882
        %v4376 = vmul.f32 %v2212, %v3892
        %v4377 = vmul.f32 %v2214, %v3902
        %v4378 = vmul.f32 %v2216, %v3912
        %v4379 = vmul.f32 %v2218, %v3922
        %v4380 = vmul.f32 %v2220, %v3932
        %v4381 = vmul.f32 %v2222, %v3942
        %v4382 = vmul.f32 %v2224, %v3952
        %v4383 = vmul.f32 %v2226, %v3962
        %v4384 = vmul.f32 %v2228, %v3972
        %v4385 = vmul.f32 %v2230, %v3982
        %v4386 = vmul.f32 %v2232, %v3992
        %v4387 = vmul.f32 %v2234, %v4002
        %v4388 = vmul.f32 %v2236, %v4012
        %v4389 = vmul.f32 %v2238, %v4022
        %v4390 = vmul.f32 %v2240, %v4032
        %v4391 = vmul.f32 %v2242, %v4042
        %v4392 = vmul.f32 %v2244, %v4052
        %v4393 = vmul.f32 %v2246, %v4062
        %v4394 = vmul.f32 %v2248, %v4072
        %v4395 = vmul.f32 %v2250, %v4082
        %v4396 = vmul.f32 %v2252, %v4092
        %v4413 = vperm.slane %v4118, 0
        %v4414 = vperm.slane %v4118, 1
        %v4415 = vperm.slane %v4118, 2
        %v4416 = vperm.slane %v4118, 3
        %v4417 = vperm.slane %v4118, 4
        %v4418 = vperm.slane %v4118, 5
        %v4419 = vperm.slane %v4118, 6
        %v4420 = vperm.slane %v4118, 7
        %v4421 = vperm.slane %v4128, 0
        %v4422 = vperm.slane %v4128, 1
        %v4423 = vperm.slane %v4128, 2
        %v4424 = vperm.slane %v4128, 3
        %v4425 = vperm.slane %v4128, 4
        %v4426 = vperm.slane %v4128, 5
        %v4427 = vperm.slane %v4128, 6
        %v4428 = vperm.slane %v4128, 7
        %v4429 = vperm.slane %v4138, 0
        %v4430 = vperm.slane %v4138, 1
        %v4431 = vperm.slane %v4138, 2
        %v4432 = vperm.slane %v4138, 3
        %v4433 = vperm.slane %v4138, 4
        %v4434 = vperm.slane %v4138, 5
        %v4435 = vperm.slane %v4138, 6
        %v4436 = vperm.slane %v4138, 7
        %v4437 = vperm.slane %v4148, 0
        %v4438 = vperm.slane %v4148, 1
        %v4439 = vperm.slane %v4148, 2
        %v4440 = vperm.slane %v4148, 3
        %v4441 = vperm.slane %v4148, 4
        %v4442 = vperm.slane %v4148, 5
        %v4443 = vperm.slane %v4148, 6
        %v4444 = vperm.slane %v4148, 7
        %v4445 = vperm.slane %v4158, 0
        %v4446 = vperm.slane %v4158, 1
        %v4447 = vperm.slane %v4158, 2
        %v4448 = vperm.slane %v4158, 3
        %v4449 = vperm.slane %v4158, 4
        %v4450 = vperm.slane %v4158, 5
        %v4451 = vperm.slane %v4158, 6
        %v4452 = vperm.slane %v4158, 7
        %v4453 = vperm.slane %v4168, 0
        %v4454 = vperm.slane %v4168, 1
        %v4455 = vperm.slane %v4168, 2
        %v4456 = vperm.slane %v4168, 3
        %v4457 = vperm.slane %v4168, 4
        %v4458 = vperm.slane %v4168, 5
        %v4459 = vperm.slane %v4168, 6
        %v4460 = vperm.slane %v4168, 7
        %v4461 = vperm.slane %v4178, 0
        %v4462 = vperm.slane %v4178, 1
        %v4463 = vperm.slane %v4178, 2
        %v4464 = vperm.slane %v4178, 3
        %v4465 = vperm.slane %v4178, 4
        %v4466 = vperm.slane %v4178, 5
        %v4467 = vperm.slane %v4178, 6
        %v4468 = vperm.slane %v4178, 7
        %v4469 = vperm.slane %v4188, 0
        %v4470 = vperm.slane %v4188, 1
        %v4471 = vperm.slane %v4188, 2
        %v4472 = vperm.slane %v4188, 3
        %v4473 = vperm.slane %v4188, 4
        %v4474 = vperm.slane %v4188, 5
        %v4475 = vperm.slane %v4188, 6
        %v4476 = vperm.slane %v4188, 7
        %v4477 = vperm.slane %v4198, 0
        %v4478 = vperm.slane %v4198, 1
        %v4479 = vperm.slane %v4198, 2
        %v4480 = vperm.slane %v4198, 3
        %v4481 = vperm.slane %v4198, 4
        %v4482 = vperm.slane %v4198, 5
        %v4483 = vperm.slane %v4198, 6
        %v4484 = vperm.slane %v4198, 7
        %v4485 = vperm.slane %v4208, 0
        %v4486 = vperm.slane %v4208, 1
        %v4487 = vperm.slane %v4208, 2
        %v4488 = vperm.slane %v4208, 3
        %v4489 = vperm.slane %v4208, 4
        %v4490 = vperm.slane %v4208, 5
        %v4491 = vperm.slane %v4208, 6
        %v4492 = vperm.slane %v4208, 7
        %v4493 = vperm.slane %v4218, 0
        %v4494 = vperm.slane %v4218, 1
        %v4495 = vperm.slane %v4218, 2
        %v4496 = vperm.slane %v4218, 3
        %v4497 = vperm.slane %v4218, 4
        %v4498 = vperm.slane %v4218, 5
        %v4499 = vperm.slane %v4218, 6
        %v4500 = vperm.slane %v4218, 7
        %v4501 = vperm.slane %v4228, 0
        %v4502 = vperm.slane %v4228, 1
        %v4503 = vperm.slane %v4228, 2
        %v4504 = vperm.slane %v4228, 3
        %v4505 = vperm.slane %v4228, 4
        %v4506 = vperm.slane %v4228, 5
        %v4507 = vperm.slane %v4228, 6
        %v4508 = vperm.slane %v4228, 7
        %v4509 = vperm.slane %v4238, 0
        %v4510 = vperm.slane %v4238, 1
        %v4511 = vperm.slane %v4238, 2
        %v4512 = vperm.slane %v4238, 3
        %v4513 = vperm.slane %v4238, 4
        %v4514 = vperm.slane %v4238, 5
        %v4515 = vperm.slane %v4238, 6
        %v4516 = vperm.slane %v4238, 7
        %v4517 = vperm.slane %v4248, 0
        %v4518 = vperm.slane %v4248, 1
        %v4519 = vperm.slane %v4248, 2
        %v4520 = vperm.slane %v4248, 3
        %v4521 = vperm.slane %v4248, 4
        %v4522 = vperm.slane %v4248, 5
        %v4523 = vperm.slane %v4248, 6
        %v4524 = vperm.slane %v4248, 7
        %v4525 = vperm.slane %v4258, 0
        %v4526 = vperm.slane %v4258, 1
        %v4527 = vperm.slane %v4258, 2
        %v4528 = vperm.slane %v4258, 3
        %v4529 = vperm.slane %v4258, 4
        %v4530 = vperm.slane %v4258, 5
        %v4531 = vperm.slane %v4258, 6
        %v4532 = vperm.slane %v4258, 7
        %v4533 = vperm.slane %v4268, 0
        %v4534 = vperm.slane %v4268, 1
        %v4535 = vperm.slane %v4268, 2
        %v4536 = vperm.slane %v4268, 3
        %v4537 = vperm.slane %v4268, 4
        %v4538 = vperm.slane %v4268, 5
        %v4539 = vperm.slane %v4268, 6
        %v4540 = vperm.slane %v4268, 7
        %v4669 = vmul.f32 %v4269, %v4413
        %v4670 = vmul.f32 %v4270, %v4414
        %v4671 = vmul.f32 %v4271, %v4415
        %v4672 = vmul.f32 %v4272, %v4416
        %v4673 = vmul.f32 %v4273, %v4417
        %v4674 = vmul.f32 %v4274, %v4418
        %v4675 = vmul.f32 %v4275, %v4419
        %v4676 = vmul.f32 %v4276, %v4420
        %v4677 = vmul.f32 %v4277, %v4421
        %v4678 = vmul.f32 %v4278, %v4422
        %v4679 = vmul.f32 %v4279, %v4423
        %v4680 = vmul.f32 %v4280, %v4424
        %v4681 = vmul.f32 %v4281, %v4425
        %v4682 = vmul.f32 %v4282, %v4426
        %v4683 = vmul.f32 %v4283, %v4427
        %v4684 = vmul.f32 %v4284, %v4428
        %v4685 = vmul.f32 %v4285, %v4429
        %v4686 = vmul.f32 %v4286, %v4430
        %v4687 = vmul.f32 %v4287, %v4431
        %v4688 = vmul.f32 %v4288, %v4432
        %v4689 = vmul.f32 %v4289, %v4433
        %v4690 = vmul.f32 %v4290, %v4434
        %v4691 = vmul.f32 %v4291, %v4435
        %v4692 = vmul.f32 %v4292, %v4436
        %v4693 = vmul.f32 %v4293, %v4437
        %v4694 = vmul.f32 %v4294, %v4438
        %v4695 = vmul.f32 %v4295, %v4439
        %v4696 = vmul.f32 %v4296, %v4440
        %v4697 = vmul.f32 %v4297, %v4441
        %v4698 = vmul.f32 %v4298, %v4442
        %v4699 = vmul.f32 %v4299, %v4443
        %v4700 = vmul.f32 %v4300, %v4444
        %v4701 = vmul.f32 %v4301, %v4445
        %v4702 = vmul.f32 %v4302, %v4446
        %v4703 = vmul.f32 %v4303, %v4447
        %v4704 = vmul.f32 %v4304, %v4448
        %v4705 = vmul.f32 %v4305, %v4449
        %v4706 = vmul.f32 %v4306, %v4450
        %v4707 = vmul.f32 %v4307, %v4451
        %v4708 = vmul.f32 %v4308, %v4452
        %v4709 = vmul.f32 %v4309, %v4453
        %v4710 = vmul.f32 %v4310, %v4454
        %v4711 = vmul.f32 %v4311, %v4455
        %v4712 = vmul.f32 %v4312, %v4456
        %v4713 = vmul.f32 %v4313, %v4457
        %v4714 = vmul.f32 %v4314, %v4458
        %v4715 = vmul.f32 %v4315, %v4459
        %v4716 = vmul.f32 %v4316, %v4460
        %v4717 = vmul.f32 %v4317, %v4461
        %v4718 = vmul.f32 %v4318, %v4462
        %v4719 = vmul.f32 %v4319, %v4463
        %v4720 = vmul.f32 %v4320, %v4464
        %v4721 = vmul.f32 %v4321, %v4465
        %v4722 = vmul.f32 %v4322, %v4466
        %v4723 = vmul.f32 %v4323, %v4467
        %v4724 = vmul.f32 %v4324, %v4468
        %v4725 = vmul.f32 %v4325, %v4469
        %v4726 = vmul.f32 %v4326, %v4470
        %v4727 = vmul.f32 %v4327, %v4471
        %v4728 = vmul.f32 %v4328, %v4472
        %v4729 = vmul.f32 %v4329, %v4473
        %v4730 = vmul.f32 %v4330, %v4474
        %v4731 = vmul.f32 %v4331, %v4475
        %v4732 = vmul.f32 %v4332, %v4476
        %v4733 = vmul.f32 %v4333, %v4477
        %v4734 = vmul.f32 %v4334, %v4478
        %v4735 = vmul.f32 %v4335, %v4479
        %v4736 = vmul.f32 %v4336, %v4480
        %v4737 = vmul.f32 %v4337, %v4481
        %v4738 = vmul.f32 %v4338, %v4482
        %v4739 = vmul.f32 %v4339, %v4483
        %v4740 = vmul.f32 %v4340, %v4484
        %v4741 = vmul.f32 %v4341, %v4485
        %v4742 = vmul.f32 %v4342, %v4486
        %v4743 = vmul.f32 %v4343, %v4487
        %v4744 = vmul.f32 %v4344, %v4488
        %v4745 = vmul.f32 %v4345, %v4489
        %v4746 = vmul.f32 %v4346, %v4490
        %v4747 = vmul.f32 %v4347, %v4491
        %v4748 = vmul.f32 %v4348, %v4492
        %v4749 = vmul.f32 %v4349, %v4493
        %v4750 = vmul.f32 %v4350, %v4494
        %v4751 = vmul.f32 %v4351, %v4495
        %v4752 = vmul.f32 %v4352, %v4496
        %v4753 = vmul.f32 %v4353, %v4497
        %v4754 = vmul.f32 %v4354, %v4498
        %v4755 = vmul.f32 %v4355, %v4499
        %v4756 = vmul.f32 %v4356, %v4500
        %v4757 = vmul.f32 %v4357, %v4501
        %v4758 = vmul.f32 %v4358, %v4502
        %v4759 = vmul.f32 %v4359, %v4503
        %v4760 = vmul.f32 %v4360, %v4504
        %v4761 = vmul.f32 %v4361, %v4505
        %v4762 = vmul.f32 %v4362, %v4506
        %v4763 = vmul.f32 %v4363, %v4507
        %v4764 = vmul.f32 %v4364, %v4508
        %v4765 = vmul.f32 %v4365, %v4509
        %v4766 = vmul.f32 %v4366, %v4510
        %v4767 = vmul.f32 %v4367, %v4511
        %v4768 = vmul.f32 %v4368, %v4512
        %v4769 = vmul.f32 %v4369, %v4513
        %v4770 = vmul.f32 %v4370, %v4514
        %v4771 = vmul.f32 %v4371, %v4515
        %v4772 = vmul.f32 %v4372, %v4516
        %v4773 = vmul.f32 %v4373, %v4517
        %v4774 = vmul.f32 %v4374, %v4518
        %v4775 = vmul.f32 %v4375, %v4519
        %v4776 = vmul.f32 %v4376, %v4520
        %v4777 = vmul.f32 %v4377, %v4521
        %v4778 = vmul.f32 %v4378, %v4522
        %v4779 = vmul.f32 %v4379, %v4523
        %v4780 = vmul.f32 %v4380, %v4524
        %v4781 = vmul.f32 %v4381, %v4525
        %v4782 = vmul.f32 %v4382, %v4526
        %v4783 = vmul.f32 %v4383, %v4527
        %v4784 = vmul.f32 %v4384, %v4528
        %v4785 = vmul.f32 %v4385, %v4529
        %v4786 = vmul.f32 %v4386, %v4530
        %v4787 = vmul.f32 %v4387, %v4531
        %v4788 = vmul.f32 %v4388, %v4532
        %v4789 = vmul.f32 %v4389, %v4533
        %v4790 = vmul.f32 %v4390, %v4534
        %v4791 = vmul.f32 %v4391, %v4535
        %v4792 = vmul.f32 %v4392, %v4536
        %v4793 = vmul.f32 %v4393, %v4537
        %v4794 = vmul.f32 %v4394, %v4538
        %v4795 = vmul.f32 %v4395, %v4539
        %v4796 = vmul.f32 %v4396, %v4540
        %v4797 = vld [vmem:[%s6] sm:$0x1]
        %v4799 = vperm.slane %v4797, 0
        %v4800 = vlaneseq
        %v4801 = vshrl.u32 %v4800, 7
        %4803 = vset.pattern.permute.xlu0 %v4801
        %4804 = vperm.xlu0 %4803, %v4799
        %v4805 = vpop.permute.xlu0 %4804
        %v4807 = vmul.f32 %v4669, %v4805
        %v4808 = vmul.f32 %v4670, %v4805
        %v4809 = vmul.f32 %v4671, %v4805
        %v4810 = vmul.f32 %v4672, %v4805
        %v4811 = vmul.f32 %v4673, %v4805
        %v4812 = vmul.f32 %v4674, %v4805
        %v4813 = vmul.f32 %v4675, %v4805
        %v4814 = vmul.f32 %v4676, %v4805
        %v4815 = vmul.f32 %v4677, %v4805
        %v4816 = vmul.f32 %v4678, %v4805
        %v4817 = vmul.f32 %v4679, %v4805
        %v4818 = vmul.f32 %v4680, %v4805
        %v4819 = vmul.f32 %v4681, %v4805
        %v4820 = vmul.f32 %v4682, %v4805
        %v4821 = vmul.f32 %v4683, %v4805
        %v4822 = vmul.f32 %v4684, %v4805
        %v4823 = vmul.f32 %v4685, %v4805
        %v4824 = vmul.f32 %v4686, %v4805
        %v4825 = vmul.f32 %v4687, %v4805
        %v4826 = vmul.f32 %v4688, %v4805
        %v4827 = vmul.f32 %v4689, %v4805
        %v4828 = vmul.f32 %v4690, %v4805
        %v4829 = vmul.f32 %v4691, %v4805
        %v4830 = vmul.f32 %v4692, %v4805
        %v4831 = vmul.f32 %v4693, %v4805
        %v4832 = vmul.f32 %v4694, %v4805
        %v4833 = vmul.f32 %v4695, %v4805
        %v4834 = vmul.f32 %v4696, %v4805
        %v4835 = vmul.f32 %v4697, %v4805
        %v4836 = vmul.f32 %v4698, %v4805
        %v4837 = vmul.f32 %v4699, %v4805
        %v4838 = vmul.f32 %v4700, %v4805
        %v4839 = vmul.f32 %v4701, %v4805
        %v4840 = vmul.f32 %v4702, %v4805
        %v4841 = vmul.f32 %v4703, %v4805
        %v4842 = vmul.f32 %v4704, %v4805
        %v4843 = vmul.f32 %v4705, %v4805
        %v4844 = vmul.f32 %v4706, %v4805
        %v4845 = vmul.f32 %v4707, %v4805
        %v4846 = vmul.f32 %v4708, %v4805
        %v4847 = vmul.f32 %v4709, %v4805
        %v4848 = vmul.f32 %v4710, %v4805
        %v4849 = vmul.f32 %v4711, %v4805
        %v4850 = vmul.f32 %v4712, %v4805
        %v4851 = vmul.f32 %v4713, %v4805
        %v4852 = vmul.f32 %v4714, %v4805
        %v4853 = vmul.f32 %v4715, %v4805
        %v4854 = vmul.f32 %v4716, %v4805
        %v4855 = vmul.f32 %v4717, %v4805
        %v4856 = vmul.f32 %v4718, %v4805
        %v4857 = vmul.f32 %v4719, %v4805
        %v4858 = vmul.f32 %v4720, %v4805
        %v4859 = vmul.f32 %v4721, %v4805
        %v4860 = vmul.f32 %v4722, %v4805
        %v4861 = vmul.f32 %v4723, %v4805
        %v4862 = vmul.f32 %v4724, %v4805
        %v4863 = vmul.f32 %v4725, %v4805
        %v4864 = vmul.f32 %v4726, %v4805
        %v4865 = vmul.f32 %v4727, %v4805
        %v4866 = vmul.f32 %v4728, %v4805
        %v4867 = vmul.f32 %v4729, %v4805
        %v4868 = vmul.f32 %v4730, %v4805
        %v4869 = vmul.f32 %v4731, %v4805
        %v4870 = vmul.f32 %v4732, %v4805
        %v4871 = vmul.f32 %v4733, %v4805
        %v4872 = vmul.f32 %v4734, %v4805
        %v4873 = vmul.f32 %v4735, %v4805
        %v4874 = vmul.f32 %v4736, %v4805
        %v4875 = vmul.f32 %v4737, %v4805
        %v4876 = vmul.f32 %v4738, %v4805
        %v4877 = vmul.f32 %v4739, %v4805
        %v4878 = vmul.f32 %v4740, %v4805
        %v4879 = vmul.f32 %v4741, %v4805
        %v4880 = vmul.f32 %v4742, %v4805
        %v4881 = vmul.f32 %v4743, %v4805
        %v4882 = vmul.f32 %v4744, %v4805
        %v4883 = vmul.f32 %v4745, %v4805
        %v4884 = vmul.f32 %v4746, %v4805
        %v4885 = vmul.f32 %v4747, %v4805
        %v4886 = vmul.f32 %v4748, %v4805
        %v4887 = vmul.f32 %v4749, %v4805
        %v4888 = vmul.f32 %v4750, %v4805
        %v4889 = vmul.f32 %v4751, %v4805
        %v4890 = vmul.f32 %v4752, %v4805
        %v4891 = vmul.f32 %v4753, %v4805
        %v4892 = vmul.f32 %v4754, %v4805
        %v4893 = vmul.f32 %v4755, %v4805
        %v4894 = vmul.f32 %v4756, %v4805
        %v4895 = vmul.f32 %v4757, %v4805
        %v4896 = vmul.f32 %v4758, %v4805
        %v4897 = vmul.f32 %v4759, %v4805
        %v4898 = vmul.f32 %v4760, %v4805
        %v4899 = vmul.f32 %v4761, %v4805
        %v4900 = vmul.f32 %v4762, %v4805
        %v4901 = vmul.f32 %v4763, %v4805
        %v4902 = vmul.f32 %v4764, %v4805
        %v4903 = vmul.f32 %v4765, %v4805
        %v4904 = vmul.f32 %v4766, %v4805
        %v4905 = vmul.f32 %v4767, %v4805
        %v4906 = vmul.f32 %v4768, %v4805
        %v4907 = vmul.f32 %v4769, %v4805
        %v4908 = vmul.f32 %v4770, %v4805
        %v4909 = vmul.f32 %v4771, %v4805
        %v4910 = vmul.f32 %v4772, %v4805
        %v4911 = vmul.f32 %v4773, %v4805
        %v4912 = vmul.f32 %v4774, %v4805
        %v4913 = vmul.f32 %v4775, %v4805
        %v4914 = vmul.f32 %v4776, %v4805
        %v4915 = vmul.f32 %v4777, %v4805
        %v4916 = vmul.f32 %v4778, %v4805
        %v4917 = vmul.f32 %v4779, %v4805
        %v4918 = vmul.f32 %v4780, %v4805
        %v4919 = vmul.f32 %v4781, %v4805
        %v4920 = vmul.f32 %v4782, %v4805
        %v4921 = vmul.f32 %v4783, %v4805
        %v4922 = vmul.f32 %v4784, %v4805
        %v4923 = vmul.f32 %v4785, %v4805
        %v4924 = vmul.f32 %v4786, %v4805
        %v4925 = vmul.f32 %v4787, %v4805
        %v4926 = vmul.f32 %v4788, %v4805
        %v4927 = vmul.f32 %v4789, %v4805
        %v4928 = vmul.f32 %v4790, %v4805
        %v4929 = vmul.f32 %v4791, %v4805
        %v4930 = vmul.f32 %v4792, %v4805
        %v4931 = vmul.f32 %v4793, %v4805
        %v4932 = vmul.f32 %v4794, %v4805
        %v4933 = vmul.f32 %v4795, %v4805
        %v4934 = vmul.f32 %v4796, %v4805
        %v4935 = vld [vmem:[%s394] sm:$0xff]
        %v4936 = vld [vmem:[%s394 + $0x8] sm:$0xff]
        %v4937 = vld [vmem:[%s394 + $0x10] sm:$0xff]
        %v4938 = vld [vmem:[%s394 + $0x18] sm:$0xff]
        %v4939 = vld [vmem:[%s394 + $0x20] sm:$0xff]
        %v4940 = vld [vmem:[%s394 + $0x28] sm:$0xff]
        %v4941 = vld [vmem:[%s394 + $0x30] sm:$0xff]
        %v4942 = vld [vmem:[%s394 + $0x38] sm:$0xff]
        %v4943 = vld [vmem:[%s394 + $0x40] sm:$0xff]
        %v4944 = vld [vmem:[%s394 + $0x48] sm:$0xff]
        %v4945 = vld [vmem:[%s394 + $0x50] sm:$0xff]
        %v4946 = vld [vmem:[%s394 + $0x58] sm:$0xff]
        %v4947 = vld [vmem:[%s394 + $0x60] sm:$0xff]
        %v4948 = vld [vmem:[%s394 + $0x68] sm:$0xff]
        %v4949 = vld [vmem:[%s394 + $0x70] sm:$0xff]
        %v4950 = vld [vmem:[%s394 + $0x78] sm:$0xff]
        %vm4951 = vcmp.eq.f32.partialorder %v4935, 0.0
        %vm4952 = vcmp.eq.f32.partialorder %v4936, 0.0
        %vm4953 = vcmp.eq.f32.partialorder %v4937, 0.0
        %vm4954 = vcmp.eq.f32.partialorder %v4938, 0.0
        %vm4955 = vcmp.eq.f32.partialorder %v4939, 0.0
        %vm4956 = vcmp.eq.f32.partialorder %v4940, 0.0
        %vm4957 = vcmp.eq.f32.partialorder %v4941, 0.0
        %vm4958 = vcmp.eq.f32.partialorder %v4942, 0.0
        %vm4959 = vcmp.eq.f32.partialorder %v4943, 0.0
        %vm4960 = vcmp.eq.f32.partialorder %v4944, 0.0
        %vm4961 = vcmp.eq.f32.partialorder %v4945, 0.0
        %vm4962 = vcmp.eq.f32.partialorder %v4946, 0.0
        %vm4963 = vcmp.eq.f32.partialorder %v4947, 0.0
        %vm4964 = vcmp.eq.f32.partialorder %v4948, 0.0
        %vm4965 = vcmp.eq.f32.partialorder %v4949, 0.0
        %vm4966 = vcmp.eq.f32.partialorder %v4950, 0.0
        %5095 = vset.pattern.permute.xlu0 0
        %5096 = vperm.xlu0 %5095, %v4807
        %v5097 = vpop.permute.xlu0 %5096
        %5098 = vset.pattern.permute.xlu0 0
        %5099 = vperm.xlu0 %5098, %v4808
        %v5100 = vpop.permute.xlu0 %5099
        %5101 = vset.pattern.permute.xlu0 0
        %5102 = vperm.xlu0 %5101, %v4809
        %v5103 = vpop.permute.xlu0 %5102
        %5104 = vset.pattern.permute.xlu0 0
        %5105 = vperm.xlu0 %5104, %v4810
        %v5106 = vpop.permute.xlu0 %5105
        %5107 = vset.pattern.permute.xlu0 0
        %5108 = vperm.xlu0 %5107, %v4811
        %v5109 = vpop.permute.xlu0 %5108
        %5110 = vset.pattern.permute.xlu0 0
        %5111 = vperm.xlu0 %5110, %v4812
        %v5112 = vpop.permute.xlu0 %5111
        %5113 = vset.pattern.permute.xlu0 0
        %5114 = vperm.xlu0 %5113, %v4813
        %v5115 = vpop.permute.xlu0 %5114
        %5116 = vset.pattern.permute.xlu0 0
        %5117 = vperm.xlu0 %5116, %v4814
        %v5118 = vpop.permute.xlu0 %5117
        %5119 = vset.pattern.permute.xlu0 0
        %5120 = vperm.xlu0 %5119, %v4815
        %v5121 = vpop.permute.xlu0 %5120
        %5122 = vset.pattern.permute.xlu0 0
        %5123 = vperm.xlu0 %5122, %v4816
        %v5124 = vpop.permute.xlu0 %5123
        %5125 = vset.pattern.permute.xlu0 0
        %5126 = vperm.xlu0 %5125, %v4817
        %v5127 = vpop.permute.xlu0 %5126
        %5128 = vset.pattern.permute.xlu0 0
        %5129 = vperm.xlu0 %5128, %v4818
        %v5130 = vpop.permute.xlu0 %5129
        %5131 = vset.pattern.permute.xlu0 0
        %5132 = vperm.xlu0 %5131, %v4819
        %v5133 = vpop.permute.xlu0 %5132
        %5134 = vset.pattern.permute.xlu0 0
        %5135 = vperm.xlu0 %5134, %v4820
        %v5136 = vpop.permute.xlu0 %5135
        %5137 = vset.pattern.permute.xlu0 0
        %5138 = vperm.xlu0 %5137, %v4821
        %v5139 = vpop.permute.xlu0 %5138
        %5140 = vset.pattern.permute.xlu0 0
        %5141 = vperm.xlu0 %5140, %v4822
        %v5142 = vpop.permute.xlu0 %5141
        %5143 = vset.pattern.permute.xlu0 0
        %5144 = vperm.xlu0 %5143, %v4823
        %v5145 = vpop.permute.xlu0 %5144
        %5146 = vset.pattern.permute.xlu0 0
        %5147 = vperm.xlu0 %5146, %v4824
        %v5148 = vpop.permute.xlu0 %5147
        %5149 = vset.pattern.permute.xlu0 0
        %5150 = vperm.xlu0 %5149, %v4825
        %v5151 = vpop.permute.xlu0 %5150
        %5152 = vset.pattern.permute.xlu0 0
        %5153 = vperm.xlu0 %5152, %v4826
        %v5154 = vpop.permute.xlu0 %5153
        %5155 = vset.pattern.permute.xlu0 0
        %5156 = vperm.xlu0 %5155, %v4827
        %v5157 = vpop.permute.xlu0 %5156
        %5158 = vset.pattern.permute.xlu0 0
        %5159 = vperm.xlu0 %5158, %v4828
        %v5160 = vpop.permute.xlu0 %5159
        %5161 = vset.pattern.permute.xlu0 0
        %5162 = vperm.xlu0 %5161, %v4829
        %v5163 = vpop.permute.xlu0 %5162
        %5164 = vset.pattern.permute.xlu0 0
        %5165 = vperm.xlu0 %5164, %v4830
        %v5166 = vpop.permute.xlu0 %5165
        %5167 = vset.pattern.permute.xlu0 0
        %5168 = vperm.xlu0 %5167, %v4831
        %v5169 = vpop.permute.xlu0 %5168
        %5170 = vset.pattern.permute.xlu0 0
        %5171 = vperm.xlu0 %5170, %v4832
        %v5172 = vpop.permute.xlu0 %5171
        %5173 = vset.pattern.permute.xlu0 0
        %5174 = vperm.xlu0 %5173, %v4833
        %v5175 = vpop.permute.xlu0 %5174
        %5176 = vset.pattern.permute.xlu0 0
        %5177 = vperm.xlu0 %5176, %v4834
        %v5178 = vpop.permute.xlu0 %5177
        %5179 = vset.pattern.permute.xlu0 0
        %5180 = vperm.xlu0 %5179, %v4835
        %v5181 = vpop.permute.xlu0 %5180
        %5182 = vset.pattern.permute.xlu0 0
        %5183 = vperm.xlu0 %5182, %v4836
        %v5184 = vpop.permute.xlu0 %5183
        %5185 = vset.pattern.permute.xlu0 0
        %5186 = vperm.xlu0 %5185, %v4837
        %v5187 = vpop.permute.xlu0 %5186
        %5188 = vset.pattern.permute.xlu0 0
        %5189 = vperm.xlu0 %5188, %v4838
        %v5190 = vpop.permute.xlu0 %5189
        %5191 = vset.pattern.permute.xlu0 0
        %5192 = vperm.xlu0 %5191, %v4839
        %v5193 = vpop.permute.xlu0 %5192
        %5194 = vset.pattern.permute.xlu0 0
        %5195 = vperm.xlu0 %5194, %v4840
        %v5196 = vpop.permute.xlu0 %5195
        %5197 = vset.pattern.permute.xlu0 0
        %5198 = vperm.xlu0 %5197, %v4841
        %v5199 = vpop.permute.xlu0 %5198
        %5200 = vset.pattern.permute.xlu0 0
        %5201 = vperm.xlu0 %5200, %v4842
        %v5202 = vpop.permute.xlu0 %5201
        %5203 = vset.pattern.permute.xlu0 0
        %5204 = vperm.xlu0 %5203, %v4843
        %v5205 = vpop.permute.xlu0 %5204
        %5206 = vset.pattern.permute.xlu0 0
        %5207 = vperm.xlu0 %5206, %v4844
        %v5208 = vpop.permute.xlu0 %5207
        %5209 = vset.pattern.permute.xlu0 0
        %5210 = vperm.xlu0 %5209, %v4845
        %v5211 = vpop.permute.xlu0 %5210
        %5212 = vset.pattern.permute.xlu0 0
        %5213 = vperm.xlu0 %5212, %v4846
        %v5214 = vpop.permute.xlu0 %5213
        %5215 = vset.pattern.permute.xlu0 0
        %5216 = vperm.xlu0 %5215, %v4847
        %v5217 = vpop.permute.xlu0 %5216
        %5218 = vset.pattern.permute.xlu0 0
        %5219 = vperm.xlu0 %5218, %v4848
        %v5220 = vpop.permute.xlu0 %5219
        %5221 = vset.pattern.permute.xlu0 0
        %5222 = vperm.xlu0 %5221, %v4849
        %v5223 = vpop.permute.xlu0 %5222
        %5224 = vset.pattern.permute.xlu0 0
        %5225 = vperm.xlu0 %5224, %v4850
        %v5226 = vpop.permute.xlu0 %5225
        %5227 = vset.pattern.permute.xlu0 0
        %5228 = vperm.xlu0 %5227, %v4851
        %v5229 = vpop.permute.xlu0 %5228
        %5230 = vset.pattern.permute.xlu0 0
        %5231 = vperm.xlu0 %5230, %v4852
        %v5232 = vpop.permute.xlu0 %5231
        %5233 = vset.pattern.permute.xlu0 0
        %5234 = vperm.xlu0 %5233, %v4853
        %v5235 = vpop.permute.xlu0 %5234
        %5236 = vset.pattern.permute.xlu0 0
        %5237 = vperm.xlu0 %5236, %v4854
        %v5238 = vpop.permute.xlu0 %5237
        %5239 = vset.pattern.permute.xlu0 0
        %5240 = vperm.xlu0 %5239, %v4855
        %v5241 = vpop.permute.xlu0 %5240
        %5242 = vset.pattern.permute.xlu0 0
        %5243 = vperm.xlu0 %5242, %v4856
        %v5244 = vpop.permute.xlu0 %5243
        %5245 = vset.pattern.permute.xlu0 0
        %5246 = vperm.xlu0 %5245, %v4857
        %v5247 = vpop.permute.xlu0 %5246
        %5248 = vset.pattern.permute.xlu0 0
        %5249 = vperm.xlu0 %5248, %v4858
        %v5250 = vpop.permute.xlu0 %5249
        %5251 = vset.pattern.permute.xlu0 0
        %5252 = vperm.xlu0 %5251, %v4859
        %v5253 = vpop.permute.xlu0 %5252
        %5254 = vset.pattern.permute.xlu0 0
        %5255 = vperm.xlu0 %5254, %v4860
        %v5256 = vpop.permute.xlu0 %5255
        %5257 = vset.pattern.permute.xlu0 0
        %5258 = vperm.xlu0 %5257, %v4861
        %v5259 = vpop.permute.xlu0 %5258
        %5260 = vset.pattern.permute.xlu0 0
        %5261 = vperm.xlu0 %5260, %v4862
        %v5262 = vpop.permute.xlu0 %5261
        %5263 = vset.pattern.permute.xlu0 0
        %5264 = vperm.xlu0 %5263, %v4863
        %v5265 = vpop.permute.xlu0 %5264
        %5266 = vset.pattern.permute.xlu0 0
        %5267 = vperm.xlu0 %5266, %v4864
        %v5268 = vpop.permute.xlu0 %5267
        %5269 = vset.pattern.permute.xlu0 0
        %5270 = vperm.xlu0 %5269, %v4865
        %v5271 = vpop.permute.xlu0 %5270
        %5272 = vset.pattern.permute.xlu0 0
        %5273 = vperm.xlu0 %5272, %v4866
        %v5274 = vpop.permute.xlu0 %5273
        %5275 = vset.pattern.permute.xlu0 0
        %5276 = vperm.xlu0 %5275, %v4867
        %v5277 = vpop.permute.xlu0 %5276
        %5278 = vset.pattern.permute.xlu0 0
        %5279 = vperm.xlu0 %5278, %v4868
        %v5280 = vpop.permute.xlu0 %5279
        %5281 = vset.pattern.permute.xlu0 0
        %5282 = vperm.xlu0 %5281, %v4869
        %v5283 = vpop.permute.xlu0 %5282
        %5284 = vset.pattern.permute.xlu0 0
        %5285 = vperm.xlu0 %5284, %v4870
        %v5286 = vpop.permute.xlu0 %5285
        %5287 = vset.pattern.permute.xlu0 0
        %5288 = vperm.xlu0 %5287, %v4871
        %v5289 = vpop.permute.xlu0 %5288
        %5290 = vset.pattern.permute.xlu0 0
        %5291 = vperm.xlu0 %5290, %v4872
        %v5292 = vpop.permute.xlu0 %5291
        %5293 = vset.pattern.permute.xlu0 0
        %5294 = vperm.xlu0 %5293, %v4873
        %v5295 = vpop.permute.xlu0 %5294
        %5296 = vset.pattern.permute.xlu0 0
        %5297 = vperm.xlu0 %5296, %v4874
        %v5298 = vpop.permute.xlu0 %5297
        %5299 = vset.pattern.permute.xlu0 0
        %5300 = vperm.xlu0 %5299, %v4875
        %v5301 = vpop.permute.xlu0 %5300
        %5302 = vset.pattern.permute.xlu0 0
        %5303 = vperm.xlu0 %5302, %v4876
        %v5304 = vpop.permute.xlu0 %5303
        %5305 = vset.pattern.permute.xlu0 0
        %5306 = vperm.xlu0 %5305, %v4877
        %v5307 = vpop.permute.xlu0 %5306
        %5308 = vset.pattern.permute.xlu0 0
        %5309 = vperm.xlu0 %5308, %v4878
        %v5310 = vpop.permute.xlu0 %5309
        %5311 = vset.pattern.permute.xlu0 0
        %5312 = vperm.xlu0 %5311, %v4879
        %v5313 = vpop.permute.xlu0 %5312
        %5314 = vset.pattern.permute.xlu0 0
        %5315 = vperm.xlu0 %5314, %v4880
        %v5316 = vpop.permute.xlu0 %5315
        %5317 = vset.pattern.permute.xlu0 0
        %5318 = vperm.xlu0 %5317, %v4881
        %v5319 = vpop.permute.xlu0 %5318
        %5320 = vset.pattern.permute.xlu0 0
        %5321 = vperm.xlu0 %5320, %v4882
        %v5322 = vpop.permute.xlu0 %5321
        %5323 = vset.pattern.permute.xlu0 0
        %5324 = vperm.xlu0 %5323, %v4883
        %v5325 = vpop.permute.xlu0 %5324
        %5326 = vset.pattern.permute.xlu0 0
        %5327 = vperm.xlu0 %5326, %v4884
        %v5328 = vpop.permute.xlu0 %5327
        %5329 = vset.pattern.permute.xlu0 0
        %5330 = vperm.xlu0 %5329, %v4885
        %v5331 = vpop.permute.xlu0 %5330
        %5332 = vset.pattern.permute.xlu0 0
        %5333 = vperm.xlu0 %5332, %v4886
        %v5334 = vpop.permute.xlu0 %5333
        %5335 = vset.pattern.permute.xlu0 0
        %5336 = vperm.xlu0 %5335, %v4887
        %v5337 = vpop.permute.xlu0 %5336
        %5338 = vset.pattern.permute.xlu0 0
        %5339 = vperm.xlu0 %5338, %v4888
        %v5340 = vpop.permute.xlu0 %5339
        %5341 = vset.pattern.permute.xlu0 0
        %5342 = vperm.xlu0 %5341, %v4889
        %v5343 = vpop.permute.xlu0 %5342
        %5344 = vset.pattern.permute.xlu0 0
        %5345 = vperm.xlu0 %5344, %v4890
        %v5346 = vpop.permute.xlu0 %5345
        %5347 = vset.pattern.permute.xlu0 0
        %5348 = vperm.xlu0 %5347, %v4891
        %v5349 = vpop.permute.xlu0 %5348
        %5350 = vset.pattern.permute.xlu0 0
        %5351 = vperm.xlu0 %5350, %v4892
        %v5352 = vpop.permute.xlu0 %5351
        %5353 = vset.pattern.permute.xlu0 0
        %5354 = vperm.xlu0 %5353, %v4893
        %v5355 = vpop.permute.xlu0 %5354
        %5356 = vset.pattern.permute.xlu0 0
        %5357 = vperm.xlu0 %5356, %v4894
        %v5358 = vpop.permute.xlu0 %5357
        %5359 = vset.pattern.permute.xlu0 0
        %5360 = vperm.xlu0 %5359, %v4895
        %v5361 = vpop.permute.xlu0 %5360
        %5362 = vset.pattern.permute.xlu0 0
        %5363 = vperm.xlu0 %5362, %v4896
        %v5364 = vpop.permute.xlu0 %5363
        %5365 = vset.pattern.permute.xlu0 0
        %5366 = vperm.xlu0 %5365, %v4897
        %v5367 = vpop.permute.xlu0 %5366
        %5368 = vset.pattern.permute.xlu0 0
        %5369 = vperm.xlu0 %5368, %v4898
        %v5370 = vpop.permute.xlu0 %5369
        %5371 = vset.pattern.permute.xlu0 0
        %5372 = vperm.xlu0 %5371, %v4899
        %v5373 = vpop.permute.xlu0 %5372
        %5374 = vset.pattern.permute.xlu0 0
        %5375 = vperm.xlu0 %5374, %v4900
        %v5376 = vpop.permute.xlu0 %5375
        %5377 = vset.pattern.permute.xlu0 0
        %5378 = vperm.xlu0 %5377, %v4901
        %v5379 = vpop.permute.xlu0 %5378
        %5380 = vset.pattern.permute.xlu0 0
        %5381 = vperm.xlu0 %5380, %v4902
        %v5382 = vpop.permute.xlu0 %5381
        %5383 = vset.pattern.permute.xlu0 0
        %5384 = vperm.xlu0 %5383, %v4903
        %v5385 = vpop.permute.xlu0 %5384
        %5386 = vset.pattern.permute.xlu0 0
        %5387 = vperm.xlu0 %5386, %v4904
        %v5388 = vpop.permute.xlu0 %5387
        %5389 = vset.pattern.permute.xlu0 0
        %5390 = vperm.xlu0 %5389, %v4905
        %v5391 = vpop.permute.xlu0 %5390
        %5392 = vset.pattern.permute.xlu0 0
        %5393 = vperm.xlu0 %5392, %v4906
        %v5394 = vpop.permute.xlu0 %5393
        %5395 = vset.pattern.permute.xlu0 0
        %5396 = vperm.xlu0 %5395, %v4907
        %v5397 = vpop.permute.xlu0 %5396
        %5398 = vset.pattern.permute.xlu0 0
        %5399 = vperm.xlu0 %5398, %v4908
        %v5400 = vpop.permute.xlu0 %5399
        %5401 = vset.pattern.permute.xlu0 0
        %5402 = vperm.xlu0 %5401, %v4909
        %v5403 = vpop.permute.xlu0 %5402
        %5404 = vset.pattern.permute.xlu0 0
        %5405 = vperm.xlu0 %5404, %v4910
        %v5406 = vpop.permute.xlu0 %5405
        %5407 = vset.pattern.permute.xlu0 0
        %5408 = vperm.xlu0 %5407, %v4911
        %v5409 = vpop.permute.xlu0 %5408
        %5410 = vset.pattern.permute.xlu0 0
        %5411 = vperm.xlu0 %5410, %v4912
        %v5412 = vpop.permute.xlu0 %5411
        %5413 = vset.pattern.permute.xlu0 0
        %5414 = vperm.xlu0 %5413, %v4913
        %v5415 = vpop.permute.xlu0 %5414
        %5416 = vset.pattern.permute.xlu0 0
        %5417 = vperm.xlu0 %5416, %v4914
        %v5418 = vpop.permute.xlu0 %5417
        %5419 = vset.pattern.permute.xlu0 0
        %5420 = vperm.xlu0 %5419, %v4915
        %v5421 = vpop.permute.xlu0 %5420
        %5422 = vset.pattern.permute.xlu0 0
        %5423 = vperm.xlu0 %5422, %v4916
        %v5424 = vpop.permute.xlu0 %5423
        %5425 = vset.pattern.permute.xlu0 0
        %5426 = vperm.xlu0 %5425, %v4917
        %v5427 = vpop.permute.xlu0 %5426
        %5428 = vset.pattern.permute.xlu0 0
        %5429 = vperm.xlu0 %5428, %v4918
        %v5430 = vpop.permute.xlu0 %5429
        %5431 = vset.pattern.permute.xlu0 0
        %5432 = vperm.xlu0 %5431, %v4919
        %v5433 = vpop.permute.xlu0 %5432
        %5434 = vset.pattern.permute.xlu0 0
        %5435 = vperm.xlu0 %5434, %v4920
        %v5436 = vpop.permute.xlu0 %5435
        %5437 = vset.pattern.permute.xlu0 0
        %5438 = vperm.xlu0 %5437, %v4921
        %v5439 = vpop.permute.xlu0 %5438
        %5440 = vset.pattern.permute.xlu0 0
        %5441 = vperm.xlu0 %5440, %v4922
        %v5442 = vpop.permute.xlu0 %5441
        %5443 = vset.pattern.permute.xlu0 0
        %5444 = vperm.xlu0 %5443, %v4923
        %v5445 = vpop.permute.xlu0 %5444
        %5446 = vset.pattern.permute.xlu0 0
        %5447 = vperm.xlu0 %5446, %v4924
        %v5448 = vpop.permute.xlu0 %5447
        %5449 = vset.pattern.permute.xlu0 0
        %5450 = vperm.xlu0 %5449, %v4925
        %v5451 = vpop.permute.xlu0 %5450
        %5452 = vset.pattern.permute.xlu0 0
        %5453 = vperm.xlu0 %5452, %v4926
        %v5454 = vpop.permute.xlu0 %5453
        %5455 = vset.pattern.permute.xlu0 0
        %5456 = vperm.xlu0 %5455, %v4927
        %v5457 = vpop.permute.xlu0 %5456
        %5458 = vset.pattern.permute.xlu0 0
        %5459 = vperm.xlu0 %5458, %v4928
        %v5460 = vpop.permute.xlu0 %5459
        %5461 = vset.pattern.permute.xlu0 0
        %5462 = vperm.xlu0 %5461, %v4929
        %v5463 = vpop.permute.xlu0 %5462
        %5464 = vset.pattern.permute.xlu0 0
        %5465 = vperm.xlu0 %5464, %v4930
        %v5466 = vpop.permute.xlu0 %5465
        %5467 = vset.pattern.permute.xlu0 0
        %5468 = vperm.xlu0 %5467, %v4931
        %v5469 = vpop.permute.xlu0 %5468
        %5470 = vset.pattern.permute.xlu0 0
        %5471 = vperm.xlu0 %5470, %v4932
        %v5472 = vpop.permute.xlu0 %5471
        %5473 = vset.pattern.permute.xlu0 0
        %5474 = vperm.xlu0 %5473, %v4933
        %v5475 = vpop.permute.xlu0 %5474
        %5476 = vset.pattern.permute.xlu0 0
        %5477 = vperm.xlu0 %5476, %v4934
        %v5478 = vpop.permute.xlu0 %5477
        %v5479 = vlaneseq
        %v5480 = vand.u32 %v5479, 127
        %v5481 = vperm.slane %v5097, %v5480
        %v5482 = vperm.slane %v5100, %v5480
        %v5483 = vperm.slane %v5103, %v5480
        %v5484 = vperm.slane %v5106, %v5480
        %v5485 = vperm.slane %v5109, %v5480
        %v5486 = vperm.slane %v5112, %v5480
        %v5487 = vperm.slane %v5115, %v5480
        %v5488 = vperm.slane %v5118, %v5480
        %v5489 = vperm.slane %v5121, %v5480
        %v5490 = vperm.slane %v5124, %v5480
        %v5491 = vperm.slane %v5127, %v5480
        %v5492 = vperm.slane %v5130, %v5480
        %v5493 = vperm.slane %v5133, %v5480
        %v5494 = vperm.slane %v5136, %v5480
        %v5495 = vperm.slane %v5139, %v5480
        %v5496 = vperm.slane %v5142, %v5480
        %v5497 = vperm.slane %v5145, %v5480
        %v5498 = vperm.slane %v5148, %v5480
        %v5499 = vperm.slane %v5151, %v5480
        %v5500 = vperm.slane %v5154, %v5480
        %v5501 = vperm.slane %v5157, %v5480
        %v5502 = vperm.slane %v5160, %v5480
        %v5503 = vperm.slane %v5163, %v5480
        %v5504 = vperm.slane %v5166, %v5480
        %v5505 = vperm.slane %v5169, %v5480
        %v5506 = vperm.slane %v5172, %v5480
        %v5507 = vperm.slane %v5175, %v5480
        %v5508 = vperm.slane %v5178, %v5480
        %v5509 = vperm.slane %v5181, %v5480
        %v5510 = vperm.slane %v5184, %v5480
        %v5511 = vperm.slane %v5187, %v5480
        %v5512 = vperm.slane %v5190, %v5480
        %v5513 = vperm.slane %v5193, %v5480
        %v5514 = vperm.slane %v5196, %v5480
        %v5515 = vperm.slane %v5199, %v5480
        %v5516 = vperm.slane %v5202, %v5480
        %v5517 = vperm.slane %v5205, %v5480
        %v5518 = vperm.slane %v5208, %v5480
        %v5519 = vperm.slane %v5211, %v5480
        %v5520 = vperm.slane %v5214, %v5480
        %v5521 = vperm.slane %v5217, %v5480
        %v5522 = vperm.slane %v5220, %v5480
        %v5523 = vperm.slane %v5223, %v5480
        %v5524 = vperm.slane %v5226, %v5480
        %v5525 = vperm.slane %v5229, %v5480
        %v5526 = vperm.slane %v5232, %v5480
        %v5527 = vperm.slane %v5235, %v5480
        %v5528 = vperm.slane %v5238, %v5480
        %v5529 = vperm.slane %v5241, %v5480
        %v5530 = vperm.slane %v5244, %v5480
        %v5531 = vperm.slane %v5247, %v5480
        %v5532 = vperm.slane %v5250, %v5480
        %v5533 = vperm.slane %v5253, %v5480
        %v5534 = vperm.slane %v5256, %v5480
        %v5535 = vperm.slane %v5259, %v5480
        %v5536 = vperm.slane %v5262, %v5480
        %v5537 = vperm.slane %v5265, %v5480
        %v5538 = vperm.slane %v5268, %v5480
        %v5539 = vperm.slane %v5271, %v5480
        %v5540 = vperm.slane %v5274, %v5480
        %v5541 = vperm.slane %v5277, %v5480
        %v5542 = vperm.slane %v5280, %v5480
        %v5543 = vperm.slane %v5283, %v5480
        %v5544 = vperm.slane %v5286, %v5480
        %v5545 = vperm.slane %v5289, %v5480
        %v5546 = vperm.slane %v5292, %v5480
        %v5547 = vperm.slane %v5295, %v5480
        %v5548 = vperm.slane %v5298, %v5480
        %v5549 = vperm.slane %v5301, %v5480
        %v5550 = vperm.slane %v5304, %v5480
        %v5551 = vperm.slane %v5307, %v5480
        %v5552 = vperm.slane %v5310, %v5480
        %v5553 = vperm.slane %v5313, %v5480
        %v5554 = vperm.slane %v5316, %v5480
        %v5555 = vperm.slane %v5319, %v5480
        %v5556 = vperm.slane %v5322, %v5480
        %v5557 = vperm.slane %v5325, %v5480
        %v5558 = vperm.slane %v5328, %v5480
        %v5559 = vperm.slane %v5331, %v5480
        %v5560 = vperm.slane %v5334, %v5480
        %v5561 = vperm.slane %v5337, %v5480
        %v5562 = vperm.slane %v5340, %v5480
        %v5563 = vperm.slane %v5343, %v5480
        %v5564 = vperm.slane %v5346, %v5480
        %v5565 = vperm.slane %v5349, %v5480
        %v5566 = vperm.slane %v5352, %v5480
        %v5567 = vperm.slane %v5355, %v5480
        %v5568 = vperm.slane %v5358, %v5480
        %v5569 = vperm.slane %v5361, %v5480
        %v5570 = vperm.slane %v5364, %v5480
        %v5571 = vperm.slane %v5367, %v5480
        %v5572 = vperm.slane %v5370, %v5480
        %v5573 = vperm.slane %v5373, %v5480
        %v5574 = vperm.slane %v5376, %v5480
        %v5575 = vperm.slane %v5379, %v5480
        %v5576 = vperm.slane %v5382, %v5480
        %v5577 = vperm.slane %v5385, %v5480
        %v5578 = vperm.slane %v5388, %v5480
        %v5579 = vperm.slane %v5391, %v5480
        %v5580 = vperm.slane %v5394, %v5480
        %v5581 = vperm.slane %v5397, %v5480
        %v5582 = vperm.slane %v5400, %v5480
        %v5583 = vperm.slane %v5403, %v5480
        %v5584 = vperm.slane %v5406, %v5480
        %v5585 = vperm.slane %v5409, %v5480
        %v5586 = vperm.slane %v5412, %v5480
        %v5587 = vperm.slane %v5415, %v5480
        %v5588 = vperm.slane %v5418, %v5480
        %v5589 = vperm.slane %v5421, %v5480
        %v5590 = vperm.slane %v5424, %v5480
        %v5591 = vperm.slane %v5427, %v5480
        %v5592 = vperm.slane %v5430, %v5480
        %v5593 = vperm.slane %v5433, %v5480
        %v5594 = vperm.slane %v5436, %v5480
        %v5595 = vperm.slane %v5439, %v5480
        %v5596 = vperm.slane %v5442, %v5480
        %v5597 = vperm.slane %v5445, %v5480
        %v5598 = vperm.slane %v5448, %v5480
        %v5599 = vperm.slane %v5451, %v5480
        %v5600 = vperm.slane %v5454, %v5480
        %v5601 = vperm.slane %v5457, %v5480
        %v5602 = vperm.slane %v5460, %v5480
        %v5603 = vperm.slane %v5463, %v5480
        %v5604 = vperm.slane %v5466, %v5480
        %v5605 = vperm.slane %v5469, %v5480
        %v5606 = vperm.slane %v5472, %v5480
        %v5607 = vperm.slane %v5475, %v5480
        %v5608 = vperm.slane %v5478, %v5480
        %vm5609 = vcmask 1041409
        %v5610 = vsel %vm5609, %v5482, %v5481
        %vm5611 = vcmask 1042434
        %v5612 = vsel %vm5611, %v5483, %v5610
        %vm5613 = vcmask 1043459
        %v5614 = vsel %vm5613, %v5484, %v5612
        %vm5615 = vcmask 1044484
        %v5616 = vsel %vm5615, %v5485, %v5614
        %vm5617 = vcmask 1045509
        %v5618 = vsel %vm5617, %v5486, %v5616
        %vm5619 = vcmask 1046534
        %v5620 = vsel %vm5619, %v5487, %v5618
        %vm5621 = vcmask 1047559
        %v5622 = vsel %vm5621, %v5488, %v5620
        %v5623 = vsel %vm5609, %v5490, %v5489
        %v5624 = vsel %vm5611, %v5491, %v5623
        %v5625 = vsel %vm5613, %v5492, %v5624
        %v5626 = vsel %vm5615, %v5493, %v5625
        %v5627 = vsel %vm5617, %v5494, %v5626
        %v5628 = vsel %vm5619, %v5495, %v5627
        %v5629 = vsel %vm5621, %v5496, %v5628
        %v5630 = vsel %vm5609, %v5498, %v5497
        %v5631 = vsel %vm5611, %v5499, %v5630
        %v5632 = vsel %vm5613, %v5500, %v5631
        %v5633 = vsel %vm5615, %v5501, %v5632
        %v5634 = vsel %vm5617, %v5502, %v5633
        %v5635 = vsel %vm5619, %v5503, %v5634
        %v5636 = vsel %vm5621, %v5504, %v5635
        %v5637 = vsel %vm5609, %v5506, %v5505
        %v5638 = vsel %vm5611, %v5507, %v5637
        %v5639 = vsel %vm5613, %v5508, %v5638
        %v5640 = vsel %vm5615, %v5509, %v5639
        %v5641 = vsel %vm5617, %v5510, %v5640
        %v5642 = vsel %vm5619, %v5511, %v5641
        %v5643 = vsel %vm5621, %v5512, %v5642
        %v5644 = vsel %vm5609, %v5514, %v5513
        %v5645 = vsel %vm5611, %v5515, %v5644
        %v5646 = vsel %vm5613, %v5516, %v5645
        %v5647 = vsel %vm5615, %v5517, %v5646
        %v5648 = vsel %vm5617, %v5518, %v5647
        %v5649 = vsel %vm5619, %v5519, %v5648
        %v5650 = vsel %vm5621, %v5520, %v5649
        %v5651 = vsel %vm5609, %v5522, %v5521
        %v5652 = vsel %vm5611, %v5523, %v5651
        %v5653 = vsel %vm5613, %v5524, %v5652
        %v5654 = vsel %vm5615, %v5525, %v5653
        %v5655 = vsel %vm5617, %v5526, %v5654
        %v5656 = vsel %vm5619, %v5527, %v5655
        %v5657 = vsel %vm5621, %v5528, %v5656
        %v5658 = vsel %vm5609, %v5530, %v5529
        %v5659 = vsel %vm5611, %v5531, %v5658
        %v5660 = vsel %vm5613, %v5532, %v5659
        %v5661 = vsel %vm5615, %v5533, %v5660
        %v5662 = vsel %vm5617, %v5534, %v5661
        %v5663 = vsel %vm5619, %v5535, %v5662
        %v5664 = vsel %vm5621, %v5536, %v5663
        %v5665 = vsel %vm5609, %v5538, %v5537
        %v5666 = vsel %vm5611, %v5539, %v5665
        %v5667 = vsel %vm5613, %v5540, %v5666
        %v5668 = vsel %vm5615, %v5541, %v5667
        %v5669 = vsel %vm5617, %v5542, %v5668
        %v5670 = vsel %vm5619, %v5543, %v5669
        %v5671 = vsel %vm5621, %v5544, %v5670
        %v5672 = vsel %vm5609, %v5546, %v5545
        %v5673 = vsel %vm5611, %v5547, %v5672
        %v5674 = vsel %vm5613, %v5548, %v5673
        %v5675 = vsel %vm5615, %v5549, %v5674
        %v5676 = vsel %vm5617, %v5550, %v5675
        %v5677 = vsel %vm5619, %v5551, %v5676
        %v5678 = vsel %vm5621, %v5552, %v5677
        %v5679 = vsel %vm5609, %v5554, %v5553
        %v5680 = vsel %vm5611, %v5555, %v5679
        %v5681 = vsel %vm5613, %v5556, %v5680
        %v5682 = vsel %vm5615, %v5557, %v5681
        %v5683 = vsel %vm5617, %v5558, %v5682
        %v5684 = vsel %vm5619, %v5559, %v5683
        %v5685 = vsel %vm5621, %v5560, %v5684
        %v5686 = vsel %vm5609, %v5562, %v5561
        %v5687 = vsel %vm5611, %v5563, %v5686
        %v5688 = vsel %vm5613, %v5564, %v5687
        %v5689 = vsel %vm5615, %v5565, %v5688
        %v5690 = vsel %vm5617, %v5566, %v5689
        %v5691 = vsel %vm5619, %v5567, %v5690
        %v5692 = vsel %vm5621, %v5568, %v5691
        %v5693 = vsel %vm5609, %v5570, %v5569
        %v5694 = vsel %vm5611, %v5571, %v5693
        %v5695 = vsel %vm5613, %v5572, %v5694
        %v5696 = vsel %vm5615, %v5573, %v5695
        %v5697 = vsel %vm5617, %v5574, %v5696
        %v5698 = vsel %vm5619, %v5575, %v5697
        %v5699 = vsel %vm5621, %v5576, %v5698
        %v5700 = vsel %vm5609, %v5578, %v5577
        %v5701 = vsel %vm5611, %v5579, %v5700
        %v5702 = vsel %vm5613, %v5580, %v5701
        %v5703 = vsel %vm5615, %v5581, %v5702
        %v5704 = vsel %vm5617, %v5582, %v5703
        %v5705 = vsel %vm5619, %v5583, %v5704
        %v5706 = vsel %vm5621, %v5584, %v5705
        %v5707 = vsel %vm5609, %v5586, %v5585
        %v5708 = vsel %vm5611, %v5587, %v5707
        %v5709 = vsel %vm5613, %v5588, %v5708
        %v5710 = vsel %vm5615, %v5589, %v5709
        %v5711 = vsel %vm5617, %v5590, %v5710
        %v5712 = vsel %vm5619, %v5591, %v5711
        %v5713 = vsel %vm5621, %v5592, %v5712
        %v5714 = vsel %vm5609, %v5594, %v5593
        %v5715 = vsel %vm5611, %v5595, %v5714
        %v5716 = vsel %vm5613, %v5596, %v5715
        %v5717 = vsel %vm5615, %v5597, %v5716
        %v5718 = vsel %vm5617, %v5598, %v5717
        %v5719 = vsel %vm5619, %v5599, %v5718
        %v5720 = vsel %vm5621, %v5600, %v5719
        %v5721 = vsel %vm5609, %v5602, %v5601
        %v5722 = vsel %vm5611, %v5603, %v5721
        %v5723 = vsel %vm5613, %v5604, %v5722
        %v5724 = vsel %vm5615, %v5605, %v5723
        %v5725 = vsel %vm5617, %v5606, %v5724
        %v5726 = vsel %vm5619, %v5607, %v5725
        %v5727 = vsel %vm5621, %v5608, %v5726
        %v5744 = vsel %vm4951, -1e+10, %v5622
        %v5745 = vsel %vm4952, -1e+10, %v5629
        %v5746 = vsel %vm4953, -1e+10, %v5636
        %v5747 = vsel %vm4954, -1e+10, %v5643
        %v5748 = vsel %vm4955, -1e+10, %v5650
        %v5749 = vsel %vm4956, -1e+10, %v5657
        %v5750 = vsel %vm4957, -1e+10, %v5664
        %v5751 = vsel %vm4958, -1e+10, %v5671
        %v5752 = vsel %vm4959, -1e+10, %v5678
        %v5753 = vsel %vm4960, -1e+10, %v5685
        %v5754 = vsel %vm4961, -1e+10, %v5692
        %v5755 = vsel %vm4962, -1e+10, %v5699
        %v5756 = vsel %vm4963, -1e+10, %v5706
        %v5757 = vsel %vm4964, -1e+10, %v5713
        %v5758 = vsel %vm4965, -1e+10, %v5720
        %v5759 = vsel %vm4966, -1e+10, %v5727
        %vm5760 = vcmask 64512
        %v5761 = vsel %vm5760, %v5744, -inf
        %5762 = vmax.xlane.f32.xlu0 %v5761
        %v5763 = vpop.xlane.xlu0 %5762
        %v5764 = vsel %vm5760, %v5745, -inf
        %5765 = vmax.xlane.f32.xlu0 %v5764
        %v5766 = vpop.xlane.xlu0 %5765
        %v5767 = vsel %vm5760, %v5746, -inf
        %5768 = vmax.xlane.f32.xlu0 %v5767
        %v5769 = vpop.xlane.xlu0 %5768
        %v5770 = vsel %vm5760, %v5747, -inf
        %5771 = vmax.xlane.f32.xlu0 %v5770
        %v5772 = vpop.xlane.xlu0 %5771
        %v5773 = vsel %vm5760, %v5748, -inf
        %5774 = vmax.xlane.f32.xlu0 %v5773
        %v5775 = vpop.xlane.xlu0 %5774
        %v5776 = vsel %vm5760, %v5749, -inf
        %5777 = vmax.xlane.f32.xlu0 %v5776
        %v5778 = vpop.xlane.xlu0 %5777
        %v5779 = vsel %vm5760, %v5750, -inf
        %5780 = vmax.xlane.f32.xlu0 %v5779
        %v5781 = vpop.xlane.xlu0 %5780
        %v5782 = vsel %vm5760, %v5751, -inf
        %5783 = vmax.xlane.f32.xlu0 %v5782
        %v5784 = vpop.xlane.xlu0 %5783
        %v5785 = vsel %vm5760, %v5752, -inf
        %5786 = vmax.xlane.f32.xlu0 %v5785
        %v5787 = vpop.xlane.xlu0 %5786
        %v5788 = vsel %vm5760, %v5753, -inf
        %5789 = vmax.xlane.f32.xlu0 %v5788
        %v5790 = vpop.xlane.xlu0 %5789
        %v5791 = vsel %vm5760, %v5754, -inf
        %5792 = vmax.xlane.f32.xlu0 %v5791
        %v5793 = vpop.xlane.xlu0 %5792
        %v5794 = vsel %vm5760, %v5755, -inf
        %5795 = vmax.xlane.f32.xlu0 %v5794
        %v5796 = vpop.xlane.xlu0 %5795
        %v5797 = vsel %vm5760, %v5756, -inf
        %5798 = vmax.xlane.f32.xlu0 %v5797
        %v5799 = vpop.xlane.xlu0 %5798
        %v5800 = vsel %vm5760, %v5757, -inf
        %5801 = vmax.xlane.f32.xlu0 %v5800
        %v5802 = vpop.xlane.xlu0 %5801
        %v5803 = vsel %vm5760, %v5758, -inf
        %5804 = vmax.xlane.f32.xlu0 %v5803
        %v5805 = vpop.xlane.xlu0 %5804
        %v5806 = vsel %vm5760, %v5759, -inf
        %5807 = vmax.xlane.f32.xlu0 %v5806
        %v5808 = vpop.xlane.xlu0 %5807
        %v5809 = vsub.f32 %v5744, %v5763
        %v5810 = vsub.f32 %v5745, %v5766
        %v5811 = vsub.f32 %v5746, %v5769
        %v5812 = vsub.f32 %v5747, %v5772
        %v5813 = vsub.f32 %v5748, %v5775
        %v5814 = vsub.f32 %v5749, %v5778
        %v5815 = vsub.f32 %v5750, %v5781
        %v5816 = vsub.f32 %v5751, %v5784
        %v5817 = vsub.f32 %v5752, %v5787
        %v5818 = vsub.f32 %v5753, %v5790
        %v5819 = vsub.f32 %v5754, %v5793
        %v5820 = vsub.f32 %v5755, %v5796
        %v5821 = vsub.f32 %v5756, %v5799
        %v5822 = vsub.f32 %v5757, %v5802
        %v5823 = vsub.f32 %v5758, %v5805
        %v5824 = vsub.f32 %v5759, %v5808
        %v5825 = vmul.f32 %v5809, 1.442695
        %v5826 = vpow.pop %v5825
        %v5827 = vmul.f32 %v5810, 1.442695
        %v5828 = vpow.pop %v5827
        %v5829 = vmul.f32 %v5811, 1.442695
        %v5830 = vpow.pop %v5829
        %v5831 = vmul.f32 %v5812, 1.442695
        %v5832 = vpow.pop %v5831
        %v5833 = vmul.f32 %v5813, 1.442695
        %v5834 = vpow.pop %v5833
        %v5835 = vmul.f32 %v5814, 1.442695
        %v5836 = vpow.pop %v5835
        %v5837 = vmul.f32 %v5815, 1.442695
        %v5838 = vpow.pop %v5837
        %v5839 = vmul.f32 %v5816, 1.442695
        %v5840 = vpow.pop %v5839
        %v5841 = vmul.f32 %v5817, 1.442695
        %v5842 = vpow.pop %v5841
        %v5843 = vmul.f32 %v5818, 1.442695
        %v5844 = vpow.pop %v5843
        %v5845 = vmul.f32 %v5819, 1.442695
        %v5846 = vpow.pop %v5845
        %v5847 = vmul.f32 %v5820, 1.442695
        %v5848 = vpow.pop %v5847
        %v5849 = vmul.f32 %v5821, 1.442695
        %v5850 = vpow.pop %v5849
        %v5851 = vmul.f32 %v5822, 1.442695
        %v5852 = vpow.pop %v5851
        %v5853 = vmul.f32 %v5823, 1.442695
        %v5854 = vpow.pop %v5853
        %v5855 = vmul.f32 %v5824, 1.442695
        %v5856 = vpow.pop %v5855
        %v5857 = vsel %vm5760, %v5826, 0.0
        %5858 = vadd.xlane.f32.xlu0 %v5857
        %v5859 = vpop.xlane.xlu0 %5858
        %v5860 = vsel %vm5760, %v5828, 0.0
        %5861 = vadd.xlane.f32.xlu0 %v5860
        %v5862 = vpop.xlane.xlu0 %5861
        %v5863 = vsel %vm5760, %v5830, 0.0
        %5864 = vadd.xlane.f32.xlu0 %v5863
        %v5865 = vpop.xlane.xlu0 %5864
        %v5866 = vsel %vm5760, %v5832, 0.0
        %5867 = vadd.xlane.f32.xlu0 %v5866
        %v5868 = vpop.xlane.xlu0 %5867
        %v5869 = vsel %vm5760, %v5834, 0.0
        %5870 = vadd.xlane.f32.xlu0 %v5869
        %v5871 = vpop.xlane.xlu0 %5870
        %v5872 = vsel %vm5760, %v5836, 0.0
        %5873 = vadd.xlane.f32.xlu0 %v5872
        %v5874 = vpop.xlane.xlu0 %5873
        %v5875 = vsel %vm5760, %v5838, 0.0
        %5876 = vadd.xlane.f32.xlu0 %v5875
        %v5877 = vpop.xlane.xlu0 %5876
        %v5878 = vsel %vm5760, %v5840, 0.0
        %5879 = vadd.xlane.f32.xlu0 %v5878
        %v5880 = vpop.xlane.xlu0 %5879
        %v5881 = vsel %vm5760, %v5842, 0.0
        %5882 = vadd.xlane.f32.xlu0 %v5881
        %v5883 = vpop.xlane.xlu0 %5882
        %v5884 = vsel %vm5760, %v5844, 0.0
        %5885 = vadd.xlane.f32.xlu0 %v5884
        %v5886 = vpop.xlane.xlu0 %5885
        %v5887 = vsel %vm5760, %v5846, 0.0
        %5888 = vadd.xlane.f32.xlu0 %v5887
        %v5889 = vpop.xlane.xlu0 %5888
        %v5890 = vsel %vm5760, %v5848, 0.0
        %5891 = vadd.xlane.f32.xlu0 %v5890
        %v5892 = vpop.xlane.xlu0 %5891
        %v5893 = vsel %vm5760, %v5850, 0.0
        %5894 = vadd.xlane.f32.xlu0 %v5893
        %v5895 = vpop.xlane.xlu0 %5894
        %v5896 = vsel %vm5760, %v5852, 0.0
        %5897 = vadd.xlane.f32.xlu0 %v5896
        %v5898 = vpop.xlane.xlu0 %5897
        %v5899 = vsel %vm5760, %v5854, 0.0
        %5900 = vadd.xlane.f32.xlu0 %v5899
        %v5901 = vpop.xlane.xlu0 %5900
        %v5902 = vsel %vm5760, %v5856, 0.0
        %5903 = vadd.xlane.f32.xlu0 %v5902
        %v5904 = vpop.xlane.xlu0 %5903
        %v5905 = vrcp.pop %v5859
        %v5906 = vmul.f32 %v5859, %v5905
        %v5907 = vsub.f32 1.0, %v5906
        %v5908 = vmul.f32 %v5905, %v5907
        %v5909 = vadd.f32 %v5905, %v5908
        %vm5910 = vweird.f32 %v5859
        %vm5911 = vweird.f32 %v5905
        %vm5912 = vmor %vm5910, %vm5911
        %v5913 = vsel %vm5912, %v5905, %v5909
        %v5914 = vand.u32 2147483647, %v5859
        %vm5915 = vcmp.eq.f32.partialorder %v5914, 8.507059e+37
        %v5916 = vand.u32 %v5859, 2147483648
        %v5917 = vor.u32 1.1754944e-38, %v5916
        %v5918 = vsel %vm5915, %v5917, %v5913
        %v5919 = vmul.f32 %v5826, %v5918
        %v5920 = vrcp.pop %v5862
        %v5921 = vmul.f32 %v5862, %v5920
        %v5922 = vsub.f32 1.0, %v5921
        %v5923 = vmul.f32 %v5920, %v5922
        %v5924 = vadd.f32 %v5920, %v5923
        %vm5925 = vweird.f32 %v5862
        %vm5926 = vweird.f32 %v5920
        %vm5927 = vmor %vm5925, %vm5926
        %v5928 = vsel %vm5927, %v5920, %v5924
        %v5929 = vand.u32 2147483647, %v5862
        %vm5930 = vcmp.eq.f32.partialorder %v5929, 8.507059e+37
        %v5931 = vand.u32 %v5862, 2147483648
        %v5932 = vor.u32 1.1754944e-38, %v5931
        %v5933 = vsel %vm5930, %v5932, %v5928
        %v5934 = vmul.f32 %v5828, %v5933
        %v5935 = vrcp.pop %v5865
        %v5936 = vmul.f32 %v5865, %v5935
        %v5937 = vsub.f32 1.0, %v5936
        %v5938 = vmul.f32 %v5935, %v5937
        %v5939 = vadd.f32 %v5935, %v5938
        %vm5940 = vweird.f32 %v5865
        %vm5941 = vweird.f32 %v5935
        %vm5942 = vmor %vm5940, %vm5941
        %v5943 = vsel %vm5942, %v5935, %v5939
        %v5944 = vand.u32 2147483647, %v5865
        %vm5945 = vcmp.eq.f32.partialorder %v5944, 8.507059e+37
        %v5946 = vand.u32 %v5865, 2147483648
        %v5947 = vor.u32 1.1754944e-38, %v5946
        %v5948 = vsel %vm5945, %v5947, %v5943
        %v5949 = vmul.f32 %v5830, %v5948
        %v5950 = vrcp.pop %v5868
        %v5951 = vmul.f32 %v5868, %v5950
        %v5952 = vsub.f32 1.0, %v5951
        %v5953 = vmul.f32 %v5950, %v5952
        %v5954 = vadd.f32 %v5950, %v5953
        %vm5955 = vweird.f32 %v5868
        %vm5956 = vweird.f32 %v5950
        %vm5957 = vmor %vm5955, %vm5956
        %v5958 = vsel %vm5957, %v5950, %v5954
        %v5959 = vand.u32 2147483647, %v5868
        %vm5960 = vcmp.eq.f32.partialorder %v5959, 8.507059e+37
        %v5961 = vand.u32 %v5868, 2147483648
        %v5962 = vor.u32 1.1754944e-38, %v5961
        %v5963 = vsel %vm5960, %v5962, %v5958
        %v5964 = vmul.f32 %v5832, %v5963
        %v5965 = vrcp.pop %v5871
        %v5966 = vmul.f32 %v5871, %v5965
        %v5967 = vsub.f32 1.0, %v5966
        %v5968 = vmul.f32 %v5965, %v5967
        %v5969 = vadd.f32 %v5965, %v5968
        %vm5970 = vweird.f32 %v5871
        %vm5971 = vweird.f32 %v5965
        %vm5972 = vmor %vm5970, %vm5971
        %v5973 = vsel %vm5972, %v5965, %v5969
        %v5974 = vand.u32 2147483647, %v5871
        %vm5975 = vcmp.eq.f32.partialorder %v5974, 8.507059e+37
        %v5976 = vand.u32 %v5871, 2147483648
        %v5977 = vor.u32 1.1754944e-38, %v5976
        %v5978 = vsel %vm5975, %v5977, %v5973
        %v5979 = vmul.f32 %v5834, %v5978
        %v5980 = vrcp.pop %v5874
        %v5981 = vmul.f32 %v5874, %v5980
        %v5982 = vsub.f32 1.0, %v5981
        %v5983 = vmul.f32 %v5980, %v5982
        %v5984 = vadd.f32 %v5980, %v5983
        %vm5985 = vweird.f32 %v5874
        %vm5986 = vweird.f32 %v5980
        %vm5987 = vmor %vm5985, %vm5986
        %v5988 = vsel %vm5987, %v5980, %v5984
        %v5989 = vand.u32 2147483647, %v5874
        %vm5990 = vcmp.eq.f32.partialorder %v5989, 8.507059e+37
        %v5991 = vand.u32 %v5874, 2147483648
        %v5992 = vor.u32 1.1754944e-38, %v5991
        %v5993 = vsel %vm5990, %v5992, %v5988
        %v5994 = vmul.f32 %v5836, %v5993
        %v5995 = vrcp.pop %v5877
        %v5996 = vmul.f32 %v5877, %v5995
        %v5997 = vsub.f32 1.0, %v5996
        %v5998 = vmul.f32 %v5995, %v5997
        %v5999 = vadd.f32 %v5995, %v5998
        %vm6000 = vweird.f32 %v5877
        %vm6001 = vweird.f32 %v5995
        %vm6002 = vmor %vm6000, %vm6001
        %v6003 = vsel %vm6002, %v5995, %v5999
        %v6004 = vand.u32 2147483647, %v5877
        %vm6005 = vcmp.eq.f32.partialorder %v6004, 8.507059e+37
        %v6006 = vand.u32 %v5877, 2147483648
        %v6007 = vor.u32 1.1754944e-38, %v6006
        %v6008 = vsel %vm6005, %v6007, %v6003
        %v6009 = vmul.f32 %v5838, %v6008
        %v6010 = vrcp.pop %v5880
        %v6011 = vmul.f32 %v5880, %v6010
        %v6012 = vsub.f32 1.0, %v6011
        %v6013 = vmul.f32 %v6010, %v6012
        %v6014 = vadd.f32 %v6010, %v6013
        %vm6015 = vweird.f32 %v5880
        %vm6016 = vweird.f32 %v6010
        %vm6017 = vmor %vm6015, %vm6016
        %v6018 = vsel %vm6017, %v6010, %v6014
        %v6019 = vand.u32 2147483647, %v5880
        %vm6020 = vcmp.eq.f32.partialorder %v6019, 8.507059e+37
        %v6021 = vand.u32 %v5880, 2147483648
        %v6022 = vor.u32 1.1754944e-38, %v6021
        %v6023 = vsel %vm6020, %v6022, %v6018
        %v6024 = vmul.f32 %v5840, %v6023
        %v6025 = vrcp.pop %v5883
        %v6026 = vmul.f32 %v5883, %v6025
        %v6027 = vsub.f32 1.0, %v6026
        %v6028 = vmul.f32 %v6025, %v6027
        %v6029 = vadd.f32 %v6025, %v6028
        %vm6030 = vweird.f32 %v5883
        %vm6031 = vweird.f32 %v6025
        %vm6032 = vmor %vm6030, %vm6031
        %v6033 = vsel %vm6032, %v6025, %v6029
        %v6034 = vand.u32 2147483647, %v5883
        %vm6035 = vcmp.eq.f32.partialorder %v6034, 8.507059e+37
        %v6036 = vand.u32 %v5883, 2147483648
        %v6037 = vor.u32 1.1754944e-38, %v6036
        %v6038 = vsel %vm6035, %v6037, %v6033
        %v6039 = vmul.f32 %v5842, %v6038
        %v6040 = vrcp.pop %v5886
        %v6041 = vmul.f32 %v5886, %v6040
        %v6042 = vsub.f32 1.0, %v6041
        %v6043 = vmul.f32 %v6040, %v6042
        %v6044 = vadd.f32 %v6040, %v6043
        %vm6045 = vweird.f32 %v5886
        %vm6046 = vweird.f32 %v6040
        %vm6047 = vmor %vm6045, %vm6046
        %v6048 = vsel %vm6047, %v6040, %v6044
        %v6049 = vand.u32 2147483647, %v5886
        %vm6050 = vcmp.eq.f32.partialorder %v6049, 8.507059e+37
        %v6051 = vand.u32 %v5886, 2147483648
        %v6052 = vor.u32 1.1754944e-38, %v6051
        %v6053 = vsel %vm6050, %v6052, %v6048
        %v6054 = vmul.f32 %v5844, %v6053
        %v6055 = vrcp.pop %v5889
        %v6056 = vmul.f32 %v5889, %v6055
        %v6057 = vsub.f32 1.0, %v6056
        %v6058 = vmul.f32 %v6055, %v6057
        %v6059 = vadd.f32 %v6055, %v6058
        %vm6060 = vweird.f32 %v5889
        %vm6061 = vweird.f32 %v6055
        %vm6062 = vmor %vm6060, %vm6061
        %v6063 = vsel %vm6062, %v6055, %v6059
        %v6064 = vand.u32 2147483647, %v5889
        %vm6065 = vcmp.eq.f32.partialorder %v6064, 8.507059e+37
        %v6066 = vand.u32 %v5889, 2147483648
        %v6067 = vor.u32 1.1754944e-38, %v6066
        %v6068 = vsel %vm6065, %v6067, %v6063
        %v6069 = vmul.f32 %v5846, %v6068
        %v6070 = vrcp.pop %v5892
        %v6071 = vmul.f32 %v5892, %v6070
        %v6072 = vsub.f32 1.0, %v6071
        %v6073 = vmul.f32 %v6070, %v6072
        %v6074 = vadd.f32 %v6070, %v6073
        %vm6075 = vweird.f32 %v5892
        %vm6076 = vweird.f32 %v6070
        %vm6077 = vmor %vm6075, %vm6076
        %v6078 = vsel %vm6077, %v6070, %v6074
        %v6079 = vand.u32 2147483647, %v5892
        %vm6080 = vcmp.eq.f32.partialorder %v6079, 8.507059e+37
        %v6081 = vand.u32 %v5892, 2147483648
        %v6082 = vor.u32 1.1754944e-38, %v6081
        %v6083 = vsel %vm6080, %v6082, %v6078
        %v6084 = vmul.f32 %v5848, %v6083
        %v6085 = vrcp.pop %v5895
        %v6086 = vmul.f32 %v5895, %v6085
        %v6087 = vsub.f32 1.0, %v6086
        %v6088 = vmul.f32 %v6085, %v6087
        %v6089 = vadd.f32 %v6085, %v6088
        %vm6090 = vweird.f32 %v5895
        %vm6091 = vweird.f32 %v6085
        %vm6092 = vmor %vm6090, %vm6091
        %v6093 = vsel %vm6092, %v6085, %v6089
        %v6094 = vand.u32 2147483647, %v5895
        %vm6095 = vcmp.eq.f32.partialorder %v6094, 8.507059e+37
        %v6096 = vand.u32 %v5895, 2147483648
        %v6097 = vor.u32 1.1754944e-38, %v6096
        %v6098 = vsel %vm6095, %v6097, %v6093
        %v6099 = vmul.f32 %v5850, %v6098
        %v6100 = vrcp.pop %v5898
        %v6101 = vmul.f32 %v5898, %v6100
        %v6102 = vsub.f32 1.0, %v6101
        %v6103 = vmul.f32 %v6100, %v6102
        %v6104 = vadd.f32 %v6100, %v6103
        %vm6105 = vweird.f32 %v5898
        %vm6106 = vweird.f32 %v6100
        %vm6107 = vmor %vm6105, %vm6106
        %v6108 = vsel %vm6107, %v6100, %v6104
        %v6109 = vand.u32 2147483647, %v5898
        %vm6110 = vcmp.eq.f32.partialorder %v6109, 8.507059e+37
        %v6111 = vand.u32 %v5898, 2147483648
        %v6112 = vor.u32 1.1754944e-38, %v6111
        %v6113 = vsel %vm6110, %v6112, %v6108
        %v6114 = vmul.f32 %v5852, %v6113
        %v6115 = vrcp.pop %v5901
        %v6116 = vmul.f32 %v5901, %v6115
        %v6117 = vsub.f32 1.0, %v6116
        %v6118 = vmul.f32 %v6115, %v6117
        %v6119 = vadd.f32 %v6115, %v6118
        %vm6120 = vweird.f32 %v5901
        %vm6121 = vweird.f32 %v6115
        %vm6122 = vmor %vm6120, %vm6121
        %v6123 = vsel %vm6122, %v6115, %v6119
        %v6124 = vand.u32 2147483647, %v5901
        %vm6125 = vcmp.eq.f32.partialorder %v6124, 8.507059e+37
        %v6126 = vand.u32 %v5901, 2147483648
        %v6127 = vor.u32 1.1754944e-38, %v6126
        %v6128 = vsel %vm6125, %v6127, %v6123
        %v6129 = vmul.f32 %v5854, %v6128
        %v6130 = vrcp.pop %v5904
        %v6131 = vmul.f32 %v5904, %v6130
        %v6132 = vsub.f32 1.0, %v6131
        %v6133 = vmul.f32 %v6130, %v6132
        %v6134 = vadd.f32 %v6130, %v6133
        %vm6135 = vweird.f32 %v5904
        %vm6136 = vweird.f32 %v6130
        %vm6137 = vmor %vm6135, %vm6136
        %v6138 = vsel %vm6137, %v6130, %v6134
        %v6139 = vand.u32 2147483647, %v5904
        %vm6140 = vcmp.eq.f32.partialorder %v6139, 8.507059e+37
        %v6141 = vand.u32 %v5904, 2147483648
        %v6142 = vor.u32 1.1754944e-38, %v6141
        %v6143 = vsel %vm6140, %v6142, %v6138
        %v6144 = vmul.f32 %v5856, %v6143
        %6145 = vst.msk [vmem:[%s401] sm:$0xff] %vm5760, %v5919
        %6146 = vst.msk [vmem:[%s401 + $0x8] sm:$0xff] %vm5760, %v5934
        %6147 = vst.msk [vmem:[%s401 + $0x10] sm:$0xff] %vm5760, %v5949
        %6148 = vst.msk [vmem:[%s401 + $0x18] sm:$0xff] %vm5760, %v5964
        %6149 = vst.msk [vmem:[%s401 + $0x20] sm:$0xff] %vm5760, %v5979
        %6150 = vst.msk [vmem:[%s401 + $0x28] sm:$0xff] %vm5760, %v5994
        %6151 = vst.msk [vmem:[%s401 + $0x30] sm:$0xff] %vm5760, %v6009
        %6152 = vst.msk [vmem:[%s401 + $0x38] sm:$0xff] %vm5760, %v6024
        %6153 = vst.msk [vmem:[%s401 + $0x40] sm:$0xff] %vm5760, %v6039
        %6154 = vst.msk [vmem:[%s401 + $0x48] sm:$0xff] %vm5760, %v6054
        %6155 = vst.msk [vmem:[%s401 + $0x50] sm:$0xff] %vm5760, %v6069
        %6156 = vst.msk [vmem:[%s401 + $0x58] sm:$0xff] %vm5760, %v6084
        %6157 = vst.msk [vmem:[%s401 + $0x60] sm:$0xff] %vm5760, %v6099
        %6158 = vst.msk [vmem:[%s401 + $0x68] sm:$0xff] %vm5760, %v6114
        %6159 = vst.msk [vmem:[%s401 + $0x70] sm:$0xff] %vm5760, %v6129
        %6160 = vst.msk [vmem:[%s401 + $0x78] sm:$0xff] %vm5760, %v6144
        %v6161 = vunpack.c.l.bf16 %v403
        %v6162 = vunpack.c.l.bf16 %v404
        %v6163 = vunpack.c.l.bf16 %v405
        %v6164 = vunpack.c.l.bf16 %v406
        %v6165 = vunpack.c.l.bf16 %v407
        %v6166 = vunpack.c.l.bf16 %v408
        %v6167 = vunpack.c.l.bf16 %v409
        %v6168 = vunpack.c.l.bf16 %v410
        %v6169 = vunpack.c.l.bf16 %v411
        %v6170 = vunpack.c.l.bf16 %v412
        %v6171 = vunpack.c.l.bf16 %v413
        %v6172 = vunpack.c.l.bf16 %v414
        %v6173 = vunpack.c.l.bf16 %v415
        %v6174 = vunpack.c.l.bf16 %v416
        %v6175 = vunpack.c.l.bf16 %v417
        %v6176 = vunpack.c.l.bf16 %v418
        %v6177 = vunpack.c.l.bf16 %v419
        %v6178 = vunpack.c.l.bf16 %v420
        %v6179 = vunpack.c.l.bf16 %v421
        %v6180 = vunpack.c.l.bf16 %v422
        %v6181 = vunpack.c.l.bf16 %v423
        %v6182 = vunpack.c.l.bf16 %v424
        %v6183 = vunpack.c.l.bf16 %v425
        %v6184 = vunpack.c.l.bf16 %v426
        %v6185 = vunpack.c.l.bf16 %v427
        %v6186 = vunpack.c.l.bf16 %v428
        %v6187 = vunpack.c.l.bf16 %v429
        %v6188 = vunpack.c.l.bf16 %v430
        %v6189 = vunpack.c.l.bf16 %v431
        %v6190 = vunpack.c.l.bf16 %v432
        %v6191 = vunpack.c.l.bf16 %v433
        %v6192 = vunpack.c.l.bf16 %v434
        %v6193 = vunpack.c.l.bf16 %v435
        %v6194 = vunpack.c.l.bf16 %v436
        %v6195 = vunpack.c.l.bf16 %v437
        %v6196 = vunpack.c.l.bf16 %v438
        %v6197 = vunpack.c.l.bf16 %v439
        %v6198 = vunpack.c.l.bf16 %v440
        %v6199 = vunpack.c.l.bf16 %v441
        %v6200 = vunpack.c.l.bf16 %v442
        %v6201 = vunpack.c.l.bf16 %v443
        %v6202 = vunpack.c.l.bf16 %v444
        %v6203 = vunpack.c.l.bf16 %v445
        %v6204 = vunpack.c.l.bf16 %v446
        %v6205 = vunpack.c.l.bf16 %v447
        %v6206 = vunpack.c.l.bf16 %v448
        %v6207 = vunpack.c.l.bf16 %v449
        %v6208 = vunpack.c.l.bf16 %v450
        %v6209 = vunpack.c.l.bf16 %v451
        %v6210 = vunpack.c.l.bf16 %v452
        %v6211 = vunpack.c.l.bf16 %v453
        %v6212 = vunpack.c.l.bf16 %v454
        %v6213 = vunpack.c.l.bf16 %v455
        %v6214 = vunpack.c.l.bf16 %v456
        %v6215 = vunpack.c.l.bf16 %v457
        %v6216 = vunpack.c.l.bf16 %v458
        %v6217 = vunpack.c.l.bf16 %v459
        %v6218 = vunpack.c.l.bf16 %v460
        %v6219 = vunpack.c.l.bf16 %v461
        %v6220 = vunpack.c.l.bf16 %v462
        %v6221 = vunpack.c.l.bf16 %v463
        %v6222 = vunpack.c.l.bf16 %v464
        %v6223 = vunpack.c.l.bf16 %v465
        %v6224 = vunpack.c.l.bf16 %v466
        %v6225 = vunpack.c.l.bf16 %v467
        %v6226 = vunpack.c.l.bf16 %v468
        %v6227 = vunpack.c.l.bf16 %v469
        %v6228 = vunpack.c.l.bf16 %v470
        %v6229 = vunpack.c.l.bf16 %v471
        %v6230 = vunpack.c.l.bf16 %v472
        %v6231 = vunpack.c.l.bf16 %v473
        %v6232 = vunpack.c.l.bf16 %v474
        %v6233 = vunpack.c.l.bf16 %v475
        %v6234 = vunpack.c.l.bf16 %v476
        %v6235 = vunpack.c.l.bf16 %v477
        %v6236 = vunpack.c.l.bf16 %v478
        %v6237 = vunpack.c.l.bf16 %v479
        %v6238 = vunpack.c.l.bf16 %v480
        %v6239 = vunpack.c.l.bf16 %v481
        %v6240 = vunpack.c.l.bf16 %v482
        %v6241 = vunpack.c.l.bf16 %v483
        %v6242 = vunpack.c.l.bf16 %v484
        %v6243 = vunpack.c.l.bf16 %v485
        %v6244 = vunpack.c.l.bf16 %v486
        %v6245 = vunpack.c.l.bf16 %v487
        %v6246 = vunpack.c.l.bf16 %v488
        %v6247 = vunpack.c.l.bf16 %v489
        %v6248 = vunpack.c.l.bf16 %v490
        %v6249 = vunpack.c.l.bf16 %v491
        %v6250 = vunpack.c.l.bf16 %v492
        %v6251 = vunpack.c.l.bf16 %v493
        %v6252 = vunpack.c.l.bf16 %v494
        %v6253 = vunpack.c.l.bf16 %v495
        %v6254 = vunpack.c.l.bf16 %v496
        %v6255 = vunpack.c.l.bf16 %v497
        %v6256 = vunpack.c.l.bf16 %v498
        %v6257 = vunpack.c.l.bf16 %v499
        %v6258 = vunpack.c.l.bf16 %v500
        %v6259 = vunpack.c.l.bf16 %v501
        %v6260 = vunpack.c.l.bf16 %v502
        %v6261 = vunpack.c.l.bf16 %v503
        %v6262 = vunpack.c.l.bf16 %v504
        %v6263 = vunpack.c.l.bf16 %v505
        %v6264 = vunpack.c.l.bf16 %v506
        %v6265 = vunpack.c.l.bf16 %v507
        %v6266 = vunpack.c.l.bf16 %v508
        %v6267 = vunpack.c.l.bf16 %v509
        %v6268 = vunpack.c.l.bf16 %v510
        %v6269 = vunpack.c.l.bf16 %v511
        %v6270 = vunpack.c.l.bf16 %v512
        %v6271 = vunpack.c.l.bf16 %v513
        %v6272 = vunpack.c.l.bf16 %v514
        %v6273 = vunpack.c.l.bf16 %v515
        %v6274 = vunpack.c.l.bf16 %v516
        %v6275 = vunpack.c.l.bf16 %v517
        %v6276 = vunpack.c.l.bf16 %v518
        %v6277 = vunpack.c.l.bf16 %v519
        %v6278 = vunpack.c.l.bf16 %v520
        %v6279 = vunpack.c.l.bf16 %v521
        %v6280 = vunpack.c.l.bf16 %v522
        %v6281 = vunpack.c.l.bf16 %v523
        %v6282 = vunpack.c.l.bf16 %v524
        %v6283 = vunpack.c.l.bf16 %v525
        %v6284 = vunpack.c.l.bf16 %v526
        %v6285 = vunpack.c.l.bf16 %v527
        %v6286 = vunpack.c.l.bf16 %v528
        %v6287 = vunpack.c.l.bf16 %v529
        %v6288 = vunpack.c.l.bf16 %v530
        %v6289 = vperm.slane %v5919, 0
        %v6290 = vlaneseq
        %v6291 = vshrl.u32 %v6290, 7
        %6293 = vset.pattern.permute.xlu0 %v6291
        %6294 = vperm.xlu0 %6293, %v6289
        %v6295 = vpop.permute.xlu0 %6294
        %v6296 = vperm.slane %v5919, 1
        %v6297 = vlaneseq
        %v6298 = vshrl.u32 %v6297, 7
        %6300 = vset.pattern.permute.xlu0 %v6298
        %6301 = vperm.xlu0 %6300, %v6296
        %v6302 = vpop.permute.xlu0 %6301
        %v6303 = vperm.slane %v5919, 2
        %v6304 = vlaneseq
        %v6305 = vshrl.u32 %v6304, 7
        %6307 = vset.pattern.permute.xlu0 %v6305
        %6308 = vperm.xlu0 %6307, %v6303
        %v6309 = vpop.permute.xlu0 %6308
        %v6310 = vperm.slane %v5919, 3
        %v6311 = vlaneseq
        %v6312 = vshrl.u32 %v6311, 7
        %6314 = vset.pattern.permute.xlu0 %v6312
        %6315 = vperm.xlu0 %6314, %v6310
        %v6316 = vpop.permute.xlu0 %6315
        %v6317 = vperm.slane %v5919, 4
        %v6318 = vlaneseq
        %v6319 = vshrl.u32 %v6318, 7
        %6321 = vset.pattern.permute.xlu0 %v6319
        %6322 = vperm.xlu0 %6321, %v6317
        %v6323 = vpop.permute.xlu0 %6322
        %v6324 = vperm.slane %v5919, 5
        %v6325 = vlaneseq
        %v6326 = vshrl.u32 %v6325, 7
        %6328 = vset.pattern.permute.xlu0 %v6326
        %6329 = vperm.xlu0 %6328, %v6324
        %v6330 = vpop.permute.xlu0 %6329
        %v6331 = vperm.slane %v5919, 6
        %v6332 = vlaneseq
        %v6333 = vshrl.u32 %v6332, 7
        %6335 = vset.pattern.permute.xlu0 %v6333
        %6336 = vperm.xlu0 %6335, %v6331
        %v6337 = vpop.permute.xlu0 %6336
        %v6338 = vperm.slane %v5919, 7
        %v6339 = vlaneseq
        %v6340 = vshrl.u32 %v6339, 7
        %6342 = vset.pattern.permute.xlu0 %v6340
        %6343 = vperm.xlu0 %6342, %v6338
        %v6344 = vpop.permute.xlu0 %6343
        %v6345 = vperm.slane %v5934, 0
        %v6346 = vlaneseq
        %v6347 = vshrl.u32 %v6346, 7
        %6349 = vset.pattern.permute.xlu0 %v6347
        %6350 = vperm.xlu0 %6349, %v6345
        %v6351 = vpop.permute.xlu0 %6350
        %v6352 = vperm.slane %v5934, 1
        %v6353 = vlaneseq
        %v6354 = vshrl.u32 %v6353, 7
        %6356 = vset.pattern.permute.xlu0 %v6354
        %6357 = vperm.xlu0 %6356, %v6352
        %v6358 = vpop.permute.xlu0 %6357
        %v6359 = vperm.slane %v5934, 2
        %v6360 = vlaneseq
        %v6361 = vshrl.u32 %v6360, 7
        %6363 = vset.pattern.permute.xlu0 %v6361
        %6364 = vperm.xlu0 %6363, %v6359
        %v6365 = vpop.permute.xlu0 %6364
        %v6366 = vperm.slane %v5934, 3
        %v6367 = vlaneseq
        %v6368 = vshrl.u32 %v6367, 7
        %6370 = vset.pattern.permute.xlu0 %v6368
        %6371 = vperm.xlu0 %6370, %v6366
        %v6372 = vpop.permute.xlu0 %6371
        %v6373 = vperm.slane %v5934, 4
        %v6374 = vlaneseq
        %v6375 = vshrl.u32 %v6374, 7
        %6377 = vset.pattern.permute.xlu0 %v6375
        %6378 = vperm.xlu0 %6377, %v6373
        %v6379 = vpop.permute.xlu0 %6378
        %v6380 = vperm.slane %v5934, 5
        %v6381 = vlaneseq
        %v6382 = vshrl.u32 %v6381, 7
        %6384 = vset.pattern.permute.xlu0 %v6382
        %6385 = vperm.xlu0 %6384, %v6380
        %v6386 = vpop.permute.xlu0 %6385
        %v6387 = vperm.slane %v5934, 6
        %v6388 = vlaneseq
        %v6389 = vshrl.u32 %v6388, 7
        %6391 = vset.pattern.permute.xlu0 %v6389
        %6392 = vperm.xlu0 %6391, %v6387
        %v6393 = vpop.permute.xlu0 %6392
        %v6394 = vperm.slane %v5934, 7
        %v6395 = vlaneseq
        %v6396 = vshrl.u32 %v6395, 7
        %6398 = vset.pattern.permute.xlu0 %v6396
        %6399 = vperm.xlu0 %6398, %v6394
        %v6400 = vpop.permute.xlu0 %6399
        %v6401 = vperm.slane %v5949, 0
        %v6402 = vlaneseq
        %v6403 = vshrl.u32 %v6402, 7
        %6405 = vset.pattern.permute.xlu0 %v6403
        %6406 = vperm.xlu0 %6405, %v6401
        %v6407 = vpop.permute.xlu0 %6406
        %v6408 = vperm.slane %v5949, 1
        %v6409 = vlaneseq
        %v6410 = vshrl.u32 %v6409, 7
        %6412 = vset.pattern.permute.xlu0 %v6410
        %6413 = vperm.xlu0 %6412, %v6408
        %v6414 = vpop.permute.xlu0 %6413
        %v6415 = vperm.slane %v5949, 2
        %v6416 = vlaneseq
        %v6417 = vshrl.u32 %v6416, 7
        %6419 = vset.pattern.permute.xlu0 %v6417
        %6420 = vperm.xlu0 %6419, %v6415
        %v6421 = vpop.permute.xlu0 %6420
        %v6422 = vperm.slane %v5949, 3
        %v6423 = vlaneseq
        %v6424 = vshrl.u32 %v6423, 7
        %6426 = vset.pattern.permute.xlu0 %v6424
        %6427 = vperm.xlu0 %6426, %v6422
        %v6428 = vpop.permute.xlu0 %6427
        %v6429 = vperm.slane %v5949, 4
        %v6430 = vlaneseq
        %v6431 = vshrl.u32 %v6430, 7
        %6433 = vset.pattern.permute.xlu0 %v6431
        %6434 = vperm.xlu0 %6433, %v6429
        %v6435 = vpop.permute.xlu0 %6434
        %v6436 = vperm.slane %v5949, 5
        %v6437 = vlaneseq
        %v6438 = vshrl.u32 %v6437, 7
        %6440 = vset.pattern.permute.xlu0 %v6438
        %6441 = vperm.xlu0 %6440, %v6436
        %v6442 = vpop.permute.xlu0 %6441
        %v6443 = vperm.slane %v5949, 6
        %v6444 = vlaneseq
        %v6445 = vshrl.u32 %v6444, 7
        %6447 = vset.pattern.permute.xlu0 %v6445
        %6448 = vperm.xlu0 %6447, %v6443
        %v6449 = vpop.permute.xlu0 %6448
        %v6450 = vperm.slane %v5949, 7
        %v6451 = vlaneseq
        %v6452 = vshrl.u32 %v6451, 7
        %6454 = vset.pattern.permute.xlu0 %v6452
        %6455 = vperm.xlu0 %6454, %v6450
        %v6456 = vpop.permute.xlu0 %6455
        %v6457 = vperm.slane %v5964, 0
        %v6458 = vlaneseq
        %v6459 = vshrl.u32 %v6458, 7
        %6461 = vset.pattern.permute.xlu0 %v6459
        %6462 = vperm.xlu0 %6461, %v6457
        %v6463 = vpop.permute.xlu0 %6462
        %v6464 = vperm.slane %v5964, 1
        %v6465 = vlaneseq
        %v6466 = vshrl.u32 %v6465, 7
        %6468 = vset.pattern.permute.xlu0 %v6466
        %6469 = vperm.xlu0 %6468, %v6464
        %v6470 = vpop.permute.xlu0 %6469
        %v6471 = vperm.slane %v5964, 2
        %v6472 = vlaneseq
        %v6473 = vshrl.u32 %v6472, 7
        %6475 = vset.pattern.permute.xlu0 %v6473
        %6476 = vperm.xlu0 %6475, %v6471
        %v6477 = vpop.permute.xlu0 %6476
        %v6478 = vperm.slane %v5964, 3
        %v6479 = vlaneseq
        %v6480 = vshrl.u32 %v6479, 7
        %6482 = vset.pattern.permute.xlu0 %v6480
        %6483 = vperm.xlu0 %6482, %v6478
        %v6484 = vpop.permute.xlu0 %6483
        %v6485 = vperm.slane %v5964, 4
        %v6486 = vlaneseq
        %v6487 = vshrl.u32 %v6486, 7
        %6489 = vset.pattern.permute.xlu0 %v6487
        %6490 = vperm.xlu0 %6489, %v6485
        %v6491 = vpop.permute.xlu0 %6490
        %v6492 = vperm.slane %v5964, 5
        %v6493 = vlaneseq
        %v6494 = vshrl.u32 %v6493, 7
        %6496 = vset.pattern.permute.xlu0 %v6494
        %6497 = vperm.xlu0 %6496, %v6492
        %v6498 = vpop.permute.xlu0 %6497
        %v6499 = vperm.slane %v5964, 6
        %v6500 = vlaneseq
        %v6501 = vshrl.u32 %v6500, 7
        %6503 = vset.pattern.permute.xlu0 %v6501
        %6504 = vperm.xlu0 %6503, %v6499
        %v6505 = vpop.permute.xlu0 %6504
        %v6506 = vperm.slane %v5964, 7
        %v6507 = vlaneseq
        %v6508 = vshrl.u32 %v6507, 7
        %6510 = vset.pattern.permute.xlu0 %v6508
        %6511 = vperm.xlu0 %6510, %v6506
        %v6512 = vpop.permute.xlu0 %6511
        %v6513 = vperm.slane %v5979, 0
        %v6514 = vlaneseq
        %v6515 = vshrl.u32 %v6514, 7
        %6517 = vset.pattern.permute.xlu0 %v6515
        %6518 = vperm.xlu0 %6517, %v6513
        %v6519 = vpop.permute.xlu0 %6518
        %v6520 = vperm.slane %v5979, 1
        %v6521 = vlaneseq
        %v6522 = vshrl.u32 %v6521, 7
        %6524 = vset.pattern.permute.xlu0 %v6522
        %6525 = vperm.xlu0 %6524, %v6520
        %v6526 = vpop.permute.xlu0 %6525
        %v6527 = vperm.slane %v5979, 2
        %v6528 = vlaneseq
        %v6529 = vshrl.u32 %v6528, 7
        %6531 = vset.pattern.permute.xlu0 %v6529
        %6532 = vperm.xlu0 %6531, %v6527
        %v6533 = vpop.permute.xlu0 %6532
        %v6534 = vperm.slane %v5979, 3
        %v6535 = vlaneseq
        %v6536 = vshrl.u32 %v6535, 7
        %6538 = vset.pattern.permute.xlu0 %v6536
        %6539 = vperm.xlu0 %6538, %v6534
        %v6540 = vpop.permute.xlu0 %6539
        %v6541 = vperm.slane %v5979, 4
        %v6542 = vlaneseq
        %v6543 = vshrl.u32 %v6542, 7
        %6545 = vset.pattern.permute.xlu0 %v6543
        %6546 = vperm.xlu0 %6545, %v6541
        %v6547 = vpop.permute.xlu0 %6546
        %v6548 = vperm.slane %v5979, 5
        %v6549 = vlaneseq
        %v6550 = vshrl.u32 %v6549, 7
        %6552 = vset.pattern.permute.xlu0 %v6550
        %6553 = vperm.xlu0 %6552, %v6548
        %v6554 = vpop.permute.xlu0 %6553
        %v6555 = vperm.slane %v5979, 6
        %v6556 = vlaneseq
        %v6557 = vshrl.u32 %v6556, 7
        %6559 = vset.pattern.permute.xlu0 %v6557
        %6560 = vperm.xlu0 %6559, %v6555
        %v6561 = vpop.permute.xlu0 %6560
        %v6562 = vperm.slane %v5979, 7
        %v6563 = vlaneseq
        %v6564 = vshrl.u32 %v6563, 7
        %6566 = vset.pattern.permute.xlu0 %v6564
        %6567 = vperm.xlu0 %6566, %v6562
        %v6568 = vpop.permute.xlu0 %6567
        %v6569 = vperm.slane %v5994, 0
        %v6570 = vlaneseq
        %v6571 = vshrl.u32 %v6570, 7
        %6573 = vset.pattern.permute.xlu0 %v6571
        %6574 = vperm.xlu0 %6573, %v6569
        %v6575 = vpop.permute.xlu0 %6574
        %v6576 = vperm.slane %v5994, 1
        %v6577 = vlaneseq
        %v6578 = vshrl.u32 %v6577, 7
        %6580 = vset.pattern.permute.xlu0 %v6578
        %6581 = vperm.xlu0 %6580, %v6576
        %v6582 = vpop.permute.xlu0 %6581
        %v6583 = vperm.slane %v5994, 2
        %v6584 = vlaneseq
        %v6585 = vshrl.u32 %v6584, 7
        %6587 = vset.pattern.permute.xlu0 %v6585
        %6588 = vperm.xlu0 %6587, %v6583
        %v6589 = vpop.permute.xlu0 %6588
        %v6590 = vperm.slane %v5994, 3
        %v6591 = vlaneseq
        %v6592 = vshrl.u32 %v6591, 7
        %6594 = vset.pattern.permute.xlu0 %v6592
        %6595 = vperm.xlu0 %6594, %v6590
        %v6596 = vpop.permute.xlu0 %6595
        %v6597 = vperm.slane %v5994, 4
        %v6598 = vlaneseq
        %v6599 = vshrl.u32 %v6598, 7
        %6601 = vset.pattern.permute.xlu0 %v6599
        %6602 = vperm.xlu0 %6601, %v6597
        %v6603 = vpop.permute.xlu0 %6602
        %v6604 = vperm.slane %v5994, 5
        %v6605 = vlaneseq
        %v6606 = vshrl.u32 %v6605, 7
        %6608 = vset.pattern.permute.xlu0 %v6606
        %6609 = vperm.xlu0 %6608, %v6604
        %v6610 = vpop.permute.xlu0 %6609
        %v6611 = vperm.slane %v5994, 6
        %v6612 = vlaneseq
        %v6613 = vshrl.u32 %v6612, 7
        %6615 = vset.pattern.permute.xlu0 %v6613
        %6616 = vperm.xlu0 %6615, %v6611
        %v6617 = vpop.permute.xlu0 %6616
        %v6618 = vperm.slane %v5994, 7
        %v6619 = vlaneseq
        %v6620 = vshrl.u32 %v6619, 7
        %6622 = vset.pattern.permute.xlu0 %v6620
        %6623 = vperm.xlu0 %6622, %v6618
        %v6624 = vpop.permute.xlu0 %6623
        %v6625 = vperm.slane %v6009, 0
        %v6626 = vlaneseq
        %v6627 = vshrl.u32 %v6626, 7
        %6629 = vset.pattern.permute.xlu0 %v6627
        %6630 = vperm.xlu0 %6629, %v6625
        %v6631 = vpop.permute.xlu0 %6630
        %v6632 = vperm.slane %v6009, 1
        %v6633 = vlaneseq
        %v6634 = vshrl.u32 %v6633, 7
        %6636 = vset.pattern.permute.xlu0 %v6634
        %6637 = vperm.xlu0 %6636, %v6632
        %v6638 = vpop.permute.xlu0 %6637
        %v6639 = vperm.slane %v6009, 2
        %v6640 = vlaneseq
        %v6641 = vshrl.u32 %v6640, 7
        %6643 = vset.pattern.permute.xlu0 %v6641
        %6644 = vperm.xlu0 %6643, %v6639
        %v6645 = vpop.permute.xlu0 %6644
        %v6646 = vperm.slane %v6009, 3
        %v6647 = vlaneseq
        %v6648 = vshrl.u32 %v6647, 7
        %6650 = vset.pattern.permute.xlu0 %v6648
        %6651 = vperm.xlu0 %6650, %v6646
        %v6652 = vpop.permute.xlu0 %6651
        %v6653 = vperm.slane %v6009, 4
        %v6654 = vlaneseq
        %v6655 = vshrl.u32 %v6654, 7
        %6657 = vset.pattern.permute.xlu0 %v6655
        %6658 = vperm.xlu0 %6657, %v6653
        %v6659 = vpop.permute.xlu0 %6658
        %v6660 = vperm.slane %v6009, 5
        %v6661 = vlaneseq
        %v6662 = vshrl.u32 %v6661, 7
        %6664 = vset.pattern.permute.xlu0 %v6662
        %6665 = vperm.xlu0 %6664, %v6660
        %v6666 = vpop.permute.xlu0 %6665
        %v6667 = vperm.slane %v6009, 6
        %v6668 = vlaneseq
        %v6669 = vshrl.u32 %v6668, 7
        %6671 = vset.pattern.permute.xlu0 %v6669
        %6672 = vperm.xlu0 %6671, %v6667
        %v6673 = vpop.permute.xlu0 %6672
        %v6674 = vperm.slane %v6009, 7
        %v6675 = vlaneseq
        %v6676 = vshrl.u32 %v6675, 7
        %6678 = vset.pattern.permute.xlu0 %v6676
        %6679 = vperm.xlu0 %6678, %v6674
        %v6680 = vpop.permute.xlu0 %6679
        %v6681 = vperm.slane %v6024, 0
        %v6682 = vlaneseq
        %v6683 = vshrl.u32 %v6682, 7
        %6685 = vset.pattern.permute.xlu0 %v6683
        %6686 = vperm.xlu0 %6685, %v6681
        %v6687 = vpop.permute.xlu0 %6686
        %v6688 = vperm.slane %v6024, 1
        %v6689 = vlaneseq
        %v6690 = vshrl.u32 %v6689, 7
        %6692 = vset.pattern.permute.xlu0 %v6690
        %6693 = vperm.xlu0 %6692, %v6688
        %v6694 = vpop.permute.xlu0 %6693
        %v6695 = vperm.slane %v6024, 2
        %v6696 = vlaneseq
        %v6697 = vshrl.u32 %v6696, 7
        %6699 = vset.pattern.permute.xlu0 %v6697
        %6700 = vperm.xlu0 %6699, %v6695
        %v6701 = vpop.permute.xlu0 %6700
        %v6702 = vperm.slane %v6024, 3
        %v6703 = vlaneseq
        %v6704 = vshrl.u32 %v6703, 7
        %6706 = vset.pattern.permute.xlu0 %v6704
        %6707 = vperm.xlu0 %6706, %v6702
        %v6708 = vpop.permute.xlu0 %6707
        %v6709 = vperm.slane %v6024, 4
        %v6710 = vlaneseq
        %v6711 = vshrl.u32 %v6710, 7
        %6713 = vset.pattern.permute.xlu0 %v6711
        %6714 = vperm.xlu0 %6713, %v6709
        %v6715 = vpop.permute.xlu0 %6714
        %v6716 = vperm.slane %v6024, 5
        %v6717 = vlaneseq
        %v6718 = vshrl.u32 %v6717, 7
        %6720 = vset.pattern.permute.xlu0 %v6718
        %6721 = vperm.xlu0 %6720, %v6716
        %v6722 = vpop.permute.xlu0 %6721
        %v6723 = vperm.slane %v6024, 6
        %v6724 = vlaneseq
        %v6725 = vshrl.u32 %v6724, 7
        %6727 = vset.pattern.permute.xlu0 %v6725
        %6728 = vperm.xlu0 %6727, %v6723
        %v6729 = vpop.permute.xlu0 %6728
        %v6730 = vperm.slane %v6024, 7
        %v6731 = vlaneseq
        %v6732 = vshrl.u32 %v6731, 7
        %6734 = vset.pattern.permute.xlu0 %v6732
        %6735 = vperm.xlu0 %6734, %v6730
        %v6736 = vpop.permute.xlu0 %6735
        %v6737 = vperm.slane %v6039, 0
        %v6738 = vlaneseq
        %v6739 = vshrl.u32 %v6738, 7
        %6741 = vset.pattern.permute.xlu0 %v6739
        %6742 = vperm.xlu0 %6741, %v6737
        %v6743 = vpop.permute.xlu0 %6742
        %v6744 = vperm.slane %v6039, 1
        %v6745 = vlaneseq
        %v6746 = vshrl.u32 %v6745, 7
        %6748 = vset.pattern.permute.xlu0 %v6746
        %6749 = vperm.xlu0 %6748, %v6744
        %v6750 = vpop.permute.xlu0 %6749
        %v6751 = vperm.slane %v6039, 2
        %v6752 = vlaneseq
        %v6753 = vshrl.u32 %v6752, 7
        %6755 = vset.pattern.permute.xlu0 %v6753
        %6756 = vperm.xlu0 %6755, %v6751
        %v6757 = vpop.permute.xlu0 %6756
        %v6758 = vperm.slane %v6039, 3
        %v6759 = vlaneseq
        %v6760 = vshrl.u32 %v6759, 7
        %6762 = vset.pattern.permute.xlu0 %v6760
        %6763 = vperm.xlu0 %6762, %v6758
        %v6764 = vpop.permute.xlu0 %6763
        %v6765 = vperm.slane %v6039, 4
        %v6766 = vlaneseq
        %v6767 = vshrl.u32 %v6766, 7
        %6769 = vset.pattern.permute.xlu0 %v6767
        %6770 = vperm.xlu0 %6769, %v6765
        %v6771 = vpop.permute.xlu0 %6770
        %v6772 = vperm.slane %v6039, 5
        %v6773 = vlaneseq
        %v6774 = vshrl.u32 %v6773, 7
        %6776 = vset.pattern.permute.xlu0 %v6774
        %6777 = vperm.xlu0 %6776, %v6772
        %v6778 = vpop.permute.xlu0 %6777
        %v6779 = vperm.slane %v6039, 6
        %v6780 = vlaneseq
        %v6781 = vshrl.u32 %v6780, 7
        %6783 = vset.pattern.permute.xlu0 %v6781
        %6784 = vperm.xlu0 %6783, %v6779
        %v6785 = vpop.permute.xlu0 %6784
        %v6786 = vperm.slane %v6039, 7
        %v6787 = vlaneseq
        %v6788 = vshrl.u32 %v6787, 7
        %6790 = vset.pattern.permute.xlu0 %v6788
        %6791 = vperm.xlu0 %6790, %v6786
        %v6792 = vpop.permute.xlu0 %6791
        %v6793 = vperm.slane %v6054, 0
        %v6794 = vlaneseq
        %v6795 = vshrl.u32 %v6794, 7
        %6797 = vset.pattern.permute.xlu0 %v6795
        %6798 = vperm.xlu0 %6797, %v6793
        %v6799 = vpop.permute.xlu0 %6798
        %v6800 = vperm.slane %v6054, 1
        %v6801 = vlaneseq
        %v6802 = vshrl.u32 %v6801, 7
        %6804 = vset.pattern.permute.xlu0 %v6802
        %6805 = vperm.xlu0 %6804, %v6800
        %v6806 = vpop.permute.xlu0 %6805
        %v6807 = vperm.slane %v6054, 2
        %v6808 = vlaneseq
        %v6809 = vshrl.u32 %v6808, 7
        %6811 = vset.pattern.permute.xlu0 %v6809
        %6812 = vperm.xlu0 %6811, %v6807
        %v6813 = vpop.permute.xlu0 %6812
        %v6814 = vperm.slane %v6054, 3
        %v6815 = vlaneseq
        %v6816 = vshrl.u32 %v6815, 7
        %6818 = vset.pattern.permute.xlu0 %v6816
        %6819 = vperm.xlu0 %6818, %v6814
        %v6820 = vpop.permute.xlu0 %6819
        %v6821 = vperm.slane %v6054, 4
        %v6822 = vlaneseq
        %v6823 = vshrl.u32 %v6822, 7
        %6825 = vset.pattern.permute.xlu0 %v6823
        %6826 = vperm.xlu0 %6825, %v6821
        %v6827 = vpop.permute.xlu0 %6826
        %v6828 = vperm.slane %v6054, 5
        %v6829 = vlaneseq
        %v6830 = vshrl.u32 %v6829, 7
        %6832 = vset.pattern.permute.xlu0 %v6830
        %6833 = vperm.xlu0 %6832, %v6828
        %v6834 = vpop.permute.xlu0 %6833
        %v6835 = vperm.slane %v6054, 6
        %v6836 = vlaneseq
        %v6837 = vshrl.u32 %v6836, 7
        %6839 = vset.pattern.permute.xlu0 %v6837
        %6840 = vperm.xlu0 %6839, %v6835
        %v6841 = vpop.permute.xlu0 %6840
        %v6842 = vperm.slane %v6054, 7
        %v6843 = vlaneseq
        %v6844 = vshrl.u32 %v6843, 7
        %6846 = vset.pattern.permute.xlu0 %v6844
        %6847 = vperm.xlu0 %6846, %v6842
        %v6848 = vpop.permute.xlu0 %6847
        %v6849 = vperm.slane %v6069, 0
        %v6850 = vlaneseq
        %v6851 = vshrl.u32 %v6850, 7
        %6853 = vset.pattern.permute.xlu0 %v6851
        %6854 = vperm.xlu0 %6853, %v6849
        %v6855 = vpop.permute.xlu0 %6854
        %v6856 = vperm.slane %v6069, 1
        %v6857 = vlaneseq
        %v6858 = vshrl.u32 %v6857, 7
        %6860 = vset.pattern.permute.xlu0 %v6858
        %6861 = vperm.xlu0 %6860, %v6856
        %v6862 = vpop.permute.xlu0 %6861
        %v6863 = vperm.slane %v6069, 2
        %v6864 = vlaneseq
        %v6865 = vshrl.u32 %v6864, 7
        %6867 = vset.pattern.permute.xlu0 %v6865
        %6868 = vperm.xlu0 %6867, %v6863
        %v6869 = vpop.permute.xlu0 %6868
        %v6870 = vperm.slane %v6069, 3
        %v6871 = vlaneseq
        %v6872 = vshrl.u32 %v6871, 7
        %6874 = vset.pattern.permute.xlu0 %v6872
        %6875 = vperm.xlu0 %6874, %v6870
        %v6876 = vpop.permute.xlu0 %6875
        %v6877 = vperm.slane %v6069, 4
        %v6878 = vlaneseq
        %v6879 = vshrl.u32 %v6878, 7
        %6881 = vset.pattern.permute.xlu0 %v6879
        %6882 = vperm.xlu0 %6881, %v6877
        %v6883 = vpop.permute.xlu0 %6882
        %v6884 = vperm.slane %v6069, 5
        %v6885 = vlaneseq
        %v6886 = vshrl.u32 %v6885, 7
        %6888 = vset.pattern.permute.xlu0 %v6886
        %6889 = vperm.xlu0 %6888, %v6884
        %v6890 = vpop.permute.xlu0 %6889
        %v6891 = vperm.slane %v6069, 6
        %v6892 = vlaneseq
        %v6893 = vshrl.u32 %v6892, 7
        %6895 = vset.pattern.permute.xlu0 %v6893
        %6896 = vperm.xlu0 %6895, %v6891
        %v6897 = vpop.permute.xlu0 %6896
        %v6898 = vperm.slane %v6069, 7
        %v6899 = vlaneseq
        %v6900 = vshrl.u32 %v6899, 7
        %6902 = vset.pattern.permute.xlu0 %v6900
        %6903 = vperm.xlu0 %6902, %v6898
        %v6904 = vpop.permute.xlu0 %6903
        %v6905 = vperm.slane %v6084, 0
        %v6906 = vlaneseq
        %v6907 = vshrl.u32 %v6906, 7
        %6909 = vset.pattern.permute.xlu0 %v6907
        %6910 = vperm.xlu0 %6909, %v6905
        %v6911 = vpop.permute.xlu0 %6910
        %v6912 = vperm.slane %v6084, 1
        %v6913 = vlaneseq
        %v6914 = vshrl.u32 %v6913, 7
        %6916 = vset.pattern.permute.xlu0 %v6914
        %6917 = vperm.xlu0 %6916, %v6912
        %v6918 = vpop.permute.xlu0 %6917
        %v6919 = vperm.slane %v6084, 2
        %v6920 = vlaneseq
        %v6921 = vshrl.u32 %v6920, 7
        %6923 = vset.pattern.permute.xlu0 %v6921
        %6924 = vperm.xlu0 %6923, %v6919
        %v6925 = vpop.permute.xlu0 %6924
        %v6926 = vperm.slane %v6084, 3
        %v6927 = vlaneseq
        %v6928 = vshrl.u32 %v6927, 7
        %6930 = vset.pattern.permute.xlu0 %v6928
        %6931 = vperm.xlu0 %6930, %v6926
        %v6932 = vpop.permute.xlu0 %6931
        %v6933 = vperm.slane %v6084, 4
        %v6934 = vlaneseq
        %v6935 = vshrl.u32 %v6934, 7
        %6937 = vset.pattern.permute.xlu0 %v6935
        %6938 = vperm.xlu0 %6937, %v6933
        %v6939 = vpop.permute.xlu0 %6938
        %v6940 = vperm.slane %v6084, 5
        %v6941 = vlaneseq
        %v6942 = vshrl.u32 %v6941, 7
        %6944 = vset.pattern.permute.xlu0 %v6942
        %6945 = vperm.xlu0 %6944, %v6940
        %v6946 = vpop.permute.xlu0 %6945
        %v6947 = vperm.slane %v6084, 6
        %v6948 = vlaneseq
        %v6949 = vshrl.u32 %v6948, 7
        %6951 = vset.pattern.permute.xlu0 %v6949
        %6952 = vperm.xlu0 %6951, %v6947
        %v6953 = vpop.permute.xlu0 %6952
        %v6954 = vperm.slane %v6084, 7
        %v6955 = vlaneseq
        %v6956 = vshrl.u32 %v6955, 7
        %6958 = vset.pattern.permute.xlu0 %v6956
        %6959 = vperm.xlu0 %6958, %v6954
        %v6960 = vpop.permute.xlu0 %6959
        %v6961 = vperm.slane %v6099, 0
        %v6962 = vlaneseq
        %v6963 = vshrl.u32 %v6962, 7
        %6965 = vset.pattern.permute.xlu0 %v6963
        %6966 = vperm.xlu0 %6965, %v6961
        %v6967 = vpop.permute.xlu0 %6966
        %v6968 = vperm.slane %v6099, 1
        %v6969 = vlaneseq
        %v6970 = vshrl.u32 %v6969, 7
        %6972 = vset.pattern.permute.xlu0 %v6970
        %6973 = vperm.xlu0 %6972, %v6968
        %v6974 = vpop.permute.xlu0 %6973
        %v6975 = vperm.slane %v6099, 2
        %v6976 = vlaneseq
        %v6977 = vshrl.u32 %v6976, 7
        %6979 = vset.pattern.permute.xlu0 %v6977
        %6980 = vperm.xlu0 %6979, %v6975
        %v6981 = vpop.permute.xlu0 %6980
        %v6982 = vperm.slane %v6099, 3
        %v6983 = vlaneseq
        %v6984 = vshrl.u32 %v6983, 7
        %6986 = vset.pattern.permute.xlu0 %v6984
        %6987 = vperm.xlu0 %6986, %v6982
        %v6988 = vpop.permute.xlu0 %6987
        %v6989 = vperm.slane %v6099, 4
        %v6990 = vlaneseq
        %v6991 = vshrl.u32 %v6990, 7
        %6993 = vset.pattern.permute.xlu0 %v6991
        %6994 = vperm.xlu0 %6993, %v6989
        %v6995 = vpop.permute.xlu0 %6994
        %v6996 = vperm.slane %v6099, 5
        %v6997 = vlaneseq
        %v6998 = vshrl.u32 %v6997, 7
        %7000 = vset.pattern.permute.xlu0 %v6998
        %7001 = vperm.xlu0 %7000, %v6996
        %v7002 = vpop.permute.xlu0 %7001
        %v7003 = vperm.slane %v6099, 6
        %v7004 = vlaneseq
        %v7005 = vshrl.u32 %v7004, 7
        %7007 = vset.pattern.permute.xlu0 %v7005
        %7008 = vperm.xlu0 %7007, %v7003
        %v7009 = vpop.permute.xlu0 %7008
        %v7010 = vperm.slane %v6099, 7
        %v7011 = vlaneseq
        %v7012 = vshrl.u32 %v7011, 7
        %7014 = vset.pattern.permute.xlu0 %v7012
        %7015 = vperm.xlu0 %7014, %v7010
        %v7016 = vpop.permute.xlu0 %7015
        %v7017 = vperm.slane %v6114, 0
        %v7018 = vlaneseq
        %v7019 = vshrl.u32 %v7018, 7
        %7021 = vset.pattern.permute.xlu0 %v7019
        %7022 = vperm.xlu0 %7021, %v7017
        %v7023 = vpop.permute.xlu0 %7022
        %v7024 = vperm.slane %v6114, 1
        %v7025 = vlaneseq
        %v7026 = vshrl.u32 %v7025, 7
        %7028 = vset.pattern.permute.xlu0 %v7026
        %7029 = vperm.xlu0 %7028, %v7024
        %v7030 = vpop.permute.xlu0 %7029
        %v7031 = vperm.slane %v6114, 2
        %v7032 = vlaneseq
        %v7033 = vshrl.u32 %v7032, 7
        %7035 = vset.pattern.permute.xlu0 %v7033
        %7036 = vperm.xlu0 %7035, %v7031
        %v7037 = vpop.permute.xlu0 %7036
        %v7038 = vperm.slane %v6114, 3
        %v7039 = vlaneseq
        %v7040 = vshrl.u32 %v7039, 7
        %7042 = vset.pattern.permute.xlu0 %v7040
        %7043 = vperm.xlu0 %7042, %v7038
        %v7044 = vpop.permute.xlu0 %7043
        %v7045 = vperm.slane %v6114, 4
        %v7046 = vlaneseq
        %v7047 = vshrl.u32 %v7046, 7
        %7049 = vset.pattern.permute.xlu0 %v7047
        %7050 = vperm.xlu0 %7049, %v7045
        %v7051 = vpop.permute.xlu0 %7050
        %v7052 = vperm.slane %v6114, 5
        %v7053 = vlaneseq
        %v7054 = vshrl.u32 %v7053, 7
        %7056 = vset.pattern.permute.xlu0 %v7054
        %7057 = vperm.xlu0 %7056, %v7052
        %v7058 = vpop.permute.xlu0 %7057
        %v7059 = vperm.slane %v6114, 6
        %v7060 = vlaneseq
        %v7061 = vshrl.u32 %v7060, 7
        %7063 = vset.pattern.permute.xlu0 %v7061
        %7064 = vperm.xlu0 %7063, %v7059
        %v7065 = vpop.permute.xlu0 %7064
        %v7066 = vperm.slane %v6114, 7
        %v7067 = vlaneseq
        %v7068 = vshrl.u32 %v7067, 7
        %7070 = vset.pattern.permute.xlu0 %v7068
        %7071 = vperm.xlu0 %7070, %v7066
        %v7072 = vpop.permute.xlu0 %7071
        %v7073 = vperm.slane %v6129, 0
        %v7074 = vlaneseq
        %v7075 = vshrl.u32 %v7074, 7
        %7077 = vset.pattern.permute.xlu0 %v7075
        %7078 = vperm.xlu0 %7077, %v7073
        %v7079 = vpop.permute.xlu0 %7078
        %v7080 = vperm.slane %v6129, 1
        %v7081 = vlaneseq
        %v7082 = vshrl.u32 %v7081, 7
        %7084 = vset.pattern.permute.xlu0 %v7082
        %7085 = vperm.xlu0 %7084, %v7080
        %v7086 = vpop.permute.xlu0 %7085
        %v7087 = vperm.slane %v6129, 2
        %v7088 = vlaneseq
        %v7089 = vshrl.u32 %v7088, 7
        %7091 = vset.pattern.permute.xlu0 %v7089
        %7092 = vperm.xlu0 %7091, %v7087
        %v7093 = vpop.permute.xlu0 %7092
        %v7094 = vperm.slane %v6129, 3
        %v7095 = vlaneseq
        %v7096 = vshrl.u32 %v7095, 7
        %7098 = vset.pattern.permute.xlu0 %v7096
        %7099 = vperm.xlu0 %7098, %v7094
        %v7100 = vpop.permute.xlu0 %7099
        %v7101 = vperm.slane %v6129, 4
        %v7102 = vlaneseq
        %v7103 = vshrl.u32 %v7102, 7
        %7105 = vset.pattern.permute.xlu0 %v7103
        %7106 = vperm.xlu0 %7105, %v7101
        %v7107 = vpop.permute.xlu0 %7106
        %v7108 = vperm.slane %v6129, 5
        %v7109 = vlaneseq
        %v7110 = vshrl.u32 %v7109, 7
        %7112 = vset.pattern.permute.xlu0 %v7110
        %7113 = vperm.xlu0 %7112, %v7108
        %v7114 = vpop.permute.xlu0 %7113
        %v7115 = vperm.slane %v6129, 6
        %v7116 = vlaneseq
        %v7117 = vshrl.u32 %v7116, 7
        %7119 = vset.pattern.permute.xlu0 %v7117
        %7120 = vperm.xlu0 %7119, %v7115
        %v7121 = vpop.permute.xlu0 %7120
        %v7122 = vperm.slane %v6129, 7
        %v7123 = vlaneseq
        %v7124 = vshrl.u32 %v7123, 7
        %7126 = vset.pattern.permute.xlu0 %v7124
        %7127 = vperm.xlu0 %7126, %v7122
        %v7128 = vpop.permute.xlu0 %7127
        %v7129 = vperm.slane %v6144, 0
        %v7130 = vlaneseq
        %v7131 = vshrl.u32 %v7130, 7
        %7133 = vset.pattern.permute.xlu0 %v7131
        %7134 = vperm.xlu0 %7133, %v7129
        %v7135 = vpop.permute.xlu0 %7134
        %v7136 = vperm.slane %v6144, 1
        %v7137 = vlaneseq
        %v7138 = vshrl.u32 %v7137, 7
        %7140 = vset.pattern.permute.xlu0 %v7138
        %7141 = vperm.xlu0 %7140, %v7136
        %v7142 = vpop.permute.xlu0 %7141
        %v7143 = vperm.slane %v6144, 2
        %v7144 = vlaneseq
        %v7145 = vshrl.u32 %v7144, 7
        %7147 = vset.pattern.permute.xlu0 %v7145
        %7148 = vperm.xlu0 %7147, %v7143
        %v7149 = vpop.permute.xlu0 %7148
        %v7150 = vperm.slane %v6144, 3
        %v7151 = vlaneseq
        %v7152 = vshrl.u32 %v7151, 7
        %7154 = vset.pattern.permute.xlu0 %v7152
        %7155 = vperm.xlu0 %7154, %v7150
        %v7156 = vpop.permute.xlu0 %7155
        %v7157 = vperm.slane %v6144, 4
        %v7158 = vlaneseq
        %v7159 = vshrl.u32 %v7158, 7
        %7161 = vset.pattern.permute.xlu0 %v7159
        %7162 = vperm.xlu0 %7161, %v7157
        %v7163 = vpop.permute.xlu0 %7162
        %v7164 = vperm.slane %v6144, 5
        %v7165 = vlaneseq
        %v7166 = vshrl.u32 %v7165, 7
        %7168 = vset.pattern.permute.xlu0 %v7166
        %7169 = vperm.xlu0 %7168, %v7164
        %v7170 = vpop.permute.xlu0 %7169
        %v7171 = vperm.slane %v6144, 6
        %v7172 = vlaneseq
        %v7173 = vshrl.u32 %v7172, 7
        %7175 = vset.pattern.permute.xlu0 %v7173
        %7176 = vperm.xlu0 %7175, %v7171
        %v7177 = vpop.permute.xlu0 %7176
        %v7178 = vperm.slane %v6144, 7
        %v7179 = vlaneseq
        %v7180 = vshrl.u32 %v7179, 7
        %7182 = vset.pattern.permute.xlu0 %v7180
        %7183 = vperm.xlu0 %7182, %v7178
        %v7184 = vpop.permute.xlu0 %7183
        %v7185 = vmul.f32 %v6295, %v6161
        %v7186 = vmul.f32 %v6302, %v6162
        %v7187 = vmul.f32 %v6309, %v6163
        %v7188 = vmul.f32 %v6316, %v6164
        %v7189 = vmul.f32 %v6323, %v6165
        %v7190 = vmul.f32 %v6330, %v6166
        %v7191 = vmul.f32 %v6337, %v6167
        %v7192 = vmul.f32 %v6344, %v6168
        %v7193 = vmul.f32 %v6351, %v6169
        %v7194 = vmul.f32 %v6358, %v6170
        %v7195 = vmul.f32 %v6365, %v6171
        %v7196 = vmul.f32 %v6372, %v6172
        %v7197 = vmul.f32 %v6379, %v6173
        %v7198 = vmul.f32 %v6386, %v6174
        %v7199 = vmul.f32 %v6393, %v6175
        %v7200 = vmul.f32 %v6400, %v6176
        %v7201 = vmul.f32 %v6407, %v6177
        %v7202 = vmul.f32 %v6414, %v6178
        %v7203 = vmul.f32 %v6421, %v6179
        %v7204 = vmul.f32 %v6428, %v6180
        %v7205 = vmul.f32 %v6435, %v6181
        %v7206 = vmul.f32 %v6442, %v6182
        %v7207 = vmul.f32 %v6449, %v6183
        %v7208 = vmul.f32 %v6456, %v6184
        %v7209 = vmul.f32 %v6463, %v6185
        %v7210 = vmul.f32 %v6470, %v6186
        %v7211 = vmul.f32 %v6477, %v6187
        %v7212 = vmul.f32 %v6484, %v6188
        %v7213 = vmul.f32 %v6491, %v6189
        %v7214 = vmul.f32 %v6498, %v6190
        %v7215 = vmul.f32 %v6505, %v6191
        %v7216 = vmul.f32 %v6512, %v6192
        %v7217 = vmul.f32 %v6519, %v6193
        %v7218 = vmul.f32 %v6526, %v6194
        %v7219 = vmul.f32 %v6533, %v6195
        %v7220 = vmul.f32 %v6540, %v6196
        %v7221 = vmul.f32 %v6547, %v6197
        %v7222 = vmul.f32 %v6554, %v6198
        %v7223 = vmul.f32 %v6561, %v6199
        %v7224 = vmul.f32 %v6568, %v6200
        %v7225 = vmul.f32 %v6575, %v6201
        %v7226 = vmul.f32 %v6582, %v6202
        %v7227 = vmul.f32 %v6589, %v6203
        %v7228 = vmul.f32 %v6596, %v6204
        %v7229 = vmul.f32 %v6603, %v6205
        %v7230 = vmul.f32 %v6610, %v6206
        %v7231 = vmul.f32 %v6617, %v6207
        %v7232 = vmul.f32 %v6624, %v6208
        %v7233 = vmul.f32 %v6631, %v6209
        %v7234 = vmul.f32 %v6638, %v6210
        %v7235 = vmul.f32 %v6645, %v6211
        %v7236 = vmul.f32 %v6652, %v6212
        %v7237 = vmul.f32 %v6659, %v6213
        %v7238 = vmul.f32 %v6666, %v6214
        %v7239 = vmul.f32 %v6673, %v6215
        %v7240 = vmul.f32 %v6680, %v6216
        %v7241 = vmul.f32 %v6687, %v6217
        %v7242 = vmul.f32 %v6694, %v6218
        %v7243 = vmul.f32 %v6701, %v6219
        %v7244 = vmul.f32 %v6708, %v6220
        %v7245 = vmul.f32 %v6715, %v6221
        %v7246 = vmul.f32 %v6722, %v6222
        %v7247 = vmul.f32 %v6729, %v6223
        %v7248 = vmul.f32 %v6736, %v6224
        %v7249 = vmul.f32 %v6743, %v6225
        %v7250 = vmul.f32 %v6750, %v6226
        %v7251 = vmul.f32 %v6757, %v6227
        %v7252 = vmul.f32 %v6764, %v6228
        %v7253 = vmul.f32 %v6771, %v6229
        %v7254 = vmul.f32 %v6778, %v6230
        %v7255 = vmul.f32 %v6785, %v6231
        %v7256 = vmul.f32 %v6792, %v6232
        %v7257 = vmul.f32 %v6799, %v6233
        %v7258 = vmul.f32 %v6806, %v6234
        %v7259 = vmul.f32 %v6813, %v6235
        %v7260 = vmul.f32 %v6820, %v6236
        %v7261 = vmul.f32 %v6827, %v6237
        %v7262 = vmul.f32 %v6834, %v6238
        %v7263 = vmul.f32 %v6841, %v6239
        %v7264 = vmul.f32 %v6848, %v6240
        %v7265 = vmul.f32 %v6855, %v6241
        %v7266 = vmul.f32 %v6862, %v6242
        %v7267 = vmul.f32 %v6869, %v6243
        %v7268 = vmul.f32 %v6876, %v6244
        %v7269 = vmul.f32 %v6883, %v6245
        %v7270 = vmul.f32 %v6890, %v6246
        %v7271 = vmul.f32 %v6897, %v6247
        %v7272 = vmul.f32 %v6904, %v6248
        %v7273 = vmul.f32 %v6911, %v6249
        %v7274 = vmul.f32 %v6918, %v6250
        %v7275 = vmul.f32 %v6925, %v6251
        %v7276 = vmul.f32 %v6932, %v6252
        %v7277 = vmul.f32 %v6939, %v6253
        %v7278 = vmul.f32 %v6946, %v6254
        %v7279 = vmul.f32 %v6953, %v6255
        %v7280 = vmul.f32 %v6960, %v6256
        %v7281 = vmul.f32 %v6967, %v6257
        %v7282 = vmul.f32 %v6974, %v6258
        %v7283 = vmul.f32 %v6981, %v6259
        %v7284 = vmul.f32 %v6988, %v6260
        %v7285 = vmul.f32 %v6995, %v6261
        %v7286 = vmul.f32 %v7002, %v6262
        %v7287 = vmul.f32 %v7009, %v6263
        %v7288 = vmul.f32 %v7016, %v6264
        %v7289 = vmul.f32 %v7023, %v6265
        %v7290 = vmul.f32 %v7030, %v6266
        %v7291 = vmul.f32 %v7037, %v6267
        %v7292 = vmul.f32 %v7044, %v6268
        %v7293 = vmul.f32 %v7051, %v6269
        %v7294 = vmul.f32 %v7058, %v6270
        %v7295 = vmul.f32 %v7065, %v6271
        %v7296 = vmul.f32 %v7072, %v6272
        %v7297 = vmul.f32 %v7079, %v6273
        %v7298 = vmul.f32 %v7086, %v6274
        %v7299 = vmul.f32 %v7093, %v6275
        %v7300 = vmul.f32 %v7100, %v6276
        %v7301 = vmul.f32 %v7107, %v6277
        %v7302 = vmul.f32 %v7114, %v6278
        %v7303 = vmul.f32 %v7121, %v6279
        %v7304 = vmul.f32 %v7128, %v6280
        %v7305 = vmul.f32 %v7135, %v6281
        %v7306 = vmul.f32 %v7142, %v6282
        %v7307 = vmul.f32 %v7149, %v6283
        %v7308 = vmul.f32 %v7156, %v6284
        %v7309 = vmul.f32 %v7163, %v6285
        %v7310 = vmul.f32 %v7170, %v6286
        %v7311 = vmul.f32 %v7177, %v6287
        %v7312 = vmul.f32 %v7184, %v6288
        %v7313 = vrot.slane %v7185, 4
        %v7314 = vadd.f32 %v7185, %v7313
        %v7315 = vrot.slane %v7314, 2
        %v7316 = vadd.f32 %v7314, %v7315
        %v7317 = vrot.slane %v7316, 1
        %v7318 = vadd.f32 %v7316, %v7317
        %v7319 = vrot.slane %v7186, 4
        %v7320 = vadd.f32 %v7186, %v7319
        %v7321 = vrot.slane %v7320, 2
        %v7322 = vadd.f32 %v7320, %v7321
        %v7323 = vrot.slane %v7322, 1
        %v7324 = vadd.f32 %v7322, %v7323
        %v7325 = vrot.slane %v7187, 4
        %v7326 = vadd.f32 %v7187, %v7325
        %v7327 = vrot.slane %v7326, 2
        %v7328 = vadd.f32 %v7326, %v7327
        %v7329 = vrot.slane %v7328, 1
        %v7330 = vadd.f32 %v7328, %v7329
        %v7331 = vrot.slane %v7188, 4
        %v7332 = vadd.f32 %v7188, %v7331
        %v7333 = vrot.slane %v7332, 2
        %v7334 = vadd.f32 %v7332, %v7333
        %v7335 = vrot.slane %v7334, 1
        %v7336 = vadd.f32 %v7334, %v7335
        %v7337 = vrot.slane %v7189, 4
        %v7338 = vadd.f32 %v7189, %v7337
        %v7339 = vrot.slane %v7338, 2
        %v7340 = vadd.f32 %v7338, %v7339
        %v7341 = vrot.slane %v7340, 1
        %v7342 = vadd.f32 %v7340, %v7341
        %v7343 = vrot.slane %v7190, 4
        %v7344 = vadd.f32 %v7190, %v7343
        %v7345 = vrot.slane %v7344, 2
        %v7346 = vadd.f32 %v7344, %v7345
        %v7347 = vrot.slane %v7346, 1
        %v7348 = vadd.f32 %v7346, %v7347
        %v7349 = vrot.slane %v7191, 4
        %v7350 = vadd.f32 %v7191, %v7349
        %v7351 = vrot.slane %v7350, 2
        %v7352 = vadd.f32 %v7350, %v7351
        %v7353 = vrot.slane %v7352, 1
        %v7354 = vadd.f32 %v7352, %v7353
        %v7355 = vrot.slane %v7192, 4
        %v7356 = vadd.f32 %v7192, %v7355
        %v7357 = vrot.slane %v7356, 2
        %v7358 = vadd.f32 %v7356, %v7357
        %v7359 = vrot.slane %v7358, 1
        %v7360 = vadd.f32 %v7358, %v7359
        %v7361 = vrot.slane %v7193, 4
        %v7362 = vadd.f32 %v7193, %v7361
        %v7363 = vrot.slane %v7362, 2
        %v7364 = vadd.f32 %v7362, %v7363
        %v7365 = vrot.slane %v7364, 1
        %v7366 = vadd.f32 %v7364, %v7365
        %v7367 = vrot.slane %v7194, 4
        %v7368 = vadd.f32 %v7194, %v7367
        %v7369 = vrot.slane %v7368, 2
        %v7370 = vadd.f32 %v7368, %v7369
        %v7371 = vrot.slane %v7370, 1
        %v7372 = vadd.f32 %v7370, %v7371
        %v7373 = vrot.slane %v7195, 4
        %v7374 = vadd.f32 %v7195, %v7373
        %v7375 = vrot.slane %v7374, 2
        %v7376 = vadd.f32 %v7374, %v7375
        %v7377 = vrot.slane %v7376, 1
        %v7378 = vadd.f32 %v7376, %v7377
        %v7379 = vrot.slane %v7196, 4
        %v7380 = vadd.f32 %v7196, %v7379
        %v7381 = vrot.slane %v7380, 2
        %v7382 = vadd.f32 %v7380, %v7381
        %v7383 = vrot.slane %v7382, 1
        %v7384 = vadd.f32 %v7382, %v7383
        %v7385 = vrot.slane %v7197, 4
        %v7386 = vadd.f32 %v7197, %v7385
        %v7387 = vrot.slane %v7386, 2
        %v7388 = vadd.f32 %v7386, %v7387
        %v7389 = vrot.slane %v7388, 1
        %v7390 = vadd.f32 %v7388, %v7389
        %v7391 = vrot.slane %v7198, 4
        %v7392 = vadd.f32 %v7198, %v7391
        %v7393 = vrot.slane %v7392, 2
        %v7394 = vadd.f32 %v7392, %v7393
        %v7395 = vrot.slane %v7394, 1
        %v7396 = vadd.f32 %v7394, %v7395
        %v7397 = vrot.slane %v7199, 4
        %v7398 = vadd.f32 %v7199, %v7397
        %v7399 = vrot.slane %v7398, 2
        %v7400 = vadd.f32 %v7398, %v7399
        %v7401 = vrot.slane %v7400, 1
        %v7402 = vadd.f32 %v7400, %v7401
        %v7403 = vrot.slane %v7200, 4
        %v7404 = vadd.f32 %v7200, %v7403
        %v7405 = vrot.slane %v7404, 2
        %v7406 = vadd.f32 %v7404, %v7405
        %v7407 = vrot.slane %v7406, 1
        %v7408 = vadd.f32 %v7406, %v7407
        %v7409 = vrot.slane %v7201, 4
        %v7410 = vadd.f32 %v7201, %v7409
        %v7411 = vrot.slane %v7410, 2
        %v7412 = vadd.f32 %v7410, %v7411
        %v7413 = vrot.slane %v7412, 1
        %v7414 = vadd.f32 %v7412, %v7413
        %v7415 = vrot.slane %v7202, 4
        %v7416 = vadd.f32 %v7202, %v7415
        %v7417 = vrot.slane %v7416, 2
        %v7418 = vadd.f32 %v7416, %v7417
        %v7419 = vrot.slane %v7418, 1
        %v7420 = vadd.f32 %v7418, %v7419
        %v7421 = vrot.slane %v7203, 4
        %v7422 = vadd.f32 %v7203, %v7421
        %v7423 = vrot.slane %v7422, 2
        %v7424 = vadd.f32 %v7422, %v7423
        %v7425 = vrot.slane %v7424, 1
        %v7426 = vadd.f32 %v7424, %v7425
        %v7427 = vrot.slane %v7204, 4
        %v7428 = vadd.f32 %v7204, %v7427
        %v7429 = vrot.slane %v7428, 2
        %v7430 = vadd.f32 %v7428, %v7429
        %v7431 = vrot.slane %v7430, 1
        %v7432 = vadd.f32 %v7430, %v7431
        %v7433 = vrot.slane %v7205, 4
        %v7434 = vadd.f32 %v7205, %v7433
        %v7435 = vrot.slane %v7434, 2
        %v7436 = vadd.f32 %v7434, %v7435
        %v7437 = vrot.slane %v7436, 1
        %v7438 = vadd.f32 %v7436, %v7437
        %v7439 = vrot.slane %v7206, 4
        %v7440 = vadd.f32 %v7206, %v7439
        %v7441 = vrot.slane %v7440, 2
        %v7442 = vadd.f32 %v7440, %v7441
        %v7443 = vrot.slane %v7442, 1
        %v7444 = vadd.f32 %v7442, %v7443
        %v7445 = vrot.slane %v7207, 4
        %v7446 = vadd.f32 %v7207, %v7445
        %v7447 = vrot.slane %v7446, 2
        %v7448 = vadd.f32 %v7446, %v7447
        %v7449 = vrot.slane %v7448, 1
        %v7450 = vadd.f32 %v7448, %v7449
        %v7451 = vrot.slane %v7208, 4
        %v7452 = vadd.f32 %v7208, %v7451
        %v7453 = vrot.slane %v7452, 2
        %v7454 = vadd.f32 %v7452, %v7453
        %v7455 = vrot.slane %v7454, 1
        %v7456 = vadd.f32 %v7454, %v7455
        %v7457 = vrot.slane %v7209, 4
        %v7458 = vadd.f32 %v7209, %v7457
        %v7459 = vrot.slane %v7458, 2
        %v7460 = vadd.f32 %v7458, %v7459
        %v7461 = vrot.slane %v7460, 1
        %v7462 = vadd.f32 %v7460, %v7461
        %v7463 = vrot.slane %v7210, 4
        %v7464 = vadd.f32 %v7210, %v7463
        %v7465 = vrot.slane %v7464, 2
        %v7466 = vadd.f32 %v7464, %v7465
        %v7467 = vrot.slane %v7466, 1
        %v7468 = vadd.f32 %v7466, %v7467
        %v7469 = vrot.slane %v7211, 4
        %v7470 = vadd.f32 %v7211, %v7469
        %v7471 = vrot.slane %v7470, 2
        %v7472 = vadd.f32 %v7470, %v7471
        %v7473 = vrot.slane %v7472, 1
        %v7474 = vadd.f32 %v7472, %v7473
        %v7475 = vrot.slane %v7212, 4
        %v7476 = vadd.f32 %v7212, %v7475
        %v7477 = vrot.slane %v7476, 2
        %v7478 = vadd.f32 %v7476, %v7477
        %v7479 = vrot.slane %v7478, 1
        %v7480 = vadd.f32 %v7478, %v7479
        %v7481 = vrot.slane %v7213, 4
        %v7482 = vadd.f32 %v7213, %v7481
        %v7483 = vrot.slane %v7482, 2
        %v7484 = vadd.f32 %v7482, %v7483
        %v7485 = vrot.slane %v7484, 1
        %v7486 = vadd.f32 %v7484, %v7485
        %v7487 = vrot.slane %v7214, 4
        %v7488 = vadd.f32 %v7214, %v7487
        %v7489 = vrot.slane %v7488, 2
        %v7490 = vadd.f32 %v7488, %v7489
        %v7491 = vrot.slane %v7490, 1
        %v7492 = vadd.f32 %v7490, %v7491
        %v7493 = vrot.slane %v7215, 4
        %v7494 = vadd.f32 %v7215, %v7493
        %v7495 = vrot.slane %v7494, 2
        %v7496 = vadd.f32 %v7494, %v7495
        %v7497 = vrot.slane %v7496, 1
        %v7498 = vadd.f32 %v7496, %v7497
        %v7499 = vrot.slane %v7216, 4
        %v7500 = vadd.f32 %v7216, %v7499
        %v7501 = vrot.slane %v7500, 2
        %v7502 = vadd.f32 %v7500, %v7501
        %v7503 = vrot.slane %v7502, 1
        %v7504 = vadd.f32 %v7502, %v7503
        %v7505 = vrot.slane %v7217, 4
        %v7506 = vadd.f32 %v7217, %v7505
        %v7507 = vrot.slane %v7506, 2
        %v7508 = vadd.f32 %v7506, %v7507
        %v7509 = vrot.slane %v7508, 1
        %v7510 = vadd.f32 %v7508, %v7509
        %v7511 = vrot.slane %v7218, 4
        %v7512 = vadd.f32 %v7218, %v7511
        %v7513 = vrot.slane %v7512, 2
        %v7514 = vadd.f32 %v7512, %v7513
        %v7515 = vrot.slane %v7514, 1
        %v7516 = vadd.f32 %v7514, %v7515
        %v7517 = vrot.slane %v7219, 4
        %v7518 = vadd.f32 %v7219, %v7517
        %v7519 = vrot.slane %v7518, 2
        %v7520 = vadd.f32 %v7518, %v7519
        %v7521 = vrot.slane %v7520, 1
        %v7522 = vadd.f32 %v7520, %v7521
        %v7523 = vrot.slane %v7220, 4
        %v7524 = vadd.f32 %v7220, %v7523
        %v7525 = vrot.slane %v7524, 2
        %v7526 = vadd.f32 %v7524, %v7525
        %v7527 = vrot.slane %v7526, 1
        %v7528 = vadd.f32 %v7526, %v7527
        %v7529 = vrot.slane %v7221, 4
        %v7530 = vadd.f32 %v7221, %v7529
        %v7531 = vrot.slane %v7530, 2
        %v7532 = vadd.f32 %v7530, %v7531
        %v7533 = vrot.slane %v7532, 1
        %v7534 = vadd.f32 %v7532, %v7533
        %v7535 = vrot.slane %v7222, 4
        %v7536 = vadd.f32 %v7222, %v7535
        %v7537 = vrot.slane %v7536, 2
        %v7538 = vadd.f32 %v7536, %v7537
        %v7539 = vrot.slane %v7538, 1
        %v7540 = vadd.f32 %v7538, %v7539
        %v7541 = vrot.slane %v7223, 4
        %v7542 = vadd.f32 %v7223, %v7541
        %v7543 = vrot.slane %v7542, 2
        %v7544 = vadd.f32 %v7542, %v7543
        %v7545 = vrot.slane %v7544, 1
        %v7546 = vadd.f32 %v7544, %v7545
        %v7547 = vrot.slane %v7224, 4
        %v7548 = vadd.f32 %v7224, %v7547
        %v7549 = vrot.slane %v7548, 2
        %v7550 = vadd.f32 %v7548, %v7549
        %v7551 = vrot.slane %v7550, 1
        %v7552 = vadd.f32 %v7550, %v7551
        %v7553 = vrot.slane %v7225, 4
        %v7554 = vadd.f32 %v7225, %v7553
        %v7555 = vrot.slane %v7554, 2
        %v7556 = vadd.f32 %v7554, %v7555
        %v7557 = vrot.slane %v7556, 1
        %v7558 = vadd.f32 %v7556, %v7557
        %v7559 = vrot.slane %v7226, 4
        %v7560 = vadd.f32 %v7226, %v7559
        %v7561 = vrot.slane %v7560, 2
        %v7562 = vadd.f32 %v7560, %v7561
        %v7563 = vrot.slane %v7562, 1
        %v7564 = vadd.f32 %v7562, %v7563
        %v7565 = vrot.slane %v7227, 4
        %v7566 = vadd.f32 %v7227, %v7565
        %v7567 = vrot.slane %v7566, 2
        %v7568 = vadd.f32 %v7566, %v7567
        %v7569 = vrot.slane %v7568, 1
        %v7570 = vadd.f32 %v7568, %v7569
        %v7571 = vrot.slane %v7228, 4
        %v7572 = vadd.f32 %v7228, %v7571
        %v7573 = vrot.slane %v7572, 2
        %v7574 = vadd.f32 %v7572, %v7573
        %v7575 = vrot.slane %v7574, 1
        %v7576 = vadd.f32 %v7574, %v7575
        %v7577 = vrot.slane %v7229, 4
        %v7578 = vadd.f32 %v7229, %v7577
        %v7579 = vrot.slane %v7578, 2
        %v7580 = vadd.f32 %v7578, %v7579
        %v7581 = vrot.slane %v7580, 1
        %v7582 = vadd.f32 %v7580, %v7581
        %v7583 = vrot.slane %v7230, 4
        %v7584 = vadd.f32 %v7230, %v7583
        %v7585 = vrot.slane %v7584, 2
        %v7586 = vadd.f32 %v7584, %v7585
        %v7587 = vrot.slane %v7586, 1
        %v7588 = vadd.f32 %v7586, %v7587
        %v7589 = vrot.slane %v7231, 4
        %v7590 = vadd.f32 %v7231, %v7589
        %v7591 = vrot.slane %v7590, 2
        %v7592 = vadd.f32 %v7590, %v7591
        %v7593 = vrot.slane %v7592, 1
        %v7594 = vadd.f32 %v7592, %v7593
        %v7595 = vrot.slane %v7232, 4
        %v7596 = vadd.f32 %v7232, %v7595
        %v7597 = vrot.slane %v7596, 2
        %v7598 = vadd.f32 %v7596, %v7597
        %v7599 = vrot.slane %v7598, 1
        %v7600 = vadd.f32 %v7598, %v7599
        %v7601 = vrot.slane %v7233, 4
        %v7602 = vadd.f32 %v7233, %v7601
        %v7603 = vrot.slane %v7602, 2
        %v7604 = vadd.f32 %v7602, %v7603
        %v7605 = vrot.slane %v7604, 1
        %v7606 = vadd.f32 %v7604, %v7605
        %v7607 = vrot.slane %v7234, 4
        %v7608 = vadd.f32 %v7234, %v7607
        %v7609 = vrot.slane %v7608, 2
        %v7610 = vadd.f32 %v7608, %v7609
        %v7611 = vrot.slane %v7610, 1
        %v7612 = vadd.f32 %v7610, %v7611
        %v7613 = vrot.slane %v7235, 4
        %v7614 = vadd.f32 %v7235, %v7613
        %v7615 = vrot.slane %v7614, 2
        %v7616 = vadd.f32 %v7614, %v7615
        %v7617 = vrot.slane %v7616, 1
        %v7618 = vadd.f32 %v7616, %v7617
        %v7619 = vrot.slane %v7236, 4
        %v7620 = vadd.f32 %v7236, %v7619
        %v7621 = vrot.slane %v7620, 2
        %v7622 = vadd.f32 %v7620, %v7621
        %v7623 = vrot.slane %v7622, 1
        %v7624 = vadd.f32 %v7622, %v7623
        %v7625 = vrot.slane %v7237, 4
        %v7626 = vadd.f32 %v7237, %v7625
        %v7627 = vrot.slane %v7626, 2
        %v7628 = vadd.f32 %v7626, %v7627
        %v7629 = vrot.slane %v7628, 1
        %v7630 = vadd.f32 %v7628, %v7629
        %v7631 = vrot.slane %v7238, 4
        %v7632 = vadd.f32 %v7238, %v7631
        %v7633 = vrot.slane %v7632, 2
        %v7634 = vadd.f32 %v7632, %v7633
        %v7635 = vrot.slane %v7634, 1
        %v7636 = vadd.f32 %v7634, %v7635
        %v7637 = vrot.slane %v7239, 4
        %v7638 = vadd.f32 %v7239, %v7637
        %v7639 = vrot.slane %v7638, 2
        %v7640 = vadd.f32 %v7638, %v7639
        %v7641 = vrot.slane %v7640, 1
        %v7642 = vadd.f32 %v7640, %v7641
        %v7643 = vrot.slane %v7240, 4
        %v7644 = vadd.f32 %v7240, %v7643
        %v7645 = vrot.slane %v7644, 2
        %v7646 = vadd.f32 %v7644, %v7645
        %v7647 = vrot.slane %v7646, 1
        %v7648 = vadd.f32 %v7646, %v7647
        %v7649 = vrot.slane %v7241, 4
        %v7650 = vadd.f32 %v7241, %v7649
        %v7651 = vrot.slane %v7650, 2
        %v7652 = vadd.f32 %v7650, %v7651
        %v7653 = vrot.slane %v7652, 1
        %v7654 = vadd.f32 %v7652, %v7653
        %v7655 = vrot.slane %v7242, 4
        %v7656 = vadd.f32 %v7242, %v7655
        %v7657 = vrot.slane %v7656, 2
        %v7658 = vadd.f32 %v7656, %v7657
        %v7659 = vrot.slane %v7658, 1
        %v7660 = vadd.f32 %v7658, %v7659
        %v7661 = vrot.slane %v7243, 4
        %v7662 = vadd.f32 %v7243, %v7661
        %v7663 = vrot.slane %v7662, 2
        %v7664 = vadd.f32 %v7662, %v7663
        %v7665 = vrot.slane %v7664, 1
        %v7666 = vadd.f32 %v7664, %v7665
        %v7667 = vrot.slane %v7244, 4
        %v7668 = vadd.f32 %v7244, %v7667
        %v7669 = vrot.slane %v7668, 2
        %v7670 = vadd.f32 %v7668, %v7669
        %v7671 = vrot.slane %v7670, 1
        %v7672 = vadd.f32 %v7670, %v7671
        %v7673 = vrot.slane %v7245, 4
        %v7674 = vadd.f32 %v7245, %v7673
        %v7675 = vrot.slane %v7674, 2
        %v7676 = vadd.f32 %v7674, %v7675
        %v7677 = vrot.slane %v7676, 1
        %v7678 = vadd.f32 %v7676, %v7677
        %v7679 = vrot.slane %v7246, 4
        %v7680 = vadd.f32 %v7246, %v7679
        %v7681 = vrot.slane %v7680, 2
        %v7682 = vadd.f32 %v7680, %v7681
        %v7683 = vrot.slane %v7682, 1
        %v7684 = vadd.f32 %v7682, %v7683
        %v7685 = vrot.slane %v7247, 4
        %v7686 = vadd.f32 %v7247, %v7685
        %v7687 = vrot.slane %v7686, 2
        %v7688 = vadd.f32 %v7686, %v7687
        %v7689 = vrot.slane %v7688, 1
        %v7690 = vadd.f32 %v7688, %v7689
        %v7691 = vrot.slane %v7248, 4
        %v7692 = vadd.f32 %v7248, %v7691
        %v7693 = vrot.slane %v7692, 2
        %v7694 = vadd.f32 %v7692, %v7693
        %v7695 = vrot.slane %v7694, 1
        %v7696 = vadd.f32 %v7694, %v7695
        %v7697 = vrot.slane %v7249, 4
        %v7698 = vadd.f32 %v7249, %v7697
        %v7699 = vrot.slane %v7698, 2
        %v7700 = vadd.f32 %v7698, %v7699
        %v7701 = vrot.slane %v7700, 1
        %v7702 = vadd.f32 %v7700, %v7701
        %v7703 = vrot.slane %v7250, 4
        %v7704 = vadd.f32 %v7250, %v7703
        %v7705 = vrot.slane %v7704, 2
        %v7706 = vadd.f32 %v7704, %v7705
        %v7707 = vrot.slane %v7706, 1
        %v7708 = vadd.f32 %v7706, %v7707
        %v7709 = vrot.slane %v7251, 4
        %v7710 = vadd.f32 %v7251, %v7709
        %v7711 = vrot.slane %v7710, 2
        %v7712 = vadd.f32 %v7710, %v7711
        %v7713 = vrot.slane %v7712, 1
        %v7714 = vadd.f32 %v7712, %v7713
        %v7715 = vrot.slane %v7252, 4
        %v7716 = vadd.f32 %v7252, %v7715
        %v7717 = vrot.slane %v7716, 2
        %v7718 = vadd.f32 %v7716, %v7717
        %v7719 = vrot.slane %v7718, 1
        %v7720 = vadd.f32 %v7718, %v7719
        %v7721 = vrot.slane %v7253, 4
        %v7722 = vadd.f32 %v7253, %v7721
        %v7723 = vrot.slane %v7722, 2
        %v7724 = vadd.f32 %v7722, %v7723
        %v7725 = vrot.slane %v7724, 1
        %v7726 = vadd.f32 %v7724, %v7725
        %v7727 = vrot.slane %v7254, 4
        %v7728 = vadd.f32 %v7254, %v7727
        %v7729 = vrot.slane %v7728, 2
        %v7730 = vadd.f32 %v7728, %v7729
        %v7731 = vrot.slane %v7730, 1
        %v7732 = vadd.f32 %v7730, %v7731
        %v7733 = vrot.slane %v7255, 4
        %v7734 = vadd.f32 %v7255, %v7733
        %v7735 = vrot.slane %v7734, 2
        %v7736 = vadd.f32 %v7734, %v7735
        %v7737 = vrot.slane %v7736, 1
        %v7738 = vadd.f32 %v7736, %v7737
        %v7739 = vrot.slane %v7256, 4
        %v7740 = vadd.f32 %v7256, %v7739
        %v7741 = vrot.slane %v7740, 2
        %v7742 = vadd.f32 %v7740, %v7741
        %v7743 = vrot.slane %v7742, 1
        %v7744 = vadd.f32 %v7742, %v7743
        %v7745 = vrot.slane %v7257, 4
        %v7746 = vadd.f32 %v7257, %v7745
        %v7747 = vrot.slane %v7746, 2
        %v7748 = vadd.f32 %v7746, %v7747
        %v7749 = vrot.slane %v7748, 1
        %v7750 = vadd.f32 %v7748, %v7749
        %v7751 = vrot.slane %v7258, 4
        %v7752 = vadd.f32 %v7258, %v7751
        %v7753 = vrot.slane %v7752, 2
        %v7754 = vadd.f32 %v7752, %v7753
        %v7755 = vrot.slane %v7754, 1
        %v7756 = vadd.f32 %v7754, %v7755
        %v7757 = vrot.slane %v7259, 4
        %v7758 = vadd.f32 %v7259, %v7757
        %v7759 = vrot.slane %v7758, 2
        %v7760 = vadd.f32 %v7758, %v7759
        %v7761 = vrot.slane %v7760, 1
        %v7762 = vadd.f32 %v7760, %v7761
        %v7763 = vrot.slane %v7260, 4
        %v7764 = vadd.f32 %v7260, %v7763
        %v7765 = vrot.slane %v7764, 2
        %v7766 = vadd.f32 %v7764, %v7765
        %v7767 = vrot.slane %v7766, 1
        %v7768 = vadd.f32 %v7766, %v7767
        %v7769 = vrot.slane %v7261, 4
        %v7770 = vadd.f32 %v7261, %v7769
        %v7771 = vrot.slane %v7770, 2
        %v7772 = vadd.f32 %v7770, %v7771
        %v7773 = vrot.slane %v7772, 1
        %v7774 = vadd.f32 %v7772, %v7773
        %v7775 = vrot.slane %v7262, 4
        %v7776 = vadd.f32 %v7262, %v7775
        %v7777 = vrot.slane %v7776, 2
        %v7778 = vadd.f32 %v7776, %v7777
        %v7779 = vrot.slane %v7778, 1
        %v7780 = vadd.f32 %v7778, %v7779
        %v7781 = vrot.slane %v7263, 4
        %v7782 = vadd.f32 %v7263, %v7781
        %v7783 = vrot.slane %v7782, 2
        %v7784 = vadd.f32 %v7782, %v7783
        %v7785 = vrot.slane %v7784, 1
        %v7786 = vadd.f32 %v7784, %v7785
        %v7787 = vrot.slane %v7264, 4
        %v7788 = vadd.f32 %v7264, %v7787
        %v7789 = vrot.slane %v7788, 2
        %v7790 = vadd.f32 %v7788, %v7789
        %v7791 = vrot.slane %v7790, 1
        %v7792 = vadd.f32 %v7790, %v7791
        %v7793 = vrot.slane %v7265, 4
        %v7794 = vadd.f32 %v7265, %v7793
        %v7795 = vrot.slane %v7794, 2
        %v7796 = vadd.f32 %v7794, %v7795
        %v7797 = vrot.slane %v7796, 1
        %v7798 = vadd.f32 %v7796, %v7797
        %v7799 = vrot.slane %v7266, 4
        %v7800 = vadd.f32 %v7266, %v7799
        %v7801 = vrot.slane %v7800, 2
        %v7802 = vadd.f32 %v7800, %v7801
        %v7803 = vrot.slane %v7802, 1
        %v7804 = vadd.f32 %v7802, %v7803
        %v7805 = vrot.slane %v7267, 4
        %v7806 = vadd.f32 %v7267, %v7805
        %v7807 = vrot.slane %v7806, 2
        %v7808 = vadd.f32 %v7806, %v7807
        %v7809 = vrot.slane %v7808, 1
        %v7810 = vadd.f32 %v7808, %v7809
        %v7811 = vrot.slane %v7268, 4
        %v7812 = vadd.f32 %v7268, %v7811
        %v7813 = vrot.slane %v7812, 2
        %v7814 = vadd.f32 %v7812, %v7813
        %v7815 = vrot.slane %v7814, 1
        %v7816 = vadd.f32 %v7814, %v7815
        %v7817 = vrot.slane %v7269, 4
        %v7818 = vadd.f32 %v7269, %v7817
        %v7819 = vrot.slane %v7818, 2
        %v7820 = vadd.f32 %v7818, %v7819
        %v7821 = vrot.slane %v7820, 1
        %v7822 = vadd.f32 %v7820, %v7821
        %v7823 = vrot.slane %v7270, 4
        %v7824 = vadd.f32 %v7270, %v7823
        %v7825 = vrot.slane %v7824, 2
        %v7826 = vadd.f32 %v7824, %v7825
        %v7827 = vrot.slane %v7826, 1
        %v7828 = vadd.f32 %v7826, %v7827
        %v7829 = vrot.slane %v7271, 4
        %v7830 = vadd.f32 %v7271, %v7829
        %v7831 = vrot.slane %v7830, 2
        %v7832 = vadd.f32 %v7830, %v7831
        %v7833 = vrot.slane %v7832, 1
        %v7834 = vadd.f32 %v7832, %v7833
        %v7835 = vrot.slane %v7272, 4
        %v7836 = vadd.f32 %v7272, %v7835
        %v7837 = vrot.slane %v7836, 2
        %v7838 = vadd.f32 %v7836, %v7837
        %v7839 = vrot.slane %v7838, 1
        %v7840 = vadd.f32 %v7838, %v7839
        %v7841 = vrot.slane %v7273, 4
        %v7842 = vadd.f32 %v7273, %v7841
        %v7843 = vrot.slane %v7842, 2
        %v7844 = vadd.f32 %v7842, %v7843
        %v7845 = vrot.slane %v7844, 1
        %v7846 = vadd.f32 %v7844, %v7845
        %v7847 = vrot.slane %v7274, 4
        %v7848 = vadd.f32 %v7274, %v7847
        %v7849 = vrot.slane %v7848, 2
        %v7850 = vadd.f32 %v7848, %v7849
        %v7851 = vrot.slane %v7850, 1
        %v7852 = vadd.f32 %v7850, %v7851
        %v7853 = vrot.slane %v7275, 4
        %v7854 = vadd.f32 %v7275, %v7853
        %v7855 = vrot.slane %v7854, 2
        %v7856 = vadd.f32 %v7854, %v7855
        %v7857 = vrot.slane %v7856, 1
        %v7858 = vadd.f32 %v7856, %v7857
        %v7859 = vrot.slane %v7276, 4
        %v7860 = vadd.f32 %v7276, %v7859
        %v7861 = vrot.slane %v7860, 2
        %v7862 = vadd.f32 %v7860, %v7861
        %v7863 = vrot.slane %v7862, 1
        %v7864 = vadd.f32 %v7862, %v7863
        %v7865 = vrot.slane %v7277, 4
        %v7866 = vadd.f32 %v7277, %v7865
        %v7867 = vrot.slane %v7866, 2
        %v7868 = vadd.f32 %v7866, %v7867
        %v7869 = vrot.slane %v7868, 1
        %v7870 = vadd.f32 %v7868, %v7869
        %v7871 = vrot.slane %v7278, 4
        %v7872 = vadd.f32 %v7278, %v7871
        %v7873 = vrot.slane %v7872, 2
        %v7874 = vadd.f32 %v7872, %v7873
        %v7875 = vrot.slane %v7874, 1
        %v7876 = vadd.f32 %v7874, %v7875
        %v7877 = vrot.slane %v7279, 4
        %v7878 = vadd.f32 %v7279, %v7877
        %v7879 = vrot.slane %v7878, 2
        %v7880 = vadd.f32 %v7878, %v7879
        %v7881 = vrot.slane %v7880, 1
        %v7882 = vadd.f32 %v7880, %v7881
        %v7883 = vrot.slane %v7280, 4
        %v7884 = vadd.f32 %v7280, %v7883
        %v7885 = vrot.slane %v7884, 2
        %v7886 = vadd.f32 %v7884, %v7885
        %v7887 = vrot.slane %v7886, 1
        %v7888 = vadd.f32 %v7886, %v7887
        %v7889 = vrot.slane %v7281, 4
        %v7890 = vadd.f32 %v7281, %v7889
        %v7891 = vrot.slane %v7890, 2
        %v7892 = vadd.f32 %v7890, %v7891
        %v7893 = vrot.slane %v7892, 1
        %v7894 = vadd.f32 %v7892, %v7893
        %v7895 = vrot.slane %v7282, 4
        %v7896 = vadd.f32 %v7282, %v7895
        %v7897 = vrot.slane %v7896, 2
        %v7898 = vadd.f32 %v7896, %v7897
        %v7899 = vrot.slane %v7898, 1
        %v7900 = vadd.f32 %v7898, %v7899
        %v7901 = vrot.slane %v7283, 4
        %v7902 = vadd.f32 %v7283, %v7901
        %v7903 = vrot.slane %v7902, 2
        %v7904 = vadd.f32 %v7902, %v7903
        %v7905 = vrot.slane %v7904, 1
        %v7906 = vadd.f32 %v7904, %v7905
        %v7907 = vrot.slane %v7284, 4
        %v7908 = vadd.f32 %v7284, %v7907
        %v7909 = vrot.slane %v7908, 2
        %v7910 = vadd.f32 %v7908, %v7909
        %v7911 = vrot.slane %v7910, 1
        %v7912 = vadd.f32 %v7910, %v7911
        %v7913 = vrot.slane %v7285, 4
        %v7914 = vadd.f32 %v7285, %v7913
        %v7915 = vrot.slane %v7914, 2
        %v7916 = vadd.f32 %v7914, %v7915
        %v7917 = vrot.slane %v7916, 1
        %v7918 = vadd.f32 %v7916, %v7917
        %v7919 = vrot.slane %v7286, 4
        %v7920 = vadd.f32 %v7286, %v7919
        %v7921 = vrot.slane %v7920, 2
        %v7922 = vadd.f32 %v7920, %v7921
        %v7923 = vrot.slane %v7922, 1
        %v7924 = vadd.f32 %v7922, %v7923
        %v7925 = vrot.slane %v7287, 4
        %v7926 = vadd.f32 %v7287, %v7925
        %v7927 = vrot.slane %v7926, 2
        %v7928 = vadd.f32 %v7926, %v7927
        %v7929 = vrot.slane %v7928, 1
        %v7930 = vadd.f32 %v7928, %v7929
        %v7931 = vrot.slane %v7288, 4
        %v7932 = vadd.f32 %v7288, %v7931
        %v7933 = vrot.slane %v7932, 2
        %v7934 = vadd.f32 %v7932, %v7933
        %v7935 = vrot.slane %v7934, 1
        %v7936 = vadd.f32 %v7934, %v7935
        %v7937 = vrot.slane %v7289, 4
        %v7938 = vadd.f32 %v7289, %v7937
        %v7939 = vrot.slane %v7938, 2
        %v7940 = vadd.f32 %v7938, %v7939
        %v7941 = vrot.slane %v7940, 1
        %v7942 = vadd.f32 %v7940, %v7941
        %v7943 = vrot.slane %v7290, 4
        %v7944 = vadd.f32 %v7290, %v7943
        %v7945 = vrot.slane %v7944, 2
        %v7946 = vadd.f32 %v7944, %v7945
        %v7947 = vrot.slane %v7946, 1
        %v7948 = vadd.f32 %v7946, %v7947
        %v7949 = vrot.slane %v7291, 4
        %v7950 = vadd.f32 %v7291, %v7949
        %v7951 = vrot.slane %v7950, 2
        %v7952 = vadd.f32 %v7950, %v7951
        %v7953 = vrot.slane %v7952, 1
        %v7954 = vadd.f32 %v7952, %v7953
        %v7955 = vrot.slane %v7292, 4
        %v7956 = vadd.f32 %v7292, %v7955
        %v7957 = vrot.slane %v7956, 2
        %v7958 = vadd.f32 %v7956, %v7957
        %v7959 = vrot.slane %v7958, 1
        %v7960 = vadd.f32 %v7958, %v7959
        %v7961 = vrot.slane %v7293, 4
        %v7962 = vadd.f32 %v7293, %v7961
        %v7963 = vrot.slane %v7962, 2
        %v7964 = vadd.f32 %v7962, %v7963
        %v7965 = vrot.slane %v7964, 1
        %v7966 = vadd.f32 %v7964, %v7965
        %v7967 = vrot.slane %v7294, 4
        %v7968 = vadd.f32 %v7294, %v7967
        %v7969 = vrot.slane %v7968, 2
        %v7970 = vadd.f32 %v7968, %v7969
        %v7971 = vrot.slane %v7970, 1
        %v7972 = vadd.f32 %v7970, %v7971
        %v7973 = vrot.slane %v7295, 4
        %v7974 = vadd.f32 %v7295, %v7973
        %v7975 = vrot.slane %v7974, 2
        %v7976 = vadd.f32 %v7974, %v7975
        %v7977 = vrot.slane %v7976, 1
        %v7978 = vadd.f32 %v7976, %v7977
        %v7979 = vrot.slane %v7296, 4
        %v7980 = vadd.f32 %v7296, %v7979
        %v7981 = vrot.slane %v7980, 2
        %v7982 = vadd.f32 %v7980, %v7981
        %v7983 = vrot.slane %v7982, 1
        %v7984 = vadd.f32 %v7982, %v7983
        %v7985 = vrot.slane %v7297, 4
        %v7986 = vadd.f32 %v7297, %v7985
        %v7987 = vrot.slane %v7986, 2
        %v7988 = vadd.f32 %v7986, %v7987
        %v7989 = vrot.slane %v7988, 1
        %v7990 = vadd.f32 %v7988, %v7989
        %v7991 = vrot.slane %v7298, 4
        %v7992 = vadd.f32 %v7298, %v7991
        %v7993 = vrot.slane %v7992, 2
        %v7994 = vadd.f32 %v7992, %v7993
        %v7995 = vrot.slane %v7994, 1
        %v7996 = vadd.f32 %v7994, %v7995
        %v7997 = vrot.slane %v7299, 4
        %v7998 = vadd.f32 %v7299, %v7997
        %v7999 = vrot.slane %v7998, 2
        %v8000 = vadd.f32 %v7998, %v7999
        %v8001 = vrot.slane %v8000, 1
        %v8002 = vadd.f32 %v8000, %v8001
        %v8003 = vrot.slane %v7300, 4
        %v8004 = vadd.f32 %v7300, %v8003
        %v8005 = vrot.slane %v8004, 2
        %v8006 = vadd.f32 %v8004, %v8005
        %v8007 = vrot.slane %v8006, 1
        %v8008 = vadd.f32 %v8006, %v8007
        %v8009 = vrot.slane %v7301, 4
        %v8010 = vadd.f32 %v7301, %v8009
        %v8011 = vrot.slane %v8010, 2
        %v8012 = vadd.f32 %v8010, %v8011
        %v8013 = vrot.slane %v8012, 1
        %v8014 = vadd.f32 %v8012, %v8013
        %v8015 = vrot.slane %v7302, 4
        %v8016 = vadd.f32 %v7302, %v8015
        %v8017 = vrot.slane %v8016, 2
        %v8018 = vadd.f32 %v8016, %v8017
        %v8019 = vrot.slane %v8018, 1
        %v8020 = vadd.f32 %v8018, %v8019
        %v8021 = vrot.slane %v7303, 4
        %v8022 = vadd.f32 %v7303, %v8021
        %v8023 = vrot.slane %v8022, 2
        %v8024 = vadd.f32 %v8022, %v8023
        %v8025 = vrot.slane %v8024, 1
        %v8026 = vadd.f32 %v8024, %v8025
        %v8027 = vrot.slane %v7304, 4
        %v8028 = vadd.f32 %v7304, %v8027
        %v8029 = vrot.slane %v8028, 2
        %v8030 = vadd.f32 %v8028, %v8029
        %v8031 = vrot.slane %v8030, 1
        %v8032 = vadd.f32 %v8030, %v8031
        %v8033 = vrot.slane %v7305, 4
        %v8034 = vadd.f32 %v7305, %v8033
        %v8035 = vrot.slane %v8034, 2
        %v8036 = vadd.f32 %v8034, %v8035
        %v8037 = vrot.slane %v8036, 1
        %v8038 = vadd.f32 %v8036, %v8037
        %v8039 = vrot.slane %v7306, 4
        %v8040 = vadd.f32 %v7306, %v8039
        %v8041 = vrot.slane %v8040, 2
        %v8042 = vadd.f32 %v8040, %v8041
        %v8043 = vrot.slane %v8042, 1
        %v8044 = vadd.f32 %v8042, %v8043
        %v8045 = vrot.slane %v7307, 4
        %v8046 = vadd.f32 %v7307, %v8045
        %v8047 = vrot.slane %v8046, 2
        %v8048 = vadd.f32 %v8046, %v8047
        %v8049 = vrot.slane %v8048, 1
        %v8050 = vadd.f32 %v8048, %v8049
        %v8051 = vrot.slane %v7308, 4
        %v8052 = vadd.f32 %v7308, %v8051
        %v8053 = vrot.slane %v8052, 2
        %v8054 = vadd.f32 %v8052, %v8053
        %v8055 = vrot.slane %v8054, 1
        %v8056 = vadd.f32 %v8054, %v8055
        %v8057 = vrot.slane %v7309, 4
        %v8058 = vadd.f32 %v7309, %v8057
        %v8059 = vrot.slane %v8058, 2
        %v8060 = vadd.f32 %v8058, %v8059
        %v8061 = vrot.slane %v8060, 1
        %v8062 = vadd.f32 %v8060, %v8061
        %v8063 = vrot.slane %v7310, 4
        %v8064 = vadd.f32 %v7310, %v8063
        %v8065 = vrot.slane %v8064, 2
        %v8066 = vadd.f32 %v8064, %v8065
        %v8067 = vrot.slane %v8066, 1
        %v8068 = vadd.f32 %v8066, %v8067
        %v8069 = vrot.slane %v7311, 4
        %v8070 = vadd.f32 %v7311, %v8069
        %v8071 = vrot.slane %v8070, 2
        %v8072 = vadd.f32 %v8070, %v8071
        %v8073 = vrot.slane %v8072, 1
        %v8074 = vadd.f32 %v8072, %v8073
        %v8075 = vrot.slane %v7312, 4
        %v8076 = vadd.f32 %v7312, %v8075
        %v8077 = vrot.slane %v8076, 2
        %v8078 = vadd.f32 %v8076, %v8077
        %v8079 = vrot.slane %v8078, 1
        %v8080 = vadd.f32 %v8078, %v8079
        %v8081 = vpack.c.bf16 %v7318, %v7318
        %v8082 = vpack.c.bf16 %v7324, %v7324
        %v8083 = vpack.c.bf16 %v7330, %v7330
        %v8084 = vpack.c.bf16 %v7336, %v7336
        %v8085 = vpack.c.bf16 %v7342, %v7342
        %v8086 = vpack.c.bf16 %v7348, %v7348
        %v8087 = vpack.c.bf16 %v7354, %v7354
        %v8088 = vpack.c.bf16 %v7360, %v7360
        %v8089 = vpack.c.bf16 %v7366, %v7366
        %v8090 = vpack.c.bf16 %v7372, %v7372
        %v8091 = vpack.c.bf16 %v7378, %v7378
        %v8092 = vpack.c.bf16 %v7384, %v7384
        %v8093 = vpack.c.bf16 %v7390, %v7390
        %v8094 = vpack.c.bf16 %v7396, %v7396
        %v8095 = vpack.c.bf16 %v7402, %v7402
        %v8096 = vpack.c.bf16 %v7408, %v7408
        %v8097 = vpack.c.bf16 %v7414, %v7414
        %v8098 = vpack.c.bf16 %v7420, %v7420
        %v8099 = vpack.c.bf16 %v7426, %v7426
        %v8100 = vpack.c.bf16 %v7432, %v7432
        %v8101 = vpack.c.bf16 %v7438, %v7438
        %v8102 = vpack.c.bf16 %v7444, %v7444
        %v8103 = vpack.c.bf16 %v7450, %v7450
        %v8104 = vpack.c.bf16 %v7456, %v7456
        %v8105 = vpack.c.bf16 %v7462, %v7462
        %v8106 = vpack.c.bf16 %v7468, %v7468
        %v8107 = vpack.c.bf16 %v7474, %v7474
        %v8108 = vpack.c.bf16 %v7480, %v7480
        %v8109 = vpack.c.bf16 %v7486, %v7486
        %v8110 = vpack.c.bf16 %v7492, %v7492
        %v8111 = vpack.c.bf16 %v7498, %v7498
        %v8112 = vpack.c.bf16 %v7504, %v7504
        %v8113 = vpack.c.bf16 %v7510, %v7510
        %v8114 = vpack.c.bf16 %v7516, %v7516
        %v8115 = vpack.c.bf16 %v7522, %v7522
        %v8116 = vpack.c.bf16 %v7528, %v7528
        %v8117 = vpack.c.bf16 %v7534, %v7534
        %v8118 = vpack.c.bf16 %v7540, %v7540
        %v8119 = vpack.c.bf16 %v7546, %v7546
        %v8120 = vpack.c.bf16 %v7552, %v7552
        %v8121 = vpack.c.bf16 %v7558, %v7558
        %v8122 = vpack.c.bf16 %v7564, %v7564
        %v8123 = vpack.c.bf16 %v7570, %v7570
        %v8124 = vpack.c.bf16 %v7576, %v7576
        %v8125 = vpack.c.bf16 %v7582, %v7582
        %v8126 = vpack.c.bf16 %v7588, %v7588
        %v8127 = vpack.c.bf16 %v7594, %v7594
        %v8128 = vpack.c.bf16 %v7600, %v7600
        %v8129 = vpack.c.bf16 %v7606, %v7606
        %v8130 = vpack.c.bf16 %v7612, %v7612
        %v8131 = vpack.c.bf16 %v7618, %v7618
        %v8132 = vpack.c.bf16 %v7624, %v7624
        %v8133 = vpack.c.bf16 %v7630, %v7630
        %v8134 = vpack.c.bf16 %v7636, %v7636
        %v8135 = vpack.c.bf16 %v7642, %v7642
        %v8136 = vpack.c.bf16 %v7648, %v7648
        %v8137 = vpack.c.bf16 %v7654, %v7654
        %v8138 = vpack.c.bf16 %v7660, %v7660
        %v8139 = vpack.c.bf16 %v7666, %v7666
        %v8140 = vpack.c.bf16 %v7672, %v7672
        %v8141 = vpack.c.bf16 %v7678, %v7678
        %v8142 = vpack.c.bf16 %v7684, %v7684
        %v8143 = vpack.c.bf16 %v7690, %v7690
        %v8144 = vpack.c.bf16 %v7696, %v7696
        %v8145 = vpack.c.bf16 %v7702, %v7702
        %v8146 = vpack.c.bf16 %v7708, %v7708
        %v8147 = vpack.c.bf16 %v7714, %v7714
        %v8148 = vpack.c.bf16 %v7720, %v7720
        %v8149 = vpack.c.bf16 %v7726, %v7726
        %v8150 = vpack.c.bf16 %v7732, %v7732
        %v8151 = vpack.c.bf16 %v7738, %v7738
        %v8152 = vpack.c.bf16 %v7744, %v7744
        %v8153 = vpack.c.bf16 %v7750, %v7750
        %v8154 = vpack.c.bf16 %v7756, %v7756
        %v8155 = vpack.c.bf16 %v7762, %v7762
        %v8156 = vpack.c.bf16 %v7768, %v7768
        %v8157 = vpack.c.bf16 %v7774, %v7774
        %v8158 = vpack.c.bf16 %v7780, %v7780
        %v8159 = vpack.c.bf16 %v7786, %v7786
        %v8160 = vpack.c.bf16 %v7792, %v7792
        %v8161 = vpack.c.bf16 %v7798, %v7798
        %v8162 = vpack.c.bf16 %v7804, %v7804
        %v8163 = vpack.c.bf16 %v7810, %v7810
        %v8164 = vpack.c.bf16 %v7816, %v7816
        %v8165 = vpack.c.bf16 %v7822, %v7822
        %v8166 = vpack.c.bf16 %v7828, %v7828
        %v8167 = vpack.c.bf16 %v7834, %v7834
        %v8168 = vpack.c.bf16 %v7840, %v7840
        %v8169 = vpack.c.bf16 %v7846, %v7846
        %v8170 = vpack.c.bf16 %v7852, %v7852
        %v8171 = vpack.c.bf16 %v7858, %v7858
        %v8172 = vpack.c.bf16 %v7864, %v7864
        %v8173 = vpack.c.bf16 %v7870, %v7870
        %v8174 = vpack.c.bf16 %v7876, %v7876
        %v8175 = vpack.c.bf16 %v7882, %v7882
        %v8176 = vpack.c.bf16 %v7888, %v7888
        %v8177 = vpack.c.bf16 %v7894, %v7894
        %v8178 = vpack.c.bf16 %v7900, %v7900
        %v8179 = vpack.c.bf16 %v7906, %v7906
        %v8180 = vpack.c.bf16 %v7912, %v7912
        %v8181 = vpack.c.bf16 %v7918, %v7918
        %v8182 = vpack.c.bf16 %v7924, %v7924
        %v8183 = vpack.c.bf16 %v7930, %v7930
        %v8184 = vpack.c.bf16 %v7936, %v7936
        %v8185 = vpack.c.bf16 %v7942, %v7942
        %v8186 = vpack.c.bf16 %v7948, %v7948
        %v8187 = vpack.c.bf16 %v7954, %v7954
        %v8188 = vpack.c.bf16 %v7960, %v7960
        %v8189 = vpack.c.bf16 %v7966, %v7966
        %v8190 = vpack.c.bf16 %v7972, %v7972
        %v8191 = vpack.c.bf16 %v7978, %v7978
        %v8192 = vpack.c.bf16 %v7984, %v7984
        %v8193 = vpack.c.bf16 %v7990, %v7990
        %v8194 = vpack.c.bf16 %v7996, %v7996
        %v8195 = vpack.c.bf16 %v8002, %v8002
        %v8196 = vpack.c.bf16 %v8008, %v8008
        %v8197 = vpack.c.bf16 %v8014, %v8014
        %v8198 = vpack.c.bf16 %v8020, %v8020
        %v8199 = vpack.c.bf16 %v8026, %v8026
        %v8200 = vpack.c.bf16 %v8032, %v8032
        %v8201 = vpack.c.bf16 %v8038, %v8038
        %v8202 = vpack.c.bf16 %v8044, %v8044
        %v8203 = vpack.c.bf16 %v8050, %v8050
        %v8204 = vpack.c.bf16 %v8056, %v8056
        %v8205 = vpack.c.bf16 %v8062, %v8062
        %v8206 = vpack.c.bf16 %v8068, %v8068
        %v8207 = vpack.c.bf16 %v8074, %v8074
        %v8208 = vpack.c.bf16 %v8080, %v8080
        %v8209 = vld [vmem:[#allocation5] sm:$0xf]
        %v8210 = vld [vmem:[#allocation5 + $0x4] sm:$0xf]
        %v8211 = vld [vmem:[#allocation5 + $0x8] sm:$0xf]
        %v8212 = vld [vmem:[#allocation5 + $0xc] sm:$0xf]
        %v8213 = vld [vmem:[#allocation5 + $0x10] sm:$0xf]
        %v8214 = vld [vmem:[#allocation5 + $0x14] sm:$0xf]
        %v8215 = vld [vmem:[#allocation5 + $0x18] sm:$0xf]
        %v8216 = vld [vmem:[#allocation5 + $0x1c] sm:$0xf]
        %v8217 = vld [vmem:[#allocation5 + $0x20] sm:$0xf]
        %v8218 = vld [vmem:[#allocation5 + $0x24] sm:$0xf]
        %v8219 = vld [vmem:[#allocation5 + $0x28] sm:$0xf]
        %v8220 = vld [vmem:[#allocation5 + $0x2c] sm:$0xf]
        %v8221 = vld [vmem:[#allocation5 + $0x30] sm:$0xf]
        %v8222 = vld [vmem:[#allocation5 + $0x34] sm:$0xf]
        %v8223 = vld [vmem:[#allocation5 + $0x38] sm:$0xf]
        %v8224 = vld [vmem:[#allocation5 + $0x3c] sm:$0xf]
        %v8353 = vunpack.c.l.b16 %v8081
        %v8354 = vunpack.c.l.b16 %v8082
        %v8355 = vunpack.c.l.b16 %v8083
        %v8356 = vunpack.c.l.b16 %v8084
        %v8357 = vunpack.c.l.b16 %v8085
        %v8358 = vunpack.c.l.b16 %v8086
        %v8359 = vunpack.c.l.b16 %v8087
        %v8360 = vunpack.c.l.b16 %v8088
        %v8361 = vunpack.c.l.b16 %v8089
        %v8362 = vunpack.c.l.b16 %v8090
        %v8363 = vunpack.c.l.b16 %v8091
        %v8364 = vunpack.c.l.b16 %v8092
        %v8365 = vunpack.c.l.b16 %v8093
        %v8366 = vunpack.c.l.b16 %v8094
        %v8367 = vunpack.c.l.b16 %v8095
        %v8368 = vunpack.c.l.b16 %v8096
        %v8369 = vunpack.c.l.b16 %v8097
        %v8370 = vunpack.c.l.b16 %v8098
        %v8371 = vunpack.c.l.b16 %v8099
        %v8372 = vunpack.c.l.b16 %v8100
        %v8373 = vunpack.c.l.b16 %v8101
        %v8374 = vunpack.c.l.b16 %v8102
        %v8375 = vunpack.c.l.b16 %v8103
        %v8376 = vunpack.c.l.b16 %v8104
        %v8377 = vunpack.c.l.b16 %v8105
        %v8378 = vunpack.c.l.b16 %v8106
        %v8379 = vunpack.c.l.b16 %v8107
        %v8380 = vunpack.c.l.b16 %v8108
        %v8381 = vunpack.c.l.b16 %v8109
        %v8382 = vunpack.c.l.b16 %v8110
        %v8383 = vunpack.c.l.b16 %v8111
        %v8384 = vunpack.c.l.b16 %v8112
        %v8385 = vunpack.c.l.b16 %v8113
        %v8386 = vunpack.c.l.b16 %v8114
        %v8387 = vunpack.c.l.b16 %v8115
        %v8388 = vunpack.c.l.b16 %v8116
        %v8389 = vunpack.c.l.b16 %v8117
        %v8390 = vunpack.c.l.b16 %v8118
        %v8391 = vunpack.c.l.b16 %v8119
        %v8392 = vunpack.c.l.b16 %v8120
        %v8393 = vunpack.c.l.b16 %v8121
        %v8394 = vunpack.c.l.b16 %v8122
        %v8395 = vunpack.c.l.b16 %v8123
        %v8396 = vunpack.c.l.b16 %v8124
        %v8397 = vunpack.c.l.b16 %v8125
        %v8398 = vunpack.c.l.b16 %v8126
        %v8399 = vunpack.c.l.b16 %v8127
        %v8400 = vunpack.c.l.b16 %v8128
        %v8401 = vunpack.c.l.b16 %v8129
        %v8402 = vunpack.c.l.b16 %v8130
        %v8403 = vunpack.c.l.b16 %v8131
        %v8404 = vunpack.c.l.b16 %v8132
        %v8405 = vunpack.c.l.b16 %v8133
        %v8406 = vunpack.c.l.b16 %v8134
        %v8407 = vunpack.c.l.b16 %v8135
        %v8408 = vunpack.c.l.b16 %v8136
        %v8409 = vunpack.c.l.b16 %v8137
        %v8410 = vunpack.c.l.b16 %v8138
        %v8411 = vunpack.c.l.b16 %v8139
        %v8412 = vunpack.c.l.b16 %v8140
        %v8413 = vunpack.c.l.b16 %v8141
        %v8414 = vunpack.c.l.b16 %v8142
        %v8415 = vunpack.c.l.b16 %v8143
        %v8416 = vunpack.c.l.b16 %v8144
        %v8417 = vunpack.c.l.b16 %v8145
        %v8418 = vunpack.c.l.b16 %v8146
        %v8419 = vunpack.c.l.b16 %v8147
        %v8420 = vunpack.c.l.b16 %v8148
        %v8421 = vunpack.c.l.b16 %v8149
        %v8422 = vunpack.c.l.b16 %v8150
        %v8423 = vunpack.c.l.b16 %v8151
        %v8424 = vunpack.c.l.b16 %v8152
        %v8425 = vunpack.c.l.b16 %v8153
        %v8426 = vunpack.c.l.b16 %v8154
        %v8427 = vunpack.c.l.b16 %v8155
        %v8428 = vunpack.c.l.b16 %v8156
        %v8429 = vunpack.c.l.b16 %v8157
        %v8430 = vunpack.c.l.b16 %v8158
        %v8431 = vunpack.c.l.b16 %v8159
        %v8432 = vunpack.c.l.b16 %v8160
        %v8433 = vunpack.c.l.b16 %v8161
        %v8434 = vunpack.c.l.b16 %v8162
        %v8435 = vunpack.c.l.b16 %v8163
        %v8436 = vunpack.c.l.b16 %v8164
        %v8437 = vunpack.c.l.b16 %v8165
        %v8438 = vunpack.c.l.b16 %v8166
        %v8439 = vunpack.c.l.b16 %v8167
        %v8440 = vunpack.c.l.b16 %v8168
        %v8441 = vunpack.c.l.b16 %v8169
        %v8442 = vunpack.c.l.b16 %v8170
        %v8443 = vunpack.c.l.b16 %v8171
        %v8444 = vunpack.c.l.b16 %v8172
        %v8445 = vunpack.c.l.b16 %v8173
        %v8446 = vunpack.c.l.b16 %v8174
        %v8447 = vunpack.c.l.b16 %v8175
        %v8448 = vunpack.c.l.b16 %v8176
        %v8449 = vunpack.c.l.b16 %v8177
        %v8450 = vunpack.c.l.b16 %v8178
        %v8451 = vunpack.c.l.b16 %v8179
        %v8452 = vunpack.c.l.b16 %v8180
        %v8453 = vunpack.c.l.b16 %v8181
        %v8454 = vunpack.c.l.b16 %v8182
        %v8455 = vunpack.c.l.b16 %v8183
        %v8456 = vunpack.c.l.b16 %v8184
        %v8457 = vunpack.c.l.b16 %v8185
        %v8458 = vunpack.c.l.b16 %v8186
        %v8459 = vunpack.c.l.b16 %v8187
        %v8460 = vunpack.c.l.b16 %v8188
        %v8461 = vunpack.c.l.b16 %v8189
        %v8462 = vunpack.c.l.b16 %v8190
        %v8463 = vunpack.c.l.b16 %v8191
        %v8464 = vunpack.c.l.b16 %v8192
        %v8465 = vunpack.c.l.b16 %v8193
        %v8466 = vunpack.c.l.b16 %v8194
        %v8467 = vunpack.c.l.b16 %v8195
        %v8468 = vunpack.c.l.b16 %v8196
        %v8469 = vunpack.c.l.b16 %v8197
        %v8470 = vunpack.c.l.b16 %v8198
        %v8471 = vunpack.c.l.b16 %v8199
        %v8472 = vunpack.c.l.b16 %v8200
        %v8473 = vunpack.c.l.b16 %v8201
        %v8474 = vunpack.c.l.b16 %v8202
        %v8475 = vunpack.c.l.b16 %v8203
        %v8476 = vunpack.c.l.b16 %v8204
        %v8477 = vunpack.c.l.b16 %v8205
        %v8478 = vunpack.c.l.b16 %v8206
        %v8479 = vunpack.c.l.b16 %v8207
        %v8480 = vunpack.c.l.b16 %v8208
        %v8481 = vsel %vm5609, %v8354, %v8353
        %v8482 = vsel %vm5611, %v8355, %v8481
        %v8483 = vsel %vm5613, %v8356, %v8482
        %v8484 = vsel %vm5615, %v8357, %v8483
        %v8485 = vsel %vm5617, %v8358, %v8484
        %v8486 = vsel %vm5619, %v8359, %v8485
        %v8487 = vsel %vm5621, %v8360, %v8486
        %v8488 = vsel %vm5609, %v8362, %v8361
        %v8489 = vsel %vm5611, %v8363, %v8488
        %v8490 = vsel %vm5613, %v8364, %v8489
        %v8491 = vsel %vm5615, %v8365, %v8490
        %v8492 = vsel %vm5617, %v8366, %v8491
        %v8493 = vsel %vm5619, %v8367, %v8492
        %v8494 = vsel %vm5621, %v8368, %v8493
        %v8495 = vsel %vm5609, %v8370, %v8369
        %v8496 = vsel %vm5611, %v8371, %v8495
        %v8497 = vsel %vm5613, %v8372, %v8496
        %v8498 = vsel %vm5615, %v8373, %v8497
        %v8499 = vsel %vm5617, %v8374, %v8498
        %v8500 = vsel %vm5619, %v8375, %v8499
        %v8501 = vsel %vm5621, %v8376, %v8500
        %v8502 = vsel %vm5609, %v8378, %v8377
        %v8503 = vsel %vm5611, %v8379, %v8502
        %v8504 = vsel %vm5613, %v8380, %v8503
        %v8505 = vsel %vm5615, %v8381, %v8504
        %v8506 = vsel %vm5617, %v8382, %v8505
        %v8507 = vsel %vm5619, %v8383, %v8506
        %v8508 = vsel %vm5621, %v8384, %v8507
        %v8509 = vsel %vm5609, %v8386, %v8385
        %v8510 = vsel %vm5611, %v8387, %v8509
        %v8511 = vsel %vm5613, %v8388, %v8510
        %v8512 = vsel %vm5615, %v8389, %v8511
        %v8513 = vsel %vm5617, %v8390, %v8512
        %v8514 = vsel %vm5619, %v8391, %v8513
        %v8515 = vsel %vm5621, %v8392, %v8514
        %v8516 = vsel %vm5609, %v8394, %v8393
        %v8517 = vsel %vm5611, %v8395, %v8516
        %v8518 = vsel %vm5613, %v8396, %v8517
        %v8519 = vsel %vm5615, %v8397, %v8518
        %v8520 = vsel %vm5617, %v8398, %v8519
        %v8521 = vsel %vm5619, %v8399, %v8520
        %v8522 = vsel %vm5621, %v8400, %v8521
        %v8523 = vsel %vm5609, %v8402, %v8401
        %v8524 = vsel %vm5611, %v8403, %v8523
        %v8525 = vsel %vm5613, %v8404, %v8524
        %v8526 = vsel %vm5615, %v8405, %v8525
        %v8527 = vsel %vm5617, %v8406, %v8526
        %v8528 = vsel %vm5619, %v8407, %v8527
        %v8529 = vsel %vm5621, %v8408, %v8528
        %v8530 = vsel %vm5609, %v8410, %v8409
        %v8531 = vsel %vm5611, %v8411, %v8530
        %v8532 = vsel %vm5613, %v8412, %v8531
        %v8533 = vsel %vm5615, %v8413, %v8532
        %v8534 = vsel %vm5617, %v8414, %v8533
        %v8535 = vsel %vm5619, %v8415, %v8534
        %v8536 = vsel %vm5621, %v8416, %v8535
        %v8537 = vsel %vm5609, %v8418, %v8417
        %v8538 = vsel %vm5611, %v8419, %v8537
        %v8539 = vsel %vm5613, %v8420, %v8538
        %v8540 = vsel %vm5615, %v8421, %v8539
        %v8541 = vsel %vm5617, %v8422, %v8540
        %v8542 = vsel %vm5619, %v8423, %v8541
        %v8543 = vsel %vm5621, %v8424, %v8542
        %v8544 = vsel %vm5609, %v8426, %v8425
        %v8545 = vsel %vm5611, %v8427, %v8544
        %v8546 = vsel %vm5613, %v8428, %v8545
        %v8547 = vsel %vm5615, %v8429, %v8546
        %v8548 = vsel %vm5617, %v8430, %v8547
        %v8549 = vsel %vm5619, %v8431, %v8548
        %v8550 = vsel %vm5621, %v8432, %v8549
        %v8551 = vsel %vm5609, %v8434, %v8433
        %v8552 = vsel %vm5611, %v8435, %v8551
        %v8553 = vsel %vm5613, %v8436, %v8552
        %v8554 = vsel %vm5615, %v8437, %v8553
        %v8555 = vsel %vm5617, %v8438, %v8554
        %v8556 = vsel %vm5619, %v8439, %v8555
        %v8557 = vsel %vm5621, %v8440, %v8556
        %v8558 = vsel %vm5609, %v8442, %v8441
        %v8559 = vsel %vm5611, %v8443, %v8558
        %v8560 = vsel %vm5613, %v8444, %v8559
        %v8561 = vsel %vm5615, %v8445, %v8560
        %v8562 = vsel %vm5617, %v8446, %v8561
        %v8563 = vsel %vm5619, %v8447, %v8562
        %v8564 = vsel %vm5621, %v8448, %v8563
        %v8565 = vsel %vm5609, %v8450, %v8449
        %v8566 = vsel %vm5611, %v8451, %v8565
        %v8567 = vsel %vm5613, %v8452, %v8566
        %v8568 = vsel %vm5615, %v8453, %v8567
        %v8569 = vsel %vm5617, %v8454, %v8568
        %v8570 = vsel %vm5619, %v8455, %v8569
        %v8571 = vsel %vm5621, %v8456, %v8570
        %v8572 = vsel %vm5609, %v8458, %v8457
        %v8573 = vsel %vm5611, %v8459, %v8572
        %v8574 = vsel %vm5613, %v8460, %v8573
        %v8575 = vsel %vm5615, %v8461, %v8574
        %v8576 = vsel %vm5617, %v8462, %v8575
        %v8577 = vsel %vm5619, %v8463, %v8576
        %v8578 = vsel %vm5621, %v8464, %v8577
        %v8579 = vsel %vm5609, %v8466, %v8465
        %v8580 = vsel %vm5611, %v8467, %v8579
        %v8581 = vsel %vm5613, %v8468, %v8580
        %v8582 = vsel %vm5615, %v8469, %v8581
        %v8583 = vsel %vm5617, %v8470, %v8582
        %v8584 = vsel %vm5619, %v8471, %v8583
        %v8585 = vsel %vm5621, %v8472, %v8584
        %v8586 = vsel %vm5609, %v8474, %v8473
        %v8587 = vsel %vm5611, %v8475, %v8586
        %v8588 = vsel %vm5613, %v8476, %v8587
        %v8589 = vsel %vm5615, %v8477, %v8588
        %v8590 = vsel %vm5617, %v8478, %v8589
        %v8591 = vsel %vm5619, %v8479, %v8590
        %v8592 = vsel %vm5621, %v8480, %v8591
        %v8593 = vpack.c.b16 %v8494, %v8487
        %v8594 = vpack.c.b16 %v8508, %v8501
        %v8595 = vpack.c.b16 %v8522, %v8515
        %v8596 = vpack.c.b16 %v8536, %v8529
        %v8597 = vpack.c.b16 %v8550, %v8543
        %v8598 = vpack.c.b16 %v8564, %v8557
        %v8599 = vpack.c.b16 %v8578, %v8571
        %v8600 = vpack.c.b16 %v8592, %v8585
        %v8625 = vunpack.c.l.b16 %v8209
        %v8626 = vunpack.c.l.b16 %v8210
        %v8627 = vunpack.c.l.b16 %v8211
        %v8628 = vunpack.c.l.b16 %v8212
        %v8629 = vunpack.c.l.b16 %v8213
        %v8630 = vunpack.c.l.b16 %v8214
        %v8631 = vunpack.c.l.b16 %v8215
        %v8632 = vunpack.c.l.b16 %v8216
        %v8633 = vunpack.c.l.b16 %v8217
        %v8634 = vunpack.c.l.b16 %v8218
        %v8635 = vunpack.c.l.b16 %v8219
        %v8636 = vunpack.c.l.b16 %v8220
        %v8637 = vunpack.c.l.b16 %v8221
        %v8638 = vunpack.c.l.b16 %v8222
        %v8639 = vunpack.c.l.b16 %v8223
        %v8640 = vunpack.c.l.b16 %v8224
        %v8641 = vpack.c.b16 %v8626, %v8625
        %v8642 = vpack.c.b16 %v8628, %v8627
        %v8643 = vpack.c.b16 %v8630, %v8629
        %v8644 = vpack.c.b16 %v8632, %v8631
        %v8645 = vpack.c.b16 %v8634, %v8633
        %v8646 = vpack.c.b16 %v8636, %v8635
        %v8647 = vpack.c.b16 %v8638, %v8637
        %v8648 = vpack.c.b16 %v8640, %v8639
        %8657 = vmatpush.bf16.msra.mxu0 %v8648
        %8658 = vmatpush.bf16.msra.mxu0 %v8647
        %8659 = vmatpush.bf16.msra.mxu0 %v8646
        %8660 = vmatpush.bf16.msra.mxu0 %v8645
        %8661 = vmatpush.bf16.msra.mxu0 %v8644
        %8662 = vmatpush.bf16.msra.mxu0 %v8643
        %8663 = vmatpush.bf16.msra.mxu0 %v8642
        %8664 = vmatpush.bf16.msra.mxu0 %v8641
        %8665 = vmatmul.bf16.gmra.mxu0 %v8593
        %v8666 = vpop.f32.mrf.mxu0
        %v8667 = vadd.f32 0.0, %v8666
        %v8668 = vpop.f32.mrf.mxu0
        %v8669 = vadd.f32 0.0, %v8668
        %8670 = vmatmul.bf16.gmra.mxu0 %v8594
        %v8671 = vpop.f32.mrf.mxu0
        %v8672 = vadd.f32 0.0, %v8671
        %v8673 = vpop.f32.mrf.mxu0
        %v8674 = vadd.f32 0.0, %v8673
        %8675 = vmatmul.bf16.gmra.mxu0 %v8595
        %v8676 = vpop.f32.mrf.mxu0
        %v8677 = vadd.f32 0.0, %v8676
        %v8678 = vpop.f32.mrf.mxu0
        %v8679 = vadd.f32 0.0, %v8678
        %8680 = vmatmul.bf16.gmra.mxu0 %v8596
        %v8681 = vpop.f32.mrf.mxu0
        %v8682 = vadd.f32 0.0, %v8681
        %v8683 = vpop.f32.mrf.mxu0
        %v8684 = vadd.f32 0.0, %v8683
        %8685 = vmatmul.bf16.gmra.mxu0 %v8597
        %v8686 = vpop.f32.mrf.mxu0
        %v8687 = vadd.f32 0.0, %v8686
        %v8688 = vpop.f32.mrf.mxu0
        %v8689 = vadd.f32 0.0, %v8688
        %8690 = vmatmul.bf16.gmra.mxu0 %v8598
        %v8691 = vpop.f32.mrf.mxu0
        %v8692 = vadd.f32 0.0, %v8691
        %v8693 = vpop.f32.mrf.mxu0
        %v8694 = vadd.f32 0.0, %v8693
        %8695 = vmatmul.bf16.gmra.mxu0 %v8599
        %v8696 = vpop.f32.mrf.mxu0
        %v8697 = vadd.f32 0.0, %v8696
        %v8698 = vpop.f32.mrf.mxu0
        %v8699 = vadd.f32 0.0, %v8698
        %8700 = vmatmul.bf16.gmra.mxu0 %v8600
        %v8701 = vpop.f32.mrf.mxu0
        %v8702 = vadd.f32 0.0, %v8701
        %v8703 = vpop.f32.mrf.mxu0
        %v8704 = vadd.f32 0.0, %v8703
        %8705 = vdwg.mxu0
        %8706 = vst [vmem:[%s375] sm:$0xff] %v8667
        %8707 = vst [vmem:[%s375 + $0x8] sm:$0xff] %v8669
        %8708 = vst [vmem:[%s375 + $0x10] sm:$0xff] %v8672
        %8709 = vst [vmem:[%s375 + $0x18] sm:$0xff] %v8674
        %8710 = vst [vmem:[%s375 + $0x20] sm:$0xff] %v8677
        %8711 = vst [vmem:[%s375 + $0x28] sm:$0xff] %v8679
        %8712 = vst [vmem:[%s375 + $0x30] sm:$0xff] %v8682
        %8713 = vst [vmem:[%s375 + $0x38] sm:$0xff] %v8684
        %8714 = vst [vmem:[%s375 + $0x40] sm:$0xff] %v8687
        %8715 = vst [vmem:[%s375 + $0x48] sm:$0xff] %v8689
        %8716 = vst [vmem:[%s375 + $0x50] sm:$0xff] %v8692
        %8717 = vst [vmem:[%s375 + $0x58] sm:$0xff] %v8694
        %8718 = vst [vmem:[%s375 + $0x60] sm:$0xff] %v8697
        %8719 = vst [vmem:[%s375 + $0x68] sm:$0xff] %v8699
        %8720 = vst [vmem:[%s375 + $0x70] sm:$0xff] %v8702
        %8721 = vst [vmem:[%s375 + $0x78] sm:$0xff] %v8704
        %s8722 = sand.u32 %s197, 1
        %s8723 = scalar_lea.sflag [#allocation4], %s8722
        %s8724 = sand.u32 %s197, 1
        %s8725 = smul.addr %s8724, 128
        %s8726 = scalar_lea.vmem [#allocation7], %s8725
        %s8727 = smul.u32 16, %s27
        %p8728 = scmp.lt.s32.totalorder %s8727, 31
        %s8729 = scalar_select %p8728, %s8727, 31
        %s8730 = smul.addr %s8729, 8
        %s8731 = scalar_lea.vmem %s8, %s8730
        // Predicated region
        $region57: #{tpu_custom_call.1} parent=47 // pred_check
          %p8732 = pneg %p207
        $region58: #{tpu_custom_call.1} parent=47 // pred_check_branch
          %8734 = sbr.rel (%p8732) target = $region60
        $region59: #{tpu_custom_call.1} parent=47 // pred_region
          %s8735 = smul.u32 16, %s27
          %8737 = vsyncadd %s8723, 0
          %s8738 = smul.addr %s8735, 8
          %s8739 = scalar_lea.hbm %s7, %s8738
          %s8740 = sshll.u32 %s8726, 4
          %s8741 = int_to_ptr.vmem [resolvable:$true] %s8740
          %s8742 = sshll.u32 %s8739, 4
          %s8743 = int_to_ptr.hbm [resolvable:$true] %s8742
          %8748 = dma.vmem_to_hbm [thread:$0]  %s8741, 2048, %s8743, %s8723, 128, 128, 8
        $region60: #{tpu_custom_call.1} parent=47 // pred_fallthru
          _
        // Predicated region
        $region61: #{tpu_custom_call.1} parent=47 // pred_check
          %p8749 = pneg %p233
        $region62: #{tpu_custom_call.1} parent=47 // pred_check_branch
          %8751 = sbr.rel (%p8749) target = $region64
        $region63: #{tpu_custom_call.1} parent=47 // pred_region
          %s8752 = smul.u32 16, %s27
        $region64: #{tpu_custom_call.1} parent=47 // pred_fallthru
          _
      $region48: #{tpu_custom_call.1} parent=5 // pred_fallthru
        _
      %p8753 = scmp.le.s32.totalorder 2, %s22
      // Predicated region
      $region65: #{tpu_custom_call.1} parent=5 // pred_check
        %p8754 = pneg %p8753
      $region66: #{tpu_custom_call.1} parent=5 // pred_check_branch
        %8756 = sbr.rel (%p8754) target = $region68
      $region67: #{tpu_custom_call.1} parent=5 // pred_region
        %s8757 = ssub.s32 %s22, 2
        // Predicated region
        $region69: #{tpu_custom_call.1} parent=67 // pred_check
          %p8758 = pneg %p213
        $region70: #{tpu_custom_call.1} parent=67 // pred_check_branch
          %8760 = sbr.rel (%p8758) target = $region72
        $region71: #{tpu_custom_call.1} parent=67 // pred_region
          %s8761 = sand.u32 %s198, 1
          %s8762 = scalar_lea.sflag [#allocation4], %s8761
          %s8763 = sand.u32 %s198, 1
          %s8764 = smul.addr %s8763, 128
          %s8765 = scalar_lea.vmem [#allocation7], %s8764
          %8767 = dma.done %s8762, 2048
        $region72: #{tpu_custom_call.1} parent=67 // pred_fallthru
          _
        // Predicated region
        $region73: #{tpu_custom_call.1} parent=67 // pred_check
          %p8768 = pneg %p239
        $region74: #{tpu_custom_call.1} parent=67 // pred_check_branch
          %8770 = sbr.rel (%p8768) target = $region76
        $region75: #{tpu_custom_call.1} parent=67 // pred_region
          %s8771 = smul.u32 16, %s28
          %p8772 = scmp.lt.s32.totalorder %s8771, 31
          %s8773 = scalar_select %p8772, %s8771, 31
          %s8774 = smul.addr %s8773, 8
          %s8775 = scalar_lea.vmem %s8, %s8774
        $region76: #{tpu_custom_call.1} parent=67 // pred_fallthru
          _
      $region68: #{tpu_custom_call.1} parent=5 // pred_fallthru
        _
    $region6: #{tpu_custom_call.1} parent=1 // loop_footer
      %s26 = sadd.s32 1, %s22
    $region7: #{tpu_custom_call.1} parent=1 // loop_footer_branch
      %21 = sbr.rel target = $region3
    $region8: #{tpu_custom_call.1} parent=1 // loop_exit
      _
    %8776 = vsyncpa [#allocation3], 1
    %s8777 = scalar_lea.sflag [#allocation3], 1
    %8778 = vsyncpa %s8777, 1
    %8779 = vsyncpa [#allocation6], 1
    %8780 = vsyncpa [#allocation4], 1
    %s8781 = scalar_lea.sflag [#allocation4], 1
    %8782 = vsyncpa %s8781, 1

</llo_original>
